<compile_context>
chip_gen: v5e
topology: v5e:2x2
jax: 0.10.0
libtpu: 0.0.40
codegen_flags: <defaults>
</compile_context>

<pallas_src>
import math
import functools

import jax
import jax.numpy as jnp
from jax import lax
from jax.experimental import pallas as pl
from jax.experimental.pallas import tpu as pltpu


def _round_up(x, m):
    return (x + m - 1) // m * m


def _pick_tile_n(n_tokens, d_pad, tile_n_max, vmem_budget_bytes):
    """Balanced token-tile size, capped so the per-step VMEM footprint
    (double-buffered gather scratch + Pallas double-buffered output block,
    ~16 * tile_n * d_pad bytes) stays inside the budget.  The budget is chosen
    conservatively so the same tiling also fits v7x's 64 MiB VMEM."""
    per_token_bytes = 16 * d_pad
    cap = max(8, (vmem_budget_bytes // per_token_bytes) // 8 * 8)
    t_max = max(8, min(tile_n_max, cap))
    num_tiles = -(-n_tokens // t_max)
    tile_n = _round_up(-(-n_tokens // num_tiles), 8)
    return tile_n, num_tiles


# ---------------------------------------------------------------------------
# Fast path: small table resident in VMEM, one-hot MXU gather.
# ---------------------------------------------------------------------------
def _resident_kernel(ids_ref, emb_ref, out_ref, *, vocab_size, scale):
    """ids_ref: (tile_n, 1) int32 VMEM, emb_ref: (V, D_pad) f32 VMEM (whole
    table, constant block), out_ref: (tile_n, D_pad) f32 VMEM."""
    ids = jnp.clip(ids_ref[...], 0, vocab_size - 1)                  # (tile_n, 1)
    iota = lax.broadcasted_iota(jnp.int32, (ids.shape[0], vocab_size), 1)
    one_hot = (ids == iota).astype(emb_ref.dtype)                    # (tile_n, V)
    # Exact row selection; HIGHEST precision keeps the f32 rows at f32 accuracy
    # on the (bf16-native) MXU.
    rows = jnp.dot(one_hot, emb_ref[...],
                   preferred_element_type=jnp.float32,
                   precision=jax.lax.Precision.HIGHEST)
    out_ref[...] = rows * scale


def _resident_lookup(ids_flat, emb_padded, scale, tile_n, num_tiles):
    V, D_pad = emb_padded.shape
    N = ids_flat.shape[0]
    N_pad = tile_n * num_tiles
    ids = jnp.pad(ids_flat, (0, N_pad - N)).reshape(N_pad, 1)

    kernel = functools.partial(_resident_kernel, vocab_size=V, scale=scale)
    out = pl.pallas_call(
        kernel,
        out_shape=jax.ShapeDtypeStruct((N_pad, D_pad), jnp.float32),
        grid=(num_tiles,),
        in_specs=[
            pl.BlockSpec((tile_n, 1), lambda i: (i, 0)),      # ids per tile
            pl.BlockSpec((V, D_pad), lambda i: (0, 0)),       # table, resident
        ],
        out_specs=pl.BlockSpec((tile_n, D_pad), lambda i: (i, 0)),
        compiler_params=pltpu.CompilerParams(
            # Tiles are independent -> parallel axis (both v7x TensorCores).
            dimension_semantics=("parallel",),
            vmem_limit_bytes=32 * 1024 * 1024,
        ),
    )(ids, emb_padded)
    return out if N_pad == N else out[:N]


# ---------------------------------------------------------------------------
# General path: table in HBM, per-row DMA gather, double-buffered tiles.
# ---------------------------------------------------------------------------
def _gather_kernel(ids_ref, emb_hbm, out_ref, buf, sems, *,
                   tile_n, num_tiles, vocab_size, scale):
    """ids_ref : (N_pad,) int32 SMEM (scalar-prefetched token ids)
    emb_hbm : (V, D_pad) f32, left in HBM (memory_space=pl.ANY)
    out_ref : (tile_n, D_pad) f32 VMEM output block
    buf     : (2, tile_n, D_pad) f32 VMEM double buffer
    sems    : (2,) DMA semaphores, ONE per slot; every row DMA of a slot
              signals the same semaphore and one aggregate wait covers them.

    Slot-reuse safety: rows prefetched into slot `1-slot` at step i are waited
    on at step i+1, and that buffer is only refilled at step i+2, after step
    i+1's compute consumed it.  Do NOT move the prefetch below the wait.
    """
    i = pl.program_id(0)
    slot = i & 1

    def start_row_gathers(tile_idx, slot_idx):
        base = tile_idx * tile_n

        def issue(r, carry):
            tok = ids_ref[base + r]
            # Defined behavior for out-of-range ids (PyTorch would raise).
            tok = jnp.minimum(jnp.maximum(tok, 0), vocab_size - 1)
            pltpu.make_async_copy(
                emb_hbm.at[pl.ds(tok, 1)],        # (1, D_pad) HBM row
                buf.at[slot_idx, pl.ds(r, 1)],    # (1, D_pad) VMEM row
                sems.at[slot_idx],                # shared per-slot semaphore
            ).start()
            return carry

        # Unrolled so address math + descriptor pushes co-issue back-to-back.
        lax.fori_loop(0, tile_n, issue, 0, unroll=8)

    # Prime the pipeline: the first grid step starts its own gathers.
    @pl.when(i == 0)
    def _():
        start_row_gathers(0, 0)

    # Prefetch the next tile's rows into the other slot before waiting on ours.
    @pl.when(i + 1 < num_tiles)
    def _():
        start_row_gathers(i + 1, 1 - slot)

    # ONE aggregate wait: the descriptor size (tile_n * D_pad * 4 bytes) equals
    # the sum of the tile_n per-row transfers that signal sems[slot].  The src
    # operand is ignored by .wait(), so we pass the dst buffer for both.
    pltpu.make_async_copy(buf.at[slot], buf.at[slot], sems.at[slot]).wait()

    # Fused sqrt(model_dim) scale (cheap VPU work, hidden under the DMAs).
    out_ref[...] = buf[slot] * scale


def _gather_lookup(ids_flat, emb_padded, scale, tile_n_max, vmem_budget_bytes):
    V, D_pad = emb_padded.shape
    N = ids_flat.shape[0]
    tile_n, num_tiles = _pick_tile_n(N, D_pad, tile_n_max, vmem_budget_bytes)
    N_pad = tile_n * num_tiles
    ids = jnp.pad(ids_flat, (0, N_pad - N))

    kernel = functools.partial(_gather_kernel, tile_n=tile_n,
                               num_tiles=num_tiles, vocab_size=V, scale=scale)
    out = pl.pallas_call(
        kernel,
        out_shape=jax.ShapeDtypeStruct((N_pad, D_pad), jnp.float32),
        grid_spec=pltpu.PrefetchScalarGridSpec(
            num_scalar_prefetch=1,                         # ids -> SMEM
            grid=(num_tiles,),
            in_specs=[pl.BlockSpec(memory_space=pl.ANY)],  # table stays in HBM
            out_specs=pl.BlockSpec((tile_n, D_pad), lambda i, ids: (i, 0)),
            scratch_shapes=[
                pltpu.VMEM((2, tile_n, D_pad), jnp.float32),   # row double buffer
                pltpu.SemaphoreType.DMA((2,)),                 # one sem per slot
            ],
        ),
        compiler_params=pltpu.CompilerParams(
            # The slot-alternating double buffer carries state across grid
            # steps, so this axis must run sequentially.
            # TODO(synk): a 2D (core, tile) grid with ("parallel","arbitrary")
            # would shard the gather across v7x's two TensorCores.
            dimension_semantics=("arbitrary",),
            vmem_limit_bytes=32 * 1024 * 1024,
        ),
    )(ids, emb_padded)
    return out if N_pad == N else out[:N]


# ---------------------------------------------------------------------------
# Public wrapper: TokenEmbedding.forward(x) = embedding(x) * sqrt(model_dim)
# ---------------------------------------------------------------------------
def token_embedding(x, emb_table, *, tile_n_max=512, onehot_vocab_max=1024,
                    vmem_budget_bytes=16 * 1024 * 1024,
                    max_prefetched_tokens=32768):
    """x: integer token ids (any shape); emb_table: (V, D) f32.
    Returns x.shape + (D,) f32."""
    V, D = emb_table.shape
    lead_shape = x.shape
    N = math.prod(lead_shape) if lead_shape else 1
    scale = math.sqrt(D)

    # Lane-dense table/output: pad D to a multiple of 128 (unmasked vst,
    # aligned row DMAs).
    D_pad = _round_up(D, 128)
    emb_padded = emb_table if D_pad == D else jnp.pad(emb_table, ((0, 0), (0, D_pad - D)))
    ids_flat = x.reshape(N).astype(jnp.int32)

    tile_n, num_tiles = _pick_tile_n(N, D_pad, tile_n_max, vmem_budget_bytes)

    # Size dispatch: keep small tables resident in VMEM (one-hot MXU gather);
    # fall back to HBM row-gather DMAs for everything else.
    resident_bytes = (2 * V * D_pad * 4            # table (double-buffered)
                      + 4 * tile_n * D_pad * 4     # out block + dot result
                      + 2 * tile_n * V * 4)        # one-hot intermediate
    use_resident = (V <= onehot_vocab_max) and (resident_bytes <= 24 * 1024 * 1024)

    if use_resident:
        flat = _resident_lookup(ids_flat, emb_padded, scale, tile_n, num_tiles)
    elif N <= max_prefetched_tokens:
        flat = _gather_lookup(ids_flat, emb_padded, scale,
                              tile_n_max, vmem_budget_bytes)
    else:
        # Bound the scalar-prefetched SMEM id array for very long token streams.
        parts = [
            _gather_lookup(ids_flat[s:s + max_prefetched_tokens], emb_padded,
                           scale, tile_n_max, vmem_budget_bytes)
            for s in range(0, N, max_prefetched_tokens)
        ]
        flat = jnp.concatenate(parts, axis=0)

    if D_pad != D:
        flat = flat[:, :D]
    return flat.reshape(*lead_shape, D)


if __name__ == "__main__":
    key = jax.random.PRNGKey(0)
    k1, k2, k3, k4, k5, k6 = jax.random.split(key, 6)

    # Case 1: small vocab, lane-aligned D -> VMEM-resident one-hot fast path,
    # multiple (parallel) grid tiles.
    V1, D1, B1, S1 = 512, 128, 8, 96
    emb1 = jax.random.normal(k1, (V1, D1), dtype=jnp.float32)
    x1 = jax.random.randint(k2, (B1, S1), 0, V1, dtype=jnp.int32)
    out1 = jax.block_until_ready(token_embedding(x1, emb1))
    ref1 = emb1[x1] * math.sqrt(D1)
    assert out1.shape == (B1, S1, D1)
    # One-hot selection on the MXU with HIGHEST precision is exact up to the
    # multi-pass f32 emulation (<~1e-5 relative), hence the 1e-4 tolerance.
    assert jnp.allclose(out1, ref1, atol=1e-4, rtol=1e-4), \
        float(jnp.max(jnp.abs(out1 - ref1)))

    # Case 2: tiny unaligned case (exercises D- and N-padding), fast path.
    V2, D2, B2, S2 = 64, 32, 2, 8
    emb2 = jax.random.normal(k3, (V2, D2), dtype=jnp.float32)
    x2 = jax.random.randint(k4, (B2, S2), 0, V2, dtype=jnp.int32)
    out2 = jax.block_until_ready(token_embedding(x2, emb2))
    ref2 = emb2[x2] * math.sqrt(D2)
    assert out2.shape == (B2, S2, D2)
    assert jnp.allclose(out2, ref2, atol=1e-4, rtol=1e-4), \
        float(jnp.max(jnp.abs(out2 - ref2)))

    # Case 3: vocab above the resident threshold -> HBM row-gather path with
    # aggregate per-slot semaphore wait, unrolled DMA issue and double-buffered
    # token tiles (exact copy + scale, so tight tolerance).
    V3, D3, B3, S3 = 2048, 128, 4, 160
    emb3 = jax.random.normal(k5, (V3, D3), dtype=jnp.float32)
    x3 = jax.random.randint(k6, (B3, S3), 0, V3, dtype=jnp.int32)
    out3 = jax.block_until_ready(token_embedding(x3, emb3))
    ref3 = emb3[x3] * math.sqrt(D3)
    assert out3.shape == (B3, S3, D3)
    assert jnp.allclose(out3, ref3, atol=1e-5, rtol=1e-5), \
        float(jnp.max(jnp.abs(out3 - ref3)))

    print("KERNEL_OK")
</pallas_src>

<mosaic_0001>
module attributes {stable_mosaic.version = 11 : i64} {
  func.func @_resident_kernel(%arg0: i32, %arg1: memref<384x1xi32, #tpu.memory_space<vmem>>, %arg2: memref<512x128xf32, #tpu.memory_space<vmem>>, %arg3: memref<384x128xf32, #tpu.memory_space<vmem>>) attributes {dimension_semantics = [#tpu.dimension_semantics<parallel>], iteration_bounds = array<i64: 2>, scalar_prefetch = 0 : i64, scratch_operands = 0 : i64, tpu.core_type = #tpu.core_type<tc>, window_params = [{transform_indices = @transform_0, window_bounds = array<i64: 384, 1>}, {pipeline_mode = #tpu.pipeline_mode<synchronous>, transform_indices = @transform_1, window_bounds = array<i64: 512, 128>}, {transform_indices = @transform_2, window_bounds = array<i64: 384, 128>}]} {
    %c0 = arith.constant 0 : index
    %c0_0 = arith.constant 0 : index
    %0 = vector.load %arg1[%c0, %c0_0] : memref<384x1xi32, #tpu.memory_space<vmem>>, vector<384x1xi32>
    %c0_i32 = arith.constant 0 : i32
    %c511_i32 = arith.constant 511 : i32
    %1 = vector.broadcast %c0_i32 : i32 to vector<384x1xi32>
    %2 = arith.maxsi %1, %0 : vector<384x1xi32>
    %3 = vector.broadcast %c511_i32 : i32 to vector<384x1xi32>
    %4 = arith.minsi %3, %2 : vector<384x1xi32>
    %5 = tpu.iota {dimensions = array<i32: 1>} : vector<384x512xi32>
    %6 = vector.broadcast %4 : vector<384x1xi32> to vector<384x512xi32>
    %7 = arith.cmpi eq, %6, %5 : vector<384x512xi32>
    %8 = arith.extui %7 : vector<384x512xi1> to vector<384x512xi32>
    %9 = arith.sitofp %8 : vector<384x512xi32> to vector<384x512xf32>
    %c0_1 = arith.constant 0 : index
    %c0_2 = arith.constant 0 : index
    %10 = vector.load %arg2[%c0_1, %c0_2] : memref<512x128xf32, #tpu.memory_space<vmem>>, vector<512x128xf32>
    %cst = arith.constant dense<0.000000e+00> : vector<384x128xf32>
    %11 = tpu.matmul %9, %10, %cst {dimension_numbers = #tpu.dot_dimension_numbers<[1], [0], [0], [1], [0, 0, 1, 1], [], []>, precision = #tpu.contract_precision<fp32>} : vector<384x512xf32>, vector<512x128xf32>, vector<384x128xf32> -> vector<384x128xf32>
    %cst_3 = arith.constant 11.3137083 : f32
    %12 = vector.broadcast %cst_3 : f32 to vector<384x128xf32>
    %13 = arith.mulf %11, %12 : vector<384x128xf32>
    %c0_4 = arith.constant 0 : index
    %c0_5 = arith.constant 0 : index
    %14 = vector.load %arg3[%c0_4, %c0_5] : memref<384x128xf32, #tpu.memory_space<vmem>>, vector<384x128xf32>
    tpu.vector_store %arg3[%c0_4, %c0_5], %13 {strides = array<i32>} : memref<384x128xf32, #tpu.memory_space<vmem>>, vector<384x128xf32>,
    return
  }
  func.func @transform_0(%arg0: i32) -> (i32, i32) {
    %c0_i32 = arith.constant 0 : i32
    %c0_i32_0 = arith.constant 0 : i32
    return %arg0, %c0_i32 : i32, i32
  }
  func.func @transform_1(%arg0: i32) -> (i32, i32) {
    %c0_i32 = arith.constant 0 : i32
    %c0_i32_0 = arith.constant 0 : i32
    %c0_i32_1 = arith.constant 0 : i32
    return %c0_i32, %c0_i32_0 : i32, i32
  }
  func.func @transform_2(%arg0: i32) -> (i32, i32) {
    %c0_i32 = arith.constant 0 : i32
    %c0_i32_0 = arith.constant 0 : i32
    return %arg0, %c0_i32 : i32, i32
  }
}

</mosaic_0001>

<llo_original>
// kernel: tpu_custom_call.1
$region0: #{tpu_custom_call.1}
  #allocation0 [shape = 'u32[]', space=smem, size = 0x4, offset = 0x4, fixed_abs, tag = 'smem constant byte address 0x4 - core index']
  #allocation1 [shape = 'u32[72,128]{1,0:T(1,128)}', space=vmem, size = 0x9000, scoped, tag = 'internal scratch']
  %s0 = inlined_call_operand.vmem [shape: s32[768,1], index: 0, kind: input, shape index: {}]
  %s1 = inlined_call_operand.vmem [shape: f32[512,128], index: 1, kind: input, shape index: {}]
  %s2 = inlined_call_operand.hbm [shape: f32[768,128], index: 2, kind: output, shape index: {}]
  %s3 = sld [smem:[#allocation0]]
  $region41: #{tpu_custom_call.1} parent=0
    _
  %s5 = ssub.s32 1, %s3
  %s6 = scalar_select 0, %s5, %s3
  $region1: #{tpu_custom_call.1} parent=0
    #allocation2 [shape = 'u8[393216]{0}', space=vmem, size = 0x60000, scoped, tag = 'output window, operand 0']
    #allocation3 [shape = 's32[2]{0}', space=sflag, size = 0x8, scoped, tag = 'scoped memory for tpu_custom_call.1']
    %7 = vsyncpa [#allocation3], 0
    %s8 = scalar_lea.sflag [#allocation3], 1
    %9 = vsyncpa %s8, 0
    loop: start=0, step=1, limit=4
    $region2: #{tpu_custom_call.1} parent=1 // loop_pre_header
      _
    $region3: #{tpu_custom_call.1} parent=1 // loop_header
      %s11 = sphi 0, %s15
      %p12 = scmp.ge.s32.totalorder %s11, 4
      %s21 = sphi 0, %s23
      %s24 = sphi 0, %s21
      %s25 = sphi 0, %s24
      %s41 = sphi 0, %s25
      %s45 = sphi 0, %s45
      %s47 = sphi 0, %s45
      %s48 = sphi 0, %s47
      %s62 = sphi 0, %s48
      %s68 = sphi 0, %s70
      %s71 = sphi 0, %s68
      %s72 = sphi 0, %s71
      %s88 = sphi 0, %s72
    $region4: #{tpu_custom_call.1} parent=1 // loop_header_branch
      %14 = sbr.rel (%p12) target = $region8
    $region5: #{tpu_custom_call.1} parent=1 // loop_body
      %s16 = ssub.s32 %s11, 1
      %s17 = ssub.s32 %s11, 2
      %s18 = sadd.s32 %s11, 1
      %s19 = ssub.s32 %s11, %s18
      %p20 = scmp.eq.s32.totalorder %s19, 0
      %s22 = sadd.s32 %s21, 1
      %s23 = scalar_select %p20, %s21, %s22
      %p26 = pneg %p20
      %p27 = scmp.eq.s32.totalorder %s11, 1
      %p28 = por %p26, %p27
      %p29 = scmp.ne.s32.totalorder %s21, %s24
      %p30 = scmp.eq.s32.totalorder %s11, 0
      %p31 = por %p29, %p30
      %p32 = scmp.ne.s32.totalorder %s21, %s24
      %p33 = scmp.eq.s32.totalorder %s16, 1
      %p34 = por %p32, %p33
      %p35 = scmp.ne.s32.totalorder %s24, %s25
      %p36 = scmp.eq.s32.totalorder %s16, 0
      %p37 = por %p35, %p36
      %p38 = scmp.ne.s32.totalorder %s24, %s25
      %p39 = scmp.eq.s32.totalorder %s17, 1
      %p40 = por %p38, %p39
      %p42 = scmp.ne.s32.totalorder %s25, %s41
      %p43 = scmp.eq.s32.totalorder %s17, 0
      %p44 = por %p42, %p43
      %s46 = sadd.s32 %s45, 1
      %p49 = scmp.eq.s32.totalorder %s11, 1
      %p50 = scmp.ne.s32.totalorder %s45, %s47
      %p51 = scmp.eq.s32.totalorder %s11, 0
      %p52 = por %p50, %p51
      %p53 = scmp.ne.s32.totalorder %s45, %s47
      %p54 = scmp.eq.s32.totalorder %s16, 1
      %p55 = por %p53, %p54
      %p56 = scmp.ne.s32.totalorder %s47, %s48
      %p57 = scmp.eq.s32.totalorder %s16, 0
      %p58 = por %p56, %p57
      %p59 = scmp.ne.s32.totalorder %s47, %s48
      %p60 = scmp.eq.s32.totalorder %s17, 1
      %p61 = por %p59, %p60
      %p63 = scmp.ne.s32.totalorder %s48, %s62
      %p64 = scmp.eq.s32.totalorder %s17, 0
      %p65 = por %p63, %p64
      %s66 = ssub.s32 %s11, %s18
      %p67 = scmp.eq.s32.totalorder %s66, 0
      %s69 = sadd.s32 %s68, 1
      %s70 = scalar_select %p67, %s68, %s69
      %p73 = pneg %p67
      %p74 = scmp.eq.s32.totalorder %s11, 1
      %p75 = por %p73, %p74
      %p76 = scmp.ne.s32.totalorder %s68, %s71
      %p77 = scmp.eq.s32.totalorder %s11, 0
      %p78 = por %p76, %p77
      %p79 = scmp.ne.s32.totalorder %s68, %s71
      %p80 = scmp.eq.s32.totalorder %s16, 1
      %p81 = por %p79, %p80
      %p82 = scmp.ne.s32.totalorder %s71, %s72
      %p83 = scmp.eq.s32.totalorder %s16, 0
      %p84 = por %p82, %p83
      %p85 = scmp.ne.s32.totalorder %s71, %s72
      %p86 = scmp.eq.s32.totalorder %s17, 1
      %p87 = por %p85, %p86
      %p89 = scmp.ne.s32.totalorder %s72, %s88
      %p90 = scmp.eq.s32.totalorder %s17, 0
      %p91 = por %p89, %p90
      %p92 = scmp.le.s32.totalorder 1, %s11
      %p93 = scmp.lt.s32.totalorder %s11, 3
      %p94 = pnand %p92, %p93
      %p95 = pneg %p94
      // Predicated region
      $region9: #{tpu_custom_call.1} parent=5 // pred_check
        _
      $region10: #{tpu_custom_call.1} parent=5 // pred_check_branch
        %97 = sbr.rel (%p94) target = $region12
      $region11: #{tpu_custom_call.1} parent=5 // pred_region
        %s98 = ssub.s32 %s11, 1
        // Predicated region
        $region13: #{tpu_custom_call.1} parent=11 // pred_check
          %p99 = pneg %p58
        $region14: #{tpu_custom_call.1} parent=11 // pred_check_branch
          %101 = sbr.rel (%p99) target = $region16
        $region15: #{tpu_custom_call.1} parent=11 // pred_region
          _
        $region16: #{tpu_custom_call.1} parent=11 // pred_fallthru
          _
      $region12: #{tpu_custom_call.1} parent=5 // pred_fallthru
        _
      %p102 = scmp.lt.s32.totalorder %s11, 2
      // Predicated region
      $region17: #{tpu_custom_call.1} parent=5 // pred_check
        %p103 = pneg %p102
      $region18: #{tpu_custom_call.1} parent=5 // pred_check_branch
        %105 = sbr.rel (%p103) target = $region20
      $region19: #{tpu_custom_call.1} parent=5 // pred_region
        // Predicated region
        $region21: #{tpu_custom_call.1} parent=19 // pred_check
          %p106 = pneg %p31
        $region22: #{tpu_custom_call.1} parent=19 // pred_check_branch
          %108 = sbr.rel (%p106) target = $region24
        $region23: #{tpu_custom_call.1} parent=19 // pred_region
          %s109 = smul.u32 48, %s11
          %p110 = scmp.lt.s32.totalorder %s109, 95
          %s111 = scalar_select %p110, %s109, 95
          %s112 = smul.addr %s111, 8
          %s113 = scalar_lea.vmem %s0, %s112
          %s114 = smul.u32 48, %s11
        $region24: #{tpu_custom_call.1} parent=19 // pred_fallthru
          _
      $region20: #{tpu_custom_call.1} parent=5 // pred_fallthru
        _
      %p115 = scmp.le.s32.totalorder 1, %s11
      %p116 = scmp.lt.s32.totalorder %s11, 3
      %p117 = pnand %p115, %p116
      %p118 = pneg %p117
      // Predicated region
      $region25: #{tpu_custom_call.1} parent=5 // pred_check
        _
      $region26: #{tpu_custom_call.1} parent=5 // pred_check_branch
        %120 = sbr.rel (%p117) target = $region28
      $region27: #{tpu_custom_call.1} parent=5 // pred_region
        %s121 = ssub.s32 %s11, 1
        %s122 = smul.u32 48, %s16
        %p123 = scmp.lt.s32.totalorder %s122, 95
        %s124 = scalar_select %p123, %s122, 95
        %s125 = smul.addr %s124, 8
        %s126 = scalar_lea.vmem %s0, %s125
        %p127 = pneg %p37
        %p128 = pneg %p34
        %p129 = pneg %p58
        %p130 = pneg %p55
        %p131 = pneg %p84
        %p132 = pneg %p81
        %s133 = sand.u32 %s71, 1
        %s134 = scalar_lea.sflag [#allocation3], %s133
        %s135 = sand.u32 %s71, 1
        %s136 = smul.addr %s135, 384
        %s137 = scalar_lea.vmem [#allocation2], %s136
        %s138 = smul.u32 48, %s16
        %p139 = scmp.lt.s32.totalorder %s138, 95
        %s140 = scalar_select %p139, %s138, 95
        %s141 = smul.addr %s140, 8
        %s142 = scalar_lea.vmem %s0, %s141
        %s143 = smul.u32 48, %s16
        %s144 = smul.u32 48, %s16
        %v145 = vld [vmem:[%s142] sm:$0xff]
        %v146 = vld [vmem:[%s142 + $0x8] sm:$0xff]
        %v147 = vld [vmem:[%s142 + $0x10] sm:$0xff]
        %v148 = vld [vmem:[%s142 + $0x18] sm:$0xff]
        %v149 = vld [vmem:[%s142 + $0x20] sm:$0xff]
        %v150 = vld [vmem:[%s142 + $0x28] sm:$0xff]
        %v151 = vld [vmem:[%s142 + $0x30] sm:$0xff]
        %v152 = vld [vmem:[%s142 + $0x38] sm:$0xff]
        %v153 = vld [vmem:[%s142 + $0x40] sm:$0xff]
        %v154 = vld [vmem:[%s142 + $0x48] sm:$0xff]
        %v155 = vld [vmem:[%s142 + $0x50] sm:$0xff]
        %v156 = vld [vmem:[%s142 + $0x58] sm:$0xff]
        %v157 = vld [vmem:[%s142 + $0x60] sm:$0xff]
        %v158 = vld [vmem:[%s142 + $0x68] sm:$0xff]
        %v159 = vld [vmem:[%s142 + $0x70] sm:$0xff]
        %v160 = vld [vmem:[%s142 + $0x78] sm:$0xff]
        %v161 = vld [vmem:[%s142 + $0x80] sm:$0xff]
        %v162 = vld [vmem:[%s142 + $0x88] sm:$0xff]
        %v163 = vld [vmem:[%s142 + $0x90] sm:$0xff]
        %v164 = vld [vmem:[%s142 + $0x98] sm:$0xff]
        %v165 = vld [vmem:[%s142 + $0xa0] sm:$0xff]
        %v166 = vld [vmem:[%s142 + $0xa8] sm:$0xff]
        %v167 = vld [vmem:[%s142 + $0xb0] sm:$0xff]
        %v168 = vld [vmem:[%s142 + $0xb8] sm:$0xff]
        %v169 = vld [vmem:[%s142 + $0xc0] sm:$0xff]
        %v170 = vld [vmem:[%s142 + $0xc8] sm:$0xff]
        %v171 = vld [vmem:[%s142 + $0xd0] sm:$0xff]
        %v172 = vld [vmem:[%s142 + $0xd8] sm:$0xff]
        %v173 = vld [vmem:[%s142 + $0xe0] sm:$0xff]
        %v174 = vld [vmem:[%s142 + $0xe8] sm:$0xff]
        %v175 = vld [vmem:[%s142 + $0xf0] sm:$0xff]
        %v176 = vld [vmem:[%s142 + $0xf8] sm:$0xff]
        %v177 = vld [vmem:[%s142 + $0x100] sm:$0xff]
        %v178 = vld [vmem:[%s142 + $0x108] sm:$0xff]
        %v179 = vld [vmem:[%s142 + $0x110] sm:$0xff]
        %v180 = vld [vmem:[%s142 + $0x118] sm:$0xff]
        %v181 = vld [vmem:[%s142 + $0x120] sm:$0xff]
        %v182 = vld [vmem:[%s142 + $0x128] sm:$0xff]
        %v183 = vld [vmem:[%s142 + $0x130] sm:$0xff]
        %v184 = vld [vmem:[%s142 + $0x138] sm:$0xff]
        %v185 = vld [vmem:[%s142 + $0x140] sm:$0xff]
        %v186 = vld [vmem:[%s142 + $0x148] sm:$0xff]
        %v187 = vld [vmem:[%s142 + $0x150] sm:$0xff]
        %v188 = vld [vmem:[%s142 + $0x158] sm:$0xff]
        %v189 = vld [vmem:[%s142 + $0x160] sm:$0xff]
        %v190 = vld [vmem:[%s142 + $0x168] sm:$0xff]
        %v191 = vld [vmem:[%s142 + $0x170] sm:$0xff]
        %v192 = vld [vmem:[%s142 + $0x178] sm:$0xff]
        %vm193 = vcmp.gt.s32.totalorder %v145, 0
        %v194 = vsel %vm193, %v145, 0
        %vm195 = vcmp.gt.s32.totalorder %v146, 0
        %v196 = vsel %vm195, %v146, 0
        %vm197 = vcmp.gt.s32.totalorder %v147, 0
        %v198 = vsel %vm197, %v147, 0
        %vm199 = vcmp.gt.s32.totalorder %v148, 0
        %v200 = vsel %vm199, %v148, 0
        %vm201 = vcmp.gt.s32.totalorder %v149, 0
        %v202 = vsel %vm201, %v149, 0
        %vm203 = vcmp.gt.s32.totalorder %v150, 0
        %v204 = vsel %vm203, %v150, 0
        %vm205 = vcmp.gt.s32.totalorder %v151, 0
        %v206 = vsel %vm205, %v151, 0
        %vm207 = vcmp.gt.s32.totalorder %v152, 0
        %v208 = vsel %vm207, %v152, 0
        %vm209 = vcmp.gt.s32.totalorder %v153, 0
        %v210 = vsel %vm209, %v153, 0
        %vm211 = vcmp.gt.s32.totalorder %v154, 0
        %v212 = vsel %vm211, %v154, 0
        %vm213 = vcmp.gt.s32.totalorder %v155, 0
        %v214 = vsel %vm213, %v155, 0
        %vm215 = vcmp.gt.s32.totalorder %v156, 0
        %v216 = vsel %vm215, %v156, 0
        %vm217 = vcmp.gt.s32.totalorder %v157, 0
        %v218 = vsel %vm217, %v157, 0
        %vm219 = vcmp.gt.s32.totalorder %v158, 0
        %v220 = vsel %vm219, %v158, 0
        %vm221 = vcmp.gt.s32.totalorder %v159, 0
        %v222 = vsel %vm221, %v159, 0
        %vm223 = vcmp.gt.s32.totalorder %v160, 0
        %v224 = vsel %vm223, %v160, 0
        %vm225 = vcmp.gt.s32.totalorder %v161, 0
        %v226 = vsel %vm225, %v161, 0
        %vm227 = vcmp.gt.s32.totalorder %v162, 0
        %v228 = vsel %vm227, %v162, 0
        %vm229 = vcmp.gt.s32.totalorder %v163, 0
        %v230 = vsel %vm229, %v163, 0
        %vm231 = vcmp.gt.s32.totalorder %v164, 0
        %v232 = vsel %vm231, %v164, 0
        %vm233 = vcmp.gt.s32.totalorder %v165, 0
        %v234 = vsel %vm233, %v165, 0
        %vm235 = vcmp.gt.s32.totalorder %v166, 0
        %v236 = vsel %vm235, %v166, 0
        %vm237 = vcmp.gt.s32.totalorder %v167, 0
        %v238 = vsel %vm237, %v167, 0
        %vm239 = vcmp.gt.s32.totalorder %v168, 0
        %v240 = vsel %vm239, %v168, 0
        %vm241 = vcmp.gt.s32.totalorder %v169, 0
        %v242 = vsel %vm241, %v169, 0
        %vm243 = vcmp.gt.s32.totalorder %v170, 0
        %v244 = vsel %vm243, %v170, 0
        %vm245 = vcmp.gt.s32.totalorder %v171, 0
        %v246 = vsel %vm245, %v171, 0
        %vm247 = vcmp.gt.s32.totalorder %v172, 0
        %v248 = vsel %vm247, %v172, 0
        %vm249 = vcmp.gt.s32.totalorder %v173, 0
        %v250 = vsel %vm249, %v173, 0
        %vm251 = vcmp.gt.s32.totalorder %v174, 0
        %v252 = vsel %vm251, %v174, 0
        %vm253 = vcmp.gt.s32.totalorder %v175, 0
        %v254 = vsel %vm253, %v175, 0
        %vm255 = vcmp.gt.s32.totalorder %v176, 0
        %v256 = vsel %vm255, %v176, 0
        %vm257 = vcmp.gt.s32.totalorder %v177, 0
        %v258 = vsel %vm257, %v177, 0
        %vm259 = vcmp.gt.s32.totalorder %v178, 0
        %v260 = vsel %vm259, %v178, 0
        %vm261 = vcmp.gt.s32.totalorder %v179, 0
        %v262 = vsel %vm261, %v179, 0
        %vm263 = vcmp.gt.s32.totalorder %v180, 0
        %v264 = vsel %vm263, %v180, 0
        %vm265 = vcmp.gt.s32.totalorder %v181, 0
        %v266 = vsel %vm265, %v181, 0
        %vm267 = vcmp.gt.s32.totalorder %v182, 0
        %v268 = vsel %vm267, %v182, 0
        %vm269 = vcmp.gt.s32.totalorder %v183, 0
        %v270 = vsel %vm269, %v183, 0
        %vm271 = vcmp.gt.s32.totalorder %v184, 0
        %v272 = vsel %vm271, %v184, 0
        %vm273 = vcmp.gt.s32.totalorder %v185, 0
        %v274 = vsel %vm273, %v185, 0
        %vm275 = vcmp.gt.s32.totalorder %v186, 0
        %v276 = vsel %vm275, %v186, 0
        %vm277 = vcmp.gt.s32.totalorder %v187, 0
        %v278 = vsel %vm277, %v187, 0
        %vm279 = vcmp.gt.s32.totalorder %v188, 0
        %v280 = vsel %vm279, %v188, 0
        %vm281 = vcmp.gt.s32.totalorder %v189, 0
        %v282 = vsel %vm281, %v189, 0
        %vm283 = vcmp.gt.s32.totalorder %v190, 0
        %v284 = vsel %vm283, %v190, 0
        %vm285 = vcmp.gt.s32.totalorder %v191, 0
        %v286 = vsel %vm285, %v191, 0
        %vm287 = vcmp.gt.s32.totalorder %v192, 0
        %v288 = vsel %vm287, %v192, 0
        %vm289 = vcmp.lt.s32.totalorder %v194, 511
        %v290 = vsel %vm289, %v194, 511
        %vm291 = vcmp.lt.s32.totalorder %v196, 511
        %v292 = vsel %vm291, %v196, 511
        %vm293 = vcmp.lt.s32.totalorder %v198, 511
        %v294 = vsel %vm293, %v198, 511
        %vm295 = vcmp.lt.s32.totalorder %v200, 511
        %v296 = vsel %vm295, %v200, 511
        %vm297 = vcmp.lt.s32.totalorder %v202, 511
        %v298 = vsel %vm297, %v202, 511
        %vm299 = vcmp.lt.s32.totalorder %v204, 511
        %v300 = vsel %vm299, %v204, 511
        %vm301 = vcmp.lt.s32.totalorder %v206, 511
        %v302 = vsel %vm301, %v206, 511
        %vm303 = vcmp.lt.s32.totalorder %v208, 511
        %v304 = vsel %vm303, %v208, 511
        %vm305 = vcmp.lt.s32.totalorder %v210, 511
        %v306 = vsel %vm305, %v210, 511
        %vm307 = vcmp.lt.s32.totalorder %v212, 511
        %v308 = vsel %vm307, %v212, 511
        %vm309 = vcmp.lt.s32.totalorder %v214, 511
        %v310 = vsel %vm309, %v214, 511
        %vm311 = vcmp.lt.s32.totalorder %v216, 511
        %v312 = vsel %vm311, %v216, 511
        %vm313 = vcmp.lt.s32.totalorder %v218, 511
        %v314 = vsel %vm313, %v218, 511
        %vm315 = vcmp.lt.s32.totalorder %v220, 511
        %v316 = vsel %vm315, %v220, 511
        %vm317 = vcmp.lt.s32.totalorder %v222, 511
        %v318 = vsel %vm317, %v222, 511
        %vm319 = vcmp.lt.s32.totalorder %v224, 511
        %v320 = vsel %vm319, %v224, 511
        %vm321 = vcmp.lt.s32.totalorder %v226, 511
        %v322 = vsel %vm321, %v226, 511
        %vm323 = vcmp.lt.s32.totalorder %v228, 511
        %v324 = vsel %vm323, %v228, 511
        %vm325 = vcmp.lt.s32.totalorder %v230, 511
        %v326 = vsel %vm325, %v230, 511
        %vm327 = vcmp.lt.s32.totalorder %v232, 511
        %v328 = vsel %vm327, %v232, 511
        %vm329 = vcmp.lt.s32.totalorder %v234, 511
        %v330 = vsel %vm329, %v234, 511
        %vm331 = vcmp.lt.s32.totalorder %v236, 511
        %v332 = vsel %vm331, %v236, 511
        %vm333 = vcmp.lt.s32.totalorder %v238, 511
        %v334 = vsel %vm333, %v238, 511
        %vm335 = vcmp.lt.s32.totalorder %v240, 511
        %v336 = vsel %vm335, %v240, 511
        %vm337 = vcmp.lt.s32.totalorder %v242, 511
        %v338 = vsel %vm337, %v242, 511
        %vm339 = vcmp.lt.s32.totalorder %v244, 511
        %v340 = vsel %vm339, %v244, 511
        %vm341 = vcmp.lt.s32.totalorder %v246, 511
        %v342 = vsel %vm341, %v246, 511
        %vm343 = vcmp.lt.s32.totalorder %v248, 511
        %v344 = vsel %vm343, %v248, 511
        %vm345 = vcmp.lt.s32.totalorder %v250, 511
        %v346 = vsel %vm345, %v250, 511
        %vm347 = vcmp.lt.s32.totalorder %v252, 511
        %v348 = vsel %vm347, %v252, 511
        %vm349 = vcmp.lt.s32.totalorder %v254, 511
        %v350 = vsel %vm349, %v254, 511
        %vm351 = vcmp.lt.s32.totalorder %v256, 511
        %v352 = vsel %vm351, %v256, 511
        %vm353 = vcmp.lt.s32.totalorder %v258, 511
        %v354 = vsel %vm353, %v258, 511
        %vm355 = vcmp.lt.s32.totalorder %v260, 511
        %v356 = vsel %vm355, %v260, 511
        %vm357 = vcmp.lt.s32.totalorder %v262, 511
        %v358 = vsel %vm357, %v262, 511
        %vm359 = vcmp.lt.s32.totalorder %v264, 511
        %v360 = vsel %vm359, %v264, 511
        %vm361 = vcmp.lt.s32.totalorder %v266, 511
        %v362 = vsel %vm361, %v266, 511
        %vm363 = vcmp.lt.s32.totalorder %v268, 511
        %v364 = vsel %vm363, %v268, 511
        %vm365 = vcmp.lt.s32.totalorder %v270, 511
        %v366 = vsel %vm365, %v270, 511
        %vm367 = vcmp.lt.s32.totalorder %v272, 511
        %v368 = vsel %vm367, %v272, 511
        %vm369 = vcmp.lt.s32.totalorder %v274, 511
        %v370 = vsel %vm369, %v274, 511
        %vm371 = vcmp.lt.s32.totalorder %v276, 511
        %v372 = vsel %vm371, %v276, 511
        %vm373 = vcmp.lt.s32.totalorder %v278, 511
        %v374 = vsel %vm373, %v278, 511
        %vm375 = vcmp.lt.s32.totalorder %v280, 511
        %v376 = vsel %vm375, %v280, 511
        %vm377 = vcmp.lt.s32.totalorder %v282, 511
        %v378 = vsel %vm377, %v282, 511
        %vm379 = vcmp.lt.s32.totalorder %v284, 511
        %v380 = vsel %vm379, %v284, 511
        %vm381 = vcmp.lt.s32.totalorder %v286, 511
        %v382 = vsel %vm381, %v286, 511
        %vm383 = vcmp.lt.s32.totalorder %v288, 511
        %v384 = vsel %vm383, %v288, 511
        %v385 = vlaneseq
        %v386 = vand.u32 %v385, 127
        %v387 = vadd.s32 %v386, 128
        %v388 = vadd.s32 %v386, 256
        %v389 = vadd.s32 %v386, 384
        %390 = vset.pattern.permute.xlu0 0
        %391 = vperm.xlu0 %390, %v290
        %v392 = vpop.permute.xlu0 %391
        %393 = vset.pattern.permute.xlu0 0
        %394 = vperm.xlu0 %393, %v292
        %v395 = vpop.permute.xlu0 %394
        %396 = vset.pattern.permute.xlu0 0
        %397 = vperm.xlu0 %396, %v294
        %v398 = vpop.permute.xlu0 %397
        %399 = vset.pattern.permute.xlu0 0
        %400 = vperm.xlu0 %399, %v296
        %v401 = vpop.permute.xlu0 %400
        %402 = vset.pattern.permute.xlu0 0
        %403 = vperm.xlu0 %402, %v298
        %v404 = vpop.permute.xlu0 %403
        %405 = vset.pattern.permute.xlu0 0
        %406 = vperm.xlu0 %405, %v300
        %v407 = vpop.permute.xlu0 %406
        %408 = vset.pattern.permute.xlu0 0
        %409 = vperm.xlu0 %408, %v302
        %v410 = vpop.permute.xlu0 %409
        %411 = vset.pattern.permute.xlu0 0
        %412 = vperm.xlu0 %411, %v304
        %v413 = vpop.permute.xlu0 %412
        %414 = vset.pattern.permute.xlu0 0
        %415 = vperm.xlu0 %414, %v306
        %v416 = vpop.permute.xlu0 %415
        %417 = vset.pattern.permute.xlu0 0
        %418 = vperm.xlu0 %417, %v308
        %v419 = vpop.permute.xlu0 %418
        %420 = vset.pattern.permute.xlu0 0
        %421 = vperm.xlu0 %420, %v310
        %v422 = vpop.permute.xlu0 %421
        %423 = vset.pattern.permute.xlu0 0
        %424 = vperm.xlu0 %423, %v312
        %v425 = vpop.permute.xlu0 %424
        %426 = vset.pattern.permute.xlu0 0
        %427 = vperm.xlu0 %426, %v314
        %v428 = vpop.permute.xlu0 %427
        %429 = vset.pattern.permute.xlu0 0
        %430 = vperm.xlu0 %429, %v316
        %v431 = vpop.permute.xlu0 %430
        %432 = vset.pattern.permute.xlu0 0
        %433 = vperm.xlu0 %432, %v318
        %v434 = vpop.permute.xlu0 %433
        %435 = vset.pattern.permute.xlu0 0
        %436 = vperm.xlu0 %435, %v320
        %v437 = vpop.permute.xlu0 %436
        %438 = vset.pattern.permute.xlu0 0
        %439 = vperm.xlu0 %438, %v322
        %v440 = vpop.permute.xlu0 %439
        %441 = vset.pattern.permute.xlu0 0
        %442 = vperm.xlu0 %441, %v324
        %v443 = vpop.permute.xlu0 %442
        %444 = vset.pattern.permute.xlu0 0
        %445 = vperm.xlu0 %444, %v326
        %v446 = vpop.permute.xlu0 %445
        %447 = vset.pattern.permute.xlu0 0
        %448 = vperm.xlu0 %447, %v328
        %v449 = vpop.permute.xlu0 %448
        %450 = vset.pattern.permute.xlu0 0
        %451 = vperm.xlu0 %450, %v330
        %v452 = vpop.permute.xlu0 %451
        %453 = vset.pattern.permute.xlu0 0
        %454 = vperm.xlu0 %453, %v332
        %v455 = vpop.permute.xlu0 %454
        %456 = vset.pattern.permute.xlu0 0
        %457 = vperm.xlu0 %456, %v334
        %v458 = vpop.permute.xlu0 %457
        %459 = vset.pattern.permute.xlu0 0
        %460 = vperm.xlu0 %459, %v336
        %v461 = vpop.permute.xlu0 %460
        %462 = vset.pattern.permute.xlu0 0
        %463 = vperm.xlu0 %462, %v338
        %v464 = vpop.permute.xlu0 %463
        %465 = vset.pattern.permute.xlu0 0
        %466 = vperm.xlu0 %465, %v340
        %v467 = vpop.permute.xlu0 %466
        %468 = vset.pattern.permute.xlu0 0
        %469 = vperm.xlu0 %468, %v342
        %v470 = vpop.permute.xlu0 %469
        %471 = vset.pattern.permute.xlu0 0
        %472 = vperm.xlu0 %471, %v344
        %v473 = vpop.permute.xlu0 %472
        %474 = vset.pattern.permute.xlu0 0
        %475 = vperm.xlu0 %474, %v346
        %v476 = vpop.permute.xlu0 %475
        %477 = vset.pattern.permute.xlu0 0
        %478 = vperm.xlu0 %477, %v348
        %v479 = vpop.permute.xlu0 %478
        %480 = vset.pattern.permute.xlu0 0
        %481 = vperm.xlu0 %480, %v350
        %v482 = vpop.permute.xlu0 %481
        %483 = vset.pattern.permute.xlu0 0
        %484 = vperm.xlu0 %483, %v352
        %v485 = vpop.permute.xlu0 %484
        %486 = vset.pattern.permute.xlu0 0
        %487 = vperm.xlu0 %486, %v354
        %v488 = vpop.permute.xlu0 %487
        %489 = vset.pattern.permute.xlu0 0
        %490 = vperm.xlu0 %489, %v356
        %v491 = vpop.permute.xlu0 %490
        %492 = vset.pattern.permute.xlu0 0
        %493 = vperm.xlu0 %492, %v358
        %v494 = vpop.permute.xlu0 %493
        %495 = vset.pattern.permute.xlu0 0
        %496 = vperm.xlu0 %495, %v360
        %v497 = vpop.permute.xlu0 %496
        %498 = vset.pattern.permute.xlu0 0
        %499 = vperm.xlu0 %498, %v362
        %v500 = vpop.permute.xlu0 %499
        %501 = vset.pattern.permute.xlu0 0
        %502 = vperm.xlu0 %501, %v364
        %v503 = vpop.permute.xlu0 %502
        %504 = vset.pattern.permute.xlu0 0
        %505 = vperm.xlu0 %504, %v366
        %v506 = vpop.permute.xlu0 %505
        %507 = vset.pattern.permute.xlu0 0
        %508 = vperm.xlu0 %507, %v368
        %v509 = vpop.permute.xlu0 %508
        %510 = vset.pattern.permute.xlu0 0
        %511 = vperm.xlu0 %510, %v370
        %v512 = vpop.permute.xlu0 %511
        %513 = vset.pattern.permute.xlu0 0
        %514 = vperm.xlu0 %513, %v372
        %v515 = vpop.permute.xlu0 %514
        %516 = vset.pattern.permute.xlu0 0
        %517 = vperm.xlu0 %516, %v374
        %v518 = vpop.permute.xlu0 %517
        %519 = vset.pattern.permute.xlu0 0
        %520 = vperm.xlu0 %519, %v376
        %v521 = vpop.permute.xlu0 %520
        %522 = vset.pattern.permute.xlu0 0
        %523 = vperm.xlu0 %522, %v378
        %v524 = vpop.permute.xlu0 %523
        %525 = vset.pattern.permute.xlu0 0
        %526 = vperm.xlu0 %525, %v380
        %v527 = vpop.permute.xlu0 %526
        %528 = vset.pattern.permute.xlu0 0
        %529 = vperm.xlu0 %528, %v382
        %v530 = vpop.permute.xlu0 %529
        %531 = vset.pattern.permute.xlu0 0
        %532 = vperm.xlu0 %531, %v384
        %v533 = vpop.permute.xlu0 %532
        %vm534 = vcmp.eq.s32.totalorder %v392, %v386
        %vm535 = vcmp.eq.s32.totalorder %v392, %v387
        %vm536 = vcmp.eq.s32.totalorder %v392, %v388
        %vm537 = vcmp.eq.s32.totalorder %v392, %v389
        %vm538 = vcmp.eq.s32.totalorder %v395, %v386
        %vm539 = vcmp.eq.s32.totalorder %v395, %v387
        %vm540 = vcmp.eq.s32.totalorder %v395, %v388
        %vm541 = vcmp.eq.s32.totalorder %v395, %v389
        %vm542 = vcmp.eq.s32.totalorder %v398, %v386
        %vm543 = vcmp.eq.s32.totalorder %v398, %v387
        %vm544 = vcmp.eq.s32.totalorder %v398, %v388
        %vm545 = vcmp.eq.s32.totalorder %v398, %v389
        %vm546 = vcmp.eq.s32.totalorder %v401, %v386
        %vm547 = vcmp.eq.s32.totalorder %v401, %v387
        %vm548 = vcmp.eq.s32.totalorder %v401, %v388
        %vm549 = vcmp.eq.s32.totalorder %v401, %v389
        %vm550 = vcmp.eq.s32.totalorder %v404, %v386
        %vm551 = vcmp.eq.s32.totalorder %v404, %v387
        %vm552 = vcmp.eq.s32.totalorder %v404, %v388
        %vm553 = vcmp.eq.s32.totalorder %v404, %v389
        %vm554 = vcmp.eq.s32.totalorder %v407, %v386
        %vm555 = vcmp.eq.s32.totalorder %v407, %v387
        %vm556 = vcmp.eq.s32.totalorder %v407, %v388
        %vm557 = vcmp.eq.s32.totalorder %v407, %v389
        %vm558 = vcmp.eq.s32.totalorder %v410, %v386
        %vm559 = vcmp.eq.s32.totalorder %v410, %v387
        %vm560 = vcmp.eq.s32.totalorder %v410, %v388
        %vm561 = vcmp.eq.s32.totalorder %v410, %v389
        %vm562 = vcmp.eq.s32.totalorder %v413, %v386
        %vm563 = vcmp.eq.s32.totalorder %v413, %v387
        %vm564 = vcmp.eq.s32.totalorder %v413, %v388
        %vm565 = vcmp.eq.s32.totalorder %v413, %v389
        %vm566 = vcmp.eq.s32.totalorder %v416, %v386
        %vm567 = vcmp.eq.s32.totalorder %v416, %v387
        %vm568 = vcmp.eq.s32.totalorder %v416, %v388
        %vm569 = vcmp.eq.s32.totalorder %v416, %v389
        %vm570 = vcmp.eq.s32.totalorder %v419, %v386
        %vm571 = vcmp.eq.s32.totalorder %v419, %v387
        %vm572 = vcmp.eq.s32.totalorder %v419, %v388
        %vm573 = vcmp.eq.s32.totalorder %v419, %v389
        %vm574 = vcmp.eq.s32.totalorder %v422, %v386
        %vm575 = vcmp.eq.s32.totalorder %v422, %v387
        %vm576 = vcmp.eq.s32.totalorder %v422, %v388
        %vm577 = vcmp.eq.s32.totalorder %v422, %v389
        %vm578 = vcmp.eq.s32.totalorder %v425, %v386
        %vm579 = vcmp.eq.s32.totalorder %v425, %v387
        %vm580 = vcmp.eq.s32.totalorder %v425, %v388
        %vm581 = vcmp.eq.s32.totalorder %v425, %v389
        %vm582 = vcmp.eq.s32.totalorder %v428, %v386
        %vm583 = vcmp.eq.s32.totalorder %v428, %v387
        %vm584 = vcmp.eq.s32.totalorder %v428, %v388
        %vm585 = vcmp.eq.s32.totalorder %v428, %v389
        %vm586 = vcmp.eq.s32.totalorder %v431, %v386
        %vm587 = vcmp.eq.s32.totalorder %v431, %v387
        %vm588 = vcmp.eq.s32.totalorder %v431, %v388
        %vm589 = vcmp.eq.s32.totalorder %v431, %v389
        %vm590 = vcmp.eq.s32.totalorder %v434, %v386
        %vm591 = vcmp.eq.s32.totalorder %v434, %v387
        %vm592 = vcmp.eq.s32.totalorder %v434, %v388
        %vm593 = vcmp.eq.s32.totalorder %v434, %v389
        %vm594 = vcmp.eq.s32.totalorder %v437, %v386
        %vm595 = vcmp.eq.s32.totalorder %v437, %v387
        %vm596 = vcmp.eq.s32.totalorder %v437, %v388
        %vm597 = vcmp.eq.s32.totalorder %v437, %v389
        %vm598 = vcmp.eq.s32.totalorder %v440, %v386
        %vm599 = vcmp.eq.s32.totalorder %v440, %v387
        %vm600 = vcmp.eq.s32.totalorder %v440, %v388
        %vm601 = vcmp.eq.s32.totalorder %v440, %v389
        %vm602 = vcmp.eq.s32.totalorder %v443, %v386
        %vm603 = vcmp.eq.s32.totalorder %v443, %v387
        %vm604 = vcmp.eq.s32.totalorder %v443, %v388
        %vm605 = vcmp.eq.s32.totalorder %v443, %v389
        %vm606 = vcmp.eq.s32.totalorder %v446, %v386
        %vm607 = vcmp.eq.s32.totalorder %v446, %v387
        %vm608 = vcmp.eq.s32.totalorder %v446, %v388
        %vm609 = vcmp.eq.s32.totalorder %v446, %v389
        %vm610 = vcmp.eq.s32.totalorder %v449, %v386
        %vm611 = vcmp.eq.s32.totalorder %v449, %v387
        %vm612 = vcmp.eq.s32.totalorder %v449, %v388
        %vm613 = vcmp.eq.s32.totalorder %v449, %v389
        %vm614 = vcmp.eq.s32.totalorder %v452, %v386
        %vm615 = vcmp.eq.s32.totalorder %v452, %v387
        %vm616 = vcmp.eq.s32.totalorder %v452, %v388
        %vm617 = vcmp.eq.s32.totalorder %v452, %v389
        %vm618 = vcmp.eq.s32.totalorder %v455, %v386
        %vm619 = vcmp.eq.s32.totalorder %v455, %v387
        %vm620 = vcmp.eq.s32.totalorder %v455, %v388
        %vm621 = vcmp.eq.s32.totalorder %v455, %v389
        %vm622 = vcmp.eq.s32.totalorder %v458, %v386
        %vm623 = vcmp.eq.s32.totalorder %v458, %v387
        %vm624 = vcmp.eq.s32.totalorder %v458, %v388
        %vm625 = vcmp.eq.s32.totalorder %v458, %v389
        %vm626 = vcmp.eq.s32.totalorder %v461, %v386
        %vm627 = vcmp.eq.s32.totalorder %v461, %v387
        %vm628 = vcmp.eq.s32.totalorder %v461, %v388
        %vm629 = vcmp.eq.s32.totalorder %v461, %v389
        %vm630 = vcmp.eq.s32.totalorder %v464, %v386
        %vm631 = vcmp.eq.s32.totalorder %v464, %v387
        %vm632 = vcmp.eq.s32.totalorder %v464, %v388
        %vm633 = vcmp.eq.s32.totalorder %v464, %v389
        %vm634 = vcmp.eq.s32.totalorder %v467, %v386
        %vm635 = vcmp.eq.s32.totalorder %v467, %v387
        %vm636 = vcmp.eq.s32.totalorder %v467, %v388
        %vm637 = vcmp.eq.s32.totalorder %v467, %v389
        %vm638 = vcmp.eq.s32.totalorder %v470, %v386
        %vm639 = vcmp.eq.s32.totalorder %v470, %v387
        %vm640 = vcmp.eq.s32.totalorder %v470, %v388
        %vm641 = vcmp.eq.s32.totalorder %v470, %v389
        %vm642 = vcmp.eq.s32.totalorder %v473, %v386
        %vm643 = vcmp.eq.s32.totalorder %v473, %v387
        %vm644 = vcmp.eq.s32.totalorder %v473, %v388
        %vm645 = vcmp.eq.s32.totalorder %v473, %v389
        %vm646 = vcmp.eq.s32.totalorder %v476, %v386
        %vm647 = vcmp.eq.s32.totalorder %v476, %v387
        %vm648 = vcmp.eq.s32.totalorder %v476, %v388
        %vm649 = vcmp.eq.s32.totalorder %v476, %v389
        %vm650 = vcmp.eq.s32.totalorder %v479, %v386
        %vm651 = vcmp.eq.s32.totalorder %v479, %v387
        %vm652 = vcmp.eq.s32.totalorder %v479, %v388
        %vm653 = vcmp.eq.s32.totalorder %v479, %v389
        %vm654 = vcmp.eq.s32.totalorder %v482, %v386
        %vm655 = vcmp.eq.s32.totalorder %v482, %v387
        %vm656 = vcmp.eq.s32.totalorder %v482, %v388
        %vm657 = vcmp.eq.s32.totalorder %v482, %v389
        %vm658 = vcmp.eq.s32.totalorder %v485, %v386
        %vm659 = vcmp.eq.s32.totalorder %v485, %v387
        %vm660 = vcmp.eq.s32.totalorder %v485, %v388
        %vm661 = vcmp.eq.s32.totalorder %v485, %v389
        %vm662 = vcmp.eq.s32.totalorder %v488, %v386
        %vm663 = vcmp.eq.s32.totalorder %v488, %v387
        %vm664 = vcmp.eq.s32.totalorder %v488, %v388
        %vm665 = vcmp.eq.s32.totalorder %v488, %v389
        %vm666 = vcmp.eq.s32.totalorder %v491, %v386
        %vm667 = vcmp.eq.s32.totalorder %v491, %v387
        %vm668 = vcmp.eq.s32.totalorder %v491, %v388
        %vm669 = vcmp.eq.s32.totalorder %v491, %v389
        %vm670 = vcmp.eq.s32.totalorder %v494, %v386
        %vm671 = vcmp.eq.s32.totalorder %v494, %v387
        %vm672 = vcmp.eq.s32.totalorder %v494, %v388
        %vm673 = vcmp.eq.s32.totalorder %v494, %v389
        %vm674 = vcmp.eq.s32.totalorder %v497, %v386
        %vm675 = vcmp.eq.s32.totalorder %v497, %v387
        %vm676 = vcmp.eq.s32.totalorder %v497, %v388
        %vm677 = vcmp.eq.s32.totalorder %v497, %v389
        %vm678 = vcmp.eq.s32.totalorder %v500, %v386
        %vm679 = vcmp.eq.s32.totalorder %v500, %v387
        %vm680 = vcmp.eq.s32.totalorder %v500, %v388
        %vm681 = vcmp.eq.s32.totalorder %v500, %v389
        %vm682 = vcmp.eq.s32.totalorder %v503, %v386
        %vm683 = vcmp.eq.s32.totalorder %v503, %v387
        %vm684 = vcmp.eq.s32.totalorder %v503, %v388
        %vm685 = vcmp.eq.s32.totalorder %v503, %v389
        %vm686 = vcmp.eq.s32.totalorder %v506, %v386
        %vm687 = vcmp.eq.s32.totalorder %v506, %v387
        %vm688 = vcmp.eq.s32.totalorder %v506, %v388
        %vm689 = vcmp.eq.s32.totalorder %v506, %v389
        %vm690 = vcmp.eq.s32.totalorder %v509, %v386
        %vm691 = vcmp.eq.s32.totalorder %v509, %v387
        %vm692 = vcmp.eq.s32.totalorder %v509, %v388
        %vm693 = vcmp.eq.s32.totalorder %v509, %v389
        %vm694 = vcmp.eq.s32.totalorder %v512, %v386
        %vm695 = vcmp.eq.s32.totalorder %v512, %v387
        %vm696 = vcmp.eq.s32.totalorder %v512, %v388
        %vm697 = vcmp.eq.s32.totalorder %v512, %v389
        %vm698 = vcmp.eq.s32.totalorder %v515, %v386
        %vm699 = vcmp.eq.s32.totalorder %v515, %v387
        %vm700 = vcmp.eq.s32.totalorder %v515, %v388
        %vm701 = vcmp.eq.s32.totalorder %v515, %v389
        %vm702 = vcmp.eq.s32.totalorder %v518, %v386
        %vm703 = vcmp.eq.s32.totalorder %v518, %v387
        %vm704 = vcmp.eq.s32.totalorder %v518, %v388
        %vm705 = vcmp.eq.s32.totalorder %v518, %v389
        %vm706 = vcmp.eq.s32.totalorder %v521, %v386
        %vm707 = vcmp.eq.s32.totalorder %v521, %v387
        %vm708 = vcmp.eq.s32.totalorder %v521, %v388
        %vm709 = vcmp.eq.s32.totalorder %v521, %v389
        %vm710 = vcmp.eq.s32.totalorder %v524, %v386
        %vm711 = vcmp.eq.s32.totalorder %v524, %v387
        %vm712 = vcmp.eq.s32.totalorder %v524, %v388
        %vm713 = vcmp.eq.s32.totalorder %v524, %v389
        %vm714 = vcmp.eq.s32.totalorder %v527, %v386
        %vm715 = vcmp.eq.s32.totalorder %v527, %v387
        %vm716 = vcmp.eq.s32.totalorder %v527, %v388
        %vm717 = vcmp.eq.s32.totalorder %v527, %v389
        %vm718 = vcmp.eq.s32.totalorder %v530, %v386
        %vm719 = vcmp.eq.s32.totalorder %v530, %v387
        %vm720 = vcmp.eq.s32.totalorder %v530, %v388
        %vm721 = vcmp.eq.s32.totalorder %v530, %v389
        %vm722 = vcmp.eq.s32.totalorder %v533, %v386
        %vm723 = vcmp.eq.s32.totalorder %v533, %v387
        %vm724 = vcmp.eq.s32.totalorder %v533, %v388
        %vm725 = vcmp.eq.s32.totalorder %v533, %v389
        %v726 = vsel %vm534, 1, 0
        %v727 = vsel %vm535, 1, 0
        %v728 = vsel %vm536, 1, 0
        %v729 = vsel %vm537, 1, 0
        %v730 = vsel %vm538, 1, 0
        %v731 = vsel %vm539, 1, 0
        %v732 = vsel %vm540, 1, 0
        %v733 = vsel %vm541, 1, 0
        %v734 = vsel %vm542, 1, 0
        %v735 = vsel %vm543, 1, 0
        %v736 = vsel %vm544, 1, 0
        %v737 = vsel %vm545, 1, 0
        %v738 = vsel %vm546, 1, 0
        %v739 = vsel %vm547, 1, 0
        %v740 = vsel %vm548, 1, 0
        %v741 = vsel %vm549, 1, 0
        %v742 = vsel %vm550, 1, 0
        %v743 = vsel %vm551, 1, 0
        %v744 = vsel %vm552, 1, 0
        %v745 = vsel %vm553, 1, 0
        %v746 = vsel %vm554, 1, 0
        %v747 = vsel %vm555, 1, 0
        %v748 = vsel %vm556, 1, 0
        %v749 = vsel %vm557, 1, 0
        %v750 = vsel %vm558, 1, 0
        %v751 = vsel %vm559, 1, 0
        %v752 = vsel %vm560, 1, 0
        %v753 = vsel %vm561, 1, 0
        %v754 = vsel %vm562, 1, 0
        %v755 = vsel %vm563, 1, 0
        %v756 = vsel %vm564, 1, 0
        %v757 = vsel %vm565, 1, 0
        %v758 = vsel %vm566, 1, 0
        %v759 = vsel %vm567, 1, 0
        %v760 = vsel %vm568, 1, 0
        %v761 = vsel %vm569, 1, 0
        %v762 = vsel %vm570, 1, 0
        %v763 = vsel %vm571, 1, 0
        %v764 = vsel %vm572, 1, 0
        %v765 = vsel %vm573, 1, 0
        %v766 = vsel %vm574, 1, 0
        %v767 = vsel %vm575, 1, 0
        %v768 = vsel %vm576, 1, 0
        %v769 = vsel %vm577, 1, 0
        %v770 = vsel %vm578, 1, 0
        %v771 = vsel %vm579, 1, 0
        %v772 = vsel %vm580, 1, 0
        %v773 = vsel %vm581, 1, 0
        %v774 = vsel %vm582, 1, 0
        %v775 = vsel %vm583, 1, 0
        %v776 = vsel %vm584, 1, 0
        %v777 = vsel %vm585, 1, 0
        %v778 = vsel %vm586, 1, 0
        %v779 = vsel %vm587, 1, 0
        %v780 = vsel %vm588, 1, 0
        %v781 = vsel %vm589, 1, 0
        %v782 = vsel %vm590, 1, 0
        %v783 = vsel %vm591, 1, 0
        %v784 = vsel %vm592, 1, 0
        %v785 = vsel %vm593, 1, 0
        %v786 = vsel %vm594, 1, 0
        %v787 = vsel %vm595, 1, 0
        %v788 = vsel %vm596, 1, 0
        %v789 = vsel %vm597, 1, 0
        %v790 = vsel %vm598, 1, 0
        %v791 = vsel %vm599, 1, 0
        %v792 = vsel %vm600, 1, 0
        %v793 = vsel %vm601, 1, 0
        %v794 = vsel %vm602, 1, 0
        %v795 = vsel %vm603, 1, 0
        %v796 = vsel %vm604, 1, 0
        %v797 = vsel %vm605, 1, 0
        %v798 = vsel %vm606, 1, 0
        %v799 = vsel %vm607, 1, 0
        %v800 = vsel %vm608, 1, 0
        %v801 = vsel %vm609, 1, 0
        %v802 = vsel %vm610, 1, 0
        %v803 = vsel %vm611, 1, 0
        %v804 = vsel %vm612, 1, 0
        %v805 = vsel %vm613, 1, 0
        %v806 = vsel %vm614, 1, 0
        %v807 = vsel %vm615, 1, 0
        %v808 = vsel %vm616, 1, 0
        %v809 = vsel %vm617, 1, 0
        %v810 = vsel %vm618, 1, 0
        %v811 = vsel %vm619, 1, 0
        %v812 = vsel %vm620, 1, 0
        %v813 = vsel %vm621, 1, 0
        %v814 = vsel %vm622, 1, 0
        %v815 = vsel %vm623, 1, 0
        %v816 = vsel %vm624, 1, 0
        %v817 = vsel %vm625, 1, 0
        %v818 = vsel %vm626, 1, 0
        %v819 = vsel %vm627, 1, 0
        %v820 = vsel %vm628, 1, 0
        %v821 = vsel %vm629, 1, 0
        %v822 = vsel %vm630, 1, 0
        %v823 = vsel %vm631, 1, 0
        %v824 = vsel %vm632, 1, 0
        %v825 = vsel %vm633, 1, 0
        %v826 = vsel %vm634, 1, 0
        %v827 = vsel %vm635, 1, 0
        %v828 = vsel %vm636, 1, 0
        %v829 = vsel %vm637, 1, 0
        %v830 = vsel %vm638, 1, 0
        %v831 = vsel %vm639, 1, 0
        %v832 = vsel %vm640, 1, 0
        %v833 = vsel %vm641, 1, 0
        %v834 = vsel %vm642, 1, 0
        %v835 = vsel %vm643, 1, 0
        %v836 = vsel %vm644, 1, 0
        %v837 = vsel %vm645, 1, 0
        %v838 = vsel %vm646, 1, 0
        %v839 = vsel %vm647, 1, 0
        %v840 = vsel %vm648, 1, 0
        %v841 = vsel %vm649, 1, 0
        %v842 = vsel %vm650, 1, 0
        %v843 = vsel %vm651, 1, 0
        %v844 = vsel %vm652, 1, 0
        %v845 = vsel %vm653, 1, 0
        %v846 = vsel %vm654, 1, 0
        %v847 = vsel %vm655, 1, 0
        %v848 = vsel %vm656, 1, 0
        %v849 = vsel %vm657, 1, 0
        %v850 = vsel %vm658, 1, 0
        %v851 = vsel %vm659, 1, 0
        %v852 = vsel %vm660, 1, 0
        %v853 = vsel %vm661, 1, 0
        %v854 = vsel %vm662, 1, 0
        %v855 = vsel %vm663, 1, 0
        %v856 = vsel %vm664, 1, 0
        %v857 = vsel %vm665, 1, 0
        %v858 = vsel %vm666, 1, 0
        %v859 = vsel %vm667, 1, 0
        %v860 = vsel %vm668, 1, 0
        %v861 = vsel %vm669, 1, 0
        %v862 = vsel %vm670, 1, 0
        %v863 = vsel %vm671, 1, 0
        %v864 = vsel %vm672, 1, 0
        %v865 = vsel %vm673, 1, 0
        %v866 = vsel %vm674, 1, 0
        %v867 = vsel %vm675, 1, 0
        %v868 = vsel %vm676, 1, 0
        %v869 = vsel %vm677, 1, 0
        %v870 = vsel %vm678, 1, 0
        %v871 = vsel %vm679, 1, 0
        %v872 = vsel %vm680, 1, 0
        %v873 = vsel %vm681, 1, 0
        %v874 = vsel %vm682, 1, 0
        %v875 = vsel %vm683, 1, 0
        %v876 = vsel %vm684, 1, 0
        %v877 = vsel %vm685, 1, 0
        %v878 = vsel %vm686, 1, 0
        %v879 = vsel %vm687, 1, 0
        %v880 = vsel %vm688, 1, 0
        %v881 = vsel %vm689, 1, 0
        %v882 = vsel %vm690, 1, 0
        %v883 = vsel %vm691, 1, 0
        %v884 = vsel %vm692, 1, 0
        %v885 = vsel %vm693, 1, 0
        %v886 = vsel %vm694, 1, 0
        %v887 = vsel %vm695, 1, 0
        %v888 = vsel %vm696, 1, 0
        %v889 = vsel %vm697, 1, 0
        %v890 = vsel %vm698, 1, 0
        %v891 = vsel %vm699, 1, 0
        %v892 = vsel %vm700, 1, 0
        %v893 = vsel %vm701, 1, 0
        %v894 = vsel %vm702, 1, 0
        %v895 = vsel %vm703, 1, 0
        %v896 = vsel %vm704, 1, 0
        %v897 = vsel %vm705, 1, 0
        %v898 = vsel %vm706, 1, 0
        %v899 = vsel %vm707, 1, 0
        %v900 = vsel %vm708, 1, 0
        %v901 = vsel %vm709, 1, 0
        %v902 = vsel %vm710, 1, 0
        %v903 = vsel %vm711, 1, 0
        %v904 = vsel %vm712, 1, 0
        %v905 = vsel %vm713, 1, 0
        %v906 = vsel %vm714, 1, 0
        %v907 = vsel %vm715, 1, 0
        %v908 = vsel %vm716, 1, 0
        %v909 = vsel %vm717, 1, 0
        %v910 = vsel %vm718, 1, 0
        %v911 = vsel %vm719, 1, 0
        %v912 = vsel %vm720, 1, 0
        %v913 = vsel %vm721, 1, 0
        %v914 = vsel %vm722, 1, 0
        %v915 = vsel %vm723, 1, 0
        %v916 = vsel %vm724, 1, 0
        %v917 = vsel %vm725, 1, 0
        %v918 = vcvt.s32.f32 %v726
        %v919 = vcvt.s32.f32 %v727
        %v920 = vcvt.s32.f32 %v728
        %v921 = vcvt.s32.f32 %v729
        %v922 = vcvt.s32.f32 %v730
        %v923 = vcvt.s32.f32 %v731
        %v924 = vcvt.s32.f32 %v732
        %v925 = vcvt.s32.f32 %v733
        %v926 = vcvt.s32.f32 %v734
        %v927 = vcvt.s32.f32 %v735
        %v928 = vcvt.s32.f32 %v736
        %v929 = vcvt.s32.f32 %v737
        %v930 = vcvt.s32.f32 %v738
        %v931 = vcvt.s32.f32 %v739
        %v932 = vcvt.s32.f32 %v740
        %v933 = vcvt.s32.f32 %v741
        %v934 = vcvt.s32.f32 %v742
        %v935 = vcvt.s32.f32 %v743
        %v936 = vcvt.s32.f32 %v744
        %v937 = vcvt.s32.f32 %v745
        %v938 = vcvt.s32.f32 %v746
        %v939 = vcvt.s32.f32 %v747
        %v940 = vcvt.s32.f32 %v748
        %v941 = vcvt.s32.f32 %v749
        %v942 = vcvt.s32.f32 %v750
        %v943 = vcvt.s32.f32 %v751
        %v944 = vcvt.s32.f32 %v752
        %v945 = vcvt.s32.f32 %v753
        %v946 = vcvt.s32.f32 %v754
        %v947 = vcvt.s32.f32 %v755
        %v948 = vcvt.s32.f32 %v756
        %v949 = vcvt.s32.f32 %v757
        %v950 = vcvt.s32.f32 %v758
        %v951 = vcvt.s32.f32 %v759
        %v952 = vcvt.s32.f32 %v760
        %v953 = vcvt.s32.f32 %v761
        %v954 = vcvt.s32.f32 %v762
        %v955 = vcvt.s32.f32 %v763
        %v956 = vcvt.s32.f32 %v764
        %v957 = vcvt.s32.f32 %v765
        %v958 = vcvt.s32.f32 %v766
        %v959 = vcvt.s32.f32 %v767
        %v960 = vcvt.s32.f32 %v768
        %v961 = vcvt.s32.f32 %v769
        %v962 = vcvt.s32.f32 %v770
        %v963 = vcvt.s32.f32 %v771
        %v964 = vcvt.s32.f32 %v772
        %v965 = vcvt.s32.f32 %v773
        %v966 = vcvt.s32.f32 %v774
        %v967 = vcvt.s32.f32 %v775
        %v968 = vcvt.s32.f32 %v776
        %v969 = vcvt.s32.f32 %v777
        %v970 = vcvt.s32.f32 %v778
        %v971 = vcvt.s32.f32 %v779
        %v972 = vcvt.s32.f32 %v780
        %v973 = vcvt.s32.f32 %v781
        %v974 = vcvt.s32.f32 %v782
        %v975 = vcvt.s32.f32 %v783
        %v976 = vcvt.s32.f32 %v784
        %v977 = vcvt.s32.f32 %v785
        %v978 = vcvt.s32.f32 %v786
        %v979 = vcvt.s32.f32 %v787
        %v980 = vcvt.s32.f32 %v788
        %v981 = vcvt.s32.f32 %v789
        %v982 = vcvt.s32.f32 %v790
        %v983 = vcvt.s32.f32 %v791
        %v984 = vcvt.s32.f32 %v792
        %v985 = vcvt.s32.f32 %v793
        %v986 = vcvt.s32.f32 %v794
        %v987 = vcvt.s32.f32 %v795
        %v988 = vcvt.s32.f32 %v796
        %v989 = vcvt.s32.f32 %v797
        %v990 = vcvt.s32.f32 %v798
        %v991 = vcvt.s32.f32 %v799
        %v992 = vcvt.s32.f32 %v800
        %v993 = vcvt.s32.f32 %v801
        %v994 = vcvt.s32.f32 %v802
        %v995 = vcvt.s32.f32 %v803
        %v996 = vcvt.s32.f32 %v804
        %v997 = vcvt.s32.f32 %v805
        %v998 = vcvt.s32.f32 %v806
        %v999 = vcvt.s32.f32 %v807
        %v1000 = vcvt.s32.f32 %v808
        %v1001 = vcvt.s32.f32 %v809
        %v1002 = vcvt.s32.f32 %v810
        %v1003 = vcvt.s32.f32 %v811
        %v1004 = vcvt.s32.f32 %v812
        %v1005 = vcvt.s32.f32 %v813
        %v1006 = vcvt.s32.f32 %v814
        %v1007 = vcvt.s32.f32 %v815
        %v1008 = vcvt.s32.f32 %v816
        %v1009 = vcvt.s32.f32 %v817
        %v1010 = vcvt.s32.f32 %v818
        %v1011 = vcvt.s32.f32 %v819
        %v1012 = vcvt.s32.f32 %v820
        %v1013 = vcvt.s32.f32 %v821
        %v1014 = vcvt.s32.f32 %v822
        %v1015 = vcvt.s32.f32 %v823
        %v1016 = vcvt.s32.f32 %v824
        %v1017 = vcvt.s32.f32 %v825
        %v1018 = vcvt.s32.f32 %v826
        %v1019 = vcvt.s32.f32 %v827
        %v1020 = vcvt.s32.f32 %v828
        %v1021 = vcvt.s32.f32 %v829
        %v1022 = vcvt.s32.f32 %v830
        %v1023 = vcvt.s32.f32 %v831
        %v1024 = vcvt.s32.f32 %v832
        %v1025 = vcvt.s32.f32 %v833
        %v1026 = vcvt.s32.f32 %v834
        %v1027 = vcvt.s32.f32 %v835
        %v1028 = vcvt.s32.f32 %v836
        %v1029 = vcvt.s32.f32 %v837
        %v1030 = vcvt.s32.f32 %v838
        %v1031 = vcvt.s32.f32 %v839
        %v1032 = vcvt.s32.f32 %v840
        %v1033 = vcvt.s32.f32 %v841
        %v1034 = vcvt.s32.f32 %v842
        %v1035 = vcvt.s32.f32 %v843
        %v1036 = vcvt.s32.f32 %v844
        %v1037 = vcvt.s32.f32 %v845
        %v1038 = vcvt.s32.f32 %v846
        %v1039 = vcvt.s32.f32 %v847
        %v1040 = vcvt.s32.f32 %v848
        %v1041 = vcvt.s32.f32 %v849
        %v1042 = vcvt.s32.f32 %v850
        %v1043 = vcvt.s32.f32 %v851
        %v1044 = vcvt.s32.f32 %v852
        %v1045 = vcvt.s32.f32 %v853
        %v1046 = vcvt.s32.f32 %v854
        %v1047 = vcvt.s32.f32 %v855
        %v1048 = vcvt.s32.f32 %v856
        %v1049 = vcvt.s32.f32 %v857
        %v1050 = vcvt.s32.f32 %v858
        %v1051 = vcvt.s32.f32 %v859
        %v1052 = vcvt.s32.f32 %v860
        %v1053 = vcvt.s32.f32 %v861
        %v1054 = vcvt.s32.f32 %v862
        %v1055 = vcvt.s32.f32 %v863
        %v1056 = vcvt.s32.f32 %v864
        %v1057 = vcvt.s32.f32 %v865
        %v1058 = vcvt.s32.f32 %v866
        %v1059 = vcvt.s32.f32 %v867
        %v1060 = vcvt.s32.f32 %v868
        %v1061 = vcvt.s32.f32 %v869
        %v1062 = vcvt.s32.f32 %v870
        %v1063 = vcvt.s32.f32 %v871
        %v1064 = vcvt.s32.f32 %v872
        %v1065 = vcvt.s32.f32 %v873
        %v1066 = vcvt.s32.f32 %v874
        %v1067 = vcvt.s32.f32 %v875
        %v1068 = vcvt.s32.f32 %v876
        %v1069 = vcvt.s32.f32 %v877
        %v1070 = vcvt.s32.f32 %v878
        %v1071 = vcvt.s32.f32 %v879
        %v1072 = vcvt.s32.f32 %v880
        %v1073 = vcvt.s32.f32 %v881
        %v1074 = vcvt.s32.f32 %v882
        %v1075 = vcvt.s32.f32 %v883
        %v1076 = vcvt.s32.f32 %v884
        %v1077 = vcvt.s32.f32 %v885
        %v1078 = vcvt.s32.f32 %v886
        %v1079 = vcvt.s32.f32 %v887
        %v1080 = vcvt.s32.f32 %v888
        %v1081 = vcvt.s32.f32 %v889
        %v1082 = vcvt.s32.f32 %v890
        %v1083 = vcvt.s32.f32 %v891
        %v1084 = vcvt.s32.f32 %v892
        %v1085 = vcvt.s32.f32 %v893
        %v1086 = vcvt.s32.f32 %v894
        %v1087 = vcvt.s32.f32 %v895
        %v1088 = vcvt.s32.f32 %v896
        %v1089 = vcvt.s32.f32 %v897
        %v1090 = vcvt.s32.f32 %v898
        %v1091 = vcvt.s32.f32 %v899
        %v1092 = vcvt.s32.f32 %v900
        %v1093 = vcvt.s32.f32 %v901
        %v1094 = vcvt.s32.f32 %v902
        %v1095 = vcvt.s32.f32 %v903
        %v1096 = vcvt.s32.f32 %v904
        %v1097 = vcvt.s32.f32 %v905
        %v1098 = vcvt.s32.f32 %v906
        %v1099 = vcvt.s32.f32 %v907
        %v1100 = vcvt.s32.f32 %v908
        %v1101 = vcvt.s32.f32 %v909
        %v1102 = vcvt.s32.f32 %v910
        %v1103 = vcvt.s32.f32 %v911
        %v1104 = vcvt.s32.f32 %v912
        %v1105 = vcvt.s32.f32 %v913
        %v1106 = vcvt.s32.f32 %v914
        %v1107 = vcvt.s32.f32 %v915
        %v1108 = vcvt.s32.f32 %v916
        %v1109 = vcvt.s32.f32 %v917
        %v1110 = vld [vmem:[%s1] sm:$0xff]
        %v1111 = vld [vmem:[%s1 + $0x8] sm:$0xff]
        %v1112 = vld [vmem:[%s1 + $0x10] sm:$0xff]
        %v1113 = vld [vmem:[%s1 + $0x18] sm:$0xff]
        %v1114 = vld [vmem:[%s1 + $0x20] sm:$0xff]
        %v1115 = vld [vmem:[%s1 + $0x28] sm:$0xff]
        %v1116 = vld [vmem:[%s1 + $0x30] sm:$0xff]
        %v1117 = vld [vmem:[%s1 + $0x38] sm:$0xff]
        %v1118 = vld [vmem:[%s1 + $0x40] sm:$0xff]
        %v1119 = vld [vmem:[%s1 + $0x48] sm:$0xff]
        %v1120 = vld [vmem:[%s1 + $0x50] sm:$0xff]
        %v1121 = vld [vmem:[%s1 + $0x58] sm:$0xff]
        %v1122 = vld [vmem:[%s1 + $0x60] sm:$0xff]
        %v1123 = vld [vmem:[%s1 + $0x68] sm:$0xff]
        %v1124 = vld [vmem:[%s1 + $0x70] sm:$0xff]
        %v1125 = vld [vmem:[%s1 + $0x78] sm:$0xff]
        %v1126 = vld [vmem:[%s1 + $0x80] sm:$0xff]
        %v1127 = vld [vmem:[%s1 + $0x88] sm:$0xff]
        %v1128 = vld [vmem:[%s1 + $0x90] sm:$0xff]
        %v1129 = vld [vmem:[%s1 + $0x98] sm:$0xff]
        %v1130 = vld [vmem:[%s1 + $0xa0] sm:$0xff]
        %v1131 = vld [vmem:[%s1 + $0xa8] sm:$0xff]
        %v1132 = vld [vmem:[%s1 + $0xb0] sm:$0xff]
        %v1133 = vld [vmem:[%s1 + $0xb8] sm:$0xff]
        %v1134 = vld [vmem:[%s1 + $0xc0] sm:$0xff]
        %v1135 = vld [vmem:[%s1 + $0xc8] sm:$0xff]
        %v1136 = vld [vmem:[%s1 + $0xd0] sm:$0xff]
        %v1137 = vld [vmem:[%s1 + $0xd8] sm:$0xff]
        %v1138 = vld [vmem:[%s1 + $0xe0] sm:$0xff]
        %v1139 = vld [vmem:[%s1 + $0xe8] sm:$0xff]
        %v1140 = vld [vmem:[%s1 + $0xf0] sm:$0xff]
        %v1141 = vld [vmem:[%s1 + $0xf8] sm:$0xff]
        %v1142 = vld [vmem:[%s1 + $0x100] sm:$0xff]
        %v1143 = vld [vmem:[%s1 + $0x108] sm:$0xff]
        %v1144 = vld [vmem:[%s1 + $0x110] sm:$0xff]
        %v1145 = vld [vmem:[%s1 + $0x118] sm:$0xff]
        %v1146 = vld [vmem:[%s1 + $0x120] sm:$0xff]
        %v1147 = vld [vmem:[%s1 + $0x128] sm:$0xff]
        %v1148 = vld [vmem:[%s1 + $0x130] sm:$0xff]
        %v1149 = vld [vmem:[%s1 + $0x138] sm:$0xff]
        %v1150 = vld [vmem:[%s1 + $0x140] sm:$0xff]
        %v1151 = vld [vmem:[%s1 + $0x148] sm:$0xff]
        %v1152 = vld [vmem:[%s1 + $0x150] sm:$0xff]
        %v1153 = vld [vmem:[%s1 + $0x158] sm:$0xff]
        %v1154 = vld [vmem:[%s1 + $0x160] sm:$0xff]
        %v1155 = vld [vmem:[%s1 + $0x168] sm:$0xff]
        %v1156 = vld [vmem:[%s1 + $0x170] sm:$0xff]
        %v1157 = vld [vmem:[%s1 + $0x178] sm:$0xff]
        %v1158 = vld [vmem:[%s1 + $0x180] sm:$0xff]
        %v1159 = vld [vmem:[%s1 + $0x188] sm:$0xff]
        %v1160 = vld [vmem:[%s1 + $0x190] sm:$0xff]
        %v1161 = vld [vmem:[%s1 + $0x198] sm:$0xff]
        %v1162 = vld [vmem:[%s1 + $0x1a0] sm:$0xff]
        %v1163 = vld [vmem:[%s1 + $0x1a8] sm:$0xff]
        %v1164 = vld [vmem:[%s1 + $0x1b0] sm:$0xff]
        %v1165 = vld [vmem:[%s1 + $0x1b8] sm:$0xff]
        %v1166 = vld [vmem:[%s1 + $0x1c0] sm:$0xff]
        %v1167 = vld [vmem:[%s1 + $0x1c8] sm:$0xff]
        %v1168 = vld [vmem:[%s1 + $0x1d0] sm:$0xff]
        %v1169 = vld [vmem:[%s1 + $0x1d8] sm:$0xff]
        %v1170 = vld [vmem:[%s1 + $0x1e0] sm:$0xff]
        %v1171 = vld [vmem:[%s1 + $0x1e8] sm:$0xff]
        %v1172 = vld [vmem:[%s1 + $0x1f0] sm:$0xff]
        %v1173 = vld [vmem:[%s1 + $0x1f8] sm:$0xff]
        %v1174 = vand.u32 %v1125, 4294901760
        %1175 = vmatpush.msra.mxu0 %v1174
        %v1176 = vand.u32 %v1124, 4294901760
        %1177 = vmatpush.msra.mxu0 %v1176
        %v1178 = vand.u32 %v1123, 4294901760
        %1179 = vmatpush.msra.mxu0 %v1178
        %v1180 = vand.u32 %v1122, 4294901760
        %1181 = vmatpush.msra.mxu0 %v1180
        %v1182 = vand.u32 %v1121, 4294901760
        %1183 = vmatpush.msra.mxu0 %v1182
        %v1184 = vand.u32 %v1120, 4294901760
        %1185 = vmatpush.msra.mxu0 %v1184
        %v1186 = vand.u32 %v1119, 4294901760
        %1187 = vmatpush.msra.mxu0 %v1186
        %v1188 = vand.u32 %v1118, 4294901760
        %1189 = vmatpush.msra.mxu0 %v1188
        %v1190 = vand.u32 %v1117, 4294901760
        %1191 = vmatpush.msra.mxu0 %v1190
        %v1192 = vand.u32 %v1116, 4294901760
        %1193 = vmatpush.msra.mxu0 %v1192
        %v1194 = vand.u32 %v1115, 4294901760
        %1195 = vmatpush.msra.mxu0 %v1194
        %v1196 = vand.u32 %v1114, 4294901760
        %1197 = vmatpush.msra.mxu0 %v1196
        %v1198 = vand.u32 %v1113, 4294901760
        %1199 = vmatpush.msra.mxu0 %v1198
        %v1200 = vand.u32 %v1112, 4294901760
        %1201 = vmatpush.msra.mxu0 %v1200
        %v1202 = vand.u32 %v1111, 4294901760
        %1203 = vmatpush.msra.mxu0 %v1202
        %v1204 = vand.u32 %v1110, 4294901760
        %1205 = vmatpush.msra.mxu0 %v1204
        %v1206 = vand.u32 %v918, 4294901760
        %v1207 = vsub.f32 %v918, %v1206
        %v1208 = vand.u32 %v1207, 4294901760
        %v1209 = vsub.f32 %v1207, %v1208
        %v1210 = vand.u32 %v1209, 4294901760
        %1211 = vmatmul.f32.gmra.mxu0 %v1210
        %v1212 = vpop.f32.mrf.mxu0
        %v1213 = vadd.f32 0.0, %v1212
        %v1214 = vand.u32 %v922, 4294901760
        %v1215 = vsub.f32 %v922, %v1214
        %v1216 = vand.u32 %v1215, 4294901760
        %v1217 = vsub.f32 %v1215, %v1216
        %v1218 = vand.u32 %v1217, 4294901760
        %1219 = vmatmul.f32.gmra.mxu0 %v1218
        %v1220 = vpop.f32.mrf.mxu0
        %v1221 = vadd.f32 0.0, %v1220
        %v1222 = vand.u32 %v926, 4294901760
        %v1223 = vsub.f32 %v926, %v1222
        %v1224 = vand.u32 %v1223, 4294901760
        %v1225 = vsub.f32 %v1223, %v1224
        %v1226 = vand.u32 %v1225, 4294901760
        %1227 = vmatmul.f32.gmra.mxu0 %v1226
        %v1228 = vpop.f32.mrf.mxu0
        %v1229 = vadd.f32 0.0, %v1228
        %v1230 = vand.u32 %v930, 4294901760
        %v1231 = vsub.f32 %v930, %v1230
        %v1232 = vand.u32 %v1231, 4294901760
        %v1233 = vsub.f32 %v1231, %v1232
        %v1234 = vand.u32 %v1233, 4294901760
        %1235 = vmatmul.f32.gmra.mxu0 %v1234
        %v1236 = vpop.f32.mrf.mxu0
        %v1237 = vadd.f32 0.0, %v1236
        %v1238 = vand.u32 %v934, 4294901760
        %v1239 = vsub.f32 %v934, %v1238
        %v1240 = vand.u32 %v1239, 4294901760
        %v1241 = vsub.f32 %v1239, %v1240
        %v1242 = vand.u32 %v1241, 4294901760
        %1243 = vmatmul.f32.gmra.mxu0 %v1242
        %v1244 = vpop.f32.mrf.mxu0
        %v1245 = vadd.f32 0.0, %v1244
        %v1246 = vand.u32 %v938, 4294901760
        %v1247 = vsub.f32 %v938, %v1246
        %v1248 = vand.u32 %v1247, 4294901760
        %v1249 = vsub.f32 %v1247, %v1248
        %v1250 = vand.u32 %v1249, 4294901760
        %1251 = vmatmul.f32.gmra.mxu0 %v1250
        %v1252 = vpop.f32.mrf.mxu0
        %v1253 = vadd.f32 0.0, %v1252
        %v1254 = vand.u32 %v942, 4294901760
        %v1255 = vsub.f32 %v942, %v1254
        %v1256 = vand.u32 %v1255, 4294901760
        %v1257 = vsub.f32 %v1255, %v1256
        %v1258 = vand.u32 %v1257, 4294901760
        %1259 = vmatmul.f32.gmra.mxu0 %v1258
        %v1260 = vpop.f32.mrf.mxu0
        %v1261 = vadd.f32 0.0, %v1260
        %v1262 = vand.u32 %v946, 4294901760
        %v1263 = vsub.f32 %v946, %v1262
        %v1264 = vand.u32 %v1263, 4294901760
        %v1265 = vsub.f32 %v1263, %v1264
        %v1266 = vand.u32 %v1265, 4294901760
        %1267 = vmatmul.f32.gmra.mxu0 %v1266
        %v1268 = vpop.f32.mrf.mxu0
        %v1269 = vadd.f32 0.0, %v1268
        %v1270 = vand.u32 %v950, 4294901760
        %v1271 = vsub.f32 %v950, %v1270
        %v1272 = vand.u32 %v1271, 4294901760
        %v1273 = vsub.f32 %v1271, %v1272
        %v1274 = vand.u32 %v1273, 4294901760
        %1275 = vmatmul.f32.gmra.mxu0 %v1274
        %v1276 = vpop.f32.mrf.mxu0
        %v1277 = vadd.f32 0.0, %v1276
        %v1278 = vand.u32 %v954, 4294901760
        %v1279 = vsub.f32 %v954, %v1278
        %v1280 = vand.u32 %v1279, 4294901760
        %v1281 = vsub.f32 %v1279, %v1280
        %v1282 = vand.u32 %v1281, 4294901760
        %1283 = vmatmul.f32.gmra.mxu0 %v1282
        %v1284 = vpop.f32.mrf.mxu0
        %v1285 = vadd.f32 0.0, %v1284
        %v1286 = vand.u32 %v958, 4294901760
        %v1287 = vsub.f32 %v958, %v1286
        %v1288 = vand.u32 %v1287, 4294901760
        %v1289 = vsub.f32 %v1287, %v1288
        %v1290 = vand.u32 %v1289, 4294901760
        %1291 = vmatmul.f32.gmra.mxu0 %v1290
        %v1292 = vpop.f32.mrf.mxu0
        %v1293 = vadd.f32 0.0, %v1292
        %v1294 = vand.u32 %v962, 4294901760
        %v1295 = vsub.f32 %v962, %v1294
        %v1296 = vand.u32 %v1295, 4294901760
        %v1297 = vsub.f32 %v1295, %v1296
        %v1298 = vand.u32 %v1297, 4294901760
        %1299 = vmatmul.f32.gmra.mxu0 %v1298
        %v1300 = vpop.f32.mrf.mxu0
        %v1301 = vadd.f32 0.0, %v1300
        %v1302 = vand.u32 %v966, 4294901760
        %v1303 = vsub.f32 %v966, %v1302
        %v1304 = vand.u32 %v1303, 4294901760
        %v1305 = vsub.f32 %v1303, %v1304
        %v1306 = vand.u32 %v1305, 4294901760
        %1307 = vmatmul.f32.gmra.mxu0 %v1306
        %v1308 = vpop.f32.mrf.mxu0
        %v1309 = vadd.f32 0.0, %v1308
        %v1310 = vand.u32 %v970, 4294901760
        %v1311 = vsub.f32 %v970, %v1310
        %v1312 = vand.u32 %v1311, 4294901760
        %v1313 = vsub.f32 %v1311, %v1312
        %v1314 = vand.u32 %v1313, 4294901760
        %1315 = vmatmul.f32.gmra.mxu0 %v1314
        %v1316 = vpop.f32.mrf.mxu0
        %v1317 = vadd.f32 0.0, %v1316
        %v1318 = vand.u32 %v974, 4294901760
        %v1319 = vsub.f32 %v974, %v1318
        %v1320 = vand.u32 %v1319, 4294901760
        %v1321 = vsub.f32 %v1319, %v1320
        %v1322 = vand.u32 %v1321, 4294901760
        %1323 = vmatmul.f32.gmra.mxu0 %v1322
        %v1324 = vpop.f32.mrf.mxu0
        %v1325 = vadd.f32 0.0, %v1324
        %v1326 = vand.u32 %v978, 4294901760
        %v1327 = vsub.f32 %v978, %v1326
        %v1328 = vand.u32 %v1327, 4294901760
        %v1329 = vsub.f32 %v1327, %v1328
        %v1330 = vand.u32 %v1329, 4294901760
        %1331 = vmatmul.f32.gmra.mxu0 %v1330
        %v1332 = vpop.f32.mrf.mxu0
        %v1333 = vadd.f32 0.0, %v1332
        %v1334 = vand.u32 %v982, 4294901760
        %v1335 = vsub.f32 %v982, %v1334
        %v1336 = vand.u32 %v1335, 4294901760
        %v1337 = vsub.f32 %v1335, %v1336
        %v1338 = vand.u32 %v1337, 4294901760
        %1339 = vmatmul.f32.gmra.mxu0 %v1338
        %v1340 = vpop.f32.mrf.mxu0
        %v1341 = vadd.f32 0.0, %v1340
        %v1342 = vand.u32 %v986, 4294901760
        %v1343 = vsub.f32 %v986, %v1342
        %v1344 = vand.u32 %v1343, 4294901760
        %v1345 = vsub.f32 %v1343, %v1344
        %v1346 = vand.u32 %v1345, 4294901760
        %1347 = vmatmul.f32.gmra.mxu0 %v1346
        %v1348 = vpop.f32.mrf.mxu0
        %v1349 = vadd.f32 0.0, %v1348
        %v1350 = vand.u32 %v990, 4294901760
        %v1351 = vsub.f32 %v990, %v1350
        %v1352 = vand.u32 %v1351, 4294901760
        %v1353 = vsub.f32 %v1351, %v1352
        %v1354 = vand.u32 %v1353, 4294901760
        %1355 = vmatmul.f32.gmra.mxu0 %v1354
        %v1356 = vpop.f32.mrf.mxu0
        %v1357 = vadd.f32 0.0, %v1356
        %v1358 = vand.u32 %v994, 4294901760
        %v1359 = vsub.f32 %v994, %v1358
        %v1360 = vand.u32 %v1359, 4294901760
        %v1361 = vsub.f32 %v1359, %v1360
        %v1362 = vand.u32 %v1361, 4294901760
        %1363 = vmatmul.f32.gmra.mxu0 %v1362
        %v1364 = vpop.f32.mrf.mxu0
        %v1365 = vadd.f32 0.0, %v1364
        %v1366 = vand.u32 %v998, 4294901760
        %v1367 = vsub.f32 %v998, %v1366
        %v1368 = vand.u32 %v1367, 4294901760
        %v1369 = vsub.f32 %v1367, %v1368
        %v1370 = vand.u32 %v1369, 4294901760
        %1371 = vmatmul.f32.gmra.mxu0 %v1370
        %v1372 = vpop.f32.mrf.mxu0
        %v1373 = vadd.f32 0.0, %v1372
        %v1374 = vand.u32 %v1002, 4294901760
        %v1375 = vsub.f32 %v1002, %v1374
        %v1376 = vand.u32 %v1375, 4294901760
        %v1377 = vsub.f32 %v1375, %v1376
        %v1378 = vand.u32 %v1377, 4294901760
        %1379 = vmatmul.f32.gmra.mxu0 %v1378
        %v1380 = vpop.f32.mrf.mxu0
        %v1381 = vadd.f32 0.0, %v1380
        %v1382 = vand.u32 %v1006, 4294901760
        %v1383 = vsub.f32 %v1006, %v1382
        %v1384 = vand.u32 %v1383, 4294901760
        %v1385 = vsub.f32 %v1383, %v1384
        %v1386 = vand.u32 %v1385, 4294901760
        %1387 = vmatmul.f32.gmra.mxu0 %v1386
        %v1388 = vpop.f32.mrf.mxu0
        %v1389 = vadd.f32 0.0, %v1388
        %v1390 = vand.u32 %v1010, 4294901760
        %v1391 = vsub.f32 %v1010, %v1390
        %v1392 = vand.u32 %v1391, 4294901760
        %v1393 = vsub.f32 %v1391, %v1392
        %v1394 = vand.u32 %v1393, 4294901760
        %1395 = vmatmul.f32.gmra.mxu0 %v1394
        %v1396 = vpop.f32.mrf.mxu0
        %v1397 = vadd.f32 0.0, %v1396
        %v1398 = vand.u32 %v1014, 4294901760
        %v1399 = vsub.f32 %v1014, %v1398
        %v1400 = vand.u32 %v1399, 4294901760
        %v1401 = vsub.f32 %v1399, %v1400
        %v1402 = vand.u32 %v1401, 4294901760
        %1403 = vmatmul.f32.gmra.mxu0 %v1402
        %v1404 = vpop.f32.mrf.mxu0
        %v1405 = vadd.f32 0.0, %v1404
        %v1406 = vand.u32 %v1018, 4294901760
        %v1407 = vsub.f32 %v1018, %v1406
        %v1408 = vand.u32 %v1407, 4294901760
        %v1409 = vsub.f32 %v1407, %v1408
        %v1410 = vand.u32 %v1409, 4294901760
        %1411 = vmatmul.f32.gmra.mxu0 %v1410
        %v1412 = vpop.f32.mrf.mxu0
        %v1413 = vadd.f32 0.0, %v1412
        %v1414 = vand.u32 %v1022, 4294901760
        %v1415 = vsub.f32 %v1022, %v1414
        %v1416 = vand.u32 %v1415, 4294901760
        %v1417 = vsub.f32 %v1415, %v1416
        %v1418 = vand.u32 %v1417, 4294901760
        %1419 = vmatmul.f32.gmra.mxu0 %v1418
        %v1420 = vpop.f32.mrf.mxu0
        %v1421 = vadd.f32 0.0, %v1420
        %v1422 = vand.u32 %v1026, 4294901760
        %v1423 = vsub.f32 %v1026, %v1422
        %v1424 = vand.u32 %v1423, 4294901760
        %v1425 = vsub.f32 %v1423, %v1424
        %v1426 = vand.u32 %v1425, 4294901760
        %1427 = vmatmul.f32.gmra.mxu0 %v1426
        %v1428 = vpop.f32.mrf.mxu0
        %v1429 = vadd.f32 0.0, %v1428
        %v1430 = vand.u32 %v1030, 4294901760
        %v1431 = vsub.f32 %v1030, %v1430
        %v1432 = vand.u32 %v1431, 4294901760
        %v1433 = vsub.f32 %v1431, %v1432
        %v1434 = vand.u32 %v1433, 4294901760
        %1435 = vmatmul.f32.gmra.mxu0 %v1434
        %v1436 = vpop.f32.mrf.mxu0
        %v1437 = vadd.f32 0.0, %v1436
        %v1438 = vand.u32 %v1034, 4294901760
        %v1439 = vsub.f32 %v1034, %v1438
        %v1440 = vand.u32 %v1439, 4294901760
        %v1441 = vsub.f32 %v1439, %v1440
        %v1442 = vand.u32 %v1441, 4294901760
        %1443 = vmatmul.f32.gmra.mxu0 %v1442
        %v1444 = vpop.f32.mrf.mxu0
        %v1445 = vadd.f32 0.0, %v1444
        %v1446 = vand.u32 %v1038, 4294901760
        %v1447 = vsub.f32 %v1038, %v1446
        %v1448 = vand.u32 %v1447, 4294901760
        %v1449 = vsub.f32 %v1447, %v1448
        %v1450 = vand.u32 %v1449, 4294901760
        %1451 = vmatmul.f32.gmra.mxu0 %v1450
        %v1452 = vpop.f32.mrf.mxu0
        %v1453 = vadd.f32 0.0, %v1452
        %v1454 = vand.u32 %v1042, 4294901760
        %v1455 = vsub.f32 %v1042, %v1454
        %v1456 = vand.u32 %v1455, 4294901760
        %v1457 = vsub.f32 %v1455, %v1456
        %v1458 = vand.u32 %v1457, 4294901760
        %1459 = vmatmul.f32.gmra.mxu0 %v1458
        %v1460 = vpop.f32.mrf.mxu0
        %v1461 = vadd.f32 0.0, %v1460
        %v1462 = vand.u32 %v1046, 4294901760
        %v1463 = vsub.f32 %v1046, %v1462
        %v1464 = vand.u32 %v1463, 4294901760
        %v1465 = vsub.f32 %v1463, %v1464
        %v1466 = vand.u32 %v1465, 4294901760
        %1467 = vmatmul.f32.gmra.mxu0 %v1466
        %v1468 = vpop.f32.mrf.mxu0
        %v1469 = vadd.f32 0.0, %v1468
        %v1470 = vand.u32 %v1050, 4294901760
        %v1471 = vsub.f32 %v1050, %v1470
        %v1472 = vand.u32 %v1471, 4294901760
        %v1473 = vsub.f32 %v1471, %v1472
        %v1474 = vand.u32 %v1473, 4294901760
        %1475 = vmatmul.f32.gmra.mxu0 %v1474
        %v1476 = vpop.f32.mrf.mxu0
        %v1477 = vadd.f32 0.0, %v1476
        %v1478 = vand.u32 %v1054, 4294901760
        %v1479 = vsub.f32 %v1054, %v1478
        %v1480 = vand.u32 %v1479, 4294901760
        %v1481 = vsub.f32 %v1479, %v1480
        %v1482 = vand.u32 %v1481, 4294901760
        %1483 = vmatmul.f32.gmra.mxu0 %v1482
        %v1484 = vpop.f32.mrf.mxu0
        %v1485 = vadd.f32 0.0, %v1484
        %v1486 = vand.u32 %v1058, 4294901760
        %v1487 = vsub.f32 %v1058, %v1486
        %v1488 = vand.u32 %v1487, 4294901760
        %v1489 = vsub.f32 %v1487, %v1488
        %v1490 = vand.u32 %v1489, 4294901760
        %1491 = vmatmul.f32.gmra.mxu0 %v1490
        %v1492 = vpop.f32.mrf.mxu0
        %v1493 = vadd.f32 0.0, %v1492
        %v1494 = vand.u32 %v1062, 4294901760
        %v1495 = vsub.f32 %v1062, %v1494
        %v1496 = vand.u32 %v1495, 4294901760
        %v1497 = vsub.f32 %v1495, %v1496
        %v1498 = vand.u32 %v1497, 4294901760
        %1499 = vmatmul.f32.gmra.mxu0 %v1498
        %v1500 = vpop.f32.mrf.mxu0
        %v1501 = vadd.f32 0.0, %v1500
        %v1502 = vand.u32 %v1066, 4294901760
        %v1503 = vsub.f32 %v1066, %v1502
        %v1504 = vand.u32 %v1503, 4294901760
        %v1505 = vsub.f32 %v1503, %v1504
        %v1506 = vand.u32 %v1505, 4294901760
        %1507 = vmatmul.f32.gmra.mxu0 %v1506
        %v1508 = vpop.f32.mrf.mxu0
        %v1509 = vadd.f32 0.0, %v1508
        %v1510 = vand.u32 %v1070, 4294901760
        %v1511 = vsub.f32 %v1070, %v1510
        %v1512 = vand.u32 %v1511, 4294901760
        %v1513 = vsub.f32 %v1511, %v1512
        %v1514 = vand.u32 %v1513, 4294901760
        %1515 = vmatmul.f32.gmra.mxu0 %v1514
        %v1516 = vpop.f32.mrf.mxu0
        %v1517 = vadd.f32 0.0, %v1516
        %v1518 = vand.u32 %v1074, 4294901760
        %v1519 = vsub.f32 %v1074, %v1518
        %v1520 = vand.u32 %v1519, 4294901760
        %v1521 = vsub.f32 %v1519, %v1520
        %v1522 = vand.u32 %v1521, 4294901760
        %1523 = vmatmul.f32.gmra.mxu0 %v1522
        %v1524 = vpop.f32.mrf.mxu0
        %v1525 = vadd.f32 0.0, %v1524
        %v1526 = vand.u32 %v1078, 4294901760
        %v1527 = vsub.f32 %v1078, %v1526
        %v1528 = vand.u32 %v1527, 4294901760
        %v1529 = vsub.f32 %v1527, %v1528
        %v1530 = vand.u32 %v1529, 4294901760
        %1531 = vmatmul.f32.gmra.mxu0 %v1530
        %v1532 = vpop.f32.mrf.mxu0
        %v1533 = vadd.f32 0.0, %v1532
        %v1534 = vand.u32 %v1082, 4294901760
        %v1535 = vsub.f32 %v1082, %v1534
        %v1536 = vand.u32 %v1535, 4294901760
        %v1537 = vsub.f32 %v1535, %v1536
        %v1538 = vand.u32 %v1537, 4294901760
        %1539 = vmatmul.f32.gmra.mxu0 %v1538
        %v1540 = vpop.f32.mrf.mxu0
        %v1541 = vadd.f32 0.0, %v1540
        %v1542 = vand.u32 %v1086, 4294901760
        %v1543 = vsub.f32 %v1086, %v1542
        %v1544 = vand.u32 %v1543, 4294901760
        %v1545 = vsub.f32 %v1543, %v1544
        %v1546 = vand.u32 %v1545, 4294901760
        %1547 = vmatmul.f32.gmra.mxu0 %v1546
        %v1548 = vpop.f32.mrf.mxu0
        %v1549 = vadd.f32 0.0, %v1548
        %v1550 = vand.u32 %v1090, 4294901760
        %v1551 = vsub.f32 %v1090, %v1550
        %v1552 = vand.u32 %v1551, 4294901760
        %v1553 = vsub.f32 %v1551, %v1552
        %v1554 = vand.u32 %v1553, 4294901760
        %1555 = vmatmul.f32.gmra.mxu0 %v1554
        %v1556 = vpop.f32.mrf.mxu0
        %v1557 = vadd.f32 0.0, %v1556
        %v1558 = vand.u32 %v1094, 4294901760
        %v1559 = vsub.f32 %v1094, %v1558
        %v1560 = vand.u32 %v1559, 4294901760
        %v1561 = vsub.f32 %v1559, %v1560
        %v1562 = vand.u32 %v1561, 4294901760
        %1563 = vmatmul.f32.gmra.mxu0 %v1562
        %v1564 = vpop.f32.mrf.mxu0
        %v1565 = vadd.f32 0.0, %v1564
        %v1566 = vand.u32 %v1098, 4294901760
        %v1567 = vsub.f32 %v1098, %v1566
        %v1568 = vand.u32 %v1567, 4294901760
        %v1569 = vsub.f32 %v1567, %v1568
        %v1570 = vand.u32 %v1569, 4294901760
        %1571 = vmatmul.f32.gmra.mxu0 %v1570
        %v1572 = vpop.f32.mrf.mxu0
        %v1573 = vadd.f32 0.0, %v1572
        %v1574 = vand.u32 %v1102, 4294901760
        %v1575 = vsub.f32 %v1102, %v1574
        %v1576 = vand.u32 %v1575, 4294901760
        %v1577 = vsub.f32 %v1575, %v1576
        %v1578 = vand.u32 %v1577, 4294901760
        %1579 = vmatmul.f32.gmra.mxu0 %v1578
        %v1580 = vpop.f32.mrf.mxu0
        %v1581 = vadd.f32 0.0, %v1580
        %v1582 = vand.u32 %v1106, 4294901760
        %v1583 = vsub.f32 %v1106, %v1582
        %v1584 = vand.u32 %v1583, 4294901760
        %v1585 = vsub.f32 %v1583, %v1584
        %v1586 = vand.u32 %v1585, 4294901760
        %1587 = vmatmul.f32.gmra.mxu0 %v1586
        %v1588 = vpop.f32.mrf.mxu0
        %v1589 = vadd.f32 0.0, %v1588
        %1590 = vdwg.mxu0
        %v1591 = vand.u32 %v1125, 4294901760
        %v1592 = vsub.f32 %v1125, %v1591
        %v1593 = vand.u32 %v1592, 4294901760
        %v1594 = vsub.f32 %v1592, %v1593
        %v1595 = vand.u32 %v1594, 4294901760
        %1596 = vmatpush.msra.mxu0 %v1595
        %v1597 = vand.u32 %v1124, 4294901760
        %v1598 = vsub.f32 %v1124, %v1597
        %v1599 = vand.u32 %v1598, 4294901760
        %v1600 = vsub.f32 %v1598, %v1599
        %v1601 = vand.u32 %v1600, 4294901760
        %1602 = vmatpush.msra.mxu0 %v1601
        %v1603 = vand.u32 %v1123, 4294901760
        %v1604 = vsub.f32 %v1123, %v1603
        %v1605 = vand.u32 %v1604, 4294901760
        %v1606 = vsub.f32 %v1604, %v1605
        %v1607 = vand.u32 %v1606, 4294901760
        %1608 = vmatpush.msra.mxu0 %v1607
        %v1609 = vand.u32 %v1122, 4294901760
        %v1610 = vsub.f32 %v1122, %v1609
        %v1611 = vand.u32 %v1610, 4294901760
        %v1612 = vsub.f32 %v1610, %v1611
        %v1613 = vand.u32 %v1612, 4294901760
        %1614 = vmatpush.msra.mxu0 %v1613
        %v1615 = vand.u32 %v1121, 4294901760
        %v1616 = vsub.f32 %v1121, %v1615
        %v1617 = vand.u32 %v1616, 4294901760
        %v1618 = vsub.f32 %v1616, %v1617
        %v1619 = vand.u32 %v1618, 4294901760
        %1620 = vmatpush.msra.mxu0 %v1619
        %v1621 = vand.u32 %v1120, 4294901760
        %v1622 = vsub.f32 %v1120, %v1621
        %v1623 = vand.u32 %v1622, 4294901760
        %v1624 = vsub.f32 %v1622, %v1623
        %v1625 = vand.u32 %v1624, 4294901760
        %1626 = vmatpush.msra.mxu0 %v1625
        %v1627 = vand.u32 %v1119, 4294901760
        %v1628 = vsub.f32 %v1119, %v1627
        %v1629 = vand.u32 %v1628, 4294901760
        %v1630 = vsub.f32 %v1628, %v1629
        %v1631 = vand.u32 %v1630, 4294901760
        %1632 = vmatpush.msra.mxu0 %v1631
        %v1633 = vand.u32 %v1118, 4294901760
        %v1634 = vsub.f32 %v1118, %v1633
        %v1635 = vand.u32 %v1634, 4294901760
        %v1636 = vsub.f32 %v1634, %v1635
        %v1637 = vand.u32 %v1636, 4294901760
        %1638 = vmatpush.msra.mxu0 %v1637
        %v1639 = vand.u32 %v1117, 4294901760
        %v1640 = vsub.f32 %v1117, %v1639
        %v1641 = vand.u32 %v1640, 4294901760
        %v1642 = vsub.f32 %v1640, %v1641
        %v1643 = vand.u32 %v1642, 4294901760
        %1644 = vmatpush.msra.mxu0 %v1643
        %v1645 = vand.u32 %v1116, 4294901760
        %v1646 = vsub.f32 %v1116, %v1645
        %v1647 = vand.u32 %v1646, 4294901760
        %v1648 = vsub.f32 %v1646, %v1647
        %v1649 = vand.u32 %v1648, 4294901760
        %1650 = vmatpush.msra.mxu0 %v1649
        %v1651 = vand.u32 %v1115, 4294901760
        %v1652 = vsub.f32 %v1115, %v1651
        %v1653 = vand.u32 %v1652, 4294901760
        %v1654 = vsub.f32 %v1652, %v1653
        %v1655 = vand.u32 %v1654, 4294901760
        %1656 = vmatpush.msra.mxu0 %v1655
        %v1657 = vand.u32 %v1114, 4294901760
        %v1658 = vsub.f32 %v1114, %v1657
        %v1659 = vand.u32 %v1658, 4294901760
        %v1660 = vsub.f32 %v1658, %v1659
        %v1661 = vand.u32 %v1660, 4294901760
        %1662 = vmatpush.msra.mxu0 %v1661
        %v1663 = vand.u32 %v1113, 4294901760
        %v1664 = vsub.f32 %v1113, %v1663
        %v1665 = vand.u32 %v1664, 4294901760
        %v1666 = vsub.f32 %v1664, %v1665
        %v1667 = vand.u32 %v1666, 4294901760
        %1668 = vmatpush.msra.mxu0 %v1667
        %v1669 = vand.u32 %v1112, 4294901760
        %v1670 = vsub.f32 %v1112, %v1669
        %v1671 = vand.u32 %v1670, 4294901760
        %v1672 = vsub.f32 %v1670, %v1671
        %v1673 = vand.u32 %v1672, 4294901760
        %1674 = vmatpush.msra.mxu0 %v1673
        %v1675 = vand.u32 %v1111, 4294901760
        %v1676 = vsub.f32 %v1111, %v1675
        %v1677 = vand.u32 %v1676, 4294901760
        %v1678 = vsub.f32 %v1676, %v1677
        %v1679 = vand.u32 %v1678, 4294901760
        %1680 = vmatpush.msra.mxu0 %v1679
        %v1681 = vand.u32 %v1110, 4294901760
        %v1682 = vsub.f32 %v1110, %v1681
        %v1683 = vand.u32 %v1682, 4294901760
        %v1684 = vsub.f32 %v1682, %v1683
        %v1685 = vand.u32 %v1684, 4294901760
        %1686 = vmatpush.msra.mxu0 %v1685
        %v1687 = vand.u32 %v918, 4294901760
        %1688 = vmatmul.f32.gmra.mxu0 %v1687
        %v1689 = vpop.f32.mrf.mxu0
        %v1690 = vadd.f32 %v1213, %v1689
        %v1691 = vand.u32 %v922, 4294901760
        %1692 = vmatmul.f32.gmra.mxu0 %v1691
        %v1693 = vpop.f32.mrf.mxu0
        %v1694 = vadd.f32 %v1221, %v1693
        %v1695 = vand.u32 %v926, 4294901760
        %1696 = vmatmul.f32.gmra.mxu0 %v1695
        %v1697 = vpop.f32.mrf.mxu0
        %v1698 = vadd.f32 %v1229, %v1697
        %v1699 = vand.u32 %v930, 4294901760
        %1700 = vmatmul.f32.gmra.mxu0 %v1699
        %v1701 = vpop.f32.mrf.mxu0
        %v1702 = vadd.f32 %v1237, %v1701
        %v1703 = vand.u32 %v934, 4294901760
        %1704 = vmatmul.f32.gmra.mxu0 %v1703
        %v1705 = vpop.f32.mrf.mxu0
        %v1706 = vadd.f32 %v1245, %v1705
        %v1707 = vand.u32 %v938, 4294901760
        %1708 = vmatmul.f32.gmra.mxu0 %v1707
        %v1709 = vpop.f32.mrf.mxu0
        %v1710 = vadd.f32 %v1253, %v1709
        %v1711 = vand.u32 %v942, 4294901760
        %1712 = vmatmul.f32.gmra.mxu0 %v1711
        %v1713 = vpop.f32.mrf.mxu0
        %v1714 = vadd.f32 %v1261, %v1713
        %v1715 = vand.u32 %v946, 4294901760
        %1716 = vmatmul.f32.gmra.mxu0 %v1715
        %v1717 = vpop.f32.mrf.mxu0
        %v1718 = vadd.f32 %v1269, %v1717
        %v1719 = vand.u32 %v950, 4294901760
        %1720 = vmatmul.f32.gmra.mxu0 %v1719
        %v1721 = vpop.f32.mrf.mxu0
        %v1722 = vadd.f32 %v1277, %v1721
        %v1723 = vand.u32 %v954, 4294901760
        %1724 = vmatmul.f32.gmra.mxu0 %v1723
        %v1725 = vpop.f32.mrf.mxu0
        %v1726 = vadd.f32 %v1285, %v1725
        %v1727 = vand.u32 %v958, 4294901760
        %1728 = vmatmul.f32.gmra.mxu0 %v1727
        %v1729 = vpop.f32.mrf.mxu0
        %v1730 = vadd.f32 %v1293, %v1729
        %v1731 = vand.u32 %v962, 4294901760
        %1732 = vmatmul.f32.gmra.mxu0 %v1731
        %v1733 = vpop.f32.mrf.mxu0
        %v1734 = vadd.f32 %v1301, %v1733
        %v1735 = vand.u32 %v966, 4294901760
        %1736 = vmatmul.f32.gmra.mxu0 %v1735
        %v1737 = vpop.f32.mrf.mxu0
        %v1738 = vadd.f32 %v1309, %v1737
        %v1739 = vand.u32 %v970, 4294901760
        %1740 = vmatmul.f32.gmra.mxu0 %v1739
        %v1741 = vpop.f32.mrf.mxu0
        %v1742 = vadd.f32 %v1317, %v1741
        %v1743 = vand.u32 %v974, 4294901760
        %1744 = vmatmul.f32.gmra.mxu0 %v1743
        %v1745 = vpop.f32.mrf.mxu0
        %v1746 = vadd.f32 %v1325, %v1745
        %v1747 = vand.u32 %v978, 4294901760
        %1748 = vmatmul.f32.gmra.mxu0 %v1747
        %v1749 = vpop.f32.mrf.mxu0
        %v1750 = vadd.f32 %v1333, %v1749
        %v1751 = vand.u32 %v982, 4294901760
        %1752 = vmatmul.f32.gmra.mxu0 %v1751
        %v1753 = vpop.f32.mrf.mxu0
        %v1754 = vadd.f32 %v1341, %v1753
        %v1755 = vand.u32 %v986, 4294901760
        %1756 = vmatmul.f32.gmra.mxu0 %v1755
        %v1757 = vpop.f32.mrf.mxu0
        %v1758 = vadd.f32 %v1349, %v1757
        %v1759 = vand.u32 %v990, 4294901760
        %1760 = vmatmul.f32.gmra.mxu0 %v1759
        %v1761 = vpop.f32.mrf.mxu0
        %v1762 = vadd.f32 %v1357, %v1761
        %v1763 = vand.u32 %v994, 4294901760
        %1764 = vmatmul.f32.gmra.mxu0 %v1763
        %v1765 = vpop.f32.mrf.mxu0
        %v1766 = vadd.f32 %v1365, %v1765
        %v1767 = vand.u32 %v998, 4294901760
        %1768 = vmatmul.f32.gmra.mxu0 %v1767
        %v1769 = vpop.f32.mrf.mxu0
        %v1770 = vadd.f32 %v1373, %v1769
        %v1771 = vand.u32 %v1002, 4294901760
        %1772 = vmatmul.f32.gmra.mxu0 %v1771
        %v1773 = vpop.f32.mrf.mxu0
        %v1774 = vadd.f32 %v1381, %v1773
        %v1775 = vand.u32 %v1006, 4294901760
        %1776 = vmatmul.f32.gmra.mxu0 %v1775
        %v1777 = vpop.f32.mrf.mxu0
        %v1778 = vadd.f32 %v1389, %v1777
        %v1779 = vand.u32 %v1010, 4294901760
        %1780 = vmatmul.f32.gmra.mxu0 %v1779
        %v1781 = vpop.f32.mrf.mxu0
        %v1782 = vadd.f32 %v1397, %v1781
        %v1783 = vand.u32 %v1014, 4294901760
        %1784 = vmatmul.f32.gmra.mxu0 %v1783
        %v1785 = vpop.f32.mrf.mxu0
        %v1786 = vadd.f32 %v1405, %v1785
        %v1787 = vand.u32 %v1018, 4294901760
        %1788 = vmatmul.f32.gmra.mxu0 %v1787
        %v1789 = vpop.f32.mrf.mxu0
        %v1790 = vadd.f32 %v1413, %v1789
        %v1791 = vand.u32 %v1022, 4294901760
        %1792 = vmatmul.f32.gmra.mxu0 %v1791
        %v1793 = vpop.f32.mrf.mxu0
        %v1794 = vadd.f32 %v1421, %v1793
        %v1795 = vand.u32 %v1026, 4294901760
        %1796 = vmatmul.f32.gmra.mxu0 %v1795
        %v1797 = vpop.f32.mrf.mxu0
        %v1798 = vadd.f32 %v1429, %v1797
        %v1799 = vand.u32 %v1030, 4294901760
        %1800 = vmatmul.f32.gmra.mxu0 %v1799
        %v1801 = vpop.f32.mrf.mxu0
        %v1802 = vadd.f32 %v1437, %v1801
        %v1803 = vand.u32 %v1034, 4294901760
        %1804 = vmatmul.f32.gmra.mxu0 %v1803
        %v1805 = vpop.f32.mrf.mxu0
        %v1806 = vadd.f32 %v1445, %v1805
        %v1807 = vand.u32 %v1038, 4294901760
        %1808 = vmatmul.f32.gmra.mxu0 %v1807
        %v1809 = vpop.f32.mrf.mxu0
        %v1810 = vadd.f32 %v1453, %v1809
        %v1811 = vand.u32 %v1042, 4294901760
        %1812 = vmatmul.f32.gmra.mxu0 %v1811
        %v1813 = vpop.f32.mrf.mxu0
        %v1814 = vadd.f32 %v1461, %v1813
        %v1815 = vand.u32 %v1046, 4294901760
        %1816 = vmatmul.f32.gmra.mxu0 %v1815
        %v1817 = vpop.f32.mrf.mxu0
        %v1818 = vadd.f32 %v1469, %v1817
        %v1819 = vand.u32 %v1050, 4294901760
        %1820 = vmatmul.f32.gmra.mxu0 %v1819
        %v1821 = vpop.f32.mrf.mxu0
        %v1822 = vadd.f32 %v1477, %v1821
        %v1823 = vand.u32 %v1054, 4294901760
        %1824 = vmatmul.f32.gmra.mxu0 %v1823
        %v1825 = vpop.f32.mrf.mxu0
        %v1826 = vadd.f32 %v1485, %v1825
        %v1827 = vand.u32 %v1058, 4294901760
        %1828 = vmatmul.f32.gmra.mxu0 %v1827
        %v1829 = vpop.f32.mrf.mxu0
        %v1830 = vadd.f32 %v1493, %v1829
        %v1831 = vand.u32 %v1062, 4294901760
        %1832 = vmatmul.f32.gmra.mxu0 %v1831
        %v1833 = vpop.f32.mrf.mxu0
        %v1834 = vadd.f32 %v1501, %v1833
        %v1835 = vand.u32 %v1066, 4294901760
        %1836 = vmatmul.f32.gmra.mxu0 %v1835
        %v1837 = vpop.f32.mrf.mxu0
        %v1838 = vadd.f32 %v1509, %v1837
        %v1839 = vand.u32 %v1070, 4294901760
        %1840 = vmatmul.f32.gmra.mxu0 %v1839
        %v1841 = vpop.f32.mrf.mxu0
        %v1842 = vadd.f32 %v1517, %v1841
        %v1843 = vand.u32 %v1074, 4294901760
        %1844 = vmatmul.f32.gmra.mxu0 %v1843
        %v1845 = vpop.f32.mrf.mxu0
        %v1846 = vadd.f32 %v1525, %v1845
        %v1847 = vand.u32 %v1078, 4294901760
        %1848 = vmatmul.f32.gmra.mxu0 %v1847
        %v1849 = vpop.f32.mrf.mxu0
        %v1850 = vadd.f32 %v1533, %v1849
        %v1851 = vand.u32 %v1082, 4294901760
        %1852 = vmatmul.f32.gmra.mxu0 %v1851
        %v1853 = vpop.f32.mrf.mxu0
        %v1854 = vadd.f32 %v1541, %v1853
        %v1855 = vand.u32 %v1086, 4294901760
        %1856 = vmatmul.f32.gmra.mxu0 %v1855
        %v1857 = vpop.f32.mrf.mxu0
        %v1858 = vadd.f32 %v1549, %v1857
        %v1859 = vand.u32 %v1090, 4294901760
        %1860 = vmatmul.f32.gmra.mxu0 %v1859
        %v1861 = vpop.f32.mrf.mxu0
        %v1862 = vadd.f32 %v1557, %v1861
        %v1863 = vand.u32 %v1094, 4294901760
        %1864 = vmatmul.f32.gmra.mxu0 %v1863
        %v1865 = vpop.f32.mrf.mxu0
        %v1866 = vadd.f32 %v1565, %v1865
        %v1867 = vand.u32 %v1098, 4294901760
        %1868 = vmatmul.f32.gmra.mxu0 %v1867
        %v1869 = vpop.f32.mrf.mxu0
        %v1870 = vadd.f32 %v1573, %v1869
        %v1871 = vand.u32 %v1102, 4294901760
        %1872 = vmatmul.f32.gmra.mxu0 %v1871
        %v1873 = vpop.f32.mrf.mxu0
        %v1874 = vadd.f32 %v1581, %v1873
        %v1875 = vand.u32 %v1106, 4294901760
        %1876 = vmatmul.f32.gmra.mxu0 %v1875
        %v1877 = vpop.f32.mrf.mxu0
        %v1878 = vadd.f32 %v1589, %v1877
        %1879 = vdwg.mxu0
        %v1880 = vand.u32 %v1125, 4294901760
        %v1881 = vsub.f32 %v1125, %v1880
        %1882 = vmatpush.msra.mxu0 %v1881
        %v1883 = vand.u32 %v1124, 4294901760
        %v1884 = vsub.f32 %v1124, %v1883
        %1885 = vmatpush.msra.mxu0 %v1884
        %v1886 = vand.u32 %v1123, 4294901760
        %v1887 = vsub.f32 %v1123, %v1886
        %1888 = vmatpush.msra.mxu0 %v1887
        %v1889 = vand.u32 %v1122, 4294901760
        %v1890 = vsub.f32 %v1122, %v1889
        %1891 = vmatpush.msra.mxu0 %v1890
        %v1892 = vand.u32 %v1121, 4294901760
        %v1893 = vsub.f32 %v1121, %v1892
        %1894 = vmatpush.msra.mxu0 %v1893
        %v1895 = vand.u32 %v1120, 4294901760
        %v1896 = vsub.f32 %v1120, %v1895
        %1897 = vmatpush.msra.mxu0 %v1896
        %v1898 = vand.u32 %v1119, 4294901760
        %v1899 = vsub.f32 %v1119, %v1898
        %1900 = vmatpush.msra.mxu0 %v1899
        %v1901 = vand.u32 %v1118, 4294901760
        %v1902 = vsub.f32 %v1118, %v1901
        %1903 = vmatpush.msra.mxu0 %v1902
        %v1904 = vand.u32 %v1117, 4294901760
        %v1905 = vsub.f32 %v1117, %v1904
        %1906 = vmatpush.msra.mxu0 %v1905
        %v1907 = vand.u32 %v1116, 4294901760
        %v1908 = vsub.f32 %v1116, %v1907
        %1909 = vmatpush.msra.mxu0 %v1908
        %v1910 = vand.u32 %v1115, 4294901760
        %v1911 = vsub.f32 %v1115, %v1910
        %1912 = vmatpush.msra.mxu0 %v1911
        %v1913 = vand.u32 %v1114, 4294901760
        %v1914 = vsub.f32 %v1114, %v1913
        %1915 = vmatpush.msra.mxu0 %v1914
        %v1916 = vand.u32 %v1113, 4294901760
        %v1917 = vsub.f32 %v1113, %v1916
        %1918 = vmatpush.msra.mxu0 %v1917
        %v1919 = vand.u32 %v1112, 4294901760
        %v1920 = vsub.f32 %v1112, %v1919
        %1921 = vmatpush.msra.mxu0 %v1920
        %v1922 = vand.u32 %v1111, 4294901760
        %v1923 = vsub.f32 %v1111, %v1922
        %1924 = vmatpush.msra.mxu0 %v1923
        %v1925 = vand.u32 %v1110, 4294901760
        %v1926 = vsub.f32 %v1110, %v1925
        %1927 = vmatpush.msra.mxu0 %v1926
        %v1928 = vand.u32 %v918, 4294901760
        %v1929 = vsub.f32 %v918, %v1928
        %1930 = vmatmul.f32.gmra.mxu0 %v1929
        %v1931 = vpop.f32.mrf.mxu0
        %v1932 = vadd.f32 %v1690, %v1931
        %v1933 = vand.u32 %v922, 4294901760
        %v1934 = vsub.f32 %v922, %v1933
        %1935 = vmatmul.f32.gmra.mxu0 %v1934
        %v1936 = vpop.f32.mrf.mxu0
        %v1937 = vadd.f32 %v1694, %v1936
        %v1938 = vand.u32 %v926, 4294901760
        %v1939 = vsub.f32 %v926, %v1938
        %1940 = vmatmul.f32.gmra.mxu0 %v1939
        %v1941 = vpop.f32.mrf.mxu0
        %v1942 = vadd.f32 %v1698, %v1941
        %v1943 = vand.u32 %v930, 4294901760
        %v1944 = vsub.f32 %v930, %v1943
        %1945 = vmatmul.f32.gmra.mxu0 %v1944
        %v1946 = vpop.f32.mrf.mxu0
        %v1947 = vadd.f32 %v1702, %v1946
        %v1948 = vand.u32 %v934, 4294901760
        %v1949 = vsub.f32 %v934, %v1948
        %1950 = vmatmul.f32.gmra.mxu0 %v1949
        %v1951 = vpop.f32.mrf.mxu0
        %v1952 = vadd.f32 %v1706, %v1951
        %v1953 = vand.u32 %v938, 4294901760
        %v1954 = vsub.f32 %v938, %v1953
        %1955 = vmatmul.f32.gmra.mxu0 %v1954
        %v1956 = vpop.f32.mrf.mxu0
        %v1957 = vadd.f32 %v1710, %v1956
        %v1958 = vand.u32 %v942, 4294901760
        %v1959 = vsub.f32 %v942, %v1958
        %1960 = vmatmul.f32.gmra.mxu0 %v1959
        %v1961 = vpop.f32.mrf.mxu0
        %v1962 = vadd.f32 %v1714, %v1961
        %v1963 = vand.u32 %v946, 4294901760
        %v1964 = vsub.f32 %v946, %v1963
        %1965 = vmatmul.f32.gmra.mxu0 %v1964
        %v1966 = vpop.f32.mrf.mxu0
        %v1967 = vadd.f32 %v1718, %v1966
        %v1968 = vand.u32 %v950, 4294901760
        %v1969 = vsub.f32 %v950, %v1968
        %1970 = vmatmul.f32.gmra.mxu0 %v1969
        %v1971 = vpop.f32.mrf.mxu0
        %v1972 = vadd.f32 %v1722, %v1971
        %v1973 = vand.u32 %v954, 4294901760
        %v1974 = vsub.f32 %v954, %v1973
        %1975 = vmatmul.f32.gmra.mxu0 %v1974
        %v1976 = vpop.f32.mrf.mxu0
        %v1977 = vadd.f32 %v1726, %v1976
        %v1978 = vand.u32 %v958, 4294901760
        %v1979 = vsub.f32 %v958, %v1978
        %1980 = vmatmul.f32.gmra.mxu0 %v1979
        %v1981 = vpop.f32.mrf.mxu0
        %v1982 = vadd.f32 %v1730, %v1981
        %v1983 = vand.u32 %v962, 4294901760
        %v1984 = vsub.f32 %v962, %v1983
        %1985 = vmatmul.f32.gmra.mxu0 %v1984
        %v1986 = vpop.f32.mrf.mxu0
        %v1987 = vadd.f32 %v1734, %v1986
        %v1988 = vand.u32 %v966, 4294901760
        %v1989 = vsub.f32 %v966, %v1988
        %1990 = vmatmul.f32.gmra.mxu0 %v1989
        %v1991 = vpop.f32.mrf.mxu0
        %v1992 = vadd.f32 %v1738, %v1991
        %v1993 = vand.u32 %v970, 4294901760
        %v1994 = vsub.f32 %v970, %v1993
        %1995 = vmatmul.f32.gmra.mxu0 %v1994
        %v1996 = vpop.f32.mrf.mxu0
        %v1997 = vadd.f32 %v1742, %v1996
        %v1998 = vand.u32 %v974, 4294901760
        %v1999 = vsub.f32 %v974, %v1998
        %2000 = vmatmul.f32.gmra.mxu0 %v1999
        %v2001 = vpop.f32.mrf.mxu0
        %v2002 = vadd.f32 %v1746, %v2001
        %v2003 = vand.u32 %v978, 4294901760
        %v2004 = vsub.f32 %v978, %v2003
        %2005 = vmatmul.f32.gmra.mxu0 %v2004
        %v2006 = vpop.f32.mrf.mxu0
        %v2007 = vadd.f32 %v1750, %v2006
        %v2008 = vand.u32 %v982, 4294901760
        %v2009 = vsub.f32 %v982, %v2008
        %2010 = vmatmul.f32.gmra.mxu0 %v2009
        %v2011 = vpop.f32.mrf.mxu0
        %v2012 = vadd.f32 %v1754, %v2011
        %v2013 = vand.u32 %v986, 4294901760
        %v2014 = vsub.f32 %v986, %v2013
        %2015 = vmatmul.f32.gmra.mxu0 %v2014
        %v2016 = vpop.f32.mrf.mxu0
        %v2017 = vadd.f32 %v1758, %v2016
        %v2018 = vand.u32 %v990, 4294901760
        %v2019 = vsub.f32 %v990, %v2018
        %2020 = vmatmul.f32.gmra.mxu0 %v2019
        %v2021 = vpop.f32.mrf.mxu0
        %v2022 = vadd.f32 %v1762, %v2021
        %v2023 = vand.u32 %v994, 4294901760
        %v2024 = vsub.f32 %v994, %v2023
        %2025 = vmatmul.f32.gmra.mxu0 %v2024
        %v2026 = vpop.f32.mrf.mxu0
        %v2027 = vadd.f32 %v1766, %v2026
        %v2028 = vand.u32 %v998, 4294901760
        %v2029 = vsub.f32 %v998, %v2028
        %2030 = vmatmul.f32.gmra.mxu0 %v2029
        %v2031 = vpop.f32.mrf.mxu0
        %v2032 = vadd.f32 %v1770, %v2031
        %v2033 = vand.u32 %v1002, 4294901760
        %v2034 = vsub.f32 %v1002, %v2033
        %2035 = vmatmul.f32.gmra.mxu0 %v2034
        %v2036 = vpop.f32.mrf.mxu0
        %v2037 = vadd.f32 %v1774, %v2036
        %v2038 = vand.u32 %v1006, 4294901760
        %v2039 = vsub.f32 %v1006, %v2038
        %2040 = vmatmul.f32.gmra.mxu0 %v2039
        %v2041 = vpop.f32.mrf.mxu0
        %v2042 = vadd.f32 %v1778, %v2041
        %v2043 = vand.u32 %v1010, 4294901760
        %v2044 = vsub.f32 %v1010, %v2043
        %2045 = vmatmul.f32.gmra.mxu0 %v2044
        %v2046 = vpop.f32.mrf.mxu0
        %v2047 = vadd.f32 %v1782, %v2046
        %v2048 = vand.u32 %v1014, 4294901760
        %v2049 = vsub.f32 %v1014, %v2048
        %2050 = vmatmul.f32.gmra.mxu0 %v2049
        %v2051 = vpop.f32.mrf.mxu0
        %v2052 = vadd.f32 %v1786, %v2051
        %v2053 = vand.u32 %v1018, 4294901760
        %v2054 = vsub.f32 %v1018, %v2053
        %2055 = vmatmul.f32.gmra.mxu0 %v2054
        %v2056 = vpop.f32.mrf.mxu0
        %v2057 = vadd.f32 %v1790, %v2056
        %v2058 = vand.u32 %v1022, 4294901760
        %v2059 = vsub.f32 %v1022, %v2058
        %2060 = vmatmul.f32.gmra.mxu0 %v2059
        %v2061 = vpop.f32.mrf.mxu0
        %v2062 = vadd.f32 %v1794, %v2061
        %v2063 = vand.u32 %v1026, 4294901760
        %v2064 = vsub.f32 %v1026, %v2063
        %2065 = vmatmul.f32.gmra.mxu0 %v2064
        %v2066 = vpop.f32.mrf.mxu0
        %v2067 = vadd.f32 %v1798, %v2066
        %v2068 = vand.u32 %v1030, 4294901760
        %v2069 = vsub.f32 %v1030, %v2068
        %2070 = vmatmul.f32.gmra.mxu0 %v2069
        %v2071 = vpop.f32.mrf.mxu0
        %v2072 = vadd.f32 %v1802, %v2071
        %v2073 = vand.u32 %v1034, 4294901760
        %v2074 = vsub.f32 %v1034, %v2073
        %2075 = vmatmul.f32.gmra.mxu0 %v2074
        %v2076 = vpop.f32.mrf.mxu0
        %v2077 = vadd.f32 %v1806, %v2076
        %v2078 = vand.u32 %v1038, 4294901760
        %v2079 = vsub.f32 %v1038, %v2078
        %2080 = vmatmul.f32.gmra.mxu0 %v2079
        %v2081 = vpop.f32.mrf.mxu0
        %v2082 = vadd.f32 %v1810, %v2081
        %v2083 = vand.u32 %v1042, 4294901760
        %v2084 = vsub.f32 %v1042, %v2083
        %2085 = vmatmul.f32.gmra.mxu0 %v2084
        %v2086 = vpop.f32.mrf.mxu0
        %v2087 = vadd.f32 %v1814, %v2086
        %v2088 = vand.u32 %v1046, 4294901760
        %v2089 = vsub.f32 %v1046, %v2088
        %2090 = vmatmul.f32.gmra.mxu0 %v2089
        %v2091 = vpop.f32.mrf.mxu0
        %v2092 = vadd.f32 %v1818, %v2091
        %v2093 = vand.u32 %v1050, 4294901760
        %v2094 = vsub.f32 %v1050, %v2093
        %2095 = vmatmul.f32.gmra.mxu0 %v2094
        %v2096 = vpop.f32.mrf.mxu0
        %v2097 = vadd.f32 %v1822, %v2096
        %v2098 = vand.u32 %v1054, 4294901760
        %v2099 = vsub.f32 %v1054, %v2098
        %2100 = vmatmul.f32.gmra.mxu0 %v2099
        %v2101 = vpop.f32.mrf.mxu0
        %v2102 = vadd.f32 %v1826, %v2101
        %v2103 = vand.u32 %v1058, 4294901760
        %v2104 = vsub.f32 %v1058, %v2103
        %2105 = vmatmul.f32.gmra.mxu0 %v2104
        %v2106 = vpop.f32.mrf.mxu0
        %v2107 = vadd.f32 %v1830, %v2106
        %v2108 = vand.u32 %v1062, 4294901760
        %v2109 = vsub.f32 %v1062, %v2108
        %2110 = vmatmul.f32.gmra.mxu0 %v2109
        %v2111 = vpop.f32.mrf.mxu0
        %v2112 = vadd.f32 %v1834, %v2111
        %v2113 = vand.u32 %v1066, 4294901760
        %v2114 = vsub.f32 %v1066, %v2113
        %2115 = vmatmul.f32.gmra.mxu0 %v2114
        %v2116 = vpop.f32.mrf.mxu0
        %v2117 = vadd.f32 %v1838, %v2116
        %v2118 = vand.u32 %v1070, 4294901760
        %v2119 = vsub.f32 %v1070, %v2118
        %2120 = vmatmul.f32.gmra.mxu0 %v2119
        %v2121 = vpop.f32.mrf.mxu0
        %v2122 = vadd.f32 %v1842, %v2121
        %v2123 = vand.u32 %v1074, 4294901760
        %v2124 = vsub.f32 %v1074, %v2123
        %2125 = vmatmul.f32.gmra.mxu0 %v2124
        %v2126 = vpop.f32.mrf.mxu0
        %v2127 = vadd.f32 %v1846, %v2126
        %v2128 = vand.u32 %v1078, 4294901760
        %v2129 = vsub.f32 %v1078, %v2128
        %2130 = vmatmul.f32.gmra.mxu0 %v2129
        %v2131 = vpop.f32.mrf.mxu0
        %v2132 = vadd.f32 %v1850, %v2131
        %v2133 = vand.u32 %v1082, 4294901760
        %v2134 = vsub.f32 %v1082, %v2133
        %2135 = vmatmul.f32.gmra.mxu0 %v2134
        %v2136 = vpop.f32.mrf.mxu0
        %v2137 = vadd.f32 %v1854, %v2136
        %v2138 = vand.u32 %v1086, 4294901760
        %v2139 = vsub.f32 %v1086, %v2138
        %2140 = vmatmul.f32.gmra.mxu0 %v2139
        %v2141 = vpop.f32.mrf.mxu0
        %v2142 = vadd.f32 %v1858, %v2141
        %v2143 = vand.u32 %v1090, 4294901760
        %v2144 = vsub.f32 %v1090, %v2143
        %2145 = vmatmul.f32.gmra.mxu0 %v2144
        %v2146 = vpop.f32.mrf.mxu0
        %v2147 = vadd.f32 %v1862, %v2146
        %v2148 = vand.u32 %v1094, 4294901760
        %v2149 = vsub.f32 %v1094, %v2148
        %2150 = vmatmul.f32.gmra.mxu0 %v2149
        %v2151 = vpop.f32.mrf.mxu0
        %v2152 = vadd.f32 %v1866, %v2151
        %v2153 = vand.u32 %v1098, 4294901760
        %v2154 = vsub.f32 %v1098, %v2153
        %2155 = vmatmul.f32.gmra.mxu0 %v2154
        %v2156 = vpop.f32.mrf.mxu0
        %v2157 = vadd.f32 %v1870, %v2156
        %v2158 = vand.u32 %v1102, 4294901760
        %v2159 = vsub.f32 %v1102, %v2158
        %2160 = vmatmul.f32.gmra.mxu0 %v2159
        %v2161 = vpop.f32.mrf.mxu0
        %v2162 = vadd.f32 %v1874, %v2161
        %v2163 = vand.u32 %v1106, 4294901760
        %v2164 = vsub.f32 %v1106, %v2163
        %2165 = vmatmul.f32.gmra.mxu0 %v2164
        %v2166 = vpop.f32.mrf.mxu0
        %v2167 = vadd.f32 %v1878, %v2166
        %2168 = vdwg.mxu0
        %v2169 = vand.u32 %v1125, 4294901760
        %2170 = vmatpush.msra.mxu0 %v2169
        %v2171 = vand.u32 %v1124, 4294901760
        %2172 = vmatpush.msra.mxu0 %v2171
        %v2173 = vand.u32 %v1123, 4294901760
        %2174 = vmatpush.msra.mxu0 %v2173
        %v2175 = vand.u32 %v1122, 4294901760
        %2176 = vmatpush.msra.mxu0 %v2175
        %v2177 = vand.u32 %v1121, 4294901760
        %2178 = vmatpush.msra.mxu0 %v2177
        %v2179 = vand.u32 %v1120, 4294901760
        %2180 = vmatpush.msra.mxu0 %v2179
        %v2181 = vand.u32 %v1119, 4294901760
        %2182 = vmatpush.msra.mxu0 %v2181
        %v2183 = vand.u32 %v1118, 4294901760
        %2184 = vmatpush.msra.mxu0 %v2183
        %v2185 = vand.u32 %v1117, 4294901760
        %2186 = vmatpush.msra.mxu0 %v2185
        %v2187 = vand.u32 %v1116, 4294901760
        %2188 = vmatpush.msra.mxu0 %v2187
        %v2189 = vand.u32 %v1115, 4294901760
        %2190 = vmatpush.msra.mxu0 %v2189
        %v2191 = vand.u32 %v1114, 4294901760
        %2192 = vmatpush.msra.mxu0 %v2191
        %v2193 = vand.u32 %v1113, 4294901760
        %2194 = vmatpush.msra.mxu0 %v2193
        %v2195 = vand.u32 %v1112, 4294901760
        %2196 = vmatpush.msra.mxu0 %v2195
        %v2197 = vand.u32 %v1111, 4294901760
        %2198 = vmatpush.msra.mxu0 %v2197
        %v2199 = vand.u32 %v1110, 4294901760
        %2200 = vmatpush.msra.mxu0 %v2199
        %v2201 = vand.u32 %v918, 4294901760
        %v2202 = vsub.f32 %v918, %v2201
        %v2203 = vand.u32 %v2202, 4294901760
        %2204 = vmatmul.f32.gmra.mxu0 %v2203
        %v2205 = vpop.f32.mrf.mxu0
        %v2206 = vadd.f32 %v1932, %v2205
        %v2207 = vand.u32 %v922, 4294901760
        %v2208 = vsub.f32 %v922, %v2207
        %v2209 = vand.u32 %v2208, 4294901760
        %2210 = vmatmul.f32.gmra.mxu0 %v2209
        %v2211 = vpop.f32.mrf.mxu0
        %v2212 = vadd.f32 %v1937, %v2211
        %v2213 = vand.u32 %v926, 4294901760
        %v2214 = vsub.f32 %v926, %v2213
        %v2215 = vand.u32 %v2214, 4294901760
        %2216 = vmatmul.f32.gmra.mxu0 %v2215
        %v2217 = vpop.f32.mrf.mxu0
        %v2218 = vadd.f32 %v1942, %v2217
        %v2219 = vand.u32 %v930, 4294901760
        %v2220 = vsub.f32 %v930, %v2219
        %v2221 = vand.u32 %v2220, 4294901760
        %2222 = vmatmul.f32.gmra.mxu0 %v2221
        %v2223 = vpop.f32.mrf.mxu0
        %v2224 = vadd.f32 %v1947, %v2223
        %v2225 = vand.u32 %v934, 4294901760
        %v2226 = vsub.f32 %v934, %v2225
        %v2227 = vand.u32 %v2226, 4294901760
        %2228 = vmatmul.f32.gmra.mxu0 %v2227
        %v2229 = vpop.f32.mrf.mxu0
        %v2230 = vadd.f32 %v1952, %v2229
        %v2231 = vand.u32 %v938, 4294901760
        %v2232 = vsub.f32 %v938, %v2231
        %v2233 = vand.u32 %v2232, 4294901760
        %2234 = vmatmul.f32.gmra.mxu0 %v2233
        %v2235 = vpop.f32.mrf.mxu0
        %v2236 = vadd.f32 %v1957, %v2235
        %v2237 = vand.u32 %v942, 4294901760
        %v2238 = vsub.f32 %v942, %v2237
        %v2239 = vand.u32 %v2238, 4294901760
        %2240 = vmatmul.f32.gmra.mxu0 %v2239
        %v2241 = vpop.f32.mrf.mxu0
        %v2242 = vadd.f32 %v1962, %v2241
        %v2243 = vand.u32 %v946, 4294901760
        %v2244 = vsub.f32 %v946, %v2243
        %v2245 = vand.u32 %v2244, 4294901760
        %2246 = vmatmul.f32.gmra.mxu0 %v2245
        %v2247 = vpop.f32.mrf.mxu0
        %v2248 = vadd.f32 %v1967, %v2247
        %v2249 = vand.u32 %v950, 4294901760
        %v2250 = vsub.f32 %v950, %v2249
        %v2251 = vand.u32 %v2250, 4294901760
        %2252 = vmatmul.f32.gmra.mxu0 %v2251
        %v2253 = vpop.f32.mrf.mxu0
        %v2254 = vadd.f32 %v1972, %v2253
        %v2255 = vand.u32 %v954, 4294901760
        %v2256 = vsub.f32 %v954, %v2255
        %v2257 = vand.u32 %v2256, 4294901760
        %2258 = vmatmul.f32.gmra.mxu0 %v2257
        %v2259 = vpop.f32.mrf.mxu0
        %v2260 = vadd.f32 %v1977, %v2259
        %v2261 = vand.u32 %v958, 4294901760
        %v2262 = vsub.f32 %v958, %v2261
        %v2263 = vand.u32 %v2262, 4294901760
        %2264 = vmatmul.f32.gmra.mxu0 %v2263
        %v2265 = vpop.f32.mrf.mxu0
        %v2266 = vadd.f32 %v1982, %v2265
        %v2267 = vand.u32 %v962, 4294901760
        %v2268 = vsub.f32 %v962, %v2267
        %v2269 = vand.u32 %v2268, 4294901760
        %2270 = vmatmul.f32.gmra.mxu0 %v2269
        %v2271 = vpop.f32.mrf.mxu0
        %v2272 = vadd.f32 %v1987, %v2271
        %v2273 = vand.u32 %v966, 4294901760
        %v2274 = vsub.f32 %v966, %v2273
        %v2275 = vand.u32 %v2274, 4294901760
        %2276 = vmatmul.f32.gmra.mxu0 %v2275
        %v2277 = vpop.f32.mrf.mxu0
        %v2278 = vadd.f32 %v1992, %v2277
        %v2279 = vand.u32 %v970, 4294901760
        %v2280 = vsub.f32 %v970, %v2279
        %v2281 = vand.u32 %v2280, 4294901760
        %2282 = vmatmul.f32.gmra.mxu0 %v2281
        %v2283 = vpop.f32.mrf.mxu0
        %v2284 = vadd.f32 %v1997, %v2283
        %v2285 = vand.u32 %v974, 4294901760
        %v2286 = vsub.f32 %v974, %v2285
        %v2287 = vand.u32 %v2286, 4294901760
        %2288 = vmatmul.f32.gmra.mxu0 %v2287
        %v2289 = vpop.f32.mrf.mxu0
        %v2290 = vadd.f32 %v2002, %v2289
        %v2291 = vand.u32 %v978, 4294901760
        %v2292 = vsub.f32 %v978, %v2291
        %v2293 = vand.u32 %v2292, 4294901760
        %2294 = vmatmul.f32.gmra.mxu0 %v2293
        %v2295 = vpop.f32.mrf.mxu0
        %v2296 = vadd.f32 %v2007, %v2295
        %v2297 = vand.u32 %v982, 4294901760
        %v2298 = vsub.f32 %v982, %v2297
        %v2299 = vand.u32 %v2298, 4294901760
        %2300 = vmatmul.f32.gmra.mxu0 %v2299
        %v2301 = vpop.f32.mrf.mxu0
        %v2302 = vadd.f32 %v2012, %v2301
        %v2303 = vand.u32 %v986, 4294901760
        %v2304 = vsub.f32 %v986, %v2303
        %v2305 = vand.u32 %v2304, 4294901760
        %2306 = vmatmul.f32.gmra.mxu0 %v2305
        %v2307 = vpop.f32.mrf.mxu0
        %v2308 = vadd.f32 %v2017, %v2307
        %v2309 = vand.u32 %v990, 4294901760
        %v2310 = vsub.f32 %v990, %v2309
        %v2311 = vand.u32 %v2310, 4294901760
        %2312 = vmatmul.f32.gmra.mxu0 %v2311
        %v2313 = vpop.f32.mrf.mxu0
        %v2314 = vadd.f32 %v2022, %v2313
        %v2315 = vand.u32 %v994, 4294901760
        %v2316 = vsub.f32 %v994, %v2315
        %v2317 = vand.u32 %v2316, 4294901760
        %2318 = vmatmul.f32.gmra.mxu0 %v2317
        %v2319 = vpop.f32.mrf.mxu0
        %v2320 = vadd.f32 %v2027, %v2319
        %v2321 = vand.u32 %v998, 4294901760
        %v2322 = vsub.f32 %v998, %v2321
        %v2323 = vand.u32 %v2322, 4294901760
        %2324 = vmatmul.f32.gmra.mxu0 %v2323
        %v2325 = vpop.f32.mrf.mxu0
        %v2326 = vadd.f32 %v2032, %v2325
        %v2327 = vand.u32 %v1002, 4294901760
        %v2328 = vsub.f32 %v1002, %v2327
        %v2329 = vand.u32 %v2328, 4294901760
        %2330 = vmatmul.f32.gmra.mxu0 %v2329
        %v2331 = vpop.f32.mrf.mxu0
        %v2332 = vadd.f32 %v2037, %v2331
        %v2333 = vand.u32 %v1006, 4294901760
        %v2334 = vsub.f32 %v1006, %v2333
        %v2335 = vand.u32 %v2334, 4294901760
        %2336 = vmatmul.f32.gmra.mxu0 %v2335
        %v2337 = vpop.f32.mrf.mxu0
        %v2338 = vadd.f32 %v2042, %v2337
        %v2339 = vand.u32 %v1010, 4294901760
        %v2340 = vsub.f32 %v1010, %v2339
        %v2341 = vand.u32 %v2340, 4294901760
        %2342 = vmatmul.f32.gmra.mxu0 %v2341
        %v2343 = vpop.f32.mrf.mxu0
        %v2344 = vadd.f32 %v2047, %v2343
        %v2345 = vand.u32 %v1014, 4294901760
        %v2346 = vsub.f32 %v1014, %v2345
        %v2347 = vand.u32 %v2346, 4294901760
        %2348 = vmatmul.f32.gmra.mxu0 %v2347
        %v2349 = vpop.f32.mrf.mxu0
        %v2350 = vadd.f32 %v2052, %v2349
        %v2351 = vand.u32 %v1018, 4294901760
        %v2352 = vsub.f32 %v1018, %v2351
        %v2353 = vand.u32 %v2352, 4294901760
        %2354 = vmatmul.f32.gmra.mxu0 %v2353
        %v2355 = vpop.f32.mrf.mxu0
        %v2356 = vadd.f32 %v2057, %v2355
        %v2357 = vand.u32 %v1022, 4294901760
        %v2358 = vsub.f32 %v1022, %v2357
        %v2359 = vand.u32 %v2358, 4294901760
        %2360 = vmatmul.f32.gmra.mxu0 %v2359
        %v2361 = vpop.f32.mrf.mxu0
        %v2362 = vadd.f32 %v2062, %v2361
        %v2363 = vand.u32 %v1026, 4294901760
        %v2364 = vsub.f32 %v1026, %v2363
        %v2365 = vand.u32 %v2364, 4294901760
        %2366 = vmatmul.f32.gmra.mxu0 %v2365
        %v2367 = vpop.f32.mrf.mxu0
        %v2368 = vadd.f32 %v2067, %v2367
        %v2369 = vand.u32 %v1030, 4294901760
        %v2370 = vsub.f32 %v1030, %v2369
        %v2371 = vand.u32 %v2370, 4294901760
        %2372 = vmatmul.f32.gmra.mxu0 %v2371
        %v2373 = vpop.f32.mrf.mxu0
        %v2374 = vadd.f32 %v2072, %v2373
        %v2375 = vand.u32 %v1034, 4294901760
        %v2376 = vsub.f32 %v1034, %v2375
        %v2377 = vand.u32 %v2376, 4294901760
        %2378 = vmatmul.f32.gmra.mxu0 %v2377
        %v2379 = vpop.f32.mrf.mxu0
        %v2380 = vadd.f32 %v2077, %v2379
        %v2381 = vand.u32 %v1038, 4294901760
        %v2382 = vsub.f32 %v1038, %v2381
        %v2383 = vand.u32 %v2382, 4294901760
        %2384 = vmatmul.f32.gmra.mxu0 %v2383
        %v2385 = vpop.f32.mrf.mxu0
        %v2386 = vadd.f32 %v2082, %v2385
        %v2387 = vand.u32 %v1042, 4294901760
        %v2388 = vsub.f32 %v1042, %v2387
        %v2389 = vand.u32 %v2388, 4294901760
        %2390 = vmatmul.f32.gmra.mxu0 %v2389
        %v2391 = vpop.f32.mrf.mxu0
        %v2392 = vadd.f32 %v2087, %v2391
        %v2393 = vand.u32 %v1046, 4294901760
        %v2394 = vsub.f32 %v1046, %v2393
        %v2395 = vand.u32 %v2394, 4294901760
        %2396 = vmatmul.f32.gmra.mxu0 %v2395
        %v2397 = vpop.f32.mrf.mxu0
        %v2398 = vadd.f32 %v2092, %v2397
        %v2399 = vand.u32 %v1050, 4294901760
        %v2400 = vsub.f32 %v1050, %v2399
        %v2401 = vand.u32 %v2400, 4294901760
        %2402 = vmatmul.f32.gmra.mxu0 %v2401
        %v2403 = vpop.f32.mrf.mxu0
        %v2404 = vadd.f32 %v2097, %v2403
        %v2405 = vand.u32 %v1054, 4294901760
        %v2406 = vsub.f32 %v1054, %v2405
        %v2407 = vand.u32 %v2406, 4294901760
        %2408 = vmatmul.f32.gmra.mxu0 %v2407
        %v2409 = vpop.f32.mrf.mxu0
        %v2410 = vadd.f32 %v2102, %v2409
        %v2411 = vand.u32 %v1058, 4294901760
        %v2412 = vsub.f32 %v1058, %v2411
        %v2413 = vand.u32 %v2412, 4294901760
        %2414 = vmatmul.f32.gmra.mxu0 %v2413
        %v2415 = vpop.f32.mrf.mxu0
        %v2416 = vadd.f32 %v2107, %v2415
        %v2417 = vand.u32 %v1062, 4294901760
        %v2418 = vsub.f32 %v1062, %v2417
        %v2419 = vand.u32 %v2418, 4294901760
        %2420 = vmatmul.f32.gmra.mxu0 %v2419
        %v2421 = vpop.f32.mrf.mxu0
        %v2422 = vadd.f32 %v2112, %v2421
        %v2423 = vand.u32 %v1066, 4294901760
        %v2424 = vsub.f32 %v1066, %v2423
        %v2425 = vand.u32 %v2424, 4294901760
        %2426 = vmatmul.f32.gmra.mxu0 %v2425
        %v2427 = vpop.f32.mrf.mxu0
        %v2428 = vadd.f32 %v2117, %v2427
        %v2429 = vand.u32 %v1070, 4294901760
        %v2430 = vsub.f32 %v1070, %v2429
        %v2431 = vand.u32 %v2430, 4294901760
        %2432 = vmatmul.f32.gmra.mxu0 %v2431
        %v2433 = vpop.f32.mrf.mxu0
        %v2434 = vadd.f32 %v2122, %v2433
        %v2435 = vand.u32 %v1074, 4294901760
        %v2436 = vsub.f32 %v1074, %v2435
        %v2437 = vand.u32 %v2436, 4294901760
        %2438 = vmatmul.f32.gmra.mxu0 %v2437
        %v2439 = vpop.f32.mrf.mxu0
        %v2440 = vadd.f32 %v2127, %v2439
        %v2441 = vand.u32 %v1078, 4294901760
        %v2442 = vsub.f32 %v1078, %v2441
        %v2443 = vand.u32 %v2442, 4294901760
        %2444 = vmatmul.f32.gmra.mxu0 %v2443
        %v2445 = vpop.f32.mrf.mxu0
        %v2446 = vadd.f32 %v2132, %v2445
        %v2447 = vand.u32 %v1082, 4294901760
        %v2448 = vsub.f32 %v1082, %v2447
        %v2449 = vand.u32 %v2448, 4294901760
        %2450 = vmatmul.f32.gmra.mxu0 %v2449
        %v2451 = vpop.f32.mrf.mxu0
        %v2452 = vadd.f32 %v2137, %v2451
        %v2453 = vand.u32 %v1086, 4294901760
        %v2454 = vsub.f32 %v1086, %v2453
        %v2455 = vand.u32 %v2454, 4294901760
        %2456 = vmatmul.f32.gmra.mxu0 %v2455
        %v2457 = vpop.f32.mrf.mxu0
        %v2458 = vadd.f32 %v2142, %v2457
        %v2459 = vand.u32 %v1090, 4294901760
        %v2460 = vsub.f32 %v1090, %v2459
        %v2461 = vand.u32 %v2460, 4294901760
        %2462 = vmatmul.f32.gmra.mxu0 %v2461
        %v2463 = vpop.f32.mrf.mxu0
        %v2464 = vadd.f32 %v2147, %v2463
        %v2465 = vand.u32 %v1094, 4294901760
        %v2466 = vsub.f32 %v1094, %v2465
        %v2467 = vand.u32 %v2466, 4294901760
        %2468 = vmatmul.f32.gmra.mxu0 %v2467
        %v2469 = vpop.f32.mrf.mxu0
        %v2470 = vadd.f32 %v2152, %v2469
        %v2471 = vand.u32 %v1098, 4294901760
        %v2472 = vsub.f32 %v1098, %v2471
        %v2473 = vand.u32 %v2472, 4294901760
        %2474 = vmatmul.f32.gmra.mxu0 %v2473
        %v2475 = vpop.f32.mrf.mxu0
        %v2476 = vadd.f32 %v2157, %v2475
        %v2477 = vand.u32 %v1102, 4294901760
        %v2478 = vsub.f32 %v1102, %v2477
        %v2479 = vand.u32 %v2478, 4294901760
        %2480 = vmatmul.f32.gmra.mxu0 %v2479
        %v2481 = vpop.f32.mrf.mxu0
        %v2482 = vadd.f32 %v2162, %v2481
        %v2483 = vand.u32 %v1106, 4294901760
        %v2484 = vsub.f32 %v1106, %v2483
        %v2485 = vand.u32 %v2484, 4294901760
        %2486 = vmatmul.f32.gmra.mxu0 %v2485
        %v2487 = vpop.f32.mrf.mxu0
        %v2488 = vadd.f32 %v2167, %v2487
        %2489 = vdwg.mxu0
        %v2490 = vand.u32 %v1125, 4294901760
        %v2491 = vsub.f32 %v1125, %v2490
        %v2492 = vand.u32 %v2491, 4294901760
        %2493 = vmatpush.msra.mxu0 %v2492
        %v2494 = vand.u32 %v1124, 4294901760
        %v2495 = vsub.f32 %v1124, %v2494
        %v2496 = vand.u32 %v2495, 4294901760
        %2497 = vmatpush.msra.mxu0 %v2496
        %v2498 = vand.u32 %v1123, 4294901760
        %v2499 = vsub.f32 %v1123, %v2498
        %v2500 = vand.u32 %v2499, 4294901760
        %2501 = vmatpush.msra.mxu0 %v2500
        %v2502 = vand.u32 %v1122, 4294901760
        %v2503 = vsub.f32 %v1122, %v2502
        %v2504 = vand.u32 %v2503, 4294901760
        %2505 = vmatpush.msra.mxu0 %v2504
        %v2506 = vand.u32 %v1121, 4294901760
        %v2507 = vsub.f32 %v1121, %v2506
        %v2508 = vand.u32 %v2507, 4294901760
        %2509 = vmatpush.msra.mxu0 %v2508
        %v2510 = vand.u32 %v1120, 4294901760
        %v2511 = vsub.f32 %v1120, %v2510
        %v2512 = vand.u32 %v2511, 4294901760
        %2513 = vmatpush.msra.mxu0 %v2512
        %v2514 = vand.u32 %v1119, 4294901760
        %v2515 = vsub.f32 %v1119, %v2514
        %v2516 = vand.u32 %v2515, 4294901760
        %2517 = vmatpush.msra.mxu0 %v2516
        %v2518 = vand.u32 %v1118, 4294901760
        %v2519 = vsub.f32 %v1118, %v2518
        %v2520 = vand.u32 %v2519, 4294901760
        %2521 = vmatpush.msra.mxu0 %v2520
        %v2522 = vand.u32 %v1117, 4294901760
        %v2523 = vsub.f32 %v1117, %v2522
        %v2524 = vand.u32 %v2523, 4294901760
        %2525 = vmatpush.msra.mxu0 %v2524
        %v2526 = vand.u32 %v1116, 4294901760
        %v2527 = vsub.f32 %v1116, %v2526
        %v2528 = vand.u32 %v2527, 4294901760
        %2529 = vmatpush.msra.mxu0 %v2528
        %v2530 = vand.u32 %v1115, 4294901760
        %v2531 = vsub.f32 %v1115, %v2530
        %v2532 = vand.u32 %v2531, 4294901760
        %2533 = vmatpush.msra.mxu0 %v2532
        %v2534 = vand.u32 %v1114, 4294901760
        %v2535 = vsub.f32 %v1114, %v2534
        %v2536 = vand.u32 %v2535, 4294901760
        %2537 = vmatpush.msra.mxu0 %v2536
        %v2538 = vand.u32 %v1113, 4294901760
        %v2539 = vsub.f32 %v1113, %v2538
        %v2540 = vand.u32 %v2539, 4294901760
        %2541 = vmatpush.msra.mxu0 %v2540
        %v2542 = vand.u32 %v1112, 4294901760
        %v2543 = vsub.f32 %v1112, %v2542
        %v2544 = vand.u32 %v2543, 4294901760
        %2545 = vmatpush.msra.mxu0 %v2544
        %v2546 = vand.u32 %v1111, 4294901760
        %v2547 = vsub.f32 %v1111, %v2546
        %v2548 = vand.u32 %v2547, 4294901760
        %2549 = vmatpush.msra.mxu0 %v2548
        %v2550 = vand.u32 %v1110, 4294901760
        %v2551 = vsub.f32 %v1110, %v2550
        %v2552 = vand.u32 %v2551, 4294901760
        %2553 = vmatpush.msra.mxu0 %v2552
        %v2554 = vand.u32 %v918, 4294901760
        %2555 = vmatmul.f32.gmra.mxu0 %v2554
        %v2556 = vpop.f32.mrf.mxu0
        %v2557 = vadd.f32 %v2206, %v2556
        %v2558 = vand.u32 %v922, 4294901760
        %2559 = vmatmul.f32.gmra.mxu0 %v2558
        %v2560 = vpop.f32.mrf.mxu0
        %v2561 = vadd.f32 %v2212, %v2560
        %v2562 = vand.u32 %v926, 4294901760
        %2563 = vmatmul.f32.gmra.mxu0 %v2562
        %v2564 = vpop.f32.mrf.mxu0
        %v2565 = vadd.f32 %v2218, %v2564
        %v2566 = vand.u32 %v930, 4294901760
        %2567 = vmatmul.f32.gmra.mxu0 %v2566
        %v2568 = vpop.f32.mrf.mxu0
        %v2569 = vadd.f32 %v2224, %v2568
        %v2570 = vand.u32 %v934, 4294901760
        %2571 = vmatmul.f32.gmra.mxu0 %v2570
        %v2572 = vpop.f32.mrf.mxu0
        %v2573 = vadd.f32 %v2230, %v2572
        %v2574 = vand.u32 %v938, 4294901760
        %2575 = vmatmul.f32.gmra.mxu0 %v2574
        %v2576 = vpop.f32.mrf.mxu0
        %v2577 = vadd.f32 %v2236, %v2576
        %v2578 = vand.u32 %v942, 4294901760
        %2579 = vmatmul.f32.gmra.mxu0 %v2578
        %v2580 = vpop.f32.mrf.mxu0
        %v2581 = vadd.f32 %v2242, %v2580
        %v2582 = vand.u32 %v946, 4294901760
        %2583 = vmatmul.f32.gmra.mxu0 %v2582
        %v2584 = vpop.f32.mrf.mxu0
        %v2585 = vadd.f32 %v2248, %v2584
        %v2586 = vand.u32 %v950, 4294901760
        %2587 = vmatmul.f32.gmra.mxu0 %v2586
        %v2588 = vpop.f32.mrf.mxu0
        %v2589 = vadd.f32 %v2254, %v2588
        %v2590 = vand.u32 %v954, 4294901760
        %2591 = vmatmul.f32.gmra.mxu0 %v2590
        %v2592 = vpop.f32.mrf.mxu0
        %v2593 = vadd.f32 %v2260, %v2592
        %v2594 = vand.u32 %v958, 4294901760
        %2595 = vmatmul.f32.gmra.mxu0 %v2594
        %v2596 = vpop.f32.mrf.mxu0
        %v2597 = vadd.f32 %v2266, %v2596
        %v2598 = vand.u32 %v962, 4294901760
        %2599 = vmatmul.f32.gmra.mxu0 %v2598
        %v2600 = vpop.f32.mrf.mxu0
        %v2601 = vadd.f32 %v2272, %v2600
        %v2602 = vand.u32 %v966, 4294901760
        %2603 = vmatmul.f32.gmra.mxu0 %v2602
        %v2604 = vpop.f32.mrf.mxu0
        %v2605 = vadd.f32 %v2278, %v2604
        %v2606 = vand.u32 %v970, 4294901760
        %2607 = vmatmul.f32.gmra.mxu0 %v2606
        %v2608 = vpop.f32.mrf.mxu0
        %v2609 = vadd.f32 %v2284, %v2608
        %v2610 = vand.u32 %v974, 4294901760
        %2611 = vmatmul.f32.gmra.mxu0 %v2610
        %v2612 = vpop.f32.mrf.mxu0
        %v2613 = vadd.f32 %v2290, %v2612
        %v2614 = vand.u32 %v978, 4294901760
        %2615 = vmatmul.f32.gmra.mxu0 %v2614
        %v2616 = vpop.f32.mrf.mxu0
        %v2617 = vadd.f32 %v2296, %v2616
        %v2618 = vand.u32 %v982, 4294901760
        %2619 = vmatmul.f32.gmra.mxu0 %v2618
        %v2620 = vpop.f32.mrf.mxu0
        %v2621 = vadd.f32 %v2302, %v2620
        %v2622 = vand.u32 %v986, 4294901760
        %2623 = vmatmul.f32.gmra.mxu0 %v2622
        %v2624 = vpop.f32.mrf.mxu0
        %v2625 = vadd.f32 %v2308, %v2624
        %v2626 = vand.u32 %v990, 4294901760
        %2627 = vmatmul.f32.gmra.mxu0 %v2626
        %v2628 = vpop.f32.mrf.mxu0
        %v2629 = vadd.f32 %v2314, %v2628
        %v2630 = vand.u32 %v994, 4294901760
        %2631 = vmatmul.f32.gmra.mxu0 %v2630
        %v2632 = vpop.f32.mrf.mxu0
        %v2633 = vadd.f32 %v2320, %v2632
        %v2634 = vand.u32 %v998, 4294901760
        %2635 = vmatmul.f32.gmra.mxu0 %v2634
        %v2636 = vpop.f32.mrf.mxu0
        %v2637 = vadd.f32 %v2326, %v2636
        %v2638 = vand.u32 %v1002, 4294901760
        %2639 = vmatmul.f32.gmra.mxu0 %v2638
        %v2640 = vpop.f32.mrf.mxu0
        %v2641 = vadd.f32 %v2332, %v2640
        %v2642 = vand.u32 %v1006, 4294901760
        %2643 = vmatmul.f32.gmra.mxu0 %v2642
        %v2644 = vpop.f32.mrf.mxu0
        %v2645 = vadd.f32 %v2338, %v2644
        %v2646 = vand.u32 %v1010, 4294901760
        %2647 = vmatmul.f32.gmra.mxu0 %v2646
        %v2648 = vpop.f32.mrf.mxu0
        %v2649 = vadd.f32 %v2344, %v2648
        %v2650 = vand.u32 %v1014, 4294901760
        %2651 = vmatmul.f32.gmra.mxu0 %v2650
        %v2652 = vpop.f32.mrf.mxu0
        %v2653 = vadd.f32 %v2350, %v2652
        %v2654 = vand.u32 %v1018, 4294901760
        %2655 = vmatmul.f32.gmra.mxu0 %v2654
        %v2656 = vpop.f32.mrf.mxu0
        %v2657 = vadd.f32 %v2356, %v2656
        %v2658 = vand.u32 %v1022, 4294901760
        %2659 = vmatmul.f32.gmra.mxu0 %v2658
        %v2660 = vpop.f32.mrf.mxu0
        %v2661 = vadd.f32 %v2362, %v2660
        %v2662 = vand.u32 %v1026, 4294901760
        %2663 = vmatmul.f32.gmra.mxu0 %v2662
        %v2664 = vpop.f32.mrf.mxu0
        %v2665 = vadd.f32 %v2368, %v2664
        %v2666 = vand.u32 %v1030, 4294901760
        %2667 = vmatmul.f32.gmra.mxu0 %v2666
        %v2668 = vpop.f32.mrf.mxu0
        %v2669 = vadd.f32 %v2374, %v2668
        %v2670 = vand.u32 %v1034, 4294901760
        %2671 = vmatmul.f32.gmra.mxu0 %v2670
        %v2672 = vpop.f32.mrf.mxu0
        %v2673 = vadd.f32 %v2380, %v2672
        %v2674 = vand.u32 %v1038, 4294901760
        %2675 = vmatmul.f32.gmra.mxu0 %v2674
        %v2676 = vpop.f32.mrf.mxu0
        %v2677 = vadd.f32 %v2386, %v2676
        %v2678 = vand.u32 %v1042, 4294901760
        %2679 = vmatmul.f32.gmra.mxu0 %v2678
        %v2680 = vpop.f32.mrf.mxu0
        %v2681 = vadd.f32 %v2392, %v2680
        %v2682 = vand.u32 %v1046, 4294901760
        %2683 = vmatmul.f32.gmra.mxu0 %v2682
        %v2684 = vpop.f32.mrf.mxu0
        %v2685 = vadd.f32 %v2398, %v2684
        %v2686 = vand.u32 %v1050, 4294901760
        %2687 = vmatmul.f32.gmra.mxu0 %v2686
        %v2688 = vpop.f32.mrf.mxu0
        %v2689 = vadd.f32 %v2404, %v2688
        %v2690 = vand.u32 %v1054, 4294901760
        %2691 = vmatmul.f32.gmra.mxu0 %v2690
        %v2692 = vpop.f32.mrf.mxu0
        %v2693 = vadd.f32 %v2410, %v2692
        %v2694 = vand.u32 %v1058, 4294901760
        %2695 = vmatmul.f32.gmra.mxu0 %v2694
        %v2696 = vpop.f32.mrf.mxu0
        %v2697 = vadd.f32 %v2416, %v2696
        %v2698 = vand.u32 %v1062, 4294901760
        %2699 = vmatmul.f32.gmra.mxu0 %v2698
        %v2700 = vpop.f32.mrf.mxu0
        %v2701 = vadd.f32 %v2422, %v2700
        %v2702 = vand.u32 %v1066, 4294901760
        %2703 = vmatmul.f32.gmra.mxu0 %v2702
        %v2704 = vpop.f32.mrf.mxu0
        %v2705 = vadd.f32 %v2428, %v2704
        %v2706 = vand.u32 %v1070, 4294901760
        %2707 = vmatmul.f32.gmra.mxu0 %v2706
        %v2708 = vpop.f32.mrf.mxu0
        %v2709 = vadd.f32 %v2434, %v2708
        %v2710 = vand.u32 %v1074, 4294901760
        %2711 = vmatmul.f32.gmra.mxu0 %v2710
        %v2712 = vpop.f32.mrf.mxu0
        %v2713 = vadd.f32 %v2440, %v2712
        %v2714 = vand.u32 %v1078, 4294901760
        %2715 = vmatmul.f32.gmra.mxu0 %v2714
        %v2716 = vpop.f32.mrf.mxu0
        %v2717 = vadd.f32 %v2446, %v2716
        %v2718 = vand.u32 %v1082, 4294901760
        %2719 = vmatmul.f32.gmra.mxu0 %v2718
        %v2720 = vpop.f32.mrf.mxu0
        %v2721 = vadd.f32 %v2452, %v2720
        %v2722 = vand.u32 %v1086, 4294901760
        %2723 = vmatmul.f32.gmra.mxu0 %v2722
        %v2724 = vpop.f32.mrf.mxu0
        %v2725 = vadd.f32 %v2458, %v2724
        %v2726 = vand.u32 %v1090, 4294901760
        %2727 = vmatmul.f32.gmra.mxu0 %v2726
        %v2728 = vpop.f32.mrf.mxu0
        %v2729 = vadd.f32 %v2464, %v2728
        %v2730 = vand.u32 %v1094, 4294901760
        %2731 = vmatmul.f32.gmra.mxu0 %v2730
        %v2732 = vpop.f32.mrf.mxu0
        %v2733 = vadd.f32 %v2470, %v2732
        %v2734 = vand.u32 %v1098, 4294901760
        %2735 = vmatmul.f32.gmra.mxu0 %v2734
        %v2736 = vpop.f32.mrf.mxu0
        %v2737 = vadd.f32 %v2476, %v2736
        %v2738 = vand.u32 %v1102, 4294901760
        %2739 = vmatmul.f32.gmra.mxu0 %v2738
        %v2740 = vpop.f32.mrf.mxu0
        %v2741 = vadd.f32 %v2482, %v2740
        %v2742 = vand.u32 %v1106, 4294901760
        %2743 = vmatmul.f32.gmra.mxu0 %v2742
        %v2744 = vpop.f32.mrf.mxu0
        %v2745 = vadd.f32 %v2488, %v2744
        %2746 = vdwg.mxu0
        %v2747 = vand.u32 %v1125, 4294901760
        %2748 = vmatpush.msra.mxu0 %v2747
        %v2749 = vand.u32 %v1124, 4294901760
        %2750 = vmatpush.msra.mxu0 %v2749
        %v2751 = vand.u32 %v1123, 4294901760
        %2752 = vmatpush.msra.mxu0 %v2751
        %v2753 = vand.u32 %v1122, 4294901760
        %2754 = vmatpush.msra.mxu0 %v2753
        %v2755 = vand.u32 %v1121, 4294901760
        %2756 = vmatpush.msra.mxu0 %v2755
        %v2757 = vand.u32 %v1120, 4294901760
        %2758 = vmatpush.msra.mxu0 %v2757
        %v2759 = vand.u32 %v1119, 4294901760
        %2760 = vmatpush.msra.mxu0 %v2759
        %v2761 = vand.u32 %v1118, 4294901760
        %2762 = vmatpush.msra.mxu0 %v2761
        %v2763 = vand.u32 %v1117, 4294901760
        %2764 = vmatpush.msra.mxu0 %v2763
        %v2765 = vand.u32 %v1116, 4294901760
        %2766 = vmatpush.msra.mxu0 %v2765
        %v2767 = vand.u32 %v1115, 4294901760
        %2768 = vmatpush.msra.mxu0 %v2767
        %v2769 = vand.u32 %v1114, 4294901760
        %2770 = vmatpush.msra.mxu0 %v2769
        %v2771 = vand.u32 %v1113, 4294901760
        %2772 = vmatpush.msra.mxu0 %v2771
        %v2773 = vand.u32 %v1112, 4294901760
        %2774 = vmatpush.msra.mxu0 %v2773
        %v2775 = vand.u32 %v1111, 4294901760
        %2776 = vmatpush.msra.mxu0 %v2775
        %v2777 = vand.u32 %v1110, 4294901760
        %2778 = vmatpush.msra.mxu0 %v2777
        %v2779 = vand.u32 %v918, 4294901760
        %2780 = vmatmul.f32.gmra.mxu0 %v2779
        %v2781 = vpop.f32.mrf.mxu0
        %v2782 = vadd.f32 %v2557, %v2781
        %v2783 = vand.u32 %v922, 4294901760
        %2784 = vmatmul.f32.gmra.mxu0 %v2783
        %v2785 = vpop.f32.mrf.mxu0
        %v2786 = vadd.f32 %v2561, %v2785
        %v2787 = vand.u32 %v926, 4294901760
        %2788 = vmatmul.f32.gmra.mxu0 %v2787
        %v2789 = vpop.f32.mrf.mxu0
        %v2790 = vadd.f32 %v2565, %v2789
        %v2791 = vand.u32 %v930, 4294901760
        %2792 = vmatmul.f32.gmra.mxu0 %v2791
        %v2793 = vpop.f32.mrf.mxu0
        %v2794 = vadd.f32 %v2569, %v2793
        %v2795 = vand.u32 %v934, 4294901760
        %2796 = vmatmul.f32.gmra.mxu0 %v2795
        %v2797 = vpop.f32.mrf.mxu0
        %v2798 = vadd.f32 %v2573, %v2797
        %v2799 = vand.u32 %v938, 4294901760
        %2800 = vmatmul.f32.gmra.mxu0 %v2799
        %v2801 = vpop.f32.mrf.mxu0
        %v2802 = vadd.f32 %v2577, %v2801
        %v2803 = vand.u32 %v942, 4294901760
        %2804 = vmatmul.f32.gmra.mxu0 %v2803
        %v2805 = vpop.f32.mrf.mxu0
        %v2806 = vadd.f32 %v2581, %v2805
        %v2807 = vand.u32 %v946, 4294901760
        %2808 = vmatmul.f32.gmra.mxu0 %v2807
        %v2809 = vpop.f32.mrf.mxu0
        %v2810 = vadd.f32 %v2585, %v2809
        %v2811 = vand.u32 %v950, 4294901760
        %2812 = vmatmul.f32.gmra.mxu0 %v2811
        %v2813 = vpop.f32.mrf.mxu0
        %v2814 = vadd.f32 %v2589, %v2813
        %v2815 = vand.u32 %v954, 4294901760
        %2816 = vmatmul.f32.gmra.mxu0 %v2815
        %v2817 = vpop.f32.mrf.mxu0
        %v2818 = vadd.f32 %v2593, %v2817
        %v2819 = vand.u32 %v958, 4294901760
        %2820 = vmatmul.f32.gmra.mxu0 %v2819
        %v2821 = vpop.f32.mrf.mxu0
        %v2822 = vadd.f32 %v2597, %v2821
        %v2823 = vand.u32 %v962, 4294901760
        %2824 = vmatmul.f32.gmra.mxu0 %v2823
        %v2825 = vpop.f32.mrf.mxu0
        %v2826 = vadd.f32 %v2601, %v2825
        %v2827 = vand.u32 %v966, 4294901760
        %2828 = vmatmul.f32.gmra.mxu0 %v2827
        %v2829 = vpop.f32.mrf.mxu0
        %v2830 = vadd.f32 %v2605, %v2829
        %v2831 = vand.u32 %v970, 4294901760
        %2832 = vmatmul.f32.gmra.mxu0 %v2831
        %v2833 = vpop.f32.mrf.mxu0
        %v2834 = vadd.f32 %v2609, %v2833
        %v2835 = vand.u32 %v974, 4294901760
        %2836 = vmatmul.f32.gmra.mxu0 %v2835
        %v2837 = vpop.f32.mrf.mxu0
        %v2838 = vadd.f32 %v2613, %v2837
        %v2839 = vand.u32 %v978, 4294901760
        %2840 = vmatmul.f32.gmra.mxu0 %v2839
        %v2841 = vpop.f32.mrf.mxu0
        %v2842 = vadd.f32 %v2617, %v2841
        %v2843 = vand.u32 %v982, 4294901760
        %2844 = vmatmul.f32.gmra.mxu0 %v2843
        %v2845 = vpop.f32.mrf.mxu0
        %v2846 = vadd.f32 %v2621, %v2845
        %v2847 = vand.u32 %v986, 4294901760
        %2848 = vmatmul.f32.gmra.mxu0 %v2847
        %v2849 = vpop.f32.mrf.mxu0
        %v2850 = vadd.f32 %v2625, %v2849
        %v2851 = vand.u32 %v990, 4294901760
        %2852 = vmatmul.f32.gmra.mxu0 %v2851
        %v2853 = vpop.f32.mrf.mxu0
        %v2854 = vadd.f32 %v2629, %v2853
        %v2855 = vand.u32 %v994, 4294901760
        %2856 = vmatmul.f32.gmra.mxu0 %v2855
        %v2857 = vpop.f32.mrf.mxu0
        %v2858 = vadd.f32 %v2633, %v2857
        %v2859 = vand.u32 %v998, 4294901760
        %2860 = vmatmul.f32.gmra.mxu0 %v2859
        %v2861 = vpop.f32.mrf.mxu0
        %v2862 = vadd.f32 %v2637, %v2861
        %v2863 = vand.u32 %v1002, 4294901760
        %2864 = vmatmul.f32.gmra.mxu0 %v2863
        %v2865 = vpop.f32.mrf.mxu0
        %v2866 = vadd.f32 %v2641, %v2865
        %v2867 = vand.u32 %v1006, 4294901760
        %2868 = vmatmul.f32.gmra.mxu0 %v2867
        %v2869 = vpop.f32.mrf.mxu0
        %v2870 = vadd.f32 %v2645, %v2869
        %v2871 = vand.u32 %v1010, 4294901760
        %2872 = vmatmul.f32.gmra.mxu0 %v2871
        %v2873 = vpop.f32.mrf.mxu0
        %v2874 = vadd.f32 %v2649, %v2873
        %v2875 = vand.u32 %v1014, 4294901760
        %2876 = vmatmul.f32.gmra.mxu0 %v2875
        %v2877 = vpop.f32.mrf.mxu0
        %v2878 = vadd.f32 %v2653, %v2877
        %v2879 = vand.u32 %v1018, 4294901760
        %2880 = vmatmul.f32.gmra.mxu0 %v2879
        %v2881 = vpop.f32.mrf.mxu0
        %v2882 = vadd.f32 %v2657, %v2881
        %v2883 = vand.u32 %v1022, 4294901760
        %2884 = vmatmul.f32.gmra.mxu0 %v2883
        %v2885 = vpop.f32.mrf.mxu0
        %v2886 = vadd.f32 %v2661, %v2885
        %v2887 = vand.u32 %v1026, 4294901760
        %2888 = vmatmul.f32.gmra.mxu0 %v2887
        %v2889 = vpop.f32.mrf.mxu0
        %v2890 = vadd.f32 %v2665, %v2889
        %v2891 = vand.u32 %v1030, 4294901760
        %2892 = vmatmul.f32.gmra.mxu0 %v2891
        %v2893 = vpop.f32.mrf.mxu0
        %v2894 = vadd.f32 %v2669, %v2893
        %v2895 = vand.u32 %v1034, 4294901760
        %2896 = vmatmul.f32.gmra.mxu0 %v2895
        %v2897 = vpop.f32.mrf.mxu0
        %v2898 = vadd.f32 %v2673, %v2897
        %v2899 = vand.u32 %v1038, 4294901760
        %2900 = vmatmul.f32.gmra.mxu0 %v2899
        %v2901 = vpop.f32.mrf.mxu0
        %v2902 = vadd.f32 %v2677, %v2901
        %v2903 = vand.u32 %v1042, 4294901760
        %2904 = vmatmul.f32.gmra.mxu0 %v2903
        %v2905 = vpop.f32.mrf.mxu0
        %v2906 = vadd.f32 %v2681, %v2905
        %v2907 = vand.u32 %v1046, 4294901760
        %2908 = vmatmul.f32.gmra.mxu0 %v2907
        %v2909 = vpop.f32.mrf.mxu0
        %v2910 = vadd.f32 %v2685, %v2909
        %v2911 = vand.u32 %v1050, 4294901760
        %2912 = vmatmul.f32.gmra.mxu0 %v2911
        %v2913 = vpop.f32.mrf.mxu0
        %v2914 = vadd.f32 %v2689, %v2913
        %v2915 = vand.u32 %v1054, 4294901760
        %2916 = vmatmul.f32.gmra.mxu0 %v2915
        %v2917 = vpop.f32.mrf.mxu0
        %v2918 = vadd.f32 %v2693, %v2917
        %v2919 = vand.u32 %v1058, 4294901760
        %2920 = vmatmul.f32.gmra.mxu0 %v2919
        %v2921 = vpop.f32.mrf.mxu0
        %v2922 = vadd.f32 %v2697, %v2921
        %v2923 = vand.u32 %v1062, 4294901760
        %2924 = vmatmul.f32.gmra.mxu0 %v2923
        %v2925 = vpop.f32.mrf.mxu0
        %v2926 = vadd.f32 %v2701, %v2925
        %v2927 = vand.u32 %v1066, 4294901760
        %2928 = vmatmul.f32.gmra.mxu0 %v2927
        %v2929 = vpop.f32.mrf.mxu0
        %v2930 = vadd.f32 %v2705, %v2929
        %v2931 = vand.u32 %v1070, 4294901760
        %2932 = vmatmul.f32.gmra.mxu0 %v2931
        %v2933 = vpop.f32.mrf.mxu0
        %v2934 = vadd.f32 %v2709, %v2933
        %v2935 = vand.u32 %v1074, 4294901760
        %2936 = vmatmul.f32.gmra.mxu0 %v2935
        %v2937 = vpop.f32.mrf.mxu0
        %v2938 = vadd.f32 %v2713, %v2937
        %v2939 = vand.u32 %v1078, 4294901760
        %2940 = vmatmul.f32.gmra.mxu0 %v2939
        %v2941 = vpop.f32.mrf.mxu0
        %v2942 = vadd.f32 %v2717, %v2941
        %v2943 = vand.u32 %v1082, 4294901760
        %2944 = vmatmul.f32.gmra.mxu0 %v2943
        %v2945 = vpop.f32.mrf.mxu0
        %v2946 = vadd.f32 %v2721, %v2945
        %v2947 = vand.u32 %v1086, 4294901760
        %2948 = vmatmul.f32.gmra.mxu0 %v2947
        %v2949 = vpop.f32.mrf.mxu0
        %v2950 = vadd.f32 %v2725, %v2949
        %v2951 = vand.u32 %v1090, 4294901760
        %2952 = vmatmul.f32.gmra.mxu0 %v2951
        %v2953 = vpop.f32.mrf.mxu0
        %v2954 = vadd.f32 %v2729, %v2953
        %v2955 = vand.u32 %v1094, 4294901760
        %2956 = vmatmul.f32.gmra.mxu0 %v2955
        %v2957 = vpop.f32.mrf.mxu0
        %v2958 = vadd.f32 %v2733, %v2957
        %v2959 = vand.u32 %v1098, 4294901760
        %2960 = vmatmul.f32.gmra.mxu0 %v2959
        %v2961 = vpop.f32.mrf.mxu0
        %v2962 = vadd.f32 %v2737, %v2961
        %v2963 = vand.u32 %v1102, 4294901760
        %2964 = vmatmul.f32.gmra.mxu0 %v2963
        %v2965 = vpop.f32.mrf.mxu0
        %v2966 = vadd.f32 %v2741, %v2965
        %v2967 = vand.u32 %v1106, 4294901760
        %2968 = vmatmul.f32.gmra.mxu0 %v2967
        %v2969 = vpop.f32.mrf.mxu0
        %v2970 = vadd.f32 %v2745, %v2969
        %2971 = vdwg.mxu0
        %v2972 = vand.u32 %v1141, 4294901760
        %2973 = vmatpush.msra.mxu0 %v2972
        %v2974 = vand.u32 %v1140, 4294901760
        %2975 = vmatpush.msra.mxu0 %v2974
        %v2976 = vand.u32 %v1139, 4294901760
        %2977 = vmatpush.msra.mxu0 %v2976
        %v2978 = vand.u32 %v1138, 4294901760
        %2979 = vmatpush.msra.mxu0 %v2978
        %v2980 = vand.u32 %v1137, 4294901760
        %2981 = vmatpush.msra.mxu0 %v2980
        %v2982 = vand.u32 %v1136, 4294901760
        %2983 = vmatpush.msra.mxu0 %v2982
        %v2984 = vand.u32 %v1135, 4294901760
        %2985 = vmatpush.msra.mxu0 %v2984
        %v2986 = vand.u32 %v1134, 4294901760
        %2987 = vmatpush.msra.mxu0 %v2986
        %v2988 = vand.u32 %v1133, 4294901760
        %2989 = vmatpush.msra.mxu0 %v2988
        %v2990 = vand.u32 %v1132, 4294901760
        %2991 = vmatpush.msra.mxu0 %v2990
        %v2992 = vand.u32 %v1131, 4294901760
        %2993 = vmatpush.msra.mxu0 %v2992
        %v2994 = vand.u32 %v1130, 4294901760
        %2995 = vmatpush.msra.mxu0 %v2994
        %v2996 = vand.u32 %v1129, 4294901760
        %2997 = vmatpush.msra.mxu0 %v2996
        %v2998 = vand.u32 %v1128, 4294901760
        %2999 = vmatpush.msra.mxu0 %v2998
        %v3000 = vand.u32 %v1127, 4294901760
        %3001 = vmatpush.msra.mxu0 %v3000
        %v3002 = vand.u32 %v1126, 4294901760
        %3003 = vmatpush.msra.mxu0 %v3002
        %v3004 = vand.u32 %v919, 4294901760
        %v3005 = vsub.f32 %v919, %v3004
        %v3006 = vand.u32 %v3005, 4294901760
        %v3007 = vsub.f32 %v3005, %v3006
        %v3008 = vand.u32 %v3007, 4294901760
        %3009 = vmatmul.f32.gmra.mxu0 %v3008
        %v3010 = vpop.f32.mrf.mxu0
        %v3011 = vadd.f32 %v2782, %v3010
        %v3012 = vand.u32 %v923, 4294901760
        %v3013 = vsub.f32 %v923, %v3012
        %v3014 = vand.u32 %v3013, 4294901760
        %v3015 = vsub.f32 %v3013, %v3014
        %v3016 = vand.u32 %v3015, 4294901760
        %3017 = vmatmul.f32.gmra.mxu0 %v3016
        %v3018 = vpop.f32.mrf.mxu0
        %v3019 = vadd.f32 %v2786, %v3018
        %v3020 = vand.u32 %v927, 4294901760
        %v3021 = vsub.f32 %v927, %v3020
        %v3022 = vand.u32 %v3021, 4294901760
        %v3023 = vsub.f32 %v3021, %v3022
        %v3024 = vand.u32 %v3023, 4294901760
        %3025 = vmatmul.f32.gmra.mxu0 %v3024
        %v3026 = vpop.f32.mrf.mxu0
        %v3027 = vadd.f32 %v2790, %v3026
        %v3028 = vand.u32 %v931, 4294901760
        %v3029 = vsub.f32 %v931, %v3028
        %v3030 = vand.u32 %v3029, 4294901760
        %v3031 = vsub.f32 %v3029, %v3030
        %v3032 = vand.u32 %v3031, 4294901760
        %3033 = vmatmul.f32.gmra.mxu0 %v3032
        %v3034 = vpop.f32.mrf.mxu0
        %v3035 = vadd.f32 %v2794, %v3034
        %v3036 = vand.u32 %v935, 4294901760
        %v3037 = vsub.f32 %v935, %v3036
        %v3038 = vand.u32 %v3037, 4294901760
        %v3039 = vsub.f32 %v3037, %v3038
        %v3040 = vand.u32 %v3039, 4294901760
        %3041 = vmatmul.f32.gmra.mxu0 %v3040
        %v3042 = vpop.f32.mrf.mxu0
        %v3043 = vadd.f32 %v2798, %v3042
        %v3044 = vand.u32 %v939, 4294901760
        %v3045 = vsub.f32 %v939, %v3044
        %v3046 = vand.u32 %v3045, 4294901760
        %v3047 = vsub.f32 %v3045, %v3046
        %v3048 = vand.u32 %v3047, 4294901760
        %3049 = vmatmul.f32.gmra.mxu0 %v3048
        %v3050 = vpop.f32.mrf.mxu0
        %v3051 = vadd.f32 %v2802, %v3050
        %v3052 = vand.u32 %v943, 4294901760
        %v3053 = vsub.f32 %v943, %v3052
        %v3054 = vand.u32 %v3053, 4294901760
        %v3055 = vsub.f32 %v3053, %v3054
        %v3056 = vand.u32 %v3055, 4294901760
        %3057 = vmatmul.f32.gmra.mxu0 %v3056
        %v3058 = vpop.f32.mrf.mxu0
        %v3059 = vadd.f32 %v2806, %v3058
        %v3060 = vand.u32 %v947, 4294901760
        %v3061 = vsub.f32 %v947, %v3060
        %v3062 = vand.u32 %v3061, 4294901760
        %v3063 = vsub.f32 %v3061, %v3062
        %v3064 = vand.u32 %v3063, 4294901760
        %3065 = vmatmul.f32.gmra.mxu0 %v3064
        %v3066 = vpop.f32.mrf.mxu0
        %v3067 = vadd.f32 %v2810, %v3066
        %v3068 = vand.u32 %v951, 4294901760
        %v3069 = vsub.f32 %v951, %v3068
        %v3070 = vand.u32 %v3069, 4294901760
        %v3071 = vsub.f32 %v3069, %v3070
        %v3072 = vand.u32 %v3071, 4294901760
        %3073 = vmatmul.f32.gmra.mxu0 %v3072
        %v3074 = vpop.f32.mrf.mxu0
        %v3075 = vadd.f32 %v2814, %v3074
        %v3076 = vand.u32 %v955, 4294901760
        %v3077 = vsub.f32 %v955, %v3076
        %v3078 = vand.u32 %v3077, 4294901760
        %v3079 = vsub.f32 %v3077, %v3078
        %v3080 = vand.u32 %v3079, 4294901760
        %3081 = vmatmul.f32.gmra.mxu0 %v3080
        %v3082 = vpop.f32.mrf.mxu0
        %v3083 = vadd.f32 %v2818, %v3082
        %v3084 = vand.u32 %v959, 4294901760
        %v3085 = vsub.f32 %v959, %v3084
        %v3086 = vand.u32 %v3085, 4294901760
        %v3087 = vsub.f32 %v3085, %v3086
        %v3088 = vand.u32 %v3087, 4294901760
        %3089 = vmatmul.f32.gmra.mxu0 %v3088
        %v3090 = vpop.f32.mrf.mxu0
        %v3091 = vadd.f32 %v2822, %v3090
        %v3092 = vand.u32 %v963, 4294901760
        %v3093 = vsub.f32 %v963, %v3092
        %v3094 = vand.u32 %v3093, 4294901760
        %v3095 = vsub.f32 %v3093, %v3094
        %v3096 = vand.u32 %v3095, 4294901760
        %3097 = vmatmul.f32.gmra.mxu0 %v3096
        %v3098 = vpop.f32.mrf.mxu0
        %v3099 = vadd.f32 %v2826, %v3098
        %v3100 = vand.u32 %v967, 4294901760
        %v3101 = vsub.f32 %v967, %v3100
        %v3102 = vand.u32 %v3101, 4294901760
        %v3103 = vsub.f32 %v3101, %v3102
        %v3104 = vand.u32 %v3103, 4294901760
        %3105 = vmatmul.f32.gmra.mxu0 %v3104
        %v3106 = vpop.f32.mrf.mxu0
        %v3107 = vadd.f32 %v2830, %v3106
        %v3108 = vand.u32 %v971, 4294901760
        %v3109 = vsub.f32 %v971, %v3108
        %v3110 = vand.u32 %v3109, 4294901760
        %v3111 = vsub.f32 %v3109, %v3110
        %v3112 = vand.u32 %v3111, 4294901760
        %3113 = vmatmul.f32.gmra.mxu0 %v3112
        %v3114 = vpop.f32.mrf.mxu0
        %v3115 = vadd.f32 %v2834, %v3114
        %v3116 = vand.u32 %v975, 4294901760
        %v3117 = vsub.f32 %v975, %v3116
        %v3118 = vand.u32 %v3117, 4294901760
        %v3119 = vsub.f32 %v3117, %v3118
        %v3120 = vand.u32 %v3119, 4294901760
        %3121 = vmatmul.f32.gmra.mxu0 %v3120
        %v3122 = vpop.f32.mrf.mxu0
        %v3123 = vadd.f32 %v2838, %v3122
        %v3124 = vand.u32 %v979, 4294901760
        %v3125 = vsub.f32 %v979, %v3124
        %v3126 = vand.u32 %v3125, 4294901760
        %v3127 = vsub.f32 %v3125, %v3126
        %v3128 = vand.u32 %v3127, 4294901760
        %3129 = vmatmul.f32.gmra.mxu0 %v3128
        %v3130 = vpop.f32.mrf.mxu0
        %v3131 = vadd.f32 %v2842, %v3130
        %v3132 = vand.u32 %v983, 4294901760
        %v3133 = vsub.f32 %v983, %v3132
        %v3134 = vand.u32 %v3133, 4294901760
        %v3135 = vsub.f32 %v3133, %v3134
        %v3136 = vand.u32 %v3135, 4294901760
        %3137 = vmatmul.f32.gmra.mxu0 %v3136
        %v3138 = vpop.f32.mrf.mxu0
        %v3139 = vadd.f32 %v2846, %v3138
        %v3140 = vand.u32 %v987, 4294901760
        %v3141 = vsub.f32 %v987, %v3140
        %v3142 = vand.u32 %v3141, 4294901760
        %v3143 = vsub.f32 %v3141, %v3142
        %v3144 = vand.u32 %v3143, 4294901760
        %3145 = vmatmul.f32.gmra.mxu0 %v3144
        %v3146 = vpop.f32.mrf.mxu0
        %v3147 = vadd.f32 %v2850, %v3146
        %v3148 = vand.u32 %v991, 4294901760
        %v3149 = vsub.f32 %v991, %v3148
        %v3150 = vand.u32 %v3149, 4294901760
        %v3151 = vsub.f32 %v3149, %v3150
        %v3152 = vand.u32 %v3151, 4294901760
        %3153 = vmatmul.f32.gmra.mxu0 %v3152
        %v3154 = vpop.f32.mrf.mxu0
        %v3155 = vadd.f32 %v2854, %v3154
        %v3156 = vand.u32 %v995, 4294901760
        %v3157 = vsub.f32 %v995, %v3156
        %v3158 = vand.u32 %v3157, 4294901760
        %v3159 = vsub.f32 %v3157, %v3158
        %v3160 = vand.u32 %v3159, 4294901760
        %3161 = vmatmul.f32.gmra.mxu0 %v3160
        %v3162 = vpop.f32.mrf.mxu0
        %v3163 = vadd.f32 %v2858, %v3162
        %v3164 = vand.u32 %v999, 4294901760
        %v3165 = vsub.f32 %v999, %v3164
        %v3166 = vand.u32 %v3165, 4294901760
        %v3167 = vsub.f32 %v3165, %v3166
        %v3168 = vand.u32 %v3167, 4294901760
        %3169 = vmatmul.f32.gmra.mxu0 %v3168
        %v3170 = vpop.f32.mrf.mxu0
        %v3171 = vadd.f32 %v2862, %v3170
        %v3172 = vand.u32 %v1003, 4294901760
        %v3173 = vsub.f32 %v1003, %v3172
        %v3174 = vand.u32 %v3173, 4294901760
        %v3175 = vsub.f32 %v3173, %v3174
        %v3176 = vand.u32 %v3175, 4294901760
        %3177 = vmatmul.f32.gmra.mxu0 %v3176
        %v3178 = vpop.f32.mrf.mxu0
        %v3179 = vadd.f32 %v2866, %v3178
        %v3180 = vand.u32 %v1007, 4294901760
        %v3181 = vsub.f32 %v1007, %v3180
        %v3182 = vand.u32 %v3181, 4294901760
        %v3183 = vsub.f32 %v3181, %v3182
        %v3184 = vand.u32 %v3183, 4294901760
        %3185 = vmatmul.f32.gmra.mxu0 %v3184
        %v3186 = vpop.f32.mrf.mxu0
        %v3187 = vadd.f32 %v2870, %v3186
        %v3188 = vand.u32 %v1011, 4294901760
        %v3189 = vsub.f32 %v1011, %v3188
        %v3190 = vand.u32 %v3189, 4294901760
        %v3191 = vsub.f32 %v3189, %v3190
        %v3192 = vand.u32 %v3191, 4294901760
        %3193 = vmatmul.f32.gmra.mxu0 %v3192
        %v3194 = vpop.f32.mrf.mxu0
        %v3195 = vadd.f32 %v2874, %v3194
        %v3196 = vand.u32 %v1015, 4294901760
        %v3197 = vsub.f32 %v1015, %v3196
        %v3198 = vand.u32 %v3197, 4294901760
        %v3199 = vsub.f32 %v3197, %v3198
        %v3200 = vand.u32 %v3199, 4294901760
        %3201 = vmatmul.f32.gmra.mxu0 %v3200
        %v3202 = vpop.f32.mrf.mxu0
        %v3203 = vadd.f32 %v2878, %v3202
        %v3204 = vand.u32 %v1019, 4294901760
        %v3205 = vsub.f32 %v1019, %v3204
        %v3206 = vand.u32 %v3205, 4294901760
        %v3207 = vsub.f32 %v3205, %v3206
        %v3208 = vand.u32 %v3207, 4294901760
        %3209 = vmatmul.f32.gmra.mxu0 %v3208
        %v3210 = vpop.f32.mrf.mxu0
        %v3211 = vadd.f32 %v2882, %v3210
        %v3212 = vand.u32 %v1023, 4294901760
        %v3213 = vsub.f32 %v1023, %v3212
        %v3214 = vand.u32 %v3213, 4294901760
        %v3215 = vsub.f32 %v3213, %v3214
        %v3216 = vand.u32 %v3215, 4294901760
        %3217 = vmatmul.f32.gmra.mxu0 %v3216
        %v3218 = vpop.f32.mrf.mxu0
        %v3219 = vadd.f32 %v2886, %v3218
        %v3220 = vand.u32 %v1027, 4294901760
        %v3221 = vsub.f32 %v1027, %v3220
        %v3222 = vand.u32 %v3221, 4294901760
        %v3223 = vsub.f32 %v3221, %v3222
        %v3224 = vand.u32 %v3223, 4294901760
        %3225 = vmatmul.f32.gmra.mxu0 %v3224
        %v3226 = vpop.f32.mrf.mxu0
        %v3227 = vadd.f32 %v2890, %v3226
        %v3228 = vand.u32 %v1031, 4294901760
        %v3229 = vsub.f32 %v1031, %v3228
        %v3230 = vand.u32 %v3229, 4294901760
        %v3231 = vsub.f32 %v3229, %v3230
        %v3232 = vand.u32 %v3231, 4294901760
        %3233 = vmatmul.f32.gmra.mxu0 %v3232
        %v3234 = vpop.f32.mrf.mxu0
        %v3235 = vadd.f32 %v2894, %v3234
        %v3236 = vand.u32 %v1035, 4294901760
        %v3237 = vsub.f32 %v1035, %v3236
        %v3238 = vand.u32 %v3237, 4294901760
        %v3239 = vsub.f32 %v3237, %v3238
        %v3240 = vand.u32 %v3239, 4294901760
        %3241 = vmatmul.f32.gmra.mxu0 %v3240
        %v3242 = vpop.f32.mrf.mxu0
        %v3243 = vadd.f32 %v2898, %v3242
        %v3244 = vand.u32 %v1039, 4294901760
        %v3245 = vsub.f32 %v1039, %v3244
        %v3246 = vand.u32 %v3245, 4294901760
        %v3247 = vsub.f32 %v3245, %v3246
        %v3248 = vand.u32 %v3247, 4294901760
        %3249 = vmatmul.f32.gmra.mxu0 %v3248
        %v3250 = vpop.f32.mrf.mxu0
        %v3251 = vadd.f32 %v2902, %v3250
        %v3252 = vand.u32 %v1043, 4294901760
        %v3253 = vsub.f32 %v1043, %v3252
        %v3254 = vand.u32 %v3253, 4294901760
        %v3255 = vsub.f32 %v3253, %v3254
        %v3256 = vand.u32 %v3255, 4294901760
        %3257 = vmatmul.f32.gmra.mxu0 %v3256
        %v3258 = vpop.f32.mrf.mxu0
        %v3259 = vadd.f32 %v2906, %v3258
        %v3260 = vand.u32 %v1047, 4294901760
        %v3261 = vsub.f32 %v1047, %v3260
        %v3262 = vand.u32 %v3261, 4294901760
        %v3263 = vsub.f32 %v3261, %v3262
        %v3264 = vand.u32 %v3263, 4294901760
        %3265 = vmatmul.f32.gmra.mxu0 %v3264
        %v3266 = vpop.f32.mrf.mxu0
        %v3267 = vadd.f32 %v2910, %v3266
        %v3268 = vand.u32 %v1051, 4294901760
        %v3269 = vsub.f32 %v1051, %v3268
        %v3270 = vand.u32 %v3269, 4294901760
        %v3271 = vsub.f32 %v3269, %v3270
        %v3272 = vand.u32 %v3271, 4294901760
        %3273 = vmatmul.f32.gmra.mxu0 %v3272
        %v3274 = vpop.f32.mrf.mxu0
        %v3275 = vadd.f32 %v2914, %v3274
        %v3276 = vand.u32 %v1055, 4294901760
        %v3277 = vsub.f32 %v1055, %v3276
        %v3278 = vand.u32 %v3277, 4294901760
        %v3279 = vsub.f32 %v3277, %v3278
        %v3280 = vand.u32 %v3279, 4294901760
        %3281 = vmatmul.f32.gmra.mxu0 %v3280
        %v3282 = vpop.f32.mrf.mxu0
        %v3283 = vadd.f32 %v2918, %v3282
        %v3284 = vand.u32 %v1059, 4294901760
        %v3285 = vsub.f32 %v1059, %v3284
        %v3286 = vand.u32 %v3285, 4294901760
        %v3287 = vsub.f32 %v3285, %v3286
        %v3288 = vand.u32 %v3287, 4294901760
        %3289 = vmatmul.f32.gmra.mxu0 %v3288
        %v3290 = vpop.f32.mrf.mxu0
        %v3291 = vadd.f32 %v2922, %v3290
        %v3292 = vand.u32 %v1063, 4294901760
        %v3293 = vsub.f32 %v1063, %v3292
        %v3294 = vand.u32 %v3293, 4294901760
        %v3295 = vsub.f32 %v3293, %v3294
        %v3296 = vand.u32 %v3295, 4294901760
        %3297 = vmatmul.f32.gmra.mxu0 %v3296
        %v3298 = vpop.f32.mrf.mxu0
        %v3299 = vadd.f32 %v2926, %v3298
        %v3300 = vand.u32 %v1067, 4294901760
        %v3301 = vsub.f32 %v1067, %v3300
        %v3302 = vand.u32 %v3301, 4294901760
        %v3303 = vsub.f32 %v3301, %v3302
        %v3304 = vand.u32 %v3303, 4294901760
        %3305 = vmatmul.f32.gmra.mxu0 %v3304
        %v3306 = vpop.f32.mrf.mxu0
        %v3307 = vadd.f32 %v2930, %v3306
        %v3308 = vand.u32 %v1071, 4294901760
        %v3309 = vsub.f32 %v1071, %v3308
        %v3310 = vand.u32 %v3309, 4294901760
        %v3311 = vsub.f32 %v3309, %v3310
        %v3312 = vand.u32 %v3311, 4294901760
        %3313 = vmatmul.f32.gmra.mxu0 %v3312
        %v3314 = vpop.f32.mrf.mxu0
        %v3315 = vadd.f32 %v2934, %v3314
        %v3316 = vand.u32 %v1075, 4294901760
        %v3317 = vsub.f32 %v1075, %v3316
        %v3318 = vand.u32 %v3317, 4294901760
        %v3319 = vsub.f32 %v3317, %v3318
        %v3320 = vand.u32 %v3319, 4294901760
        %3321 = vmatmul.f32.gmra.mxu0 %v3320
        %v3322 = vpop.f32.mrf.mxu0
        %v3323 = vadd.f32 %v2938, %v3322
        %v3324 = vand.u32 %v1079, 4294901760
        %v3325 = vsub.f32 %v1079, %v3324
        %v3326 = vand.u32 %v3325, 4294901760
        %v3327 = vsub.f32 %v3325, %v3326
        %v3328 = vand.u32 %v3327, 4294901760
        %3329 = vmatmul.f32.gmra.mxu0 %v3328
        %v3330 = vpop.f32.mrf.mxu0
        %v3331 = vadd.f32 %v2942, %v3330
        %v3332 = vand.u32 %v1083, 4294901760
        %v3333 = vsub.f32 %v1083, %v3332
        %v3334 = vand.u32 %v3333, 4294901760
        %v3335 = vsub.f32 %v3333, %v3334
        %v3336 = vand.u32 %v3335, 4294901760
        %3337 = vmatmul.f32.gmra.mxu0 %v3336
        %v3338 = vpop.f32.mrf.mxu0
        %v3339 = vadd.f32 %v2946, %v3338
        %v3340 = vand.u32 %v1087, 4294901760
        %v3341 = vsub.f32 %v1087, %v3340
        %v3342 = vand.u32 %v3341, 4294901760
        %v3343 = vsub.f32 %v3341, %v3342
        %v3344 = vand.u32 %v3343, 4294901760
        %3345 = vmatmul.f32.gmra.mxu0 %v3344
        %v3346 = vpop.f32.mrf.mxu0
        %v3347 = vadd.f32 %v2950, %v3346
        %v3348 = vand.u32 %v1091, 4294901760
        %v3349 = vsub.f32 %v1091, %v3348
        %v3350 = vand.u32 %v3349, 4294901760
        %v3351 = vsub.f32 %v3349, %v3350
        %v3352 = vand.u32 %v3351, 4294901760
        %3353 = vmatmul.f32.gmra.mxu0 %v3352
        %v3354 = vpop.f32.mrf.mxu0
        %v3355 = vadd.f32 %v2954, %v3354
        %v3356 = vand.u32 %v1095, 4294901760
        %v3357 = vsub.f32 %v1095, %v3356
        %v3358 = vand.u32 %v3357, 4294901760
        %v3359 = vsub.f32 %v3357, %v3358
        %v3360 = vand.u32 %v3359, 4294901760
        %3361 = vmatmul.f32.gmra.mxu0 %v3360
        %v3362 = vpop.f32.mrf.mxu0
        %v3363 = vadd.f32 %v2958, %v3362
        %v3364 = vand.u32 %v1099, 4294901760
        %v3365 = vsub.f32 %v1099, %v3364
        %v3366 = vand.u32 %v3365, 4294901760
        %v3367 = vsub.f32 %v3365, %v3366
        %v3368 = vand.u32 %v3367, 4294901760
        %3369 = vmatmul.f32.gmra.mxu0 %v3368
        %v3370 = vpop.f32.mrf.mxu0
        %v3371 = vadd.f32 %v2962, %v3370
        %v3372 = vand.u32 %v1103, 4294901760
        %v3373 = vsub.f32 %v1103, %v3372
        %v3374 = vand.u32 %v3373, 4294901760
        %v3375 = vsub.f32 %v3373, %v3374
        %v3376 = vand.u32 %v3375, 4294901760
        %3377 = vmatmul.f32.gmra.mxu0 %v3376
        %v3378 = vpop.f32.mrf.mxu0
        %v3379 = vadd.f32 %v2966, %v3378
        %v3380 = vand.u32 %v1107, 4294901760
        %v3381 = vsub.f32 %v1107, %v3380
        %v3382 = vand.u32 %v3381, 4294901760
        %v3383 = vsub.f32 %v3381, %v3382
        %v3384 = vand.u32 %v3383, 4294901760
        %3385 = vmatmul.f32.gmra.mxu0 %v3384
        %v3386 = vpop.f32.mrf.mxu0
        %v3387 = vadd.f32 %v2970, %v3386
        %3388 = vdwg.mxu0
        %v3389 = vand.u32 %v1141, 4294901760
        %v3390 = vsub.f32 %v1141, %v3389
        %v3391 = vand.u32 %v3390, 4294901760
        %v3392 = vsub.f32 %v3390, %v3391
        %v3393 = vand.u32 %v3392, 4294901760
        %3394 = vmatpush.msra.mxu0 %v3393
        %v3395 = vand.u32 %v1140, 4294901760
        %v3396 = vsub.f32 %v1140, %v3395
        %v3397 = vand.u32 %v3396, 4294901760
        %v3398 = vsub.f32 %v3396, %v3397
        %v3399 = vand.u32 %v3398, 4294901760
        %3400 = vmatpush.msra.mxu0 %v3399
        %v3401 = vand.u32 %v1139, 4294901760
        %v3402 = vsub.f32 %v1139, %v3401
        %v3403 = vand.u32 %v3402, 4294901760
        %v3404 = vsub.f32 %v3402, %v3403
        %v3405 = vand.u32 %v3404, 4294901760
        %3406 = vmatpush.msra.mxu0 %v3405
        %v3407 = vand.u32 %v1138, 4294901760
        %v3408 = vsub.f32 %v1138, %v3407
        %v3409 = vand.u32 %v3408, 4294901760
        %v3410 = vsub.f32 %v3408, %v3409
        %v3411 = vand.u32 %v3410, 4294901760
        %3412 = vmatpush.msra.mxu0 %v3411
        %v3413 = vand.u32 %v1137, 4294901760
        %v3414 = vsub.f32 %v1137, %v3413
        %v3415 = vand.u32 %v3414, 4294901760
        %v3416 = vsub.f32 %v3414, %v3415
        %v3417 = vand.u32 %v3416, 4294901760
        %3418 = vmatpush.msra.mxu0 %v3417
        %v3419 = vand.u32 %v1136, 4294901760
        %v3420 = vsub.f32 %v1136, %v3419
        %v3421 = vand.u32 %v3420, 4294901760
        %v3422 = vsub.f32 %v3420, %v3421
        %v3423 = vand.u32 %v3422, 4294901760
        %3424 = vmatpush.msra.mxu0 %v3423
        %v3425 = vand.u32 %v1135, 4294901760
        %v3426 = vsub.f32 %v1135, %v3425
        %v3427 = vand.u32 %v3426, 4294901760
        %v3428 = vsub.f32 %v3426, %v3427
        %v3429 = vand.u32 %v3428, 4294901760
        %3430 = vmatpush.msra.mxu0 %v3429
        %v3431 = vand.u32 %v1134, 4294901760
        %v3432 = vsub.f32 %v1134, %v3431
        %v3433 = vand.u32 %v3432, 4294901760
        %v3434 = vsub.f32 %v3432, %v3433
        %v3435 = vand.u32 %v3434, 4294901760
        %3436 = vmatpush.msra.mxu0 %v3435
        %v3437 = vand.u32 %v1133, 4294901760
        %v3438 = vsub.f32 %v1133, %v3437
        %v3439 = vand.u32 %v3438, 4294901760
        %v3440 = vsub.f32 %v3438, %v3439
        %v3441 = vand.u32 %v3440, 4294901760
        %3442 = vmatpush.msra.mxu0 %v3441
        %v3443 = vand.u32 %v1132, 4294901760
        %v3444 = vsub.f32 %v1132, %v3443
        %v3445 = vand.u32 %v3444, 4294901760
        %v3446 = vsub.f32 %v3444, %v3445
        %v3447 = vand.u32 %v3446, 4294901760
        %3448 = vmatpush.msra.mxu0 %v3447
        %v3449 = vand.u32 %v1131, 4294901760
        %v3450 = vsub.f32 %v1131, %v3449
        %v3451 = vand.u32 %v3450, 4294901760
        %v3452 = vsub.f32 %v3450, %v3451
        %v3453 = vand.u32 %v3452, 4294901760
        %3454 = vmatpush.msra.mxu0 %v3453
        %v3455 = vand.u32 %v1130, 4294901760
        %v3456 = vsub.f32 %v1130, %v3455
        %v3457 = vand.u32 %v3456, 4294901760
        %v3458 = vsub.f32 %v3456, %v3457
        %v3459 = vand.u32 %v3458, 4294901760
        %3460 = vmatpush.msra.mxu0 %v3459
        %v3461 = vand.u32 %v1129, 4294901760
        %v3462 = vsub.f32 %v1129, %v3461
        %v3463 = vand.u32 %v3462, 4294901760
        %v3464 = vsub.f32 %v3462, %v3463
        %v3465 = vand.u32 %v3464, 4294901760
        %3466 = vmatpush.msra.mxu0 %v3465
        %v3467 = vand.u32 %v1128, 4294901760
        %v3468 = vsub.f32 %v1128, %v3467
        %v3469 = vand.u32 %v3468, 4294901760
        %v3470 = vsub.f32 %v3468, %v3469
        %v3471 = vand.u32 %v3470, 4294901760
        %3472 = vmatpush.msra.mxu0 %v3471
        %v3473 = vand.u32 %v1127, 4294901760
        %v3474 = vsub.f32 %v1127, %v3473
        %v3475 = vand.u32 %v3474, 4294901760
        %v3476 = vsub.f32 %v3474, %v3475
        %v3477 = vand.u32 %v3476, 4294901760
        %3478 = vmatpush.msra.mxu0 %v3477
        %v3479 = vand.u32 %v1126, 4294901760
        %v3480 = vsub.f32 %v1126, %v3479
        %v3481 = vand.u32 %v3480, 4294901760
        %v3482 = vsub.f32 %v3480, %v3481
        %v3483 = vand.u32 %v3482, 4294901760
        %3484 = vmatpush.msra.mxu0 %v3483
        %v3485 = vand.u32 %v919, 4294901760
        %3486 = vmatmul.f32.gmra.mxu0 %v3485
        %v3487 = vpop.f32.mrf.mxu0
        %v3488 = vadd.f32 %v3011, %v3487
        %v3489 = vand.u32 %v923, 4294901760
        %3490 = vmatmul.f32.gmra.mxu0 %v3489
        %v3491 = vpop.f32.mrf.mxu0
        %v3492 = vadd.f32 %v3019, %v3491
        %v3493 = vand.u32 %v927, 4294901760
        %3494 = vmatmul.f32.gmra.mxu0 %v3493
        %v3495 = vpop.f32.mrf.mxu0
        %v3496 = vadd.f32 %v3027, %v3495
        %v3497 = vand.u32 %v931, 4294901760
        %3498 = vmatmul.f32.gmra.mxu0 %v3497
        %v3499 = vpop.f32.mrf.mxu0
        %v3500 = vadd.f32 %v3035, %v3499
        %v3501 = vand.u32 %v935, 4294901760
        %3502 = vmatmul.f32.gmra.mxu0 %v3501
        %v3503 = vpop.f32.mrf.mxu0
        %v3504 = vadd.f32 %v3043, %v3503
        %v3505 = vand.u32 %v939, 4294901760
        %3506 = vmatmul.f32.gmra.mxu0 %v3505
        %v3507 = vpop.f32.mrf.mxu0
        %v3508 = vadd.f32 %v3051, %v3507
        %v3509 = vand.u32 %v943, 4294901760
        %3510 = vmatmul.f32.gmra.mxu0 %v3509
        %v3511 = vpop.f32.mrf.mxu0
        %v3512 = vadd.f32 %v3059, %v3511
        %v3513 = vand.u32 %v947, 4294901760
        %3514 = vmatmul.f32.gmra.mxu0 %v3513
        %v3515 = vpop.f32.mrf.mxu0
        %v3516 = vadd.f32 %v3067, %v3515
        %v3517 = vand.u32 %v951, 4294901760
        %3518 = vmatmul.f32.gmra.mxu0 %v3517
        %v3519 = vpop.f32.mrf.mxu0
        %v3520 = vadd.f32 %v3075, %v3519
        %v3521 = vand.u32 %v955, 4294901760
        %3522 = vmatmul.f32.gmra.mxu0 %v3521
        %v3523 = vpop.f32.mrf.mxu0
        %v3524 = vadd.f32 %v3083, %v3523
        %v3525 = vand.u32 %v959, 4294901760
        %3526 = vmatmul.f32.gmra.mxu0 %v3525
        %v3527 = vpop.f32.mrf.mxu0
        %v3528 = vadd.f32 %v3091, %v3527
        %v3529 = vand.u32 %v963, 4294901760
        %3530 = vmatmul.f32.gmra.mxu0 %v3529
        %v3531 = vpop.f32.mrf.mxu0
        %v3532 = vadd.f32 %v3099, %v3531
        %v3533 = vand.u32 %v967, 4294901760
        %3534 = vmatmul.f32.gmra.mxu0 %v3533
        %v3535 = vpop.f32.mrf.mxu0
        %v3536 = vadd.f32 %v3107, %v3535
        %v3537 = vand.u32 %v971, 4294901760
        %3538 = vmatmul.f32.gmra.mxu0 %v3537
        %v3539 = vpop.f32.mrf.mxu0
        %v3540 = vadd.f32 %v3115, %v3539
        %v3541 = vand.u32 %v975, 4294901760
        %3542 = vmatmul.f32.gmra.mxu0 %v3541
        %v3543 = vpop.f32.mrf.mxu0
        %v3544 = vadd.f32 %v3123, %v3543
        %v3545 = vand.u32 %v979, 4294901760
        %3546 = vmatmul.f32.gmra.mxu0 %v3545
        %v3547 = vpop.f32.mrf.mxu0
        %v3548 = vadd.f32 %v3131, %v3547
        %v3549 = vand.u32 %v983, 4294901760
        %3550 = vmatmul.f32.gmra.mxu0 %v3549
        %v3551 = vpop.f32.mrf.mxu0
        %v3552 = vadd.f32 %v3139, %v3551
        %v3553 = vand.u32 %v987, 4294901760
        %3554 = vmatmul.f32.gmra.mxu0 %v3553
        %v3555 = vpop.f32.mrf.mxu0
        %v3556 = vadd.f32 %v3147, %v3555
        %v3557 = vand.u32 %v991, 4294901760
        %3558 = vmatmul.f32.gmra.mxu0 %v3557
        %v3559 = vpop.f32.mrf.mxu0
        %v3560 = vadd.f32 %v3155, %v3559
        %v3561 = vand.u32 %v995, 4294901760
        %3562 = vmatmul.f32.gmra.mxu0 %v3561
        %v3563 = vpop.f32.mrf.mxu0
        %v3564 = vadd.f32 %v3163, %v3563
        %v3565 = vand.u32 %v999, 4294901760
        %3566 = vmatmul.f32.gmra.mxu0 %v3565
        %v3567 = vpop.f32.mrf.mxu0
        %v3568 = vadd.f32 %v3171, %v3567
        %v3569 = vand.u32 %v1003, 4294901760
        %3570 = vmatmul.f32.gmra.mxu0 %v3569
        %v3571 = vpop.f32.mrf.mxu0
        %v3572 = vadd.f32 %v3179, %v3571
        %v3573 = vand.u32 %v1007, 4294901760
        %3574 = vmatmul.f32.gmra.mxu0 %v3573
        %v3575 = vpop.f32.mrf.mxu0
        %v3576 = vadd.f32 %v3187, %v3575
        %v3577 = vand.u32 %v1011, 4294901760
        %3578 = vmatmul.f32.gmra.mxu0 %v3577
        %v3579 = vpop.f32.mrf.mxu0
        %v3580 = vadd.f32 %v3195, %v3579
        %v3581 = vand.u32 %v1015, 4294901760
        %3582 = vmatmul.f32.gmra.mxu0 %v3581
        %v3583 = vpop.f32.mrf.mxu0
        %v3584 = vadd.f32 %v3203, %v3583
        %v3585 = vand.u32 %v1019, 4294901760
        %3586 = vmatmul.f32.gmra.mxu0 %v3585
        %v3587 = vpop.f32.mrf.mxu0
        %v3588 = vadd.f32 %v3211, %v3587
        %v3589 = vand.u32 %v1023, 4294901760
        %3590 = vmatmul.f32.gmra.mxu0 %v3589
        %v3591 = vpop.f32.mrf.mxu0
        %v3592 = vadd.f32 %v3219, %v3591
        %v3593 = vand.u32 %v1027, 4294901760
        %3594 = vmatmul.f32.gmra.mxu0 %v3593
        %v3595 = vpop.f32.mrf.mxu0
        %v3596 = vadd.f32 %v3227, %v3595
        %v3597 = vand.u32 %v1031, 4294901760
        %3598 = vmatmul.f32.gmra.mxu0 %v3597
        %v3599 = vpop.f32.mrf.mxu0
        %v3600 = vadd.f32 %v3235, %v3599
        %v3601 = vand.u32 %v1035, 4294901760
        %3602 = vmatmul.f32.gmra.mxu0 %v3601
        %v3603 = vpop.f32.mrf.mxu0
        %v3604 = vadd.f32 %v3243, %v3603
        %v3605 = vand.u32 %v1039, 4294901760
        %3606 = vmatmul.f32.gmra.mxu0 %v3605
        %v3607 = vpop.f32.mrf.mxu0
        %v3608 = vadd.f32 %v3251, %v3607
        %v3609 = vand.u32 %v1043, 4294901760
        %3610 = vmatmul.f32.gmra.mxu0 %v3609
        %v3611 = vpop.f32.mrf.mxu0
        %v3612 = vadd.f32 %v3259, %v3611
        %v3613 = vand.u32 %v1047, 4294901760
        %3614 = vmatmul.f32.gmra.mxu0 %v3613
        %v3615 = vpop.f32.mrf.mxu0
        %v3616 = vadd.f32 %v3267, %v3615
        %v3617 = vand.u32 %v1051, 4294901760
        %3618 = vmatmul.f32.gmra.mxu0 %v3617
        %v3619 = vpop.f32.mrf.mxu0
        %v3620 = vadd.f32 %v3275, %v3619
        %v3621 = vand.u32 %v1055, 4294901760
        %3622 = vmatmul.f32.gmra.mxu0 %v3621
        %v3623 = vpop.f32.mrf.mxu0
        %v3624 = vadd.f32 %v3283, %v3623
        %v3625 = vand.u32 %v1059, 4294901760
        %3626 = vmatmul.f32.gmra.mxu0 %v3625
        %v3627 = vpop.f32.mrf.mxu0
        %v3628 = vadd.f32 %v3291, %v3627
        %v3629 = vand.u32 %v1063, 4294901760
        %3630 = vmatmul.f32.gmra.mxu0 %v3629
        %v3631 = vpop.f32.mrf.mxu0
        %v3632 = vadd.f32 %v3299, %v3631
        %v3633 = vand.u32 %v1067, 4294901760
        %3634 = vmatmul.f32.gmra.mxu0 %v3633
        %v3635 = vpop.f32.mrf.mxu0
        %v3636 = vadd.f32 %v3307, %v3635
        %v3637 = vand.u32 %v1071, 4294901760
        %3638 = vmatmul.f32.gmra.mxu0 %v3637
        %v3639 = vpop.f32.mrf.mxu0
        %v3640 = vadd.f32 %v3315, %v3639
        %v3641 = vand.u32 %v1075, 4294901760
        %3642 = vmatmul.f32.gmra.mxu0 %v3641
        %v3643 = vpop.f32.mrf.mxu0
        %v3644 = vadd.f32 %v3323, %v3643
        %v3645 = vand.u32 %v1079, 4294901760
        %3646 = vmatmul.f32.gmra.mxu0 %v3645
        %v3647 = vpop.f32.mrf.mxu0
        %v3648 = vadd.f32 %v3331, %v3647
        %v3649 = vand.u32 %v1083, 4294901760
        %3650 = vmatmul.f32.gmra.mxu0 %v3649
        %v3651 = vpop.f32.mrf.mxu0
        %v3652 = vadd.f32 %v3339, %v3651
        %v3653 = vand.u32 %v1087, 4294901760
        %3654 = vmatmul.f32.gmra.mxu0 %v3653
        %v3655 = vpop.f32.mrf.mxu0
        %v3656 = vadd.f32 %v3347, %v3655
        %v3657 = vand.u32 %v1091, 4294901760
        %3658 = vmatmul.f32.gmra.mxu0 %v3657
        %v3659 = vpop.f32.mrf.mxu0
        %v3660 = vadd.f32 %v3355, %v3659
        %v3661 = vand.u32 %v1095, 4294901760
        %3662 = vmatmul.f32.gmra.mxu0 %v3661
        %v3663 = vpop.f32.mrf.mxu0
        %v3664 = vadd.f32 %v3363, %v3663
        %v3665 = vand.u32 %v1099, 4294901760
        %3666 = vmatmul.f32.gmra.mxu0 %v3665
        %v3667 = vpop.f32.mrf.mxu0
        %v3668 = vadd.f32 %v3371, %v3667
        %v3669 = vand.u32 %v1103, 4294901760
        %3670 = vmatmul.f32.gmra.mxu0 %v3669
        %v3671 = vpop.f32.mrf.mxu0
        %v3672 = vadd.f32 %v3379, %v3671
        %v3673 = vand.u32 %v1107, 4294901760
        %3674 = vmatmul.f32.gmra.mxu0 %v3673
        %v3675 = vpop.f32.mrf.mxu0
        %v3676 = vadd.f32 %v3387, %v3675
        %3677 = vdwg.mxu0
        %v3678 = vand.u32 %v1141, 4294901760
        %v3679 = vsub.f32 %v1141, %v3678
        %3680 = vmatpush.msra.mxu0 %v3679
        %v3681 = vand.u32 %v1140, 4294901760
        %v3682 = vsub.f32 %v1140, %v3681
        %3683 = vmatpush.msra.mxu0 %v3682
        %v3684 = vand.u32 %v1139, 4294901760
        %v3685 = vsub.f32 %v1139, %v3684
        %3686 = vmatpush.msra.mxu0 %v3685
        %v3687 = vand.u32 %v1138, 4294901760
        %v3688 = vsub.f32 %v1138, %v3687
        %3689 = vmatpush.msra.mxu0 %v3688
        %v3690 = vand.u32 %v1137, 4294901760
        %v3691 = vsub.f32 %v1137, %v3690
        %3692 = vmatpush.msra.mxu0 %v3691
        %v3693 = vand.u32 %v1136, 4294901760
        %v3694 = vsub.f32 %v1136, %v3693
        %3695 = vmatpush.msra.mxu0 %v3694
        %v3696 = vand.u32 %v1135, 4294901760
        %v3697 = vsub.f32 %v1135, %v3696
        %3698 = vmatpush.msra.mxu0 %v3697
        %v3699 = vand.u32 %v1134, 4294901760
        %v3700 = vsub.f32 %v1134, %v3699
        %3701 = vmatpush.msra.mxu0 %v3700
        %v3702 = vand.u32 %v1133, 4294901760
        %v3703 = vsub.f32 %v1133, %v3702
        %3704 = vmatpush.msra.mxu0 %v3703
        %v3705 = vand.u32 %v1132, 4294901760
        %v3706 = vsub.f32 %v1132, %v3705
        %3707 = vmatpush.msra.mxu0 %v3706
        %v3708 = vand.u32 %v1131, 4294901760
        %v3709 = vsub.f32 %v1131, %v3708
        %3710 = vmatpush.msra.mxu0 %v3709
        %v3711 = vand.u32 %v1130, 4294901760
        %v3712 = vsub.f32 %v1130, %v3711
        %3713 = vmatpush.msra.mxu0 %v3712
        %v3714 = vand.u32 %v1129, 4294901760
        %v3715 = vsub.f32 %v1129, %v3714
        %3716 = vmatpush.msra.mxu0 %v3715
        %v3717 = vand.u32 %v1128, 4294901760
        %v3718 = vsub.f32 %v1128, %v3717
        %3719 = vmatpush.msra.mxu0 %v3718
        %v3720 = vand.u32 %v1127, 4294901760
        %v3721 = vsub.f32 %v1127, %v3720
        %3722 = vmatpush.msra.mxu0 %v3721
        %v3723 = vand.u32 %v1126, 4294901760
        %v3724 = vsub.f32 %v1126, %v3723
        %3725 = vmatpush.msra.mxu0 %v3724
        %v3726 = vand.u32 %v919, 4294901760
        %v3727 = vsub.f32 %v919, %v3726
        %3728 = vmatmul.f32.gmra.mxu0 %v3727
        %v3729 = vpop.f32.mrf.mxu0
        %v3730 = vadd.f32 %v3488, %v3729
        %v3731 = vand.u32 %v923, 4294901760
        %v3732 = vsub.f32 %v923, %v3731
        %3733 = vmatmul.f32.gmra.mxu0 %v3732
        %v3734 = vpop.f32.mrf.mxu0
        %v3735 = vadd.f32 %v3492, %v3734
        %v3736 = vand.u32 %v927, 4294901760
        %v3737 = vsub.f32 %v927, %v3736
        %3738 = vmatmul.f32.gmra.mxu0 %v3737
        %v3739 = vpop.f32.mrf.mxu0
        %v3740 = vadd.f32 %v3496, %v3739
        %v3741 = vand.u32 %v931, 4294901760
        %v3742 = vsub.f32 %v931, %v3741
        %3743 = vmatmul.f32.gmra.mxu0 %v3742
        %v3744 = vpop.f32.mrf.mxu0
        %v3745 = vadd.f32 %v3500, %v3744
        %v3746 = vand.u32 %v935, 4294901760
        %v3747 = vsub.f32 %v935, %v3746
        %3748 = vmatmul.f32.gmra.mxu0 %v3747
        %v3749 = vpop.f32.mrf.mxu0
        %v3750 = vadd.f32 %v3504, %v3749
        %v3751 = vand.u32 %v939, 4294901760
        %v3752 = vsub.f32 %v939, %v3751
        %3753 = vmatmul.f32.gmra.mxu0 %v3752
        %v3754 = vpop.f32.mrf.mxu0
        %v3755 = vadd.f32 %v3508, %v3754
        %v3756 = vand.u32 %v943, 4294901760
        %v3757 = vsub.f32 %v943, %v3756
        %3758 = vmatmul.f32.gmra.mxu0 %v3757
        %v3759 = vpop.f32.mrf.mxu0
        %v3760 = vadd.f32 %v3512, %v3759
        %v3761 = vand.u32 %v947, 4294901760
        %v3762 = vsub.f32 %v947, %v3761
        %3763 = vmatmul.f32.gmra.mxu0 %v3762
        %v3764 = vpop.f32.mrf.mxu0
        %v3765 = vadd.f32 %v3516, %v3764
        %v3766 = vand.u32 %v951, 4294901760
        %v3767 = vsub.f32 %v951, %v3766
        %3768 = vmatmul.f32.gmra.mxu0 %v3767
        %v3769 = vpop.f32.mrf.mxu0
        %v3770 = vadd.f32 %v3520, %v3769
        %v3771 = vand.u32 %v955, 4294901760
        %v3772 = vsub.f32 %v955, %v3771
        %3773 = vmatmul.f32.gmra.mxu0 %v3772
        %v3774 = vpop.f32.mrf.mxu0
        %v3775 = vadd.f32 %v3524, %v3774
        %v3776 = vand.u32 %v959, 4294901760
        %v3777 = vsub.f32 %v959, %v3776
        %3778 = vmatmul.f32.gmra.mxu0 %v3777
        %v3779 = vpop.f32.mrf.mxu0
        %v3780 = vadd.f32 %v3528, %v3779
        %v3781 = vand.u32 %v963, 4294901760
        %v3782 = vsub.f32 %v963, %v3781
        %3783 = vmatmul.f32.gmra.mxu0 %v3782
        %v3784 = vpop.f32.mrf.mxu0
        %v3785 = vadd.f32 %v3532, %v3784
        %v3786 = vand.u32 %v967, 4294901760
        %v3787 = vsub.f32 %v967, %v3786
        %3788 = vmatmul.f32.gmra.mxu0 %v3787
        %v3789 = vpop.f32.mrf.mxu0
        %v3790 = vadd.f32 %v3536, %v3789
        %v3791 = vand.u32 %v971, 4294901760
        %v3792 = vsub.f32 %v971, %v3791
        %3793 = vmatmul.f32.gmra.mxu0 %v3792
        %v3794 = vpop.f32.mrf.mxu0
        %v3795 = vadd.f32 %v3540, %v3794
        %v3796 = vand.u32 %v975, 4294901760
        %v3797 = vsub.f32 %v975, %v3796
        %3798 = vmatmul.f32.gmra.mxu0 %v3797
        %v3799 = vpop.f32.mrf.mxu0
        %v3800 = vadd.f32 %v3544, %v3799
        %v3801 = vand.u32 %v979, 4294901760
        %v3802 = vsub.f32 %v979, %v3801
        %3803 = vmatmul.f32.gmra.mxu0 %v3802
        %v3804 = vpop.f32.mrf.mxu0
        %v3805 = vadd.f32 %v3548, %v3804
        %v3806 = vand.u32 %v983, 4294901760
        %v3807 = vsub.f32 %v983, %v3806
        %3808 = vmatmul.f32.gmra.mxu0 %v3807
        %v3809 = vpop.f32.mrf.mxu0
        %v3810 = vadd.f32 %v3552, %v3809
        %v3811 = vand.u32 %v987, 4294901760
        %v3812 = vsub.f32 %v987, %v3811
        %3813 = vmatmul.f32.gmra.mxu0 %v3812
        %v3814 = vpop.f32.mrf.mxu0
        %v3815 = vadd.f32 %v3556, %v3814
        %v3816 = vand.u32 %v991, 4294901760
        %v3817 = vsub.f32 %v991, %v3816
        %3818 = vmatmul.f32.gmra.mxu0 %v3817
        %v3819 = vpop.f32.mrf.mxu0
        %v3820 = vadd.f32 %v3560, %v3819
        %v3821 = vand.u32 %v995, 4294901760
        %v3822 = vsub.f32 %v995, %v3821
        %3823 = vmatmul.f32.gmra.mxu0 %v3822
        %v3824 = vpop.f32.mrf.mxu0
        %v3825 = vadd.f32 %v3564, %v3824
        %v3826 = vand.u32 %v999, 4294901760
        %v3827 = vsub.f32 %v999, %v3826
        %3828 = vmatmul.f32.gmra.mxu0 %v3827
        %v3829 = vpop.f32.mrf.mxu0
        %v3830 = vadd.f32 %v3568, %v3829
        %v3831 = vand.u32 %v1003, 4294901760
        %v3832 = vsub.f32 %v1003, %v3831
        %3833 = vmatmul.f32.gmra.mxu0 %v3832
        %v3834 = vpop.f32.mrf.mxu0
        %v3835 = vadd.f32 %v3572, %v3834
        %v3836 = vand.u32 %v1007, 4294901760
        %v3837 = vsub.f32 %v1007, %v3836
        %3838 = vmatmul.f32.gmra.mxu0 %v3837
        %v3839 = vpop.f32.mrf.mxu0
        %v3840 = vadd.f32 %v3576, %v3839
        %v3841 = vand.u32 %v1011, 4294901760
        %v3842 = vsub.f32 %v1011, %v3841
        %3843 = vmatmul.f32.gmra.mxu0 %v3842
        %v3844 = vpop.f32.mrf.mxu0
        %v3845 = vadd.f32 %v3580, %v3844
        %v3846 = vand.u32 %v1015, 4294901760
        %v3847 = vsub.f32 %v1015, %v3846
        %3848 = vmatmul.f32.gmra.mxu0 %v3847
        %v3849 = vpop.f32.mrf.mxu0
        %v3850 = vadd.f32 %v3584, %v3849
        %v3851 = vand.u32 %v1019, 4294901760
        %v3852 = vsub.f32 %v1019, %v3851
        %3853 = vmatmul.f32.gmra.mxu0 %v3852
        %v3854 = vpop.f32.mrf.mxu0
        %v3855 = vadd.f32 %v3588, %v3854
        %v3856 = vand.u32 %v1023, 4294901760
        %v3857 = vsub.f32 %v1023, %v3856
        %3858 = vmatmul.f32.gmra.mxu0 %v3857
        %v3859 = vpop.f32.mrf.mxu0
        %v3860 = vadd.f32 %v3592, %v3859
        %v3861 = vand.u32 %v1027, 4294901760
        %v3862 = vsub.f32 %v1027, %v3861
        %3863 = vmatmul.f32.gmra.mxu0 %v3862
        %v3864 = vpop.f32.mrf.mxu0
        %v3865 = vadd.f32 %v3596, %v3864
        %v3866 = vand.u32 %v1031, 4294901760
        %v3867 = vsub.f32 %v1031, %v3866
        %3868 = vmatmul.f32.gmra.mxu0 %v3867
        %v3869 = vpop.f32.mrf.mxu0
        %v3870 = vadd.f32 %v3600, %v3869
        %v3871 = vand.u32 %v1035, 4294901760
        %v3872 = vsub.f32 %v1035, %v3871
        %3873 = vmatmul.f32.gmra.mxu0 %v3872
        %v3874 = vpop.f32.mrf.mxu0
        %v3875 = vadd.f32 %v3604, %v3874
        %v3876 = vand.u32 %v1039, 4294901760
        %v3877 = vsub.f32 %v1039, %v3876
        %3878 = vmatmul.f32.gmra.mxu0 %v3877
        %v3879 = vpop.f32.mrf.mxu0
        %v3880 = vadd.f32 %v3608, %v3879
        %v3881 = vand.u32 %v1043, 4294901760
        %v3882 = vsub.f32 %v1043, %v3881
        %3883 = vmatmul.f32.gmra.mxu0 %v3882
        %v3884 = vpop.f32.mrf.mxu0
        %v3885 = vadd.f32 %v3612, %v3884
        %v3886 = vand.u32 %v1047, 4294901760
        %v3887 = vsub.f32 %v1047, %v3886
        %3888 = vmatmul.f32.gmra.mxu0 %v3887
        %v3889 = vpop.f32.mrf.mxu0
        %v3890 = vadd.f32 %v3616, %v3889
        %v3891 = vand.u32 %v1051, 4294901760
        %v3892 = vsub.f32 %v1051, %v3891
        %3893 = vmatmul.f32.gmra.mxu0 %v3892
        %v3894 = vpop.f32.mrf.mxu0
        %v3895 = vadd.f32 %v3620, %v3894
        %v3896 = vand.u32 %v1055, 4294901760
        %v3897 = vsub.f32 %v1055, %v3896
        %3898 = vmatmul.f32.gmra.mxu0 %v3897
        %v3899 = vpop.f32.mrf.mxu0
        %v3900 = vadd.f32 %v3624, %v3899
        %v3901 = vand.u32 %v1059, 4294901760
        %v3902 = vsub.f32 %v1059, %v3901
        %3903 = vmatmul.f32.gmra.mxu0 %v3902
        %v3904 = vpop.f32.mrf.mxu0
        %v3905 = vadd.f32 %v3628, %v3904
        %v3906 = vand.u32 %v1063, 4294901760
        %v3907 = vsub.f32 %v1063, %v3906
        %3908 = vmatmul.f32.gmra.mxu0 %v3907
        %v3909 = vpop.f32.mrf.mxu0
        %v3910 = vadd.f32 %v3632, %v3909
        %v3911 = vand.u32 %v1067, 4294901760
        %v3912 = vsub.f32 %v1067, %v3911
        %3913 = vmatmul.f32.gmra.mxu0 %v3912
        %v3914 = vpop.f32.mrf.mxu0
        %v3915 = vadd.f32 %v3636, %v3914
        %v3916 = vand.u32 %v1071, 4294901760
        %v3917 = vsub.f32 %v1071, %v3916
        %3918 = vmatmul.f32.gmra.mxu0 %v3917
        %v3919 = vpop.f32.mrf.mxu0
        %v3920 = vadd.f32 %v3640, %v3919
        %v3921 = vand.u32 %v1075, 4294901760
        %v3922 = vsub.f32 %v1075, %v3921
        %3923 = vmatmul.f32.gmra.mxu0 %v3922
        %v3924 = vpop.f32.mrf.mxu0
        %v3925 = vadd.f32 %v3644, %v3924
        %v3926 = vand.u32 %v1079, 4294901760
        %v3927 = vsub.f32 %v1079, %v3926
        %3928 = vmatmul.f32.gmra.mxu0 %v3927
        %v3929 = vpop.f32.mrf.mxu0
        %v3930 = vadd.f32 %v3648, %v3929
        %v3931 = vand.u32 %v1083, 4294901760
        %v3932 = vsub.f32 %v1083, %v3931
        %3933 = vmatmul.f32.gmra.mxu0 %v3932
        %v3934 = vpop.f32.mrf.mxu0
        %v3935 = vadd.f32 %v3652, %v3934
        %v3936 = vand.u32 %v1087, 4294901760
        %v3937 = vsub.f32 %v1087, %v3936
        %3938 = vmatmul.f32.gmra.mxu0 %v3937
        %v3939 = vpop.f32.mrf.mxu0
        %v3940 = vadd.f32 %v3656, %v3939
        %v3941 = vand.u32 %v1091, 4294901760
        %v3942 = vsub.f32 %v1091, %v3941
        %3943 = vmatmul.f32.gmra.mxu0 %v3942
        %v3944 = vpop.f32.mrf.mxu0
        %v3945 = vadd.f32 %v3660, %v3944
        %v3946 = vand.u32 %v1095, 4294901760
        %v3947 = vsub.f32 %v1095, %v3946
        %3948 = vmatmul.f32.gmra.mxu0 %v3947
        %v3949 = vpop.f32.mrf.mxu0
        %v3950 = vadd.f32 %v3664, %v3949
        %v3951 = vand.u32 %v1099, 4294901760
        %v3952 = vsub.f32 %v1099, %v3951
        %3953 = vmatmul.f32.gmra.mxu0 %v3952
        %v3954 = vpop.f32.mrf.mxu0
        %v3955 = vadd.f32 %v3668, %v3954
        %v3956 = vand.u32 %v1103, 4294901760
        %v3957 = vsub.f32 %v1103, %v3956
        %3958 = vmatmul.f32.gmra.mxu0 %v3957
        %v3959 = vpop.f32.mrf.mxu0
        %v3960 = vadd.f32 %v3672, %v3959
        %v3961 = vand.u32 %v1107, 4294901760
        %v3962 = vsub.f32 %v1107, %v3961
        %3963 = vmatmul.f32.gmra.mxu0 %v3962
        %v3964 = vpop.f32.mrf.mxu0
        %v3965 = vadd.f32 %v3676, %v3964
        %3966 = vdwg.mxu0
        %v3967 = vand.u32 %v1141, 4294901760
        %3968 = vmatpush.msra.mxu0 %v3967
        %v3969 = vand.u32 %v1140, 4294901760
        %3970 = vmatpush.msra.mxu0 %v3969
        %v3971 = vand.u32 %v1139, 4294901760
        %3972 = vmatpush.msra.mxu0 %v3971
        %v3973 = vand.u32 %v1138, 4294901760
        %3974 = vmatpush.msra.mxu0 %v3973
        %v3975 = vand.u32 %v1137, 4294901760
        %3976 = vmatpush.msra.mxu0 %v3975
        %v3977 = vand.u32 %v1136, 4294901760
        %3978 = vmatpush.msra.mxu0 %v3977
        %v3979 = vand.u32 %v1135, 4294901760
        %3980 = vmatpush.msra.mxu0 %v3979
        %v3981 = vand.u32 %v1134, 4294901760
        %3982 = vmatpush.msra.mxu0 %v3981
        %v3983 = vand.u32 %v1133, 4294901760
        %3984 = vmatpush.msra.mxu0 %v3983
        %v3985 = vand.u32 %v1132, 4294901760
        %3986 = vmatpush.msra.mxu0 %v3985
        %v3987 = vand.u32 %v1131, 4294901760
        %3988 = vmatpush.msra.mxu0 %v3987
        %v3989 = vand.u32 %v1130, 4294901760
        %3990 = vmatpush.msra.mxu0 %v3989
        %v3991 = vand.u32 %v1129, 4294901760
        %3992 = vmatpush.msra.mxu0 %v3991
        %v3993 = vand.u32 %v1128, 4294901760
        %3994 = vmatpush.msra.mxu0 %v3993
        %v3995 = vand.u32 %v1127, 4294901760
        %3996 = vmatpush.msra.mxu0 %v3995
        %v3997 = vand.u32 %v1126, 4294901760
        %3998 = vmatpush.msra.mxu0 %v3997
        %v3999 = vand.u32 %v919, 4294901760
        %v4000 = vsub.f32 %v919, %v3999
        %v4001 = vand.u32 %v4000, 4294901760
        %4002 = vmatmul.f32.gmra.mxu0 %v4001
        %v4003 = vpop.f32.mrf.mxu0
        %v4004 = vadd.f32 %v3730, %v4003
        %v4005 = vand.u32 %v923, 4294901760
        %v4006 = vsub.f32 %v923, %v4005
        %v4007 = vand.u32 %v4006, 4294901760
        %4008 = vmatmul.f32.gmra.mxu0 %v4007
        %v4009 = vpop.f32.mrf.mxu0
        %v4010 = vadd.f32 %v3735, %v4009
        %v4011 = vand.u32 %v927, 4294901760
        %v4012 = vsub.f32 %v927, %v4011
        %v4013 = vand.u32 %v4012, 4294901760
        %4014 = vmatmul.f32.gmra.mxu0 %v4013
        %v4015 = vpop.f32.mrf.mxu0
        %v4016 = vadd.f32 %v3740, %v4015
        %v4017 = vand.u32 %v931, 4294901760
        %v4018 = vsub.f32 %v931, %v4017
        %v4019 = vand.u32 %v4018, 4294901760
        %4020 = vmatmul.f32.gmra.mxu0 %v4019
        %v4021 = vpop.f32.mrf.mxu0
        %v4022 = vadd.f32 %v3745, %v4021
        %v4023 = vand.u32 %v935, 4294901760
        %v4024 = vsub.f32 %v935, %v4023
        %v4025 = vand.u32 %v4024, 4294901760
        %4026 = vmatmul.f32.gmra.mxu0 %v4025
        %v4027 = vpop.f32.mrf.mxu0
        %v4028 = vadd.f32 %v3750, %v4027
        %v4029 = vand.u32 %v939, 4294901760
        %v4030 = vsub.f32 %v939, %v4029
        %v4031 = vand.u32 %v4030, 4294901760
        %4032 = vmatmul.f32.gmra.mxu0 %v4031
        %v4033 = vpop.f32.mrf.mxu0
        %v4034 = vadd.f32 %v3755, %v4033
        %v4035 = vand.u32 %v943, 4294901760
        %v4036 = vsub.f32 %v943, %v4035
        %v4037 = vand.u32 %v4036, 4294901760
        %4038 = vmatmul.f32.gmra.mxu0 %v4037
        %v4039 = vpop.f32.mrf.mxu0
        %v4040 = vadd.f32 %v3760, %v4039
        %v4041 = vand.u32 %v947, 4294901760
        %v4042 = vsub.f32 %v947, %v4041
        %v4043 = vand.u32 %v4042, 4294901760
        %4044 = vmatmul.f32.gmra.mxu0 %v4043
        %v4045 = vpop.f32.mrf.mxu0
        %v4046 = vadd.f32 %v3765, %v4045
        %v4047 = vand.u32 %v951, 4294901760
        %v4048 = vsub.f32 %v951, %v4047
        %v4049 = vand.u32 %v4048, 4294901760
        %4050 = vmatmul.f32.gmra.mxu0 %v4049
        %v4051 = vpop.f32.mrf.mxu0
        %v4052 = vadd.f32 %v3770, %v4051
        %v4053 = vand.u32 %v955, 4294901760
        %v4054 = vsub.f32 %v955, %v4053
        %v4055 = vand.u32 %v4054, 4294901760
        %4056 = vmatmul.f32.gmra.mxu0 %v4055
        %v4057 = vpop.f32.mrf.mxu0
        %v4058 = vadd.f32 %v3775, %v4057
        %v4059 = vand.u32 %v959, 4294901760
        %v4060 = vsub.f32 %v959, %v4059
        %v4061 = vand.u32 %v4060, 4294901760
        %4062 = vmatmul.f32.gmra.mxu0 %v4061
        %v4063 = vpop.f32.mrf.mxu0
        %v4064 = vadd.f32 %v3780, %v4063
        %v4065 = vand.u32 %v963, 4294901760
        %v4066 = vsub.f32 %v963, %v4065
        %v4067 = vand.u32 %v4066, 4294901760
        %4068 = vmatmul.f32.gmra.mxu0 %v4067
        %v4069 = vpop.f32.mrf.mxu0
        %v4070 = vadd.f32 %v3785, %v4069
        %v4071 = vand.u32 %v967, 4294901760
        %v4072 = vsub.f32 %v967, %v4071
        %v4073 = vand.u32 %v4072, 4294901760
        %4074 = vmatmul.f32.gmra.mxu0 %v4073
        %v4075 = vpop.f32.mrf.mxu0
        %v4076 = vadd.f32 %v3790, %v4075
        %v4077 = vand.u32 %v971, 4294901760
        %v4078 = vsub.f32 %v971, %v4077
        %v4079 = vand.u32 %v4078, 4294901760
        %4080 = vmatmul.f32.gmra.mxu0 %v4079
        %v4081 = vpop.f32.mrf.mxu0
        %v4082 = vadd.f32 %v3795, %v4081
        %v4083 = vand.u32 %v975, 4294901760
        %v4084 = vsub.f32 %v975, %v4083
        %v4085 = vand.u32 %v4084, 4294901760
        %4086 = vmatmul.f32.gmra.mxu0 %v4085
        %v4087 = vpop.f32.mrf.mxu0
        %v4088 = vadd.f32 %v3800, %v4087
        %v4089 = vand.u32 %v979, 4294901760
        %v4090 = vsub.f32 %v979, %v4089
        %v4091 = vand.u32 %v4090, 4294901760
        %4092 = vmatmul.f32.gmra.mxu0 %v4091
        %v4093 = vpop.f32.mrf.mxu0
        %v4094 = vadd.f32 %v3805, %v4093
        %v4095 = vand.u32 %v983, 4294901760
        %v4096 = vsub.f32 %v983, %v4095
        %v4097 = vand.u32 %v4096, 4294901760
        %4098 = vmatmul.f32.gmra.mxu0 %v4097
        %v4099 = vpop.f32.mrf.mxu0
        %v4100 = vadd.f32 %v3810, %v4099
        %v4101 = vand.u32 %v987, 4294901760
        %v4102 = vsub.f32 %v987, %v4101
        %v4103 = vand.u32 %v4102, 4294901760
        %4104 = vmatmul.f32.gmra.mxu0 %v4103
        %v4105 = vpop.f32.mrf.mxu0
        %v4106 = vadd.f32 %v3815, %v4105
        %v4107 = vand.u32 %v991, 4294901760
        %v4108 = vsub.f32 %v991, %v4107
        %v4109 = vand.u32 %v4108, 4294901760
        %4110 = vmatmul.f32.gmra.mxu0 %v4109
        %v4111 = vpop.f32.mrf.mxu0
        %v4112 = vadd.f32 %v3820, %v4111
        %v4113 = vand.u32 %v995, 4294901760
        %v4114 = vsub.f32 %v995, %v4113
        %v4115 = vand.u32 %v4114, 4294901760
        %4116 = vmatmul.f32.gmra.mxu0 %v4115
        %v4117 = vpop.f32.mrf.mxu0
        %v4118 = vadd.f32 %v3825, %v4117
        %v4119 = vand.u32 %v999, 4294901760
        %v4120 = vsub.f32 %v999, %v4119
        %v4121 = vand.u32 %v4120, 4294901760
        %4122 = vmatmul.f32.gmra.mxu0 %v4121
        %v4123 = vpop.f32.mrf.mxu0
        %v4124 = vadd.f32 %v3830, %v4123
        %v4125 = vand.u32 %v1003, 4294901760
        %v4126 = vsub.f32 %v1003, %v4125
        %v4127 = vand.u32 %v4126, 4294901760
        %4128 = vmatmul.f32.gmra.mxu0 %v4127
        %v4129 = vpop.f32.mrf.mxu0
        %v4130 = vadd.f32 %v3835, %v4129
        %v4131 = vand.u32 %v1007, 4294901760
        %v4132 = vsub.f32 %v1007, %v4131
        %v4133 = vand.u32 %v4132, 4294901760
        %4134 = vmatmul.f32.gmra.mxu0 %v4133
        %v4135 = vpop.f32.mrf.mxu0
        %v4136 = vadd.f32 %v3840, %v4135
        %v4137 = vand.u32 %v1011, 4294901760
        %v4138 = vsub.f32 %v1011, %v4137
        %v4139 = vand.u32 %v4138, 4294901760
        %4140 = vmatmul.f32.gmra.mxu0 %v4139
        %v4141 = vpop.f32.mrf.mxu0
        %v4142 = vadd.f32 %v3845, %v4141
        %v4143 = vand.u32 %v1015, 4294901760
        %v4144 = vsub.f32 %v1015, %v4143
        %v4145 = vand.u32 %v4144, 4294901760
        %4146 = vmatmul.f32.gmra.mxu0 %v4145
        %v4147 = vpop.f32.mrf.mxu0
        %v4148 = vadd.f32 %v3850, %v4147
        %v4149 = vand.u32 %v1019, 4294901760
        %v4150 = vsub.f32 %v1019, %v4149
        %v4151 = vand.u32 %v4150, 4294901760
        %4152 = vmatmul.f32.gmra.mxu0 %v4151
        %v4153 = vpop.f32.mrf.mxu0
        %v4154 = vadd.f32 %v3855, %v4153
        %v4155 = vand.u32 %v1023, 4294901760
        %v4156 = vsub.f32 %v1023, %v4155
        %v4157 = vand.u32 %v4156, 4294901760
        %4158 = vmatmul.f32.gmra.mxu0 %v4157
        %v4159 = vpop.f32.mrf.mxu0
        %v4160 = vadd.f32 %v3860, %v4159
        %v4161 = vand.u32 %v1027, 4294901760
        %v4162 = vsub.f32 %v1027, %v4161
        %v4163 = vand.u32 %v4162, 4294901760
        %4164 = vmatmul.f32.gmra.mxu0 %v4163
        %v4165 = vpop.f32.mrf.mxu0
        %v4166 = vadd.f32 %v3865, %v4165
        %v4167 = vand.u32 %v1031, 4294901760
        %v4168 = vsub.f32 %v1031, %v4167
        %v4169 = vand.u32 %v4168, 4294901760
        %4170 = vmatmul.f32.gmra.mxu0 %v4169
        %v4171 = vpop.f32.mrf.mxu0
        %v4172 = vadd.f32 %v3870, %v4171
        %v4173 = vand.u32 %v1035, 4294901760
        %v4174 = vsub.f32 %v1035, %v4173
        %v4175 = vand.u32 %v4174, 4294901760
        %4176 = vmatmul.f32.gmra.mxu0 %v4175
        %v4177 = vpop.f32.mrf.mxu0
        %v4178 = vadd.f32 %v3875, %v4177
        %v4179 = vand.u32 %v1039, 4294901760
        %v4180 = vsub.f32 %v1039, %v4179
        %v4181 = vand.u32 %v4180, 4294901760
        %4182 = vmatmul.f32.gmra.mxu0 %v4181
        %v4183 = vpop.f32.mrf.mxu0
        %v4184 = vadd.f32 %v3880, %v4183
        %v4185 = vand.u32 %v1043, 4294901760
        %v4186 = vsub.f32 %v1043, %v4185
        %v4187 = vand.u32 %v4186, 4294901760
        %4188 = vmatmul.f32.gmra.mxu0 %v4187
        %v4189 = vpop.f32.mrf.mxu0
        %v4190 = vadd.f32 %v3885, %v4189
        %v4191 = vand.u32 %v1047, 4294901760
        %v4192 = vsub.f32 %v1047, %v4191
        %v4193 = vand.u32 %v4192, 4294901760
        %4194 = vmatmul.f32.gmra.mxu0 %v4193
        %v4195 = vpop.f32.mrf.mxu0
        %v4196 = vadd.f32 %v3890, %v4195
        %v4197 = vand.u32 %v1051, 4294901760
        %v4198 = vsub.f32 %v1051, %v4197
        %v4199 = vand.u32 %v4198, 4294901760
        %4200 = vmatmul.f32.gmra.mxu0 %v4199
        %v4201 = vpop.f32.mrf.mxu0
        %v4202 = vadd.f32 %v3895, %v4201
        %v4203 = vand.u32 %v1055, 4294901760
        %v4204 = vsub.f32 %v1055, %v4203
        %v4205 = vand.u32 %v4204, 4294901760
        %4206 = vmatmul.f32.gmra.mxu0 %v4205
        %v4207 = vpop.f32.mrf.mxu0
        %v4208 = vadd.f32 %v3900, %v4207
        %v4209 = vand.u32 %v1059, 4294901760
        %v4210 = vsub.f32 %v1059, %v4209
        %v4211 = vand.u32 %v4210, 4294901760
        %4212 = vmatmul.f32.gmra.mxu0 %v4211
        %v4213 = vpop.f32.mrf.mxu0
        %v4214 = vadd.f32 %v3905, %v4213
        %v4215 = vand.u32 %v1063, 4294901760
        %v4216 = vsub.f32 %v1063, %v4215
        %v4217 = vand.u32 %v4216, 4294901760
        %4218 = vmatmul.f32.gmra.mxu0 %v4217
        %v4219 = vpop.f32.mrf.mxu0
        %v4220 = vadd.f32 %v3910, %v4219
        %v4221 = vand.u32 %v1067, 4294901760
        %v4222 = vsub.f32 %v1067, %v4221
        %v4223 = vand.u32 %v4222, 4294901760
        %4224 = vmatmul.f32.gmra.mxu0 %v4223
        %v4225 = vpop.f32.mrf.mxu0
        %v4226 = vadd.f32 %v3915, %v4225
        %v4227 = vand.u32 %v1071, 4294901760
        %v4228 = vsub.f32 %v1071, %v4227
        %v4229 = vand.u32 %v4228, 4294901760
        %4230 = vmatmul.f32.gmra.mxu0 %v4229
        %v4231 = vpop.f32.mrf.mxu0
        %v4232 = vadd.f32 %v3920, %v4231
        %v4233 = vand.u32 %v1075, 4294901760
        %v4234 = vsub.f32 %v1075, %v4233
        %v4235 = vand.u32 %v4234, 4294901760
        %4236 = vmatmul.f32.gmra.mxu0 %v4235
        %v4237 = vpop.f32.mrf.mxu0
        %v4238 = vadd.f32 %v3925, %v4237
        %v4239 = vand.u32 %v1079, 4294901760
        %v4240 = vsub.f32 %v1079, %v4239
        %v4241 = vand.u32 %v4240, 4294901760
        %4242 = vmatmul.f32.gmra.mxu0 %v4241
        %v4243 = vpop.f32.mrf.mxu0
        %v4244 = vadd.f32 %v3930, %v4243
        %v4245 = vand.u32 %v1083, 4294901760
        %v4246 = vsub.f32 %v1083, %v4245
        %v4247 = vand.u32 %v4246, 4294901760
        %4248 = vmatmul.f32.gmra.mxu0 %v4247
        %v4249 = vpop.f32.mrf.mxu0
        %v4250 = vadd.f32 %v3935, %v4249
        %v4251 = vand.u32 %v1087, 4294901760
        %v4252 = vsub.f32 %v1087, %v4251
        %v4253 = vand.u32 %v4252, 4294901760
        %4254 = vmatmul.f32.gmra.mxu0 %v4253
        %v4255 = vpop.f32.mrf.mxu0
        %v4256 = vadd.f32 %v3940, %v4255
        %v4257 = vand.u32 %v1091, 4294901760
        %v4258 = vsub.f32 %v1091, %v4257
        %v4259 = vand.u32 %v4258, 4294901760
        %4260 = vmatmul.f32.gmra.mxu0 %v4259
        %v4261 = vpop.f32.mrf.mxu0
        %v4262 = vadd.f32 %v3945, %v4261
        %v4263 = vand.u32 %v1095, 4294901760
        %v4264 = vsub.f32 %v1095, %v4263
        %v4265 = vand.u32 %v4264, 4294901760
        %4266 = vmatmul.f32.gmra.mxu0 %v4265
        %v4267 = vpop.f32.mrf.mxu0
        %v4268 = vadd.f32 %v3950, %v4267
        %v4269 = vand.u32 %v1099, 4294901760
        %v4270 = vsub.f32 %v1099, %v4269
        %v4271 = vand.u32 %v4270, 4294901760
        %4272 = vmatmul.f32.gmra.mxu0 %v4271
        %v4273 = vpop.f32.mrf.mxu0
        %v4274 = vadd.f32 %v3955, %v4273
        %v4275 = vand.u32 %v1103, 4294901760
        %v4276 = vsub.f32 %v1103, %v4275
        %v4277 = vand.u32 %v4276, 4294901760
        %4278 = vmatmul.f32.gmra.mxu0 %v4277
        %v4279 = vpop.f32.mrf.mxu0
        %v4280 = vadd.f32 %v3960, %v4279
        %v4281 = vand.u32 %v1107, 4294901760
        %v4282 = vsub.f32 %v1107, %v4281
        %v4283 = vand.u32 %v4282, 4294901760
        %4284 = vmatmul.f32.gmra.mxu0 %v4283
        %v4285 = vpop.f32.mrf.mxu0
        %v4286 = vadd.f32 %v3965, %v4285
        %4287 = vdwg.mxu0
        %v4288 = vand.u32 %v1141, 4294901760
        %v4289 = vsub.f32 %v1141, %v4288
        %v4290 = vand.u32 %v4289, 4294901760
        %4291 = vmatpush.msra.mxu0 %v4290
        %v4292 = vand.u32 %v1140, 4294901760
        %v4293 = vsub.f32 %v1140, %v4292
        %v4294 = vand.u32 %v4293, 4294901760
        %4295 = vmatpush.msra.mxu0 %v4294
        %v4296 = vand.u32 %v1139, 4294901760
        %v4297 = vsub.f32 %v1139, %v4296
        %v4298 = vand.u32 %v4297, 4294901760
        %4299 = vmatpush.msra.mxu0 %v4298
        %v4300 = vand.u32 %v1138, 4294901760
        %v4301 = vsub.f32 %v1138, %v4300
        %v4302 = vand.u32 %v4301, 4294901760
        %4303 = vmatpush.msra.mxu0 %v4302
        %v4304 = vand.u32 %v1137, 4294901760
        %v4305 = vsub.f32 %v1137, %v4304
        %v4306 = vand.u32 %v4305, 4294901760
        %4307 = vmatpush.msra.mxu0 %v4306
        %v4308 = vand.u32 %v1136, 4294901760
        %v4309 = vsub.f32 %v1136, %v4308
        %v4310 = vand.u32 %v4309, 4294901760
        %4311 = vmatpush.msra.mxu0 %v4310
        %v4312 = vand.u32 %v1135, 4294901760
        %v4313 = vsub.f32 %v1135, %v4312
        %v4314 = vand.u32 %v4313, 4294901760
        %4315 = vmatpush.msra.mxu0 %v4314
        %v4316 = vand.u32 %v1134, 4294901760
        %v4317 = vsub.f32 %v1134, %v4316
        %v4318 = vand.u32 %v4317, 4294901760
        %4319 = vmatpush.msra.mxu0 %v4318
        %v4320 = vand.u32 %v1133, 4294901760
        %v4321 = vsub.f32 %v1133, %v4320
        %v4322 = vand.u32 %v4321, 4294901760
        %4323 = vmatpush.msra.mxu0 %v4322
        %v4324 = vand.u32 %v1132, 4294901760
        %v4325 = vsub.f32 %v1132, %v4324
        %v4326 = vand.u32 %v4325, 4294901760
        %4327 = vmatpush.msra.mxu0 %v4326
        %v4328 = vand.u32 %v1131, 4294901760
        %v4329 = vsub.f32 %v1131, %v4328
        %v4330 = vand.u32 %v4329, 4294901760
        %4331 = vmatpush.msra.mxu0 %v4330
        %v4332 = vand.u32 %v1130, 4294901760
        %v4333 = vsub.f32 %v1130, %v4332
        %v4334 = vand.u32 %v4333, 4294901760
        %4335 = vmatpush.msra.mxu0 %v4334
        %v4336 = vand.u32 %v1129, 4294901760
        %v4337 = vsub.f32 %v1129, %v4336
        %v4338 = vand.u32 %v4337, 4294901760
        %4339 = vmatpush.msra.mxu0 %v4338
        %v4340 = vand.u32 %v1128, 4294901760
        %v4341 = vsub.f32 %v1128, %v4340
        %v4342 = vand.u32 %v4341, 4294901760
        %4343 = vmatpush.msra.mxu0 %v4342
        %v4344 = vand.u32 %v1127, 4294901760
        %v4345 = vsub.f32 %v1127, %v4344
        %v4346 = vand.u32 %v4345, 4294901760
        %4347 = vmatpush.msra.mxu0 %v4346
        %v4348 = vand.u32 %v1126, 4294901760
        %v4349 = vsub.f32 %v1126, %v4348
        %v4350 = vand.u32 %v4349, 4294901760
        %4351 = vmatpush.msra.mxu0 %v4350
        %v4352 = vand.u32 %v919, 4294901760
        %4353 = vmatmul.f32.gmra.mxu0 %v4352
        %v4354 = vpop.f32.mrf.mxu0
        %v4355 = vadd.f32 %v4004, %v4354
        %v4356 = vand.u32 %v923, 4294901760
        %4357 = vmatmul.f32.gmra.mxu0 %v4356
        %v4358 = vpop.f32.mrf.mxu0
        %v4359 = vadd.f32 %v4010, %v4358
        %v4360 = vand.u32 %v927, 4294901760
        %4361 = vmatmul.f32.gmra.mxu0 %v4360
        %v4362 = vpop.f32.mrf.mxu0
        %v4363 = vadd.f32 %v4016, %v4362
        %v4364 = vand.u32 %v931, 4294901760
        %4365 = vmatmul.f32.gmra.mxu0 %v4364
        %v4366 = vpop.f32.mrf.mxu0
        %v4367 = vadd.f32 %v4022, %v4366
        %v4368 = vand.u32 %v935, 4294901760
        %4369 = vmatmul.f32.gmra.mxu0 %v4368
        %v4370 = vpop.f32.mrf.mxu0
        %v4371 = vadd.f32 %v4028, %v4370
        %v4372 = vand.u32 %v939, 4294901760
        %4373 = vmatmul.f32.gmra.mxu0 %v4372
        %v4374 = vpop.f32.mrf.mxu0
        %v4375 = vadd.f32 %v4034, %v4374
        %v4376 = vand.u32 %v943, 4294901760
        %4377 = vmatmul.f32.gmra.mxu0 %v4376
        %v4378 = vpop.f32.mrf.mxu0
        %v4379 = vadd.f32 %v4040, %v4378
        %v4380 = vand.u32 %v947, 4294901760
        %4381 = vmatmul.f32.gmra.mxu0 %v4380
        %v4382 = vpop.f32.mrf.mxu0
        %v4383 = vadd.f32 %v4046, %v4382
        %v4384 = vand.u32 %v951, 4294901760
        %4385 = vmatmul.f32.gmra.mxu0 %v4384
        %v4386 = vpop.f32.mrf.mxu0
        %v4387 = vadd.f32 %v4052, %v4386
        %v4388 = vand.u32 %v955, 4294901760
        %4389 = vmatmul.f32.gmra.mxu0 %v4388
        %v4390 = vpop.f32.mrf.mxu0
        %v4391 = vadd.f32 %v4058, %v4390
        %v4392 = vand.u32 %v959, 4294901760
        %4393 = vmatmul.f32.gmra.mxu0 %v4392
        %v4394 = vpop.f32.mrf.mxu0
        %v4395 = vadd.f32 %v4064, %v4394
        %v4396 = vand.u32 %v963, 4294901760
        %4397 = vmatmul.f32.gmra.mxu0 %v4396
        %v4398 = vpop.f32.mrf.mxu0
        %v4399 = vadd.f32 %v4070, %v4398
        %v4400 = vand.u32 %v967, 4294901760
        %4401 = vmatmul.f32.gmra.mxu0 %v4400
        %v4402 = vpop.f32.mrf.mxu0
        %v4403 = vadd.f32 %v4076, %v4402
        %v4404 = vand.u32 %v971, 4294901760
        %4405 = vmatmul.f32.gmra.mxu0 %v4404
        %v4406 = vpop.f32.mrf.mxu0
        %v4407 = vadd.f32 %v4082, %v4406
        %v4408 = vand.u32 %v975, 4294901760
        %4409 = vmatmul.f32.gmra.mxu0 %v4408
        %v4410 = vpop.f32.mrf.mxu0
        %v4411 = vadd.f32 %v4088, %v4410
        %v4412 = vand.u32 %v979, 4294901760
        %4413 = vmatmul.f32.gmra.mxu0 %v4412
        %v4414 = vpop.f32.mrf.mxu0
        %v4415 = vadd.f32 %v4094, %v4414
        %v4416 = vand.u32 %v983, 4294901760
        %4417 = vmatmul.f32.gmra.mxu0 %v4416
        %v4418 = vpop.f32.mrf.mxu0
        %v4419 = vadd.f32 %v4100, %v4418
        %v4420 = vand.u32 %v987, 4294901760
        %4421 = vmatmul.f32.gmra.mxu0 %v4420
        %v4422 = vpop.f32.mrf.mxu0
        %v4423 = vadd.f32 %v4106, %v4422
        %v4424 = vand.u32 %v991, 4294901760
        %4425 = vmatmul.f32.gmra.mxu0 %v4424
        %v4426 = vpop.f32.mrf.mxu0
        %v4427 = vadd.f32 %v4112, %v4426
        %v4428 = vand.u32 %v995, 4294901760
        %4429 = vmatmul.f32.gmra.mxu0 %v4428
        %v4430 = vpop.f32.mrf.mxu0
        %v4431 = vadd.f32 %v4118, %v4430
        %v4432 = vand.u32 %v999, 4294901760
        %4433 = vmatmul.f32.gmra.mxu0 %v4432
        %v4434 = vpop.f32.mrf.mxu0
        %v4435 = vadd.f32 %v4124, %v4434
        %v4436 = vand.u32 %v1003, 4294901760
        %4437 = vmatmul.f32.gmra.mxu0 %v4436
        %v4438 = vpop.f32.mrf.mxu0
        %v4439 = vadd.f32 %v4130, %v4438
        %v4440 = vand.u32 %v1007, 4294901760
        %4441 = vmatmul.f32.gmra.mxu0 %v4440
        %v4442 = vpop.f32.mrf.mxu0
        %v4443 = vadd.f32 %v4136, %v4442
        %v4444 = vand.u32 %v1011, 4294901760
        %4445 = vmatmul.f32.gmra.mxu0 %v4444
        %v4446 = vpop.f32.mrf.mxu0
        %v4447 = vadd.f32 %v4142, %v4446
        %v4448 = vand.u32 %v1015, 4294901760
        %4449 = vmatmul.f32.gmra.mxu0 %v4448
        %v4450 = vpop.f32.mrf.mxu0
        %v4451 = vadd.f32 %v4148, %v4450
        %v4452 = vand.u32 %v1019, 4294901760
        %4453 = vmatmul.f32.gmra.mxu0 %v4452
        %v4454 = vpop.f32.mrf.mxu0
        %v4455 = vadd.f32 %v4154, %v4454
        %v4456 = vand.u32 %v1023, 4294901760
        %4457 = vmatmul.f32.gmra.mxu0 %v4456
        %v4458 = vpop.f32.mrf.mxu0
        %v4459 = vadd.f32 %v4160, %v4458
        %v4460 = vand.u32 %v1027, 4294901760
        %4461 = vmatmul.f32.gmra.mxu0 %v4460
        %v4462 = vpop.f32.mrf.mxu0
        %v4463 = vadd.f32 %v4166, %v4462
        %v4464 = vand.u32 %v1031, 4294901760
        %4465 = vmatmul.f32.gmra.mxu0 %v4464
        %v4466 = vpop.f32.mrf.mxu0
        %v4467 = vadd.f32 %v4172, %v4466
        %v4468 = vand.u32 %v1035, 4294901760
        %4469 = vmatmul.f32.gmra.mxu0 %v4468
        %v4470 = vpop.f32.mrf.mxu0
        %v4471 = vadd.f32 %v4178, %v4470
        %v4472 = vand.u32 %v1039, 4294901760
        %4473 = vmatmul.f32.gmra.mxu0 %v4472
        %v4474 = vpop.f32.mrf.mxu0
        %v4475 = vadd.f32 %v4184, %v4474
        %v4476 = vand.u32 %v1043, 4294901760
        %4477 = vmatmul.f32.gmra.mxu0 %v4476
        %v4478 = vpop.f32.mrf.mxu0
        %v4479 = vadd.f32 %v4190, %v4478
        %v4480 = vand.u32 %v1047, 4294901760
        %4481 = vmatmul.f32.gmra.mxu0 %v4480
        %v4482 = vpop.f32.mrf.mxu0
        %v4483 = vadd.f32 %v4196, %v4482
        %v4484 = vand.u32 %v1051, 4294901760
        %4485 = vmatmul.f32.gmra.mxu0 %v4484
        %v4486 = vpop.f32.mrf.mxu0
        %v4487 = vadd.f32 %v4202, %v4486
        %v4488 = vand.u32 %v1055, 4294901760
        %4489 = vmatmul.f32.gmra.mxu0 %v4488
        %v4490 = vpop.f32.mrf.mxu0
        %v4491 = vadd.f32 %v4208, %v4490
        %v4492 = vand.u32 %v1059, 4294901760
        %4493 = vmatmul.f32.gmra.mxu0 %v4492
        %v4494 = vpop.f32.mrf.mxu0
        %v4495 = vadd.f32 %v4214, %v4494
        %v4496 = vand.u32 %v1063, 4294901760
        %4497 = vmatmul.f32.gmra.mxu0 %v4496
        %v4498 = vpop.f32.mrf.mxu0
        %v4499 = vadd.f32 %v4220, %v4498
        %v4500 = vand.u32 %v1067, 4294901760
        %4501 = vmatmul.f32.gmra.mxu0 %v4500
        %v4502 = vpop.f32.mrf.mxu0
        %v4503 = vadd.f32 %v4226, %v4502
        %v4504 = vand.u32 %v1071, 4294901760
        %4505 = vmatmul.f32.gmra.mxu0 %v4504
        %v4506 = vpop.f32.mrf.mxu0
        %v4507 = vadd.f32 %v4232, %v4506
        %v4508 = vand.u32 %v1075, 4294901760
        %4509 = vmatmul.f32.gmra.mxu0 %v4508
        %v4510 = vpop.f32.mrf.mxu0
        %v4511 = vadd.f32 %v4238, %v4510
        %v4512 = vand.u32 %v1079, 4294901760
        %4513 = vmatmul.f32.gmra.mxu0 %v4512
        %v4514 = vpop.f32.mrf.mxu0
        %v4515 = vadd.f32 %v4244, %v4514
        %v4516 = vand.u32 %v1083, 4294901760
        %4517 = vmatmul.f32.gmra.mxu0 %v4516
        %v4518 = vpop.f32.mrf.mxu0
        %v4519 = vadd.f32 %v4250, %v4518
        %v4520 = vand.u32 %v1087, 4294901760
        %4521 = vmatmul.f32.gmra.mxu0 %v4520
        %v4522 = vpop.f32.mrf.mxu0
        %v4523 = vadd.f32 %v4256, %v4522
        %v4524 = vand.u32 %v1091, 4294901760
        %4525 = vmatmul.f32.gmra.mxu0 %v4524
        %v4526 = vpop.f32.mrf.mxu0
        %v4527 = vadd.f32 %v4262, %v4526
        %v4528 = vand.u32 %v1095, 4294901760
        %4529 = vmatmul.f32.gmra.mxu0 %v4528
        %v4530 = vpop.f32.mrf.mxu0
        %v4531 = vadd.f32 %v4268, %v4530
        %v4532 = vand.u32 %v1099, 4294901760
        %4533 = vmatmul.f32.gmra.mxu0 %v4532
        %v4534 = vpop.f32.mrf.mxu0
        %v4535 = vadd.f32 %v4274, %v4534
        %v4536 = vand.u32 %v1103, 4294901760
        %4537 = vmatmul.f32.gmra.mxu0 %v4536
        %v4538 = vpop.f32.mrf.mxu0
        %v4539 = vadd.f32 %v4280, %v4538
        %v4540 = vand.u32 %v1107, 4294901760
        %4541 = vmatmul.f32.gmra.mxu0 %v4540
        %v4542 = vpop.f32.mrf.mxu0
        %v4543 = vadd.f32 %v4286, %v4542
        %4544 = vdwg.mxu0
        %v4545 = vand.u32 %v1141, 4294901760
        %4546 = vmatpush.msra.mxu0 %v4545
        %v4547 = vand.u32 %v1140, 4294901760
        %4548 = vmatpush.msra.mxu0 %v4547
        %v4549 = vand.u32 %v1139, 4294901760
        %4550 = vmatpush.msra.mxu0 %v4549
        %v4551 = vand.u32 %v1138, 4294901760
        %4552 = vmatpush.msra.mxu0 %v4551
        %v4553 = vand.u32 %v1137, 4294901760
        %4554 = vmatpush.msra.mxu0 %v4553
        %v4555 = vand.u32 %v1136, 4294901760
        %4556 = vmatpush.msra.mxu0 %v4555
        %v4557 = vand.u32 %v1135, 4294901760
        %4558 = vmatpush.msra.mxu0 %v4557
        %v4559 = vand.u32 %v1134, 4294901760
        %4560 = vmatpush.msra.mxu0 %v4559
        %v4561 = vand.u32 %v1133, 4294901760
        %4562 = vmatpush.msra.mxu0 %v4561
        %v4563 = vand.u32 %v1132, 4294901760
        %4564 = vmatpush.msra.mxu0 %v4563
        %v4565 = vand.u32 %v1131, 4294901760
        %4566 = vmatpush.msra.mxu0 %v4565
        %v4567 = vand.u32 %v1130, 4294901760
        %4568 = vmatpush.msra.mxu0 %v4567
        %v4569 = vand.u32 %v1129, 4294901760
        %4570 = vmatpush.msra.mxu0 %v4569
        %v4571 = vand.u32 %v1128, 4294901760
        %4572 = vmatpush.msra.mxu0 %v4571
        %v4573 = vand.u32 %v1127, 4294901760
        %4574 = vmatpush.msra.mxu0 %v4573
        %v4575 = vand.u32 %v1126, 4294901760
        %4576 = vmatpush.msra.mxu0 %v4575
        %v4577 = vand.u32 %v919, 4294901760
        %4578 = vmatmul.f32.gmra.mxu0 %v4577
        %v4579 = vpop.f32.mrf.mxu0
        %v4580 = vadd.f32 %v4355, %v4579
        %v4581 = vand.u32 %v923, 4294901760
        %4582 = vmatmul.f32.gmra.mxu0 %v4581
        %v4583 = vpop.f32.mrf.mxu0
        %v4584 = vadd.f32 %v4359, %v4583
        %v4585 = vand.u32 %v927, 4294901760
        %4586 = vmatmul.f32.gmra.mxu0 %v4585
        %v4587 = vpop.f32.mrf.mxu0
        %v4588 = vadd.f32 %v4363, %v4587
        %v4589 = vand.u32 %v931, 4294901760
        %4590 = vmatmul.f32.gmra.mxu0 %v4589
        %v4591 = vpop.f32.mrf.mxu0
        %v4592 = vadd.f32 %v4367, %v4591
        %v4593 = vand.u32 %v935, 4294901760
        %4594 = vmatmul.f32.gmra.mxu0 %v4593
        %v4595 = vpop.f32.mrf.mxu0
        %v4596 = vadd.f32 %v4371, %v4595
        %v4597 = vand.u32 %v939, 4294901760
        %4598 = vmatmul.f32.gmra.mxu0 %v4597
        %v4599 = vpop.f32.mrf.mxu0
        %v4600 = vadd.f32 %v4375, %v4599
        %v4601 = vand.u32 %v943, 4294901760
        %4602 = vmatmul.f32.gmra.mxu0 %v4601
        %v4603 = vpop.f32.mrf.mxu0
        %v4604 = vadd.f32 %v4379, %v4603
        %v4605 = vand.u32 %v947, 4294901760
        %4606 = vmatmul.f32.gmra.mxu0 %v4605
        %v4607 = vpop.f32.mrf.mxu0
        %v4608 = vadd.f32 %v4383, %v4607
        %v4609 = vand.u32 %v951, 4294901760
        %4610 = vmatmul.f32.gmra.mxu0 %v4609
        %v4611 = vpop.f32.mrf.mxu0
        %v4612 = vadd.f32 %v4387, %v4611
        %v4613 = vand.u32 %v955, 4294901760
        %4614 = vmatmul.f32.gmra.mxu0 %v4613
        %v4615 = vpop.f32.mrf.mxu0
        %v4616 = vadd.f32 %v4391, %v4615
        %v4617 = vand.u32 %v959, 4294901760
        %4618 = vmatmul.f32.gmra.mxu0 %v4617
        %v4619 = vpop.f32.mrf.mxu0
        %v4620 = vadd.f32 %v4395, %v4619
        %v4621 = vand.u32 %v963, 4294901760
        %4622 = vmatmul.f32.gmra.mxu0 %v4621
        %v4623 = vpop.f32.mrf.mxu0
        %v4624 = vadd.f32 %v4399, %v4623
        %v4625 = vand.u32 %v967, 4294901760
        %4626 = vmatmul.f32.gmra.mxu0 %v4625
        %v4627 = vpop.f32.mrf.mxu0
        %v4628 = vadd.f32 %v4403, %v4627
        %v4629 = vand.u32 %v971, 4294901760
        %4630 = vmatmul.f32.gmra.mxu0 %v4629
        %v4631 = vpop.f32.mrf.mxu0
        %v4632 = vadd.f32 %v4407, %v4631
        %v4633 = vand.u32 %v975, 4294901760
        %4634 = vmatmul.f32.gmra.mxu0 %v4633
        %v4635 = vpop.f32.mrf.mxu0
        %v4636 = vadd.f32 %v4411, %v4635
        %v4637 = vand.u32 %v979, 4294901760
        %4638 = vmatmul.f32.gmra.mxu0 %v4637
        %v4639 = vpop.f32.mrf.mxu0
        %v4640 = vadd.f32 %v4415, %v4639
        %v4641 = vand.u32 %v983, 4294901760
        %4642 = vmatmul.f32.gmra.mxu0 %v4641
        %v4643 = vpop.f32.mrf.mxu0
        %v4644 = vadd.f32 %v4419, %v4643
        %v4645 = vand.u32 %v987, 4294901760
        %4646 = vmatmul.f32.gmra.mxu0 %v4645
        %v4647 = vpop.f32.mrf.mxu0
        %v4648 = vadd.f32 %v4423, %v4647
        %v4649 = vand.u32 %v991, 4294901760
        %4650 = vmatmul.f32.gmra.mxu0 %v4649
        %v4651 = vpop.f32.mrf.mxu0
        %v4652 = vadd.f32 %v4427, %v4651
        %v4653 = vand.u32 %v995, 4294901760
        %4654 = vmatmul.f32.gmra.mxu0 %v4653
        %v4655 = vpop.f32.mrf.mxu0
        %v4656 = vadd.f32 %v4431, %v4655
        %v4657 = vand.u32 %v999, 4294901760
        %4658 = vmatmul.f32.gmra.mxu0 %v4657
        %v4659 = vpop.f32.mrf.mxu0
        %v4660 = vadd.f32 %v4435, %v4659
        %v4661 = vand.u32 %v1003, 4294901760
        %4662 = vmatmul.f32.gmra.mxu0 %v4661
        %v4663 = vpop.f32.mrf.mxu0
        %v4664 = vadd.f32 %v4439, %v4663
        %v4665 = vand.u32 %v1007, 4294901760
        %4666 = vmatmul.f32.gmra.mxu0 %v4665
        %v4667 = vpop.f32.mrf.mxu0
        %v4668 = vadd.f32 %v4443, %v4667
        %v4669 = vand.u32 %v1011, 4294901760
        %4670 = vmatmul.f32.gmra.mxu0 %v4669
        %v4671 = vpop.f32.mrf.mxu0
        %v4672 = vadd.f32 %v4447, %v4671
        %v4673 = vand.u32 %v1015, 4294901760
        %4674 = vmatmul.f32.gmra.mxu0 %v4673
        %v4675 = vpop.f32.mrf.mxu0
        %v4676 = vadd.f32 %v4451, %v4675
        %v4677 = vand.u32 %v1019, 4294901760
        %4678 = vmatmul.f32.gmra.mxu0 %v4677
        %v4679 = vpop.f32.mrf.mxu0
        %v4680 = vadd.f32 %v4455, %v4679
        %v4681 = vand.u32 %v1023, 4294901760
        %4682 = vmatmul.f32.gmra.mxu0 %v4681
        %v4683 = vpop.f32.mrf.mxu0
        %v4684 = vadd.f32 %v4459, %v4683
        %v4685 = vand.u32 %v1027, 4294901760
        %4686 = vmatmul.f32.gmra.mxu0 %v4685
        %v4687 = vpop.f32.mrf.mxu0
        %v4688 = vadd.f32 %v4463, %v4687
        %v4689 = vand.u32 %v1031, 4294901760
        %4690 = vmatmul.f32.gmra.mxu0 %v4689
        %v4691 = vpop.f32.mrf.mxu0
        %v4692 = vadd.f32 %v4467, %v4691
        %v4693 = vand.u32 %v1035, 4294901760
        %4694 = vmatmul.f32.gmra.mxu0 %v4693
        %v4695 = vpop.f32.mrf.mxu0
        %v4696 = vadd.f32 %v4471, %v4695
        %v4697 = vand.u32 %v1039, 4294901760
        %4698 = vmatmul.f32.gmra.mxu0 %v4697
        %v4699 = vpop.f32.mrf.mxu0
        %v4700 = vadd.f32 %v4475, %v4699
        %v4701 = vand.u32 %v1043, 4294901760
        %4702 = vmatmul.f32.gmra.mxu0 %v4701
        %v4703 = vpop.f32.mrf.mxu0
        %v4704 = vadd.f32 %v4479, %v4703
        %v4705 = vand.u32 %v1047, 4294901760
        %4706 = vmatmul.f32.gmra.mxu0 %v4705
        %v4707 = vpop.f32.mrf.mxu0
        %v4708 = vadd.f32 %v4483, %v4707
        %v4709 = vand.u32 %v1051, 4294901760
        %4710 = vmatmul.f32.gmra.mxu0 %v4709
        %v4711 = vpop.f32.mrf.mxu0
        %v4712 = vadd.f32 %v4487, %v4711
        %v4713 = vand.u32 %v1055, 4294901760
        %4714 = vmatmul.f32.gmra.mxu0 %v4713
        %v4715 = vpop.f32.mrf.mxu0
        %v4716 = vadd.f32 %v4491, %v4715
        %v4717 = vand.u32 %v1059, 4294901760
        %4718 = vmatmul.f32.gmra.mxu0 %v4717
        %v4719 = vpop.f32.mrf.mxu0
        %v4720 = vadd.f32 %v4495, %v4719
        %v4721 = vand.u32 %v1063, 4294901760
        %4722 = vmatmul.f32.gmra.mxu0 %v4721
        %v4723 = vpop.f32.mrf.mxu0
        %v4724 = vadd.f32 %v4499, %v4723
        %v4725 = vand.u32 %v1067, 4294901760
        %4726 = vmatmul.f32.gmra.mxu0 %v4725
        %v4727 = vpop.f32.mrf.mxu0
        %v4728 = vadd.f32 %v4503, %v4727
        %v4729 = vand.u32 %v1071, 4294901760
        %4730 = vmatmul.f32.gmra.mxu0 %v4729
        %v4731 = vpop.f32.mrf.mxu0
        %v4732 = vadd.f32 %v4507, %v4731
        %v4733 = vand.u32 %v1075, 4294901760
        %4734 = vmatmul.f32.gmra.mxu0 %v4733
        %v4735 = vpop.f32.mrf.mxu0
        %v4736 = vadd.f32 %v4511, %v4735
        %v4737 = vand.u32 %v1079, 4294901760
        %4738 = vmatmul.f32.gmra.mxu0 %v4737
        %v4739 = vpop.f32.mrf.mxu0
        %v4740 = vadd.f32 %v4515, %v4739
        %v4741 = vand.u32 %v1083, 4294901760
        %4742 = vmatmul.f32.gmra.mxu0 %v4741
        %v4743 = vpop.f32.mrf.mxu0
        %v4744 = vadd.f32 %v4519, %v4743
        %v4745 = vand.u32 %v1087, 4294901760
        %4746 = vmatmul.f32.gmra.mxu0 %v4745
        %v4747 = vpop.f32.mrf.mxu0
        %v4748 = vadd.f32 %v4523, %v4747
        %v4749 = vand.u32 %v1091, 4294901760
        %4750 = vmatmul.f32.gmra.mxu0 %v4749
        %v4751 = vpop.f32.mrf.mxu0
        %v4752 = vadd.f32 %v4527, %v4751
        %v4753 = vand.u32 %v1095, 4294901760
        %4754 = vmatmul.f32.gmra.mxu0 %v4753
        %v4755 = vpop.f32.mrf.mxu0
        %v4756 = vadd.f32 %v4531, %v4755
        %v4757 = vand.u32 %v1099, 4294901760
        %4758 = vmatmul.f32.gmra.mxu0 %v4757
        %v4759 = vpop.f32.mrf.mxu0
        %v4760 = vadd.f32 %v4535, %v4759
        %v4761 = vand.u32 %v1103, 4294901760
        %4762 = vmatmul.f32.gmra.mxu0 %v4761
        %v4763 = vpop.f32.mrf.mxu0
        %v4764 = vadd.f32 %v4539, %v4763
        %v4765 = vand.u32 %v1107, 4294901760
        %4766 = vmatmul.f32.gmra.mxu0 %v4765
        %v4767 = vpop.f32.mrf.mxu0
        %v4768 = vadd.f32 %v4543, %v4767
        %4769 = vdwg.mxu0
        %v4770 = vand.u32 %v1157, 4294901760
        %4771 = vmatpush.msra.mxu0 %v4770
        %v4772 = vand.u32 %v1156, 4294901760
        %4773 = vmatpush.msra.mxu0 %v4772
        %v4774 = vand.u32 %v1155, 4294901760
        %4775 = vmatpush.msra.mxu0 %v4774
        %v4776 = vand.u32 %v1154, 4294901760
        %4777 = vmatpush.msra.mxu0 %v4776
        %v4778 = vand.u32 %v1153, 4294901760
        %4779 = vmatpush.msra.mxu0 %v4778
        %v4780 = vand.u32 %v1152, 4294901760
        %4781 = vmatpush.msra.mxu0 %v4780
        %v4782 = vand.u32 %v1151, 4294901760
        %4783 = vmatpush.msra.mxu0 %v4782
        %v4784 = vand.u32 %v1150, 4294901760
        %4785 = vmatpush.msra.mxu0 %v4784
        %v4786 = vand.u32 %v1149, 4294901760
        %4787 = vmatpush.msra.mxu0 %v4786
        %v4788 = vand.u32 %v1148, 4294901760
        %4789 = vmatpush.msra.mxu0 %v4788
        %v4790 = vand.u32 %v1147, 4294901760
        %4791 = vmatpush.msra.mxu0 %v4790
        %v4792 = vand.u32 %v1146, 4294901760
        %4793 = vmatpush.msra.mxu0 %v4792
        %v4794 = vand.u32 %v1145, 4294901760
        %4795 = vmatpush.msra.mxu0 %v4794
        %v4796 = vand.u32 %v1144, 4294901760
        %4797 = vmatpush.msra.mxu0 %v4796
        %v4798 = vand.u32 %v1143, 4294901760
        %4799 = vmatpush.msra.mxu0 %v4798
        %v4800 = vand.u32 %v1142, 4294901760
        %4801 = vmatpush.msra.mxu0 %v4800
        %v4802 = vand.u32 %v920, 4294901760
        %v4803 = vsub.f32 %v920, %v4802
        %v4804 = vand.u32 %v4803, 4294901760
        %v4805 = vsub.f32 %v4803, %v4804
        %v4806 = vand.u32 %v4805, 4294901760
        %4807 = vmatmul.f32.gmra.mxu0 %v4806
        %v4808 = vpop.f32.mrf.mxu0
        %v4809 = vadd.f32 %v4580, %v4808
        %v4810 = vand.u32 %v924, 4294901760
        %v4811 = vsub.f32 %v924, %v4810
        %v4812 = vand.u32 %v4811, 4294901760
        %v4813 = vsub.f32 %v4811, %v4812
        %v4814 = vand.u32 %v4813, 4294901760
        %4815 = vmatmul.f32.gmra.mxu0 %v4814
        %v4816 = vpop.f32.mrf.mxu0
        %v4817 = vadd.f32 %v4584, %v4816
        %v4818 = vand.u32 %v928, 4294901760
        %v4819 = vsub.f32 %v928, %v4818
        %v4820 = vand.u32 %v4819, 4294901760
        %v4821 = vsub.f32 %v4819, %v4820
        %v4822 = vand.u32 %v4821, 4294901760
        %4823 = vmatmul.f32.gmra.mxu0 %v4822
        %v4824 = vpop.f32.mrf.mxu0
        %v4825 = vadd.f32 %v4588, %v4824
        %v4826 = vand.u32 %v932, 4294901760
        %v4827 = vsub.f32 %v932, %v4826
        %v4828 = vand.u32 %v4827, 4294901760
        %v4829 = vsub.f32 %v4827, %v4828
        %v4830 = vand.u32 %v4829, 4294901760
        %4831 = vmatmul.f32.gmra.mxu0 %v4830
        %v4832 = vpop.f32.mrf.mxu0
        %v4833 = vadd.f32 %v4592, %v4832
        %v4834 = vand.u32 %v936, 4294901760
        %v4835 = vsub.f32 %v936, %v4834
        %v4836 = vand.u32 %v4835, 4294901760
        %v4837 = vsub.f32 %v4835, %v4836
        %v4838 = vand.u32 %v4837, 4294901760
        %4839 = vmatmul.f32.gmra.mxu0 %v4838
        %v4840 = vpop.f32.mrf.mxu0
        %v4841 = vadd.f32 %v4596, %v4840
        %v4842 = vand.u32 %v940, 4294901760
        %v4843 = vsub.f32 %v940, %v4842
        %v4844 = vand.u32 %v4843, 4294901760
        %v4845 = vsub.f32 %v4843, %v4844
        %v4846 = vand.u32 %v4845, 4294901760
        %4847 = vmatmul.f32.gmra.mxu0 %v4846
        %v4848 = vpop.f32.mrf.mxu0
        %v4849 = vadd.f32 %v4600, %v4848
        %v4850 = vand.u32 %v944, 4294901760
        %v4851 = vsub.f32 %v944, %v4850
        %v4852 = vand.u32 %v4851, 4294901760
        %v4853 = vsub.f32 %v4851, %v4852
        %v4854 = vand.u32 %v4853, 4294901760
        %4855 = vmatmul.f32.gmra.mxu0 %v4854
        %v4856 = vpop.f32.mrf.mxu0
        %v4857 = vadd.f32 %v4604, %v4856
        %v4858 = vand.u32 %v948, 4294901760
        %v4859 = vsub.f32 %v948, %v4858
        %v4860 = vand.u32 %v4859, 4294901760
        %v4861 = vsub.f32 %v4859, %v4860
        %v4862 = vand.u32 %v4861, 4294901760
        %4863 = vmatmul.f32.gmra.mxu0 %v4862
        %v4864 = vpop.f32.mrf.mxu0
        %v4865 = vadd.f32 %v4608, %v4864
        %v4866 = vand.u32 %v952, 4294901760
        %v4867 = vsub.f32 %v952, %v4866
        %v4868 = vand.u32 %v4867, 4294901760
        %v4869 = vsub.f32 %v4867, %v4868
        %v4870 = vand.u32 %v4869, 4294901760
        %4871 = vmatmul.f32.gmra.mxu0 %v4870
        %v4872 = vpop.f32.mrf.mxu0
        %v4873 = vadd.f32 %v4612, %v4872
        %v4874 = vand.u32 %v956, 4294901760
        %v4875 = vsub.f32 %v956, %v4874
        %v4876 = vand.u32 %v4875, 4294901760
        %v4877 = vsub.f32 %v4875, %v4876
        %v4878 = vand.u32 %v4877, 4294901760
        %4879 = vmatmul.f32.gmra.mxu0 %v4878
        %v4880 = vpop.f32.mrf.mxu0
        %v4881 = vadd.f32 %v4616, %v4880
        %v4882 = vand.u32 %v960, 4294901760
        %v4883 = vsub.f32 %v960, %v4882
        %v4884 = vand.u32 %v4883, 4294901760
        %v4885 = vsub.f32 %v4883, %v4884
        %v4886 = vand.u32 %v4885, 4294901760
        %4887 = vmatmul.f32.gmra.mxu0 %v4886
        %v4888 = vpop.f32.mrf.mxu0
        %v4889 = vadd.f32 %v4620, %v4888
        %v4890 = vand.u32 %v964, 4294901760
        %v4891 = vsub.f32 %v964, %v4890
        %v4892 = vand.u32 %v4891, 4294901760
        %v4893 = vsub.f32 %v4891, %v4892
        %v4894 = vand.u32 %v4893, 4294901760
        %4895 = vmatmul.f32.gmra.mxu0 %v4894
        %v4896 = vpop.f32.mrf.mxu0
        %v4897 = vadd.f32 %v4624, %v4896
        %v4898 = vand.u32 %v968, 4294901760
        %v4899 = vsub.f32 %v968, %v4898
        %v4900 = vand.u32 %v4899, 4294901760
        %v4901 = vsub.f32 %v4899, %v4900
        %v4902 = vand.u32 %v4901, 4294901760
        %4903 = vmatmul.f32.gmra.mxu0 %v4902
        %v4904 = vpop.f32.mrf.mxu0
        %v4905 = vadd.f32 %v4628, %v4904
        %v4906 = vand.u32 %v972, 4294901760
        %v4907 = vsub.f32 %v972, %v4906
        %v4908 = vand.u32 %v4907, 4294901760
        %v4909 = vsub.f32 %v4907, %v4908
        %v4910 = vand.u32 %v4909, 4294901760
        %4911 = vmatmul.f32.gmra.mxu0 %v4910
        %v4912 = vpop.f32.mrf.mxu0
        %v4913 = vadd.f32 %v4632, %v4912
        %v4914 = vand.u32 %v976, 4294901760
        %v4915 = vsub.f32 %v976, %v4914
        %v4916 = vand.u32 %v4915, 4294901760
        %v4917 = vsub.f32 %v4915, %v4916
        %v4918 = vand.u32 %v4917, 4294901760
        %4919 = vmatmul.f32.gmra.mxu0 %v4918
        %v4920 = vpop.f32.mrf.mxu0
        %v4921 = vadd.f32 %v4636, %v4920
        %v4922 = vand.u32 %v980, 4294901760
        %v4923 = vsub.f32 %v980, %v4922
        %v4924 = vand.u32 %v4923, 4294901760
        %v4925 = vsub.f32 %v4923, %v4924
        %v4926 = vand.u32 %v4925, 4294901760
        %4927 = vmatmul.f32.gmra.mxu0 %v4926
        %v4928 = vpop.f32.mrf.mxu0
        %v4929 = vadd.f32 %v4640, %v4928
        %v4930 = vand.u32 %v984, 4294901760
        %v4931 = vsub.f32 %v984, %v4930
        %v4932 = vand.u32 %v4931, 4294901760
        %v4933 = vsub.f32 %v4931, %v4932
        %v4934 = vand.u32 %v4933, 4294901760
        %4935 = vmatmul.f32.gmra.mxu0 %v4934
        %v4936 = vpop.f32.mrf.mxu0
        %v4937 = vadd.f32 %v4644, %v4936
        %v4938 = vand.u32 %v988, 4294901760
        %v4939 = vsub.f32 %v988, %v4938
        %v4940 = vand.u32 %v4939, 4294901760
        %v4941 = vsub.f32 %v4939, %v4940
        %v4942 = vand.u32 %v4941, 4294901760
        %4943 = vmatmul.f32.gmra.mxu0 %v4942
        %v4944 = vpop.f32.mrf.mxu0
        %v4945 = vadd.f32 %v4648, %v4944
        %v4946 = vand.u32 %v992, 4294901760
        %v4947 = vsub.f32 %v992, %v4946
        %v4948 = vand.u32 %v4947, 4294901760
        %v4949 = vsub.f32 %v4947, %v4948
        %v4950 = vand.u32 %v4949, 4294901760
        %4951 = vmatmul.f32.gmra.mxu0 %v4950
        %v4952 = vpop.f32.mrf.mxu0
        %v4953 = vadd.f32 %v4652, %v4952
        %v4954 = vand.u32 %v996, 4294901760
        %v4955 = vsub.f32 %v996, %v4954
        %v4956 = vand.u32 %v4955, 4294901760
        %v4957 = vsub.f32 %v4955, %v4956
        %v4958 = vand.u32 %v4957, 4294901760
        %4959 = vmatmul.f32.gmra.mxu0 %v4958
        %v4960 = vpop.f32.mrf.mxu0
        %v4961 = vadd.f32 %v4656, %v4960
        %v4962 = vand.u32 %v1000, 4294901760
        %v4963 = vsub.f32 %v1000, %v4962
        %v4964 = vand.u32 %v4963, 4294901760
        %v4965 = vsub.f32 %v4963, %v4964
        %v4966 = vand.u32 %v4965, 4294901760
        %4967 = vmatmul.f32.gmra.mxu0 %v4966
        %v4968 = vpop.f32.mrf.mxu0
        %v4969 = vadd.f32 %v4660, %v4968
        %v4970 = vand.u32 %v1004, 4294901760
        %v4971 = vsub.f32 %v1004, %v4970
        %v4972 = vand.u32 %v4971, 4294901760
        %v4973 = vsub.f32 %v4971, %v4972
        %v4974 = vand.u32 %v4973, 4294901760
        %4975 = vmatmul.f32.gmra.mxu0 %v4974
        %v4976 = vpop.f32.mrf.mxu0
        %v4977 = vadd.f32 %v4664, %v4976
        %v4978 = vand.u32 %v1008, 4294901760
        %v4979 = vsub.f32 %v1008, %v4978
        %v4980 = vand.u32 %v4979, 4294901760
        %v4981 = vsub.f32 %v4979, %v4980
        %v4982 = vand.u32 %v4981, 4294901760
        %4983 = vmatmul.f32.gmra.mxu0 %v4982
        %v4984 = vpop.f32.mrf.mxu0
        %v4985 = vadd.f32 %v4668, %v4984
        %v4986 = vand.u32 %v1012, 4294901760
        %v4987 = vsub.f32 %v1012, %v4986
        %v4988 = vand.u32 %v4987, 4294901760
        %v4989 = vsub.f32 %v4987, %v4988
        %v4990 = vand.u32 %v4989, 4294901760
        %4991 = vmatmul.f32.gmra.mxu0 %v4990
        %v4992 = vpop.f32.mrf.mxu0
        %v4993 = vadd.f32 %v4672, %v4992
        %v4994 = vand.u32 %v1016, 4294901760
        %v4995 = vsub.f32 %v1016, %v4994
        %v4996 = vand.u32 %v4995, 4294901760
        %v4997 = vsub.f32 %v4995, %v4996
        %v4998 = vand.u32 %v4997, 4294901760
        %4999 = vmatmul.f32.gmra.mxu0 %v4998
        %v5000 = vpop.f32.mrf.mxu0
        %v5001 = vadd.f32 %v4676, %v5000
        %v5002 = vand.u32 %v1020, 4294901760
        %v5003 = vsub.f32 %v1020, %v5002
        %v5004 = vand.u32 %v5003, 4294901760
        %v5005 = vsub.f32 %v5003, %v5004
        %v5006 = vand.u32 %v5005, 4294901760
        %5007 = vmatmul.f32.gmra.mxu0 %v5006
        %v5008 = vpop.f32.mrf.mxu0
        %v5009 = vadd.f32 %v4680, %v5008
        %v5010 = vand.u32 %v1024, 4294901760
        %v5011 = vsub.f32 %v1024, %v5010
        %v5012 = vand.u32 %v5011, 4294901760
        %v5013 = vsub.f32 %v5011, %v5012
        %v5014 = vand.u32 %v5013, 4294901760
        %5015 = vmatmul.f32.gmra.mxu0 %v5014
        %v5016 = vpop.f32.mrf.mxu0
        %v5017 = vadd.f32 %v4684, %v5016
        %v5018 = vand.u32 %v1028, 4294901760
        %v5019 = vsub.f32 %v1028, %v5018
        %v5020 = vand.u32 %v5019, 4294901760
        %v5021 = vsub.f32 %v5019, %v5020
        %v5022 = vand.u32 %v5021, 4294901760
        %5023 = vmatmul.f32.gmra.mxu0 %v5022
        %v5024 = vpop.f32.mrf.mxu0
        %v5025 = vadd.f32 %v4688, %v5024
        %v5026 = vand.u32 %v1032, 4294901760
        %v5027 = vsub.f32 %v1032, %v5026
        %v5028 = vand.u32 %v5027, 4294901760
        %v5029 = vsub.f32 %v5027, %v5028
        %v5030 = vand.u32 %v5029, 4294901760
        %5031 = vmatmul.f32.gmra.mxu0 %v5030
        %v5032 = vpop.f32.mrf.mxu0
        %v5033 = vadd.f32 %v4692, %v5032
        %v5034 = vand.u32 %v1036, 4294901760
        %v5035 = vsub.f32 %v1036, %v5034
        %v5036 = vand.u32 %v5035, 4294901760
        %v5037 = vsub.f32 %v5035, %v5036
        %v5038 = vand.u32 %v5037, 4294901760
        %5039 = vmatmul.f32.gmra.mxu0 %v5038
        %v5040 = vpop.f32.mrf.mxu0
        %v5041 = vadd.f32 %v4696, %v5040
        %v5042 = vand.u32 %v1040, 4294901760
        %v5043 = vsub.f32 %v1040, %v5042
        %v5044 = vand.u32 %v5043, 4294901760
        %v5045 = vsub.f32 %v5043, %v5044
        %v5046 = vand.u32 %v5045, 4294901760
        %5047 = vmatmul.f32.gmra.mxu0 %v5046
        %v5048 = vpop.f32.mrf.mxu0
        %v5049 = vadd.f32 %v4700, %v5048
        %v5050 = vand.u32 %v1044, 4294901760
        %v5051 = vsub.f32 %v1044, %v5050
        %v5052 = vand.u32 %v5051, 4294901760
        %v5053 = vsub.f32 %v5051, %v5052
        %v5054 = vand.u32 %v5053, 4294901760
        %5055 = vmatmul.f32.gmra.mxu0 %v5054
        %v5056 = vpop.f32.mrf.mxu0
        %v5057 = vadd.f32 %v4704, %v5056
        %v5058 = vand.u32 %v1048, 4294901760
        %v5059 = vsub.f32 %v1048, %v5058
        %v5060 = vand.u32 %v5059, 4294901760
        %v5061 = vsub.f32 %v5059, %v5060
        %v5062 = vand.u32 %v5061, 4294901760
        %5063 = vmatmul.f32.gmra.mxu0 %v5062
        %v5064 = vpop.f32.mrf.mxu0
        %v5065 = vadd.f32 %v4708, %v5064
        %v5066 = vand.u32 %v1052, 4294901760
        %v5067 = vsub.f32 %v1052, %v5066
        %v5068 = vand.u32 %v5067, 4294901760
        %v5069 = vsub.f32 %v5067, %v5068
        %v5070 = vand.u32 %v5069, 4294901760
        %5071 = vmatmul.f32.gmra.mxu0 %v5070
        %v5072 = vpop.f32.mrf.mxu0
        %v5073 = vadd.f32 %v4712, %v5072
        %v5074 = vand.u32 %v1056, 4294901760
        %v5075 = vsub.f32 %v1056, %v5074
        %v5076 = vand.u32 %v5075, 4294901760
        %v5077 = vsub.f32 %v5075, %v5076
        %v5078 = vand.u32 %v5077, 4294901760
        %5079 = vmatmul.f32.gmra.mxu0 %v5078
        %v5080 = vpop.f32.mrf.mxu0
        %v5081 = vadd.f32 %v4716, %v5080
        %v5082 = vand.u32 %v1060, 4294901760
        %v5083 = vsub.f32 %v1060, %v5082
        %v5084 = vand.u32 %v5083, 4294901760
        %v5085 = vsub.f32 %v5083, %v5084
        %v5086 = vand.u32 %v5085, 4294901760
        %5087 = vmatmul.f32.gmra.mxu0 %v5086
        %v5088 = vpop.f32.mrf.mxu0
        %v5089 = vadd.f32 %v4720, %v5088
        %v5090 = vand.u32 %v1064, 4294901760
        %v5091 = vsub.f32 %v1064, %v5090
        %v5092 = vand.u32 %v5091, 4294901760
        %v5093 = vsub.f32 %v5091, %v5092
        %v5094 = vand.u32 %v5093, 4294901760
        %5095 = vmatmul.f32.gmra.mxu0 %v5094
        %v5096 = vpop.f32.mrf.mxu0
        %v5097 = vadd.f32 %v4724, %v5096
        %v5098 = vand.u32 %v1068, 4294901760
        %v5099 = vsub.f32 %v1068, %v5098
        %v5100 = vand.u32 %v5099, 4294901760
        %v5101 = vsub.f32 %v5099, %v5100
        %v5102 = vand.u32 %v5101, 4294901760
        %5103 = vmatmul.f32.gmra.mxu0 %v5102
        %v5104 = vpop.f32.mrf.mxu0
        %v5105 = vadd.f32 %v4728, %v5104
        %v5106 = vand.u32 %v1072, 4294901760
        %v5107 = vsub.f32 %v1072, %v5106
        %v5108 = vand.u32 %v5107, 4294901760
        %v5109 = vsub.f32 %v5107, %v5108
        %v5110 = vand.u32 %v5109, 4294901760
        %5111 = vmatmul.f32.gmra.mxu0 %v5110
        %v5112 = vpop.f32.mrf.mxu0
        %v5113 = vadd.f32 %v4732, %v5112
        %v5114 = vand.u32 %v1076, 4294901760
        %v5115 = vsub.f32 %v1076, %v5114
        %v5116 = vand.u32 %v5115, 4294901760
        %v5117 = vsub.f32 %v5115, %v5116
        %v5118 = vand.u32 %v5117, 4294901760
        %5119 = vmatmul.f32.gmra.mxu0 %v5118
        %v5120 = vpop.f32.mrf.mxu0
        %v5121 = vadd.f32 %v4736, %v5120
        %v5122 = vand.u32 %v1080, 4294901760
        %v5123 = vsub.f32 %v1080, %v5122
        %v5124 = vand.u32 %v5123, 4294901760
        %v5125 = vsub.f32 %v5123, %v5124
        %v5126 = vand.u32 %v5125, 4294901760
        %5127 = vmatmul.f32.gmra.mxu0 %v5126
        %v5128 = vpop.f32.mrf.mxu0
        %v5129 = vadd.f32 %v4740, %v5128
        %v5130 = vand.u32 %v1084, 4294901760
        %v5131 = vsub.f32 %v1084, %v5130
        %v5132 = vand.u32 %v5131, 4294901760
        %v5133 = vsub.f32 %v5131, %v5132
        %v5134 = vand.u32 %v5133, 4294901760
        %5135 = vmatmul.f32.gmra.mxu0 %v5134
        %v5136 = vpop.f32.mrf.mxu0
        %v5137 = vadd.f32 %v4744, %v5136
        %v5138 = vand.u32 %v1088, 4294901760
        %v5139 = vsub.f32 %v1088, %v5138
        %v5140 = vand.u32 %v5139, 4294901760
        %v5141 = vsub.f32 %v5139, %v5140
        %v5142 = vand.u32 %v5141, 4294901760
        %5143 = vmatmul.f32.gmra.mxu0 %v5142
        %v5144 = vpop.f32.mrf.mxu0
        %v5145 = vadd.f32 %v4748, %v5144
        %v5146 = vand.u32 %v1092, 4294901760
        %v5147 = vsub.f32 %v1092, %v5146
        %v5148 = vand.u32 %v5147, 4294901760
        %v5149 = vsub.f32 %v5147, %v5148
        %v5150 = vand.u32 %v5149, 4294901760
        %5151 = vmatmul.f32.gmra.mxu0 %v5150
        %v5152 = vpop.f32.mrf.mxu0
        %v5153 = vadd.f32 %v4752, %v5152
        %v5154 = vand.u32 %v1096, 4294901760
        %v5155 = vsub.f32 %v1096, %v5154
        %v5156 = vand.u32 %v5155, 4294901760
        %v5157 = vsub.f32 %v5155, %v5156
        %v5158 = vand.u32 %v5157, 4294901760
        %5159 = vmatmul.f32.gmra.mxu0 %v5158
        %v5160 = vpop.f32.mrf.mxu0
        %v5161 = vadd.f32 %v4756, %v5160
        %v5162 = vand.u32 %v1100, 4294901760
        %v5163 = vsub.f32 %v1100, %v5162
        %v5164 = vand.u32 %v5163, 4294901760
        %v5165 = vsub.f32 %v5163, %v5164
        %v5166 = vand.u32 %v5165, 4294901760
        %5167 = vmatmul.f32.gmra.mxu0 %v5166
        %v5168 = vpop.f32.mrf.mxu0
        %v5169 = vadd.f32 %v4760, %v5168
        %v5170 = vand.u32 %v1104, 4294901760
        %v5171 = vsub.f32 %v1104, %v5170
        %v5172 = vand.u32 %v5171, 4294901760
        %v5173 = vsub.f32 %v5171, %v5172
        %v5174 = vand.u32 %v5173, 4294901760
        %5175 = vmatmul.f32.gmra.mxu0 %v5174
        %v5176 = vpop.f32.mrf.mxu0
        %v5177 = vadd.f32 %v4764, %v5176
        %v5178 = vand.u32 %v1108, 4294901760
        %v5179 = vsub.f32 %v1108, %v5178
        %v5180 = vand.u32 %v5179, 4294901760
        %v5181 = vsub.f32 %v5179, %v5180
        %v5182 = vand.u32 %v5181, 4294901760
        %5183 = vmatmul.f32.gmra.mxu0 %v5182
        %v5184 = vpop.f32.mrf.mxu0
        %v5185 = vadd.f32 %v4768, %v5184
        %5186 = vdwg.mxu0
        %v5187 = vand.u32 %v1157, 4294901760
        %v5188 = vsub.f32 %v1157, %v5187
        %v5189 = vand.u32 %v5188, 4294901760
        %v5190 = vsub.f32 %v5188, %v5189
        %v5191 = vand.u32 %v5190, 4294901760
        %5192 = vmatpush.msra.mxu0 %v5191
        %v5193 = vand.u32 %v1156, 4294901760
        %v5194 = vsub.f32 %v1156, %v5193
        %v5195 = vand.u32 %v5194, 4294901760
        %v5196 = vsub.f32 %v5194, %v5195
        %v5197 = vand.u32 %v5196, 4294901760
        %5198 = vmatpush.msra.mxu0 %v5197
        %v5199 = vand.u32 %v1155, 4294901760
        %v5200 = vsub.f32 %v1155, %v5199
        %v5201 = vand.u32 %v5200, 4294901760
        %v5202 = vsub.f32 %v5200, %v5201
        %v5203 = vand.u32 %v5202, 4294901760
        %5204 = vmatpush.msra.mxu0 %v5203
        %v5205 = vand.u32 %v1154, 4294901760
        %v5206 = vsub.f32 %v1154, %v5205
        %v5207 = vand.u32 %v5206, 4294901760
        %v5208 = vsub.f32 %v5206, %v5207
        %v5209 = vand.u32 %v5208, 4294901760
        %5210 = vmatpush.msra.mxu0 %v5209
        %v5211 = vand.u32 %v1153, 4294901760
        %v5212 = vsub.f32 %v1153, %v5211
        %v5213 = vand.u32 %v5212, 4294901760
        %v5214 = vsub.f32 %v5212, %v5213
        %v5215 = vand.u32 %v5214, 4294901760
        %5216 = vmatpush.msra.mxu0 %v5215
        %v5217 = vand.u32 %v1152, 4294901760
        %v5218 = vsub.f32 %v1152, %v5217
        %v5219 = vand.u32 %v5218, 4294901760
        %v5220 = vsub.f32 %v5218, %v5219
        %v5221 = vand.u32 %v5220, 4294901760
        %5222 = vmatpush.msra.mxu0 %v5221
        %v5223 = vand.u32 %v1151, 4294901760
        %v5224 = vsub.f32 %v1151, %v5223
        %v5225 = vand.u32 %v5224, 4294901760
        %v5226 = vsub.f32 %v5224, %v5225
        %v5227 = vand.u32 %v5226, 4294901760
        %5228 = vmatpush.msra.mxu0 %v5227
        %v5229 = vand.u32 %v1150, 4294901760
        %v5230 = vsub.f32 %v1150, %v5229
        %v5231 = vand.u32 %v5230, 4294901760
        %v5232 = vsub.f32 %v5230, %v5231
        %v5233 = vand.u32 %v5232, 4294901760
        %5234 = vmatpush.msra.mxu0 %v5233
        %v5235 = vand.u32 %v1149, 4294901760
        %v5236 = vsub.f32 %v1149, %v5235
        %v5237 = vand.u32 %v5236, 4294901760
        %v5238 = vsub.f32 %v5236, %v5237
        %v5239 = vand.u32 %v5238, 4294901760
        %5240 = vmatpush.msra.mxu0 %v5239
        %v5241 = vand.u32 %v1148, 4294901760
        %v5242 = vsub.f32 %v1148, %v5241
        %v5243 = vand.u32 %v5242, 4294901760
        %v5244 = vsub.f32 %v5242, %v5243
        %v5245 = vand.u32 %v5244, 4294901760
        %5246 = vmatpush.msra.mxu0 %v5245
        %v5247 = vand.u32 %v1147, 4294901760
        %v5248 = vsub.f32 %v1147, %v5247
        %v5249 = vand.u32 %v5248, 4294901760
        %v5250 = vsub.f32 %v5248, %v5249
        %v5251 = vand.u32 %v5250, 4294901760
        %5252 = vmatpush.msra.mxu0 %v5251
        %v5253 = vand.u32 %v1146, 4294901760
        %v5254 = vsub.f32 %v1146, %v5253
        %v5255 = vand.u32 %v5254, 4294901760
        %v5256 = vsub.f32 %v5254, %v5255
        %v5257 = vand.u32 %v5256, 4294901760
        %5258 = vmatpush.msra.mxu0 %v5257
        %v5259 = vand.u32 %v1145, 4294901760
        %v5260 = vsub.f32 %v1145, %v5259
        %v5261 = vand.u32 %v5260, 4294901760
        %v5262 = vsub.f32 %v5260, %v5261
        %v5263 = vand.u32 %v5262, 4294901760
        %5264 = vmatpush.msra.mxu0 %v5263
        %v5265 = vand.u32 %v1144, 4294901760
        %v5266 = vsub.f32 %v1144, %v5265
        %v5267 = vand.u32 %v5266, 4294901760
        %v5268 = vsub.f32 %v5266, %v5267
        %v5269 = vand.u32 %v5268, 4294901760
        %5270 = vmatpush.msra.mxu0 %v5269
        %v5271 = vand.u32 %v1143, 4294901760
        %v5272 = vsub.f32 %v1143, %v5271
        %v5273 = vand.u32 %v5272, 4294901760
        %v5274 = vsub.f32 %v5272, %v5273
        %v5275 = vand.u32 %v5274, 4294901760
        %5276 = vmatpush.msra.mxu0 %v5275
        %v5277 = vand.u32 %v1142, 4294901760
        %v5278 = vsub.f32 %v1142, %v5277
        %v5279 = vand.u32 %v5278, 4294901760
        %v5280 = vsub.f32 %v5278, %v5279
        %v5281 = vand.u32 %v5280, 4294901760
        %5282 = vmatpush.msra.mxu0 %v5281
        %v5283 = vand.u32 %v920, 4294901760
        %5284 = vmatmul.f32.gmra.mxu0 %v5283
        %v5285 = vpop.f32.mrf.mxu0
        %v5286 = vadd.f32 %v4809, %v5285
        %v5287 = vand.u32 %v924, 4294901760
        %5288 = vmatmul.f32.gmra.mxu0 %v5287
        %v5289 = vpop.f32.mrf.mxu0
        %v5290 = vadd.f32 %v4817, %v5289
        %v5291 = vand.u32 %v928, 4294901760
        %5292 = vmatmul.f32.gmra.mxu0 %v5291
        %v5293 = vpop.f32.mrf.mxu0
        %v5294 = vadd.f32 %v4825, %v5293
        %v5295 = vand.u32 %v932, 4294901760
        %5296 = vmatmul.f32.gmra.mxu0 %v5295
        %v5297 = vpop.f32.mrf.mxu0
        %v5298 = vadd.f32 %v4833, %v5297
        %v5299 = vand.u32 %v936, 4294901760
        %5300 = vmatmul.f32.gmra.mxu0 %v5299
        %v5301 = vpop.f32.mrf.mxu0
        %v5302 = vadd.f32 %v4841, %v5301
        %v5303 = vand.u32 %v940, 4294901760
        %5304 = vmatmul.f32.gmra.mxu0 %v5303
        %v5305 = vpop.f32.mrf.mxu0
        %v5306 = vadd.f32 %v4849, %v5305
        %v5307 = vand.u32 %v944, 4294901760
        %5308 = vmatmul.f32.gmra.mxu0 %v5307
        %v5309 = vpop.f32.mrf.mxu0
        %v5310 = vadd.f32 %v4857, %v5309
        %v5311 = vand.u32 %v948, 4294901760
        %5312 = vmatmul.f32.gmra.mxu0 %v5311
        %v5313 = vpop.f32.mrf.mxu0
        %v5314 = vadd.f32 %v4865, %v5313
        %v5315 = vand.u32 %v952, 4294901760
        %5316 = vmatmul.f32.gmra.mxu0 %v5315
        %v5317 = vpop.f32.mrf.mxu0
        %v5318 = vadd.f32 %v4873, %v5317
        %v5319 = vand.u32 %v956, 4294901760
        %5320 = vmatmul.f32.gmra.mxu0 %v5319
        %v5321 = vpop.f32.mrf.mxu0
        %v5322 = vadd.f32 %v4881, %v5321
        %v5323 = vand.u32 %v960, 4294901760
        %5324 = vmatmul.f32.gmra.mxu0 %v5323
        %v5325 = vpop.f32.mrf.mxu0
        %v5326 = vadd.f32 %v4889, %v5325
        %v5327 = vand.u32 %v964, 4294901760
        %5328 = vmatmul.f32.gmra.mxu0 %v5327
        %v5329 = vpop.f32.mrf.mxu0
        %v5330 = vadd.f32 %v4897, %v5329
        %v5331 = vand.u32 %v968, 4294901760
        %5332 = vmatmul.f32.gmra.mxu0 %v5331
        %v5333 = vpop.f32.mrf.mxu0
        %v5334 = vadd.f32 %v4905, %v5333
        %v5335 = vand.u32 %v972, 4294901760
        %5336 = vmatmul.f32.gmra.mxu0 %v5335
        %v5337 = vpop.f32.mrf.mxu0
        %v5338 = vadd.f32 %v4913, %v5337
        %v5339 = vand.u32 %v976, 4294901760
        %5340 = vmatmul.f32.gmra.mxu0 %v5339
        %v5341 = vpop.f32.mrf.mxu0
        %v5342 = vadd.f32 %v4921, %v5341
        %v5343 = vand.u32 %v980, 4294901760
        %5344 = vmatmul.f32.gmra.mxu0 %v5343
        %v5345 = vpop.f32.mrf.mxu0
        %v5346 = vadd.f32 %v4929, %v5345
        %v5347 = vand.u32 %v984, 4294901760
        %5348 = vmatmul.f32.gmra.mxu0 %v5347
        %v5349 = vpop.f32.mrf.mxu0
        %v5350 = vadd.f32 %v4937, %v5349
        %v5351 = vand.u32 %v988, 4294901760
        %5352 = vmatmul.f32.gmra.mxu0 %v5351
        %v5353 = vpop.f32.mrf.mxu0
        %v5354 = vadd.f32 %v4945, %v5353
        %v5355 = vand.u32 %v992, 4294901760
        %5356 = vmatmul.f32.gmra.mxu0 %v5355
        %v5357 = vpop.f32.mrf.mxu0
        %v5358 = vadd.f32 %v4953, %v5357
        %v5359 = vand.u32 %v996, 4294901760
        %5360 = vmatmul.f32.gmra.mxu0 %v5359
        %v5361 = vpop.f32.mrf.mxu0
        %v5362 = vadd.f32 %v4961, %v5361
        %v5363 = vand.u32 %v1000, 4294901760
        %5364 = vmatmul.f32.gmra.mxu0 %v5363
        %v5365 = vpop.f32.mrf.mxu0
        %v5366 = vadd.f32 %v4969, %v5365
        %v5367 = vand.u32 %v1004, 4294901760
        %5368 = vmatmul.f32.gmra.mxu0 %v5367
        %v5369 = vpop.f32.mrf.mxu0
        %v5370 = vadd.f32 %v4977, %v5369
        %v5371 = vand.u32 %v1008, 4294901760
        %5372 = vmatmul.f32.gmra.mxu0 %v5371
        %v5373 = vpop.f32.mrf.mxu0
        %v5374 = vadd.f32 %v4985, %v5373
        %v5375 = vand.u32 %v1012, 4294901760
        %5376 = vmatmul.f32.gmra.mxu0 %v5375
        %v5377 = vpop.f32.mrf.mxu0
        %v5378 = vadd.f32 %v4993, %v5377
        %v5379 = vand.u32 %v1016, 4294901760
        %5380 = vmatmul.f32.gmra.mxu0 %v5379
        %v5381 = vpop.f32.mrf.mxu0
        %v5382 = vadd.f32 %v5001, %v5381
        %v5383 = vand.u32 %v1020, 4294901760
        %5384 = vmatmul.f32.gmra.mxu0 %v5383
        %v5385 = vpop.f32.mrf.mxu0
        %v5386 = vadd.f32 %v5009, %v5385
        %v5387 = vand.u32 %v1024, 4294901760
        %5388 = vmatmul.f32.gmra.mxu0 %v5387
        %v5389 = vpop.f32.mrf.mxu0
        %v5390 = vadd.f32 %v5017, %v5389
        %v5391 = vand.u32 %v1028, 4294901760
        %5392 = vmatmul.f32.gmra.mxu0 %v5391
        %v5393 = vpop.f32.mrf.mxu0
        %v5394 = vadd.f32 %v5025, %v5393
        %v5395 = vand.u32 %v1032, 4294901760
        %5396 = vmatmul.f32.gmra.mxu0 %v5395
        %v5397 = vpop.f32.mrf.mxu0
        %v5398 = vadd.f32 %v5033, %v5397
        %v5399 = vand.u32 %v1036, 4294901760
        %5400 = vmatmul.f32.gmra.mxu0 %v5399
        %v5401 = vpop.f32.mrf.mxu0
        %v5402 = vadd.f32 %v5041, %v5401
        %v5403 = vand.u32 %v1040, 4294901760
        %5404 = vmatmul.f32.gmra.mxu0 %v5403
        %v5405 = vpop.f32.mrf.mxu0
        %v5406 = vadd.f32 %v5049, %v5405
        %v5407 = vand.u32 %v1044, 4294901760
        %5408 = vmatmul.f32.gmra.mxu0 %v5407
        %v5409 = vpop.f32.mrf.mxu0
        %v5410 = vadd.f32 %v5057, %v5409
        %v5411 = vand.u32 %v1048, 4294901760
        %5412 = vmatmul.f32.gmra.mxu0 %v5411
        %v5413 = vpop.f32.mrf.mxu0
        %v5414 = vadd.f32 %v5065, %v5413
        %v5415 = vand.u32 %v1052, 4294901760
        %5416 = vmatmul.f32.gmra.mxu0 %v5415
        %v5417 = vpop.f32.mrf.mxu0
        %v5418 = vadd.f32 %v5073, %v5417
        %v5419 = vand.u32 %v1056, 4294901760
        %5420 = vmatmul.f32.gmra.mxu0 %v5419
        %v5421 = vpop.f32.mrf.mxu0
        %v5422 = vadd.f32 %v5081, %v5421
        %v5423 = vand.u32 %v1060, 4294901760
        %5424 = vmatmul.f32.gmra.mxu0 %v5423
        %v5425 = vpop.f32.mrf.mxu0
        %v5426 = vadd.f32 %v5089, %v5425
        %v5427 = vand.u32 %v1064, 4294901760
        %5428 = vmatmul.f32.gmra.mxu0 %v5427
        %v5429 = vpop.f32.mrf.mxu0
        %v5430 = vadd.f32 %v5097, %v5429
        %v5431 = vand.u32 %v1068, 4294901760
        %5432 = vmatmul.f32.gmra.mxu0 %v5431
        %v5433 = vpop.f32.mrf.mxu0
        %v5434 = vadd.f32 %v5105, %v5433
        %v5435 = vand.u32 %v1072, 4294901760
        %5436 = vmatmul.f32.gmra.mxu0 %v5435
        %v5437 = vpop.f32.mrf.mxu0
        %v5438 = vadd.f32 %v5113, %v5437
        %v5439 = vand.u32 %v1076, 4294901760
        %5440 = vmatmul.f32.gmra.mxu0 %v5439
        %v5441 = vpop.f32.mrf.mxu0
        %v5442 = vadd.f32 %v5121, %v5441
        %v5443 = vand.u32 %v1080, 4294901760
        %5444 = vmatmul.f32.gmra.mxu0 %v5443
        %v5445 = vpop.f32.mrf.mxu0
        %v5446 = vadd.f32 %v5129, %v5445
        %v5447 = vand.u32 %v1084, 4294901760
        %5448 = vmatmul.f32.gmra.mxu0 %v5447
        %v5449 = vpop.f32.mrf.mxu0
        %v5450 = vadd.f32 %v5137, %v5449
        %v5451 = vand.u32 %v1088, 4294901760
        %5452 = vmatmul.f32.gmra.mxu0 %v5451
        %v5453 = vpop.f32.mrf.mxu0
        %v5454 = vadd.f32 %v5145, %v5453
        %v5455 = vand.u32 %v1092, 4294901760
        %5456 = vmatmul.f32.gmra.mxu0 %v5455
        %v5457 = vpop.f32.mrf.mxu0
        %v5458 = vadd.f32 %v5153, %v5457
        %v5459 = vand.u32 %v1096, 4294901760
        %5460 = vmatmul.f32.gmra.mxu0 %v5459
        %v5461 = vpop.f32.mrf.mxu0
        %v5462 = vadd.f32 %v5161, %v5461
        %v5463 = vand.u32 %v1100, 4294901760
        %5464 = vmatmul.f32.gmra.mxu0 %v5463
        %v5465 = vpop.f32.mrf.mxu0
        %v5466 = vadd.f32 %v5169, %v5465
        %v5467 = vand.u32 %v1104, 4294901760
        %5468 = vmatmul.f32.gmra.mxu0 %v5467
        %v5469 = vpop.f32.mrf.mxu0
        %v5470 = vadd.f32 %v5177, %v5469
        %v5471 = vand.u32 %v1108, 4294901760
        %5472 = vmatmul.f32.gmra.mxu0 %v5471
        %v5473 = vpop.f32.mrf.mxu0
        %v5474 = vadd.f32 %v5185, %v5473
        %5475 = vdwg.mxu0
        %v5476 = vand.u32 %v1157, 4294901760
        %v5477 = vsub.f32 %v1157, %v5476
        %5478 = vmatpush.msra.mxu0 %v5477
        %v5479 = vand.u32 %v1156, 4294901760
        %v5480 = vsub.f32 %v1156, %v5479
        %5481 = vmatpush.msra.mxu0 %v5480
        %v5482 = vand.u32 %v1155, 4294901760
        %v5483 = vsub.f32 %v1155, %v5482
        %5484 = vmatpush.msra.mxu0 %v5483
        %v5485 = vand.u32 %v1154, 4294901760
        %v5486 = vsub.f32 %v1154, %v5485
        %5487 = vmatpush.msra.mxu0 %v5486
        %v5488 = vand.u32 %v1153, 4294901760
        %v5489 = vsub.f32 %v1153, %v5488
        %5490 = vmatpush.msra.mxu0 %v5489
        %v5491 = vand.u32 %v1152, 4294901760
        %v5492 = vsub.f32 %v1152, %v5491
        %5493 = vmatpush.msra.mxu0 %v5492
        %v5494 = vand.u32 %v1151, 4294901760
        %v5495 = vsub.f32 %v1151, %v5494
        %5496 = vmatpush.msra.mxu0 %v5495
        %v5497 = vand.u32 %v1150, 4294901760
        %v5498 = vsub.f32 %v1150, %v5497
        %5499 = vmatpush.msra.mxu0 %v5498
        %v5500 = vand.u32 %v1149, 4294901760
        %v5501 = vsub.f32 %v1149, %v5500
        %5502 = vmatpush.msra.mxu0 %v5501
        %v5503 = vand.u32 %v1148, 4294901760
        %v5504 = vsub.f32 %v1148, %v5503
        %5505 = vmatpush.msra.mxu0 %v5504
        %v5506 = vand.u32 %v1147, 4294901760
        %v5507 = vsub.f32 %v1147, %v5506
        %5508 = vmatpush.msra.mxu0 %v5507
        %v5509 = vand.u32 %v1146, 4294901760
        %v5510 = vsub.f32 %v1146, %v5509
        %5511 = vmatpush.msra.mxu0 %v5510
        %v5512 = vand.u32 %v1145, 4294901760
        %v5513 = vsub.f32 %v1145, %v5512
        %5514 = vmatpush.msra.mxu0 %v5513
        %v5515 = vand.u32 %v1144, 4294901760
        %v5516 = vsub.f32 %v1144, %v5515
        %5517 = vmatpush.msra.mxu0 %v5516
        %v5518 = vand.u32 %v1143, 4294901760
        %v5519 = vsub.f32 %v1143, %v5518
        %5520 = vmatpush.msra.mxu0 %v5519
        %v5521 = vand.u32 %v1142, 4294901760
        %v5522 = vsub.f32 %v1142, %v5521
        %5523 = vmatpush.msra.mxu0 %v5522
        %v5524 = vand.u32 %v920, 4294901760
        %v5525 = vsub.f32 %v920, %v5524
        %5526 = vmatmul.f32.gmra.mxu0 %v5525
        %v5527 = vpop.f32.mrf.mxu0
        %v5528 = vadd.f32 %v5286, %v5527
        %v5529 = vand.u32 %v924, 4294901760
        %v5530 = vsub.f32 %v924, %v5529
        %5531 = vmatmul.f32.gmra.mxu0 %v5530
        %v5532 = vpop.f32.mrf.mxu0
        %v5533 = vadd.f32 %v5290, %v5532
        %v5534 = vand.u32 %v928, 4294901760
        %v5535 = vsub.f32 %v928, %v5534
        %5536 = vmatmul.f32.gmra.mxu0 %v5535
        %v5537 = vpop.f32.mrf.mxu0
        %v5538 = vadd.f32 %v5294, %v5537
        %v5539 = vand.u32 %v932, 4294901760
        %v5540 = vsub.f32 %v932, %v5539
        %5541 = vmatmul.f32.gmra.mxu0 %v5540
        %v5542 = vpop.f32.mrf.mxu0
        %v5543 = vadd.f32 %v5298, %v5542
        %v5544 = vand.u32 %v936, 4294901760
        %v5545 = vsub.f32 %v936, %v5544
        %5546 = vmatmul.f32.gmra.mxu0 %v5545
        %v5547 = vpop.f32.mrf.mxu0
        %v5548 = vadd.f32 %v5302, %v5547
        %v5549 = vand.u32 %v940, 4294901760
        %v5550 = vsub.f32 %v940, %v5549
        %5551 = vmatmul.f32.gmra.mxu0 %v5550
        %v5552 = vpop.f32.mrf.mxu0
        %v5553 = vadd.f32 %v5306, %v5552
        %v5554 = vand.u32 %v944, 4294901760
        %v5555 = vsub.f32 %v944, %v5554
        %5556 = vmatmul.f32.gmra.mxu0 %v5555
        %v5557 = vpop.f32.mrf.mxu0
        %v5558 = vadd.f32 %v5310, %v5557
        %v5559 = vand.u32 %v948, 4294901760
        %v5560 = vsub.f32 %v948, %v5559
        %5561 = vmatmul.f32.gmra.mxu0 %v5560
        %v5562 = vpop.f32.mrf.mxu0
        %v5563 = vadd.f32 %v5314, %v5562
        %v5564 = vand.u32 %v952, 4294901760
        %v5565 = vsub.f32 %v952, %v5564
        %5566 = vmatmul.f32.gmra.mxu0 %v5565
        %v5567 = vpop.f32.mrf.mxu0
        %v5568 = vadd.f32 %v5318, %v5567
        %v5569 = vand.u32 %v956, 4294901760
        %v5570 = vsub.f32 %v956, %v5569
        %5571 = vmatmul.f32.gmra.mxu0 %v5570
        %v5572 = vpop.f32.mrf.mxu0
        %v5573 = vadd.f32 %v5322, %v5572
        %v5574 = vand.u32 %v960, 4294901760
        %v5575 = vsub.f32 %v960, %v5574
        %5576 = vmatmul.f32.gmra.mxu0 %v5575
        %v5577 = vpop.f32.mrf.mxu0
        %v5578 = vadd.f32 %v5326, %v5577
        %v5579 = vand.u32 %v964, 4294901760
        %v5580 = vsub.f32 %v964, %v5579
        %5581 = vmatmul.f32.gmra.mxu0 %v5580
        %v5582 = vpop.f32.mrf.mxu0
        %v5583 = vadd.f32 %v5330, %v5582
        %v5584 = vand.u32 %v968, 4294901760
        %v5585 = vsub.f32 %v968, %v5584
        %5586 = vmatmul.f32.gmra.mxu0 %v5585
        %v5587 = vpop.f32.mrf.mxu0
        %v5588 = vadd.f32 %v5334, %v5587
        %v5589 = vand.u32 %v972, 4294901760
        %v5590 = vsub.f32 %v972, %v5589
        %5591 = vmatmul.f32.gmra.mxu0 %v5590
        %v5592 = vpop.f32.mrf.mxu0
        %v5593 = vadd.f32 %v5338, %v5592
        %v5594 = vand.u32 %v976, 4294901760
        %v5595 = vsub.f32 %v976, %v5594
        %5596 = vmatmul.f32.gmra.mxu0 %v5595
        %v5597 = vpop.f32.mrf.mxu0
        %v5598 = vadd.f32 %v5342, %v5597
        %v5599 = vand.u32 %v980, 4294901760
        %v5600 = vsub.f32 %v980, %v5599
        %5601 = vmatmul.f32.gmra.mxu0 %v5600
        %v5602 = vpop.f32.mrf.mxu0
        %v5603 = vadd.f32 %v5346, %v5602
        %v5604 = vand.u32 %v984, 4294901760
        %v5605 = vsub.f32 %v984, %v5604
        %5606 = vmatmul.f32.gmra.mxu0 %v5605
        %v5607 = vpop.f32.mrf.mxu0
        %v5608 = vadd.f32 %v5350, %v5607
        %v5609 = vand.u32 %v988, 4294901760
        %v5610 = vsub.f32 %v988, %v5609
        %5611 = vmatmul.f32.gmra.mxu0 %v5610
        %v5612 = vpop.f32.mrf.mxu0
        %v5613 = vadd.f32 %v5354, %v5612
        %v5614 = vand.u32 %v992, 4294901760
        %v5615 = vsub.f32 %v992, %v5614
        %5616 = vmatmul.f32.gmra.mxu0 %v5615
        %v5617 = vpop.f32.mrf.mxu0
        %v5618 = vadd.f32 %v5358, %v5617
        %v5619 = vand.u32 %v996, 4294901760
        %v5620 = vsub.f32 %v996, %v5619
        %5621 = vmatmul.f32.gmra.mxu0 %v5620
        %v5622 = vpop.f32.mrf.mxu0
        %v5623 = vadd.f32 %v5362, %v5622
        %v5624 = vand.u32 %v1000, 4294901760
        %v5625 = vsub.f32 %v1000, %v5624
        %5626 = vmatmul.f32.gmra.mxu0 %v5625
        %v5627 = vpop.f32.mrf.mxu0
        %v5628 = vadd.f32 %v5366, %v5627
        %v5629 = vand.u32 %v1004, 4294901760
        %v5630 = vsub.f32 %v1004, %v5629
        %5631 = vmatmul.f32.gmra.mxu0 %v5630
        %v5632 = vpop.f32.mrf.mxu0
        %v5633 = vadd.f32 %v5370, %v5632
        %v5634 = vand.u32 %v1008, 4294901760
        %v5635 = vsub.f32 %v1008, %v5634
        %5636 = vmatmul.f32.gmra.mxu0 %v5635
        %v5637 = vpop.f32.mrf.mxu0
        %v5638 = vadd.f32 %v5374, %v5637
        %v5639 = vand.u32 %v1012, 4294901760
        %v5640 = vsub.f32 %v1012, %v5639
        %5641 = vmatmul.f32.gmra.mxu0 %v5640
        %v5642 = vpop.f32.mrf.mxu0
        %v5643 = vadd.f32 %v5378, %v5642
        %v5644 = vand.u32 %v1016, 4294901760
        %v5645 = vsub.f32 %v1016, %v5644
        %5646 = vmatmul.f32.gmra.mxu0 %v5645
        %v5647 = vpop.f32.mrf.mxu0
        %v5648 = vadd.f32 %v5382, %v5647
        %v5649 = vand.u32 %v1020, 4294901760
        %v5650 = vsub.f32 %v1020, %v5649
        %5651 = vmatmul.f32.gmra.mxu0 %v5650
        %v5652 = vpop.f32.mrf.mxu0
        %v5653 = vadd.f32 %v5386, %v5652
        %v5654 = vand.u32 %v1024, 4294901760
        %v5655 = vsub.f32 %v1024, %v5654
        %5656 = vmatmul.f32.gmra.mxu0 %v5655
        %v5657 = vpop.f32.mrf.mxu0
        %v5658 = vadd.f32 %v5390, %v5657
        %v5659 = vand.u32 %v1028, 4294901760
        %v5660 = vsub.f32 %v1028, %v5659
        %5661 = vmatmul.f32.gmra.mxu0 %v5660
        %v5662 = vpop.f32.mrf.mxu0
        %v5663 = vadd.f32 %v5394, %v5662
        %v5664 = vand.u32 %v1032, 4294901760
        %v5665 = vsub.f32 %v1032, %v5664
        %5666 = vmatmul.f32.gmra.mxu0 %v5665
        %v5667 = vpop.f32.mrf.mxu0
        %v5668 = vadd.f32 %v5398, %v5667
        %v5669 = vand.u32 %v1036, 4294901760
        %v5670 = vsub.f32 %v1036, %v5669
        %5671 = vmatmul.f32.gmra.mxu0 %v5670
        %v5672 = vpop.f32.mrf.mxu0
        %v5673 = vadd.f32 %v5402, %v5672
        %v5674 = vand.u32 %v1040, 4294901760
        %v5675 = vsub.f32 %v1040, %v5674
        %5676 = vmatmul.f32.gmra.mxu0 %v5675
        %v5677 = vpop.f32.mrf.mxu0
        %v5678 = vadd.f32 %v5406, %v5677
        %v5679 = vand.u32 %v1044, 4294901760
        %v5680 = vsub.f32 %v1044, %v5679
        %5681 = vmatmul.f32.gmra.mxu0 %v5680
        %v5682 = vpop.f32.mrf.mxu0
        %v5683 = vadd.f32 %v5410, %v5682
        %v5684 = vand.u32 %v1048, 4294901760
        %v5685 = vsub.f32 %v1048, %v5684
        %5686 = vmatmul.f32.gmra.mxu0 %v5685
        %v5687 = vpop.f32.mrf.mxu0
        %v5688 = vadd.f32 %v5414, %v5687
        %v5689 = vand.u32 %v1052, 4294901760
        %v5690 = vsub.f32 %v1052, %v5689
        %5691 = vmatmul.f32.gmra.mxu0 %v5690
        %v5692 = vpop.f32.mrf.mxu0
        %v5693 = vadd.f32 %v5418, %v5692
        %v5694 = vand.u32 %v1056, 4294901760
        %v5695 = vsub.f32 %v1056, %v5694
        %5696 = vmatmul.f32.gmra.mxu0 %v5695
        %v5697 = vpop.f32.mrf.mxu0
        %v5698 = vadd.f32 %v5422, %v5697
        %v5699 = vand.u32 %v1060, 4294901760
        %v5700 = vsub.f32 %v1060, %v5699
        %5701 = vmatmul.f32.gmra.mxu0 %v5700
        %v5702 = vpop.f32.mrf.mxu0
        %v5703 = vadd.f32 %v5426, %v5702
        %v5704 = vand.u32 %v1064, 4294901760
        %v5705 = vsub.f32 %v1064, %v5704
        %5706 = vmatmul.f32.gmra.mxu0 %v5705
        %v5707 = vpop.f32.mrf.mxu0
        %v5708 = vadd.f32 %v5430, %v5707
        %v5709 = vand.u32 %v1068, 4294901760
        %v5710 = vsub.f32 %v1068, %v5709
        %5711 = vmatmul.f32.gmra.mxu0 %v5710
        %v5712 = vpop.f32.mrf.mxu0
        %v5713 = vadd.f32 %v5434, %v5712
        %v5714 = vand.u32 %v1072, 4294901760
        %v5715 = vsub.f32 %v1072, %v5714
        %5716 = vmatmul.f32.gmra.mxu0 %v5715
        %v5717 = vpop.f32.mrf.mxu0
        %v5718 = vadd.f32 %v5438, %v5717
        %v5719 = vand.u32 %v1076, 4294901760
        %v5720 = vsub.f32 %v1076, %v5719
        %5721 = vmatmul.f32.gmra.mxu0 %v5720
        %v5722 = vpop.f32.mrf.mxu0
        %v5723 = vadd.f32 %v5442, %v5722
        %v5724 = vand.u32 %v1080, 4294901760
        %v5725 = vsub.f32 %v1080, %v5724
        %5726 = vmatmul.f32.gmra.mxu0 %v5725
        %v5727 = vpop.f32.mrf.mxu0
        %v5728 = vadd.f32 %v5446, %v5727
        %v5729 = vand.u32 %v1084, 4294901760
        %v5730 = vsub.f32 %v1084, %v5729
        %5731 = vmatmul.f32.gmra.mxu0 %v5730
        %v5732 = vpop.f32.mrf.mxu0
        %v5733 = vadd.f32 %v5450, %v5732
        %v5734 = vand.u32 %v1088, 4294901760
        %v5735 = vsub.f32 %v1088, %v5734
        %5736 = vmatmul.f32.gmra.mxu0 %v5735
        %v5737 = vpop.f32.mrf.mxu0
        %v5738 = vadd.f32 %v5454, %v5737
        %v5739 = vand.u32 %v1092, 4294901760
        %v5740 = vsub.f32 %v1092, %v5739
        %5741 = vmatmul.f32.gmra.mxu0 %v5740
        %v5742 = vpop.f32.mrf.mxu0
        %v5743 = vadd.f32 %v5458, %v5742
        %v5744 = vand.u32 %v1096, 4294901760
        %v5745 = vsub.f32 %v1096, %v5744
        %5746 = vmatmul.f32.gmra.mxu0 %v5745
        %v5747 = vpop.f32.mrf.mxu0
        %v5748 = vadd.f32 %v5462, %v5747
        %v5749 = vand.u32 %v1100, 4294901760
        %v5750 = vsub.f32 %v1100, %v5749
        %5751 = vmatmul.f32.gmra.mxu0 %v5750
        %v5752 = vpop.f32.mrf.mxu0
        %v5753 = vadd.f32 %v5466, %v5752
        %v5754 = vand.u32 %v1104, 4294901760
        %v5755 = vsub.f32 %v1104, %v5754
        %5756 = vmatmul.f32.gmra.mxu0 %v5755
        %v5757 = vpop.f32.mrf.mxu0
        %v5758 = vadd.f32 %v5470, %v5757
        %v5759 = vand.u32 %v1108, 4294901760
        %v5760 = vsub.f32 %v1108, %v5759
        %5761 = vmatmul.f32.gmra.mxu0 %v5760
        %v5762 = vpop.f32.mrf.mxu0
        %v5763 = vadd.f32 %v5474, %v5762
        %5764 = vdwg.mxu0
        %v5765 = vand.u32 %v1157, 4294901760
        %5766 = vmatpush.msra.mxu0 %v5765
        %v5767 = vand.u32 %v1156, 4294901760
        %5768 = vmatpush.msra.mxu0 %v5767
        %v5769 = vand.u32 %v1155, 4294901760
        %5770 = vmatpush.msra.mxu0 %v5769
        %v5771 = vand.u32 %v1154, 4294901760
        %5772 = vmatpush.msra.mxu0 %v5771
        %v5773 = vand.u32 %v1153, 4294901760
        %5774 = vmatpush.msra.mxu0 %v5773
        %v5775 = vand.u32 %v1152, 4294901760
        %5776 = vmatpush.msra.mxu0 %v5775
        %v5777 = vand.u32 %v1151, 4294901760
        %5778 = vmatpush.msra.mxu0 %v5777
        %v5779 = vand.u32 %v1150, 4294901760
        %5780 = vmatpush.msra.mxu0 %v5779
        %v5781 = vand.u32 %v1149, 4294901760
        %5782 = vmatpush.msra.mxu0 %v5781
        %v5783 = vand.u32 %v1148, 4294901760
        %5784 = vmatpush.msra.mxu0 %v5783
        %v5785 = vand.u32 %v1147, 4294901760
        %5786 = vmatpush.msra.mxu0 %v5785
        %v5787 = vand.u32 %v1146, 4294901760
        %5788 = vmatpush.msra.mxu0 %v5787
        %v5789 = vand.u32 %v1145, 4294901760
        %5790 = vmatpush.msra.mxu0 %v5789
        %v5791 = vand.u32 %v1144, 4294901760
        %5792 = vmatpush.msra.mxu0 %v5791
        %v5793 = vand.u32 %v1143, 4294901760
        %5794 = vmatpush.msra.mxu0 %v5793
        %v5795 = vand.u32 %v1142, 4294901760
        %5796 = vmatpush.msra.mxu0 %v5795
        %v5797 = vand.u32 %v920, 4294901760
        %v5798 = vsub.f32 %v920, %v5797
        %v5799 = vand.u32 %v5798, 4294901760
        %5800 = vmatmul.f32.gmra.mxu0 %v5799
        %v5801 = vpop.f32.mrf.mxu0
        %v5802 = vadd.f32 %v5528, %v5801
        %v5803 = vand.u32 %v924, 4294901760
        %v5804 = vsub.f32 %v924, %v5803
        %v5805 = vand.u32 %v5804, 4294901760
        %5806 = vmatmul.f32.gmra.mxu0 %v5805
        %v5807 = vpop.f32.mrf.mxu0
        %v5808 = vadd.f32 %v5533, %v5807
        %v5809 = vand.u32 %v928, 4294901760
        %v5810 = vsub.f32 %v928, %v5809
        %v5811 = vand.u32 %v5810, 4294901760
        %5812 = vmatmul.f32.gmra.mxu0 %v5811
        %v5813 = vpop.f32.mrf.mxu0
        %v5814 = vadd.f32 %v5538, %v5813
        %v5815 = vand.u32 %v932, 4294901760
        %v5816 = vsub.f32 %v932, %v5815
        %v5817 = vand.u32 %v5816, 4294901760
        %5818 = vmatmul.f32.gmra.mxu0 %v5817
        %v5819 = vpop.f32.mrf.mxu0
        %v5820 = vadd.f32 %v5543, %v5819
        %v5821 = vand.u32 %v936, 4294901760
        %v5822 = vsub.f32 %v936, %v5821
        %v5823 = vand.u32 %v5822, 4294901760
        %5824 = vmatmul.f32.gmra.mxu0 %v5823
        %v5825 = vpop.f32.mrf.mxu0
        %v5826 = vadd.f32 %v5548, %v5825
        %v5827 = vand.u32 %v940, 4294901760
        %v5828 = vsub.f32 %v940, %v5827
        %v5829 = vand.u32 %v5828, 4294901760
        %5830 = vmatmul.f32.gmra.mxu0 %v5829
        %v5831 = vpop.f32.mrf.mxu0
        %v5832 = vadd.f32 %v5553, %v5831
        %v5833 = vand.u32 %v944, 4294901760
        %v5834 = vsub.f32 %v944, %v5833
        %v5835 = vand.u32 %v5834, 4294901760
        %5836 = vmatmul.f32.gmra.mxu0 %v5835
        %v5837 = vpop.f32.mrf.mxu0
        %v5838 = vadd.f32 %v5558, %v5837
        %v5839 = vand.u32 %v948, 4294901760
        %v5840 = vsub.f32 %v948, %v5839
        %v5841 = vand.u32 %v5840, 4294901760
        %5842 = vmatmul.f32.gmra.mxu0 %v5841
        %v5843 = vpop.f32.mrf.mxu0
        %v5844 = vadd.f32 %v5563, %v5843
        %v5845 = vand.u32 %v952, 4294901760
        %v5846 = vsub.f32 %v952, %v5845
        %v5847 = vand.u32 %v5846, 4294901760
        %5848 = vmatmul.f32.gmra.mxu0 %v5847
        %v5849 = vpop.f32.mrf.mxu0
        %v5850 = vadd.f32 %v5568, %v5849
        %v5851 = vand.u32 %v956, 4294901760
        %v5852 = vsub.f32 %v956, %v5851
        %v5853 = vand.u32 %v5852, 4294901760
        %5854 = vmatmul.f32.gmra.mxu0 %v5853
        %v5855 = vpop.f32.mrf.mxu0
        %v5856 = vadd.f32 %v5573, %v5855
        %v5857 = vand.u32 %v960, 4294901760
        %v5858 = vsub.f32 %v960, %v5857
        %v5859 = vand.u32 %v5858, 4294901760
        %5860 = vmatmul.f32.gmra.mxu0 %v5859
        %v5861 = vpop.f32.mrf.mxu0
        %v5862 = vadd.f32 %v5578, %v5861
        %v5863 = vand.u32 %v964, 4294901760
        %v5864 = vsub.f32 %v964, %v5863
        %v5865 = vand.u32 %v5864, 4294901760
        %5866 = vmatmul.f32.gmra.mxu0 %v5865
        %v5867 = vpop.f32.mrf.mxu0
        %v5868 = vadd.f32 %v5583, %v5867
        %v5869 = vand.u32 %v968, 4294901760
        %v5870 = vsub.f32 %v968, %v5869
        %v5871 = vand.u32 %v5870, 4294901760
        %5872 = vmatmul.f32.gmra.mxu0 %v5871
        %v5873 = vpop.f32.mrf.mxu0
        %v5874 = vadd.f32 %v5588, %v5873
        %v5875 = vand.u32 %v972, 4294901760
        %v5876 = vsub.f32 %v972, %v5875
        %v5877 = vand.u32 %v5876, 4294901760
        %5878 = vmatmul.f32.gmra.mxu0 %v5877
        %v5879 = vpop.f32.mrf.mxu0
        %v5880 = vadd.f32 %v5593, %v5879
        %v5881 = vand.u32 %v976, 4294901760
        %v5882 = vsub.f32 %v976, %v5881
        %v5883 = vand.u32 %v5882, 4294901760
        %5884 = vmatmul.f32.gmra.mxu0 %v5883
        %v5885 = vpop.f32.mrf.mxu0
        %v5886 = vadd.f32 %v5598, %v5885
        %v5887 = vand.u32 %v980, 4294901760
        %v5888 = vsub.f32 %v980, %v5887
        %v5889 = vand.u32 %v5888, 4294901760
        %5890 = vmatmul.f32.gmra.mxu0 %v5889
        %v5891 = vpop.f32.mrf.mxu0
        %v5892 = vadd.f32 %v5603, %v5891
        %v5893 = vand.u32 %v984, 4294901760
        %v5894 = vsub.f32 %v984, %v5893
        %v5895 = vand.u32 %v5894, 4294901760
        %5896 = vmatmul.f32.gmra.mxu0 %v5895
        %v5897 = vpop.f32.mrf.mxu0
        %v5898 = vadd.f32 %v5608, %v5897
        %v5899 = vand.u32 %v988, 4294901760
        %v5900 = vsub.f32 %v988, %v5899
        %v5901 = vand.u32 %v5900, 4294901760
        %5902 = vmatmul.f32.gmra.mxu0 %v5901
        %v5903 = vpop.f32.mrf.mxu0
        %v5904 = vadd.f32 %v5613, %v5903
        %v5905 = vand.u32 %v992, 4294901760
        %v5906 = vsub.f32 %v992, %v5905
        %v5907 = vand.u32 %v5906, 4294901760
        %5908 = vmatmul.f32.gmra.mxu0 %v5907
        %v5909 = vpop.f32.mrf.mxu0
        %v5910 = vadd.f32 %v5618, %v5909
        %v5911 = vand.u32 %v996, 4294901760
        %v5912 = vsub.f32 %v996, %v5911
        %v5913 = vand.u32 %v5912, 4294901760
        %5914 = vmatmul.f32.gmra.mxu0 %v5913
        %v5915 = vpop.f32.mrf.mxu0
        %v5916 = vadd.f32 %v5623, %v5915
        %v5917 = vand.u32 %v1000, 4294901760
        %v5918 = vsub.f32 %v1000, %v5917
        %v5919 = vand.u32 %v5918, 4294901760
        %5920 = vmatmul.f32.gmra.mxu0 %v5919
        %v5921 = vpop.f32.mrf.mxu0
        %v5922 = vadd.f32 %v5628, %v5921
        %v5923 = vand.u32 %v1004, 4294901760
        %v5924 = vsub.f32 %v1004, %v5923
        %v5925 = vand.u32 %v5924, 4294901760
        %5926 = vmatmul.f32.gmra.mxu0 %v5925
        %v5927 = vpop.f32.mrf.mxu0
        %v5928 = vadd.f32 %v5633, %v5927
        %v5929 = vand.u32 %v1008, 4294901760
        %v5930 = vsub.f32 %v1008, %v5929
        %v5931 = vand.u32 %v5930, 4294901760
        %5932 = vmatmul.f32.gmra.mxu0 %v5931
        %v5933 = vpop.f32.mrf.mxu0
        %v5934 = vadd.f32 %v5638, %v5933
        %v5935 = vand.u32 %v1012, 4294901760
        %v5936 = vsub.f32 %v1012, %v5935
        %v5937 = vand.u32 %v5936, 4294901760
        %5938 = vmatmul.f32.gmra.mxu0 %v5937
        %v5939 = vpop.f32.mrf.mxu0
        %v5940 = vadd.f32 %v5643, %v5939
        %v5941 = vand.u32 %v1016, 4294901760
        %v5942 = vsub.f32 %v1016, %v5941
        %v5943 = vand.u32 %v5942, 4294901760
        %5944 = vmatmul.f32.gmra.mxu0 %v5943
        %v5945 = vpop.f32.mrf.mxu0
        %v5946 = vadd.f32 %v5648, %v5945
        %v5947 = vand.u32 %v1020, 4294901760
        %v5948 = vsub.f32 %v1020, %v5947
        %v5949 = vand.u32 %v5948, 4294901760
        %5950 = vmatmul.f32.gmra.mxu0 %v5949
        %v5951 = vpop.f32.mrf.mxu0
        %v5952 = vadd.f32 %v5653, %v5951
        %v5953 = vand.u32 %v1024, 4294901760
        %v5954 = vsub.f32 %v1024, %v5953
        %v5955 = vand.u32 %v5954, 4294901760
        %5956 = vmatmul.f32.gmra.mxu0 %v5955
        %v5957 = vpop.f32.mrf.mxu0
        %v5958 = vadd.f32 %v5658, %v5957
        %v5959 = vand.u32 %v1028, 4294901760
        %v5960 = vsub.f32 %v1028, %v5959
        %v5961 = vand.u32 %v5960, 4294901760
        %5962 = vmatmul.f32.gmra.mxu0 %v5961
        %v5963 = vpop.f32.mrf.mxu0
        %v5964 = vadd.f32 %v5663, %v5963
        %v5965 = vand.u32 %v1032, 4294901760
        %v5966 = vsub.f32 %v1032, %v5965
        %v5967 = vand.u32 %v5966, 4294901760
        %5968 = vmatmul.f32.gmra.mxu0 %v5967
        %v5969 = vpop.f32.mrf.mxu0
        %v5970 = vadd.f32 %v5668, %v5969
        %v5971 = vand.u32 %v1036, 4294901760
        %v5972 = vsub.f32 %v1036, %v5971
        %v5973 = vand.u32 %v5972, 4294901760
        %5974 = vmatmul.f32.gmra.mxu0 %v5973
        %v5975 = vpop.f32.mrf.mxu0
        %v5976 = vadd.f32 %v5673, %v5975
        %v5977 = vand.u32 %v1040, 4294901760
        %v5978 = vsub.f32 %v1040, %v5977
        %v5979 = vand.u32 %v5978, 4294901760
        %5980 = vmatmul.f32.gmra.mxu0 %v5979
        %v5981 = vpop.f32.mrf.mxu0
        %v5982 = vadd.f32 %v5678, %v5981
        %v5983 = vand.u32 %v1044, 4294901760
        %v5984 = vsub.f32 %v1044, %v5983
        %v5985 = vand.u32 %v5984, 4294901760
        %5986 = vmatmul.f32.gmra.mxu0 %v5985
        %v5987 = vpop.f32.mrf.mxu0
        %v5988 = vadd.f32 %v5683, %v5987
        %v5989 = vand.u32 %v1048, 4294901760
        %v5990 = vsub.f32 %v1048, %v5989
        %v5991 = vand.u32 %v5990, 4294901760
        %5992 = vmatmul.f32.gmra.mxu0 %v5991
        %v5993 = vpop.f32.mrf.mxu0
        %v5994 = vadd.f32 %v5688, %v5993
        %v5995 = vand.u32 %v1052, 4294901760
        %v5996 = vsub.f32 %v1052, %v5995
        %v5997 = vand.u32 %v5996, 4294901760
        %5998 = vmatmul.f32.gmra.mxu0 %v5997
        %v5999 = vpop.f32.mrf.mxu0
        %v6000 = vadd.f32 %v5693, %v5999
        %v6001 = vand.u32 %v1056, 4294901760
        %v6002 = vsub.f32 %v1056, %v6001
        %v6003 = vand.u32 %v6002, 4294901760
        %6004 = vmatmul.f32.gmra.mxu0 %v6003
        %v6005 = vpop.f32.mrf.mxu0
        %v6006 = vadd.f32 %v5698, %v6005
        %v6007 = vand.u32 %v1060, 4294901760
        %v6008 = vsub.f32 %v1060, %v6007
        %v6009 = vand.u32 %v6008, 4294901760
        %6010 = vmatmul.f32.gmra.mxu0 %v6009
        %v6011 = vpop.f32.mrf.mxu0
        %v6012 = vadd.f32 %v5703, %v6011
        %v6013 = vand.u32 %v1064, 4294901760
        %v6014 = vsub.f32 %v1064, %v6013
        %v6015 = vand.u32 %v6014, 4294901760
        %6016 = vmatmul.f32.gmra.mxu0 %v6015
        %v6017 = vpop.f32.mrf.mxu0
        %v6018 = vadd.f32 %v5708, %v6017
        %v6019 = vand.u32 %v1068, 4294901760
        %v6020 = vsub.f32 %v1068, %v6019
        %v6021 = vand.u32 %v6020, 4294901760
        %6022 = vmatmul.f32.gmra.mxu0 %v6021
        %v6023 = vpop.f32.mrf.mxu0
        %v6024 = vadd.f32 %v5713, %v6023
        %v6025 = vand.u32 %v1072, 4294901760
        %v6026 = vsub.f32 %v1072, %v6025
        %v6027 = vand.u32 %v6026, 4294901760
        %6028 = vmatmul.f32.gmra.mxu0 %v6027
        %v6029 = vpop.f32.mrf.mxu0
        %v6030 = vadd.f32 %v5718, %v6029
        %v6031 = vand.u32 %v1076, 4294901760
        %v6032 = vsub.f32 %v1076, %v6031
        %v6033 = vand.u32 %v6032, 4294901760
        %6034 = vmatmul.f32.gmra.mxu0 %v6033
        %v6035 = vpop.f32.mrf.mxu0
        %v6036 = vadd.f32 %v5723, %v6035
        %v6037 = vand.u32 %v1080, 4294901760
        %v6038 = vsub.f32 %v1080, %v6037
        %v6039 = vand.u32 %v6038, 4294901760
        %6040 = vmatmul.f32.gmra.mxu0 %v6039
        %v6041 = vpop.f32.mrf.mxu0
        %v6042 = vadd.f32 %v5728, %v6041
        %v6043 = vand.u32 %v1084, 4294901760
        %v6044 = vsub.f32 %v1084, %v6043
        %v6045 = vand.u32 %v6044, 4294901760
        %6046 = vmatmul.f32.gmra.mxu0 %v6045
        %v6047 = vpop.f32.mrf.mxu0
        %v6048 = vadd.f32 %v5733, %v6047
        %v6049 = vand.u32 %v1088, 4294901760
        %v6050 = vsub.f32 %v1088, %v6049
        %v6051 = vand.u32 %v6050, 4294901760
        %6052 = vmatmul.f32.gmra.mxu0 %v6051
        %v6053 = vpop.f32.mrf.mxu0
        %v6054 = vadd.f32 %v5738, %v6053
        %v6055 = vand.u32 %v1092, 4294901760
        %v6056 = vsub.f32 %v1092, %v6055
        %v6057 = vand.u32 %v6056, 4294901760
        %6058 = vmatmul.f32.gmra.mxu0 %v6057
        %v6059 = vpop.f32.mrf.mxu0
        %v6060 = vadd.f32 %v5743, %v6059
        %v6061 = vand.u32 %v1096, 4294901760
        %v6062 = vsub.f32 %v1096, %v6061
        %v6063 = vand.u32 %v6062, 4294901760
        %6064 = vmatmul.f32.gmra.mxu0 %v6063
        %v6065 = vpop.f32.mrf.mxu0
        %v6066 = vadd.f32 %v5748, %v6065
        %v6067 = vand.u32 %v1100, 4294901760
        %v6068 = vsub.f32 %v1100, %v6067
        %v6069 = vand.u32 %v6068, 4294901760
        %6070 = vmatmul.f32.gmra.mxu0 %v6069
        %v6071 = vpop.f32.mrf.mxu0
        %v6072 = vadd.f32 %v5753, %v6071
        %v6073 = vand.u32 %v1104, 4294901760
        %v6074 = vsub.f32 %v1104, %v6073
        %v6075 = vand.u32 %v6074, 4294901760
        %6076 = vmatmul.f32.gmra.mxu0 %v6075
        %v6077 = vpop.f32.mrf.mxu0
        %v6078 = vadd.f32 %v5758, %v6077
        %v6079 = vand.u32 %v1108, 4294901760
        %v6080 = vsub.f32 %v1108, %v6079
        %v6081 = vand.u32 %v6080, 4294901760
        %6082 = vmatmul.f32.gmra.mxu0 %v6081
        %v6083 = vpop.f32.mrf.mxu0
        %v6084 = vadd.f32 %v5763, %v6083
        %6085 = vdwg.mxu0
        %v6086 = vand.u32 %v1157, 4294901760
        %v6087 = vsub.f32 %v1157, %v6086
        %v6088 = vand.u32 %v6087, 4294901760
        %6089 = vmatpush.msra.mxu0 %v6088
        %v6090 = vand.u32 %v1156, 4294901760
        %v6091 = vsub.f32 %v1156, %v6090
        %v6092 = vand.u32 %v6091, 4294901760
        %6093 = vmatpush.msra.mxu0 %v6092
        %v6094 = vand.u32 %v1155, 4294901760
        %v6095 = vsub.f32 %v1155, %v6094
        %v6096 = vand.u32 %v6095, 4294901760
        %6097 = vmatpush.msra.mxu0 %v6096
        %v6098 = vand.u32 %v1154, 4294901760
        %v6099 = vsub.f32 %v1154, %v6098
        %v6100 = vand.u32 %v6099, 4294901760
        %6101 = vmatpush.msra.mxu0 %v6100
        %v6102 = vand.u32 %v1153, 4294901760
        %v6103 = vsub.f32 %v1153, %v6102
        %v6104 = vand.u32 %v6103, 4294901760
        %6105 = vmatpush.msra.mxu0 %v6104
        %v6106 = vand.u32 %v1152, 4294901760
        %v6107 = vsub.f32 %v1152, %v6106
        %v6108 = vand.u32 %v6107, 4294901760
        %6109 = vmatpush.msra.mxu0 %v6108
        %v6110 = vand.u32 %v1151, 4294901760
        %v6111 = vsub.f32 %v1151, %v6110
        %v6112 = vand.u32 %v6111, 4294901760
        %6113 = vmatpush.msra.mxu0 %v6112
        %v6114 = vand.u32 %v1150, 4294901760
        %v6115 = vsub.f32 %v1150, %v6114
        %v6116 = vand.u32 %v6115, 4294901760
        %6117 = vmatpush.msra.mxu0 %v6116
        %v6118 = vand.u32 %v1149, 4294901760
        %v6119 = vsub.f32 %v1149, %v6118
        %v6120 = vand.u32 %v6119, 4294901760
        %6121 = vmatpush.msra.mxu0 %v6120
        %v6122 = vand.u32 %v1148, 4294901760
        %v6123 = vsub.f32 %v1148, %v6122
        %v6124 = vand.u32 %v6123, 4294901760
        %6125 = vmatpush.msra.mxu0 %v6124
        %v6126 = vand.u32 %v1147, 4294901760
        %v6127 = vsub.f32 %v1147, %v6126
        %v6128 = vand.u32 %v6127, 4294901760
        %6129 = vmatpush.msra.mxu0 %v6128
        %v6130 = vand.u32 %v1146, 4294901760
        %v6131 = vsub.f32 %v1146, %v6130
        %v6132 = vand.u32 %v6131, 4294901760
        %6133 = vmatpush.msra.mxu0 %v6132
        %v6134 = vand.u32 %v1145, 4294901760
        %v6135 = vsub.f32 %v1145, %v6134
        %v6136 = vand.u32 %v6135, 4294901760
        %6137 = vmatpush.msra.mxu0 %v6136
        %v6138 = vand.u32 %v1144, 4294901760
        %v6139 = vsub.f32 %v1144, %v6138
        %v6140 = vand.u32 %v6139, 4294901760
        %6141 = vmatpush.msra.mxu0 %v6140
        %v6142 = vand.u32 %v1143, 4294901760
        %v6143 = vsub.f32 %v1143, %v6142
        %v6144 = vand.u32 %v6143, 4294901760
        %6145 = vmatpush.msra.mxu0 %v6144
        %v6146 = vand.u32 %v1142, 4294901760
        %v6147 = vsub.f32 %v1142, %v6146
        %v6148 = vand.u32 %v6147, 4294901760
        %6149 = vmatpush.msra.mxu0 %v6148
        %v6150 = vand.u32 %v920, 4294901760
        %6151 = vmatmul.f32.gmra.mxu0 %v6150
        %v6152 = vpop.f32.mrf.mxu0
        %v6153 = vadd.f32 %v5802, %v6152
        %v6154 = vand.u32 %v924, 4294901760
        %6155 = vmatmul.f32.gmra.mxu0 %v6154
        %v6156 = vpop.f32.mrf.mxu0
        %v6157 = vadd.f32 %v5808, %v6156
        %v6158 = vand.u32 %v928, 4294901760
        %6159 = vmatmul.f32.gmra.mxu0 %v6158
        %v6160 = vpop.f32.mrf.mxu0
        %v6161 = vadd.f32 %v5814, %v6160
        %v6162 = vand.u32 %v932, 4294901760
        %6163 = vmatmul.f32.gmra.mxu0 %v6162
        %v6164 = vpop.f32.mrf.mxu0
        %v6165 = vadd.f32 %v5820, %v6164
        %v6166 = vand.u32 %v936, 4294901760
        %6167 = vmatmul.f32.gmra.mxu0 %v6166
        %v6168 = vpop.f32.mrf.mxu0
        %v6169 = vadd.f32 %v5826, %v6168
        %v6170 = vand.u32 %v940, 4294901760
        %6171 = vmatmul.f32.gmra.mxu0 %v6170
        %v6172 = vpop.f32.mrf.mxu0
        %v6173 = vadd.f32 %v5832, %v6172
        %v6174 = vand.u32 %v944, 4294901760
        %6175 = vmatmul.f32.gmra.mxu0 %v6174
        %v6176 = vpop.f32.mrf.mxu0
        %v6177 = vadd.f32 %v5838, %v6176
        %v6178 = vand.u32 %v948, 4294901760
        %6179 = vmatmul.f32.gmra.mxu0 %v6178
        %v6180 = vpop.f32.mrf.mxu0
        %v6181 = vadd.f32 %v5844, %v6180
        %v6182 = vand.u32 %v952, 4294901760
        %6183 = vmatmul.f32.gmra.mxu0 %v6182
        %v6184 = vpop.f32.mrf.mxu0
        %v6185 = vadd.f32 %v5850, %v6184
        %v6186 = vand.u32 %v956, 4294901760
        %6187 = vmatmul.f32.gmra.mxu0 %v6186
        %v6188 = vpop.f32.mrf.mxu0
        %v6189 = vadd.f32 %v5856, %v6188
        %v6190 = vand.u32 %v960, 4294901760
        %6191 = vmatmul.f32.gmra.mxu0 %v6190
        %v6192 = vpop.f32.mrf.mxu0
        %v6193 = vadd.f32 %v5862, %v6192
        %v6194 = vand.u32 %v964, 4294901760
        %6195 = vmatmul.f32.gmra.mxu0 %v6194
        %v6196 = vpop.f32.mrf.mxu0
        %v6197 = vadd.f32 %v5868, %v6196
        %v6198 = vand.u32 %v968, 4294901760
        %6199 = vmatmul.f32.gmra.mxu0 %v6198
        %v6200 = vpop.f32.mrf.mxu0
        %v6201 = vadd.f32 %v5874, %v6200
        %v6202 = vand.u32 %v972, 4294901760
        %6203 = vmatmul.f32.gmra.mxu0 %v6202
        %v6204 = vpop.f32.mrf.mxu0
        %v6205 = vadd.f32 %v5880, %v6204
        %v6206 = vand.u32 %v976, 4294901760
        %6207 = vmatmul.f32.gmra.mxu0 %v6206
        %v6208 = vpop.f32.mrf.mxu0
        %v6209 = vadd.f32 %v5886, %v6208
        %v6210 = vand.u32 %v980, 4294901760
        %6211 = vmatmul.f32.gmra.mxu0 %v6210
        %v6212 = vpop.f32.mrf.mxu0
        %v6213 = vadd.f32 %v5892, %v6212
        %v6214 = vand.u32 %v984, 4294901760
        %6215 = vmatmul.f32.gmra.mxu0 %v6214
        %v6216 = vpop.f32.mrf.mxu0
        %v6217 = vadd.f32 %v5898, %v6216
        %v6218 = vand.u32 %v988, 4294901760
        %6219 = vmatmul.f32.gmra.mxu0 %v6218
        %v6220 = vpop.f32.mrf.mxu0
        %v6221 = vadd.f32 %v5904, %v6220
        %v6222 = vand.u32 %v992, 4294901760
        %6223 = vmatmul.f32.gmra.mxu0 %v6222
        %v6224 = vpop.f32.mrf.mxu0
        %v6225 = vadd.f32 %v5910, %v6224
        %v6226 = vand.u32 %v996, 4294901760
        %6227 = vmatmul.f32.gmra.mxu0 %v6226
        %v6228 = vpop.f32.mrf.mxu0
        %v6229 = vadd.f32 %v5916, %v6228
        %v6230 = vand.u32 %v1000, 4294901760
        %6231 = vmatmul.f32.gmra.mxu0 %v6230
        %v6232 = vpop.f32.mrf.mxu0
        %v6233 = vadd.f32 %v5922, %v6232
        %v6234 = vand.u32 %v1004, 4294901760
        %6235 = vmatmul.f32.gmra.mxu0 %v6234
        %v6236 = vpop.f32.mrf.mxu0
        %v6237 = vadd.f32 %v5928, %v6236
        %v6238 = vand.u32 %v1008, 4294901760
        %6239 = vmatmul.f32.gmra.mxu0 %v6238
        %v6240 = vpop.f32.mrf.mxu0
        %v6241 = vadd.f32 %v5934, %v6240
        %v6242 = vand.u32 %v1012, 4294901760
        %6243 = vmatmul.f32.gmra.mxu0 %v6242
        %v6244 = vpop.f32.mrf.mxu0
        %v6245 = vadd.f32 %v5940, %v6244
        %v6246 = vand.u32 %v1016, 4294901760
        %6247 = vmatmul.f32.gmra.mxu0 %v6246
        %v6248 = vpop.f32.mrf.mxu0
        %v6249 = vadd.f32 %v5946, %v6248
        %v6250 = vand.u32 %v1020, 4294901760
        %6251 = vmatmul.f32.gmra.mxu0 %v6250
        %v6252 = vpop.f32.mrf.mxu0
        %v6253 = vadd.f32 %v5952, %v6252
        %v6254 = vand.u32 %v1024, 4294901760
        %6255 = vmatmul.f32.gmra.mxu0 %v6254
        %v6256 = vpop.f32.mrf.mxu0
        %v6257 = vadd.f32 %v5958, %v6256
        %v6258 = vand.u32 %v1028, 4294901760
        %6259 = vmatmul.f32.gmra.mxu0 %v6258
        %v6260 = vpop.f32.mrf.mxu0
        %v6261 = vadd.f32 %v5964, %v6260
        %v6262 = vand.u32 %v1032, 4294901760
        %6263 = vmatmul.f32.gmra.mxu0 %v6262
        %v6264 = vpop.f32.mrf.mxu0
        %v6265 = vadd.f32 %v5970, %v6264
        %v6266 = vand.u32 %v1036, 4294901760
        %6267 = vmatmul.f32.gmra.mxu0 %v6266
        %v6268 = vpop.f32.mrf.mxu0
        %v6269 = vadd.f32 %v5976, %v6268
        %v6270 = vand.u32 %v1040, 4294901760
        %6271 = vmatmul.f32.gmra.mxu0 %v6270
        %v6272 = vpop.f32.mrf.mxu0
        %v6273 = vadd.f32 %v5982, %v6272
        %v6274 = vand.u32 %v1044, 4294901760
        %6275 = vmatmul.f32.gmra.mxu0 %v6274
        %v6276 = vpop.f32.mrf.mxu0
        %v6277 = vadd.f32 %v5988, %v6276
        %v6278 = vand.u32 %v1048, 4294901760
        %6279 = vmatmul.f32.gmra.mxu0 %v6278
        %v6280 = vpop.f32.mrf.mxu0
        %v6281 = vadd.f32 %v5994, %v6280
        %v6282 = vand.u32 %v1052, 4294901760
        %6283 = vmatmul.f32.gmra.mxu0 %v6282
        %v6284 = vpop.f32.mrf.mxu0
        %v6285 = vadd.f32 %v6000, %v6284
        %v6286 = vand.u32 %v1056, 4294901760
        %6287 = vmatmul.f32.gmra.mxu0 %v6286
        %v6288 = vpop.f32.mrf.mxu0
        %v6289 = vadd.f32 %v6006, %v6288
        %v6290 = vand.u32 %v1060, 4294901760
        %6291 = vmatmul.f32.gmra.mxu0 %v6290
        %v6292 = vpop.f32.mrf.mxu0
        %v6293 = vadd.f32 %v6012, %v6292
        %v6294 = vand.u32 %v1064, 4294901760
        %6295 = vmatmul.f32.gmra.mxu0 %v6294
        %v6296 = vpop.f32.mrf.mxu0
        %v6297 = vadd.f32 %v6018, %v6296
        %v6298 = vand.u32 %v1068, 4294901760
        %6299 = vmatmul.f32.gmra.mxu0 %v6298
        %v6300 = vpop.f32.mrf.mxu0
        %v6301 = vadd.f32 %v6024, %v6300
        %v6302 = vand.u32 %v1072, 4294901760
        %6303 = vmatmul.f32.gmra.mxu0 %v6302
        %v6304 = vpop.f32.mrf.mxu0
        %v6305 = vadd.f32 %v6030, %v6304
        %v6306 = vand.u32 %v1076, 4294901760
        %6307 = vmatmul.f32.gmra.mxu0 %v6306
        %v6308 = vpop.f32.mrf.mxu0
        %v6309 = vadd.f32 %v6036, %v6308
        %v6310 = vand.u32 %v1080, 4294901760
        %6311 = vmatmul.f32.gmra.mxu0 %v6310
        %v6312 = vpop.f32.mrf.mxu0
        %v6313 = vadd.f32 %v6042, %v6312
        %v6314 = vand.u32 %v1084, 4294901760
        %6315 = vmatmul.f32.gmra.mxu0 %v6314
        %v6316 = vpop.f32.mrf.mxu0
        %v6317 = vadd.f32 %v6048, %v6316
        %v6318 = vand.u32 %v1088, 4294901760
        %6319 = vmatmul.f32.gmra.mxu0 %v6318
        %v6320 = vpop.f32.mrf.mxu0
        %v6321 = vadd.f32 %v6054, %v6320
        %v6322 = vand.u32 %v1092, 4294901760
        %6323 = vmatmul.f32.gmra.mxu0 %v6322
        %v6324 = vpop.f32.mrf.mxu0
        %v6325 = vadd.f32 %v6060, %v6324
        %v6326 = vand.u32 %v1096, 4294901760
        %6327 = vmatmul.f32.gmra.mxu0 %v6326
        %v6328 = vpop.f32.mrf.mxu0
        %v6329 = vadd.f32 %v6066, %v6328
        %v6330 = vand.u32 %v1100, 4294901760
        %6331 = vmatmul.f32.gmra.mxu0 %v6330
        %v6332 = vpop.f32.mrf.mxu0
        %v6333 = vadd.f32 %v6072, %v6332
        %v6334 = vand.u32 %v1104, 4294901760
        %6335 = vmatmul.f32.gmra.mxu0 %v6334
        %v6336 = vpop.f32.mrf.mxu0
        %v6337 = vadd.f32 %v6078, %v6336
        %v6338 = vand.u32 %v1108, 4294901760
        %6339 = vmatmul.f32.gmra.mxu0 %v6338
        %v6340 = vpop.f32.mrf.mxu0
        %v6341 = vadd.f32 %v6084, %v6340
        %6342 = vdwg.mxu0
        %v6343 = vand.u32 %v1157, 4294901760
        %6344 = vmatpush.msra.mxu0 %v6343
        %v6345 = vand.u32 %v1156, 4294901760
        %6346 = vmatpush.msra.mxu0 %v6345
        %v6347 = vand.u32 %v1155, 4294901760
        %6348 = vmatpush.msra.mxu0 %v6347
        %v6349 = vand.u32 %v1154, 4294901760
        %6350 = vmatpush.msra.mxu0 %v6349
        %v6351 = vand.u32 %v1153, 4294901760
        %6352 = vmatpush.msra.mxu0 %v6351
        %v6353 = vand.u32 %v1152, 4294901760
        %6354 = vmatpush.msra.mxu0 %v6353
        %v6355 = vand.u32 %v1151, 4294901760
        %6356 = vmatpush.msra.mxu0 %v6355
        %v6357 = vand.u32 %v1150, 4294901760
        %6358 = vmatpush.msra.mxu0 %v6357
        %v6359 = vand.u32 %v1149, 4294901760
        %6360 = vmatpush.msra.mxu0 %v6359
        %v6361 = vand.u32 %v1148, 4294901760
        %6362 = vmatpush.msra.mxu0 %v6361
        %v6363 = vand.u32 %v1147, 4294901760
        %6364 = vmatpush.msra.mxu0 %v6363
        %v6365 = vand.u32 %v1146, 4294901760
        %6366 = vmatpush.msra.mxu0 %v6365
        %v6367 = vand.u32 %v1145, 4294901760
        %6368 = vmatpush.msra.mxu0 %v6367
        %v6369 = vand.u32 %v1144, 4294901760
        %6370 = vmatpush.msra.mxu0 %v6369
        %v6371 = vand.u32 %v1143, 4294901760
        %6372 = vmatpush.msra.mxu0 %v6371
        %v6373 = vand.u32 %v1142, 4294901760
        %6374 = vmatpush.msra.mxu0 %v6373
        %v6375 = vand.u32 %v920, 4294901760
        %6376 = vmatmul.f32.gmra.mxu0 %v6375
        %v6377 = vpop.f32.mrf.mxu0
        %v6378 = vadd.f32 %v6153, %v6377
        %v6379 = vand.u32 %v924, 4294901760
        %6380 = vmatmul.f32.gmra.mxu0 %v6379
        %v6381 = vpop.f32.mrf.mxu0
        %v6382 = vadd.f32 %v6157, %v6381
        %v6383 = vand.u32 %v928, 4294901760
        %6384 = vmatmul.f32.gmra.mxu0 %v6383
        %v6385 = vpop.f32.mrf.mxu0
        %v6386 = vadd.f32 %v6161, %v6385
        %v6387 = vand.u32 %v932, 4294901760
        %6388 = vmatmul.f32.gmra.mxu0 %v6387
        %v6389 = vpop.f32.mrf.mxu0
        %v6390 = vadd.f32 %v6165, %v6389
        %v6391 = vand.u32 %v936, 4294901760
        %6392 = vmatmul.f32.gmra.mxu0 %v6391
        %v6393 = vpop.f32.mrf.mxu0
        %v6394 = vadd.f32 %v6169, %v6393
        %v6395 = vand.u32 %v940, 4294901760
        %6396 = vmatmul.f32.gmra.mxu0 %v6395
        %v6397 = vpop.f32.mrf.mxu0
        %v6398 = vadd.f32 %v6173, %v6397
        %v6399 = vand.u32 %v944, 4294901760
        %6400 = vmatmul.f32.gmra.mxu0 %v6399
        %v6401 = vpop.f32.mrf.mxu0
        %v6402 = vadd.f32 %v6177, %v6401
        %v6403 = vand.u32 %v948, 4294901760
        %6404 = vmatmul.f32.gmra.mxu0 %v6403
        %v6405 = vpop.f32.mrf.mxu0
        %v6406 = vadd.f32 %v6181, %v6405
        %v6407 = vand.u32 %v952, 4294901760
        %6408 = vmatmul.f32.gmra.mxu0 %v6407
        %v6409 = vpop.f32.mrf.mxu0
        %v6410 = vadd.f32 %v6185, %v6409
        %v6411 = vand.u32 %v956, 4294901760
        %6412 = vmatmul.f32.gmra.mxu0 %v6411
        %v6413 = vpop.f32.mrf.mxu0
        %v6414 = vadd.f32 %v6189, %v6413
        %v6415 = vand.u32 %v960, 4294901760
        %6416 = vmatmul.f32.gmra.mxu0 %v6415
        %v6417 = vpop.f32.mrf.mxu0
        %v6418 = vadd.f32 %v6193, %v6417
        %v6419 = vand.u32 %v964, 4294901760
        %6420 = vmatmul.f32.gmra.mxu0 %v6419
        %v6421 = vpop.f32.mrf.mxu0
        %v6422 = vadd.f32 %v6197, %v6421
        %v6423 = vand.u32 %v968, 4294901760
        %6424 = vmatmul.f32.gmra.mxu0 %v6423
        %v6425 = vpop.f32.mrf.mxu0
        %v6426 = vadd.f32 %v6201, %v6425
        %v6427 = vand.u32 %v972, 4294901760
        %6428 = vmatmul.f32.gmra.mxu0 %v6427
        %v6429 = vpop.f32.mrf.mxu0
        %v6430 = vadd.f32 %v6205, %v6429
        %v6431 = vand.u32 %v976, 4294901760
        %6432 = vmatmul.f32.gmra.mxu0 %v6431
        %v6433 = vpop.f32.mrf.mxu0
        %v6434 = vadd.f32 %v6209, %v6433
        %v6435 = vand.u32 %v980, 4294901760
        %6436 = vmatmul.f32.gmra.mxu0 %v6435
        %v6437 = vpop.f32.mrf.mxu0
        %v6438 = vadd.f32 %v6213, %v6437
        %v6439 = vand.u32 %v984, 4294901760
        %6440 = vmatmul.f32.gmra.mxu0 %v6439
        %v6441 = vpop.f32.mrf.mxu0
        %v6442 = vadd.f32 %v6217, %v6441
        %v6443 = vand.u32 %v988, 4294901760
        %6444 = vmatmul.f32.gmra.mxu0 %v6443
        %v6445 = vpop.f32.mrf.mxu0
        %v6446 = vadd.f32 %v6221, %v6445
        %v6447 = vand.u32 %v992, 4294901760
        %6448 = vmatmul.f32.gmra.mxu0 %v6447
        %v6449 = vpop.f32.mrf.mxu0
        %v6450 = vadd.f32 %v6225, %v6449
        %v6451 = vand.u32 %v996, 4294901760
        %6452 = vmatmul.f32.gmra.mxu0 %v6451
        %v6453 = vpop.f32.mrf.mxu0
        %v6454 = vadd.f32 %v6229, %v6453
        %v6455 = vand.u32 %v1000, 4294901760
        %6456 = vmatmul.f32.gmra.mxu0 %v6455
        %v6457 = vpop.f32.mrf.mxu0
        %v6458 = vadd.f32 %v6233, %v6457
        %v6459 = vand.u32 %v1004, 4294901760
        %6460 = vmatmul.f32.gmra.mxu0 %v6459
        %v6461 = vpop.f32.mrf.mxu0
        %v6462 = vadd.f32 %v6237, %v6461
        %v6463 = vand.u32 %v1008, 4294901760
        %6464 = vmatmul.f32.gmra.mxu0 %v6463
        %v6465 = vpop.f32.mrf.mxu0
        %v6466 = vadd.f32 %v6241, %v6465
        %v6467 = vand.u32 %v1012, 4294901760
        %6468 = vmatmul.f32.gmra.mxu0 %v6467
        %v6469 = vpop.f32.mrf.mxu0
        %v6470 = vadd.f32 %v6245, %v6469
        %v6471 = vand.u32 %v1016, 4294901760
        %6472 = vmatmul.f32.gmra.mxu0 %v6471
        %v6473 = vpop.f32.mrf.mxu0
        %v6474 = vadd.f32 %v6249, %v6473
        %v6475 = vand.u32 %v1020, 4294901760
        %6476 = vmatmul.f32.gmra.mxu0 %v6475
        %v6477 = vpop.f32.mrf.mxu0
        %v6478 = vadd.f32 %v6253, %v6477
        %v6479 = vand.u32 %v1024, 4294901760
        %6480 = vmatmul.f32.gmra.mxu0 %v6479
        %v6481 = vpop.f32.mrf.mxu0
        %v6482 = vadd.f32 %v6257, %v6481
        %v6483 = vand.u32 %v1028, 4294901760
        %6484 = vmatmul.f32.gmra.mxu0 %v6483
        %v6485 = vpop.f32.mrf.mxu0
        %v6486 = vadd.f32 %v6261, %v6485
        %v6487 = vand.u32 %v1032, 4294901760
        %6488 = vmatmul.f32.gmra.mxu0 %v6487
        %v6489 = vpop.f32.mrf.mxu0
        %v6490 = vadd.f32 %v6265, %v6489
        %v6491 = vand.u32 %v1036, 4294901760
        %6492 = vmatmul.f32.gmra.mxu0 %v6491
        %v6493 = vpop.f32.mrf.mxu0
        %v6494 = vadd.f32 %v6269, %v6493
        %v6495 = vand.u32 %v1040, 4294901760
        %6496 = vmatmul.f32.gmra.mxu0 %v6495
        %v6497 = vpop.f32.mrf.mxu0
        %v6498 = vadd.f32 %v6273, %v6497
        %v6499 = vand.u32 %v1044, 4294901760
        %6500 = vmatmul.f32.gmra.mxu0 %v6499
        %v6501 = vpop.f32.mrf.mxu0
        %v6502 = vadd.f32 %v6277, %v6501
        %v6503 = vand.u32 %v1048, 4294901760
        %6504 = vmatmul.f32.gmra.mxu0 %v6503
        %v6505 = vpop.f32.mrf.mxu0
        %v6506 = vadd.f32 %v6281, %v6505
        %v6507 = vand.u32 %v1052, 4294901760
        %6508 = vmatmul.f32.gmra.mxu0 %v6507
        %v6509 = vpop.f32.mrf.mxu0
        %v6510 = vadd.f32 %v6285, %v6509
        %v6511 = vand.u32 %v1056, 4294901760
        %6512 = vmatmul.f32.gmra.mxu0 %v6511
        %v6513 = vpop.f32.mrf.mxu0
        %v6514 = vadd.f32 %v6289, %v6513
        %v6515 = vand.u32 %v1060, 4294901760
        %6516 = vmatmul.f32.gmra.mxu0 %v6515
        %v6517 = vpop.f32.mrf.mxu0
        %v6518 = vadd.f32 %v6293, %v6517
        %v6519 = vand.u32 %v1064, 4294901760
        %6520 = vmatmul.f32.gmra.mxu0 %v6519
        %v6521 = vpop.f32.mrf.mxu0
        %v6522 = vadd.f32 %v6297, %v6521
        %v6523 = vand.u32 %v1068, 4294901760
        %6524 = vmatmul.f32.gmra.mxu0 %v6523
        %v6525 = vpop.f32.mrf.mxu0
        %v6526 = vadd.f32 %v6301, %v6525
        %v6527 = vand.u32 %v1072, 4294901760
        %6528 = vmatmul.f32.gmra.mxu0 %v6527
        %v6529 = vpop.f32.mrf.mxu0
        %v6530 = vadd.f32 %v6305, %v6529
        %v6531 = vand.u32 %v1076, 4294901760
        %6532 = vmatmul.f32.gmra.mxu0 %v6531
        %v6533 = vpop.f32.mrf.mxu0
        %v6534 = vadd.f32 %v6309, %v6533
        %v6535 = vand.u32 %v1080, 4294901760
        %6536 = vmatmul.f32.gmra.mxu0 %v6535
        %v6537 = vpop.f32.mrf.mxu0
        %v6538 = vadd.f32 %v6313, %v6537
        %v6539 = vand.u32 %v1084, 4294901760
        %6540 = vmatmul.f32.gmra.mxu0 %v6539
        %v6541 = vpop.f32.mrf.mxu0
        %v6542 = vadd.f32 %v6317, %v6541
        %v6543 = vand.u32 %v1088, 4294901760
        %6544 = vmatmul.f32.gmra.mxu0 %v6543
        %v6545 = vpop.f32.mrf.mxu0
        %v6546 = vadd.f32 %v6321, %v6545
        %v6547 = vand.u32 %v1092, 4294901760
        %6548 = vmatmul.f32.gmra.mxu0 %v6547
        %v6549 = vpop.f32.mrf.mxu0
        %v6550 = vadd.f32 %v6325, %v6549
        %v6551 = vand.u32 %v1096, 4294901760
        %6552 = vmatmul.f32.gmra.mxu0 %v6551
        %v6553 = vpop.f32.mrf.mxu0
        %v6554 = vadd.f32 %v6329, %v6553
        %v6555 = vand.u32 %v1100, 4294901760
        %6556 = vmatmul.f32.gmra.mxu0 %v6555
        %v6557 = vpop.f32.mrf.mxu0
        %v6558 = vadd.f32 %v6333, %v6557
        %v6559 = vand.u32 %v1104, 4294901760
        %6560 = vmatmul.f32.gmra.mxu0 %v6559
        %v6561 = vpop.f32.mrf.mxu0
        %v6562 = vadd.f32 %v6337, %v6561
        %v6563 = vand.u32 %v1108, 4294901760
        %6564 = vmatmul.f32.gmra.mxu0 %v6563
        %v6565 = vpop.f32.mrf.mxu0
        %v6566 = vadd.f32 %v6341, %v6565
        %6567 = vdwg.mxu0
        %v6568 = vand.u32 %v1173, 4294901760
        %6569 = vmatpush.msra.mxu0 %v6568
        %v6570 = vand.u32 %v1172, 4294901760
        %6571 = vmatpush.msra.mxu0 %v6570
        %v6572 = vand.u32 %v1171, 4294901760
        %6573 = vmatpush.msra.mxu0 %v6572
        %v6574 = vand.u32 %v1170, 4294901760
        %6575 = vmatpush.msra.mxu0 %v6574
        %v6576 = vand.u32 %v1169, 4294901760
        %6577 = vmatpush.msra.mxu0 %v6576
        %v6578 = vand.u32 %v1168, 4294901760
        %6579 = vmatpush.msra.mxu0 %v6578
        %v6580 = vand.u32 %v1167, 4294901760
        %6581 = vmatpush.msra.mxu0 %v6580
        %v6582 = vand.u32 %v1166, 4294901760
        %6583 = vmatpush.msra.mxu0 %v6582
        %v6584 = vand.u32 %v1165, 4294901760
        %6585 = vmatpush.msra.mxu0 %v6584
        %v6586 = vand.u32 %v1164, 4294901760
        %6587 = vmatpush.msra.mxu0 %v6586
        %v6588 = vand.u32 %v1163, 4294901760
        %6589 = vmatpush.msra.mxu0 %v6588
        %v6590 = vand.u32 %v1162, 4294901760
        %6591 = vmatpush.msra.mxu0 %v6590
        %v6592 = vand.u32 %v1161, 4294901760
        %6593 = vmatpush.msra.mxu0 %v6592
        %v6594 = vand.u32 %v1160, 4294901760
        %6595 = vmatpush.msra.mxu0 %v6594
        %v6596 = vand.u32 %v1159, 4294901760
        %6597 = vmatpush.msra.mxu0 %v6596
        %v6598 = vand.u32 %v1158, 4294901760
        %6599 = vmatpush.msra.mxu0 %v6598
        %v6600 = vand.u32 %v921, 4294901760
        %v6601 = vsub.f32 %v921, %v6600
        %v6602 = vand.u32 %v6601, 4294901760
        %v6603 = vsub.f32 %v6601, %v6602
        %v6604 = vand.u32 %v6603, 4294901760
        %6605 = vmatmul.f32.gmra.mxu0 %v6604
        %v6606 = vpop.f32.mrf.mxu0
        %v6607 = vadd.f32 %v6378, %v6606
        %v6608 = vand.u32 %v925, 4294901760
        %v6609 = vsub.f32 %v925, %v6608
        %v6610 = vand.u32 %v6609, 4294901760
        %v6611 = vsub.f32 %v6609, %v6610
        %v6612 = vand.u32 %v6611, 4294901760
        %6613 = vmatmul.f32.gmra.mxu0 %v6612
        %v6614 = vpop.f32.mrf.mxu0
        %v6615 = vadd.f32 %v6382, %v6614
        %v6616 = vand.u32 %v929, 4294901760
        %v6617 = vsub.f32 %v929, %v6616
        %v6618 = vand.u32 %v6617, 4294901760
        %v6619 = vsub.f32 %v6617, %v6618
        %v6620 = vand.u32 %v6619, 4294901760
        %6621 = vmatmul.f32.gmra.mxu0 %v6620
        %v6622 = vpop.f32.mrf.mxu0
        %v6623 = vadd.f32 %v6386, %v6622
        %v6624 = vand.u32 %v933, 4294901760
        %v6625 = vsub.f32 %v933, %v6624
        %v6626 = vand.u32 %v6625, 4294901760
        %v6627 = vsub.f32 %v6625, %v6626
        %v6628 = vand.u32 %v6627, 4294901760
        %6629 = vmatmul.f32.gmra.mxu0 %v6628
        %v6630 = vpop.f32.mrf.mxu0
        %v6631 = vadd.f32 %v6390, %v6630
        %v6632 = vand.u32 %v937, 4294901760
        %v6633 = vsub.f32 %v937, %v6632
        %v6634 = vand.u32 %v6633, 4294901760
        %v6635 = vsub.f32 %v6633, %v6634
        %v6636 = vand.u32 %v6635, 4294901760
        %6637 = vmatmul.f32.gmra.mxu0 %v6636
        %v6638 = vpop.f32.mrf.mxu0
        %v6639 = vadd.f32 %v6394, %v6638
        %v6640 = vand.u32 %v941, 4294901760
        %v6641 = vsub.f32 %v941, %v6640
        %v6642 = vand.u32 %v6641, 4294901760
        %v6643 = vsub.f32 %v6641, %v6642
        %v6644 = vand.u32 %v6643, 4294901760
        %6645 = vmatmul.f32.gmra.mxu0 %v6644
        %v6646 = vpop.f32.mrf.mxu0
        %v6647 = vadd.f32 %v6398, %v6646
        %v6648 = vand.u32 %v945, 4294901760
        %v6649 = vsub.f32 %v945, %v6648
        %v6650 = vand.u32 %v6649, 4294901760
        %v6651 = vsub.f32 %v6649, %v6650
        %v6652 = vand.u32 %v6651, 4294901760
        %6653 = vmatmul.f32.gmra.mxu0 %v6652
        %v6654 = vpop.f32.mrf.mxu0
        %v6655 = vadd.f32 %v6402, %v6654
        %v6656 = vand.u32 %v949, 4294901760
        %v6657 = vsub.f32 %v949, %v6656
        %v6658 = vand.u32 %v6657, 4294901760
        %v6659 = vsub.f32 %v6657, %v6658
        %v6660 = vand.u32 %v6659, 4294901760
        %6661 = vmatmul.f32.gmra.mxu0 %v6660
        %v6662 = vpop.f32.mrf.mxu0
        %v6663 = vadd.f32 %v6406, %v6662
        %v6664 = vand.u32 %v953, 4294901760
        %v6665 = vsub.f32 %v953, %v6664
        %v6666 = vand.u32 %v6665, 4294901760
        %v6667 = vsub.f32 %v6665, %v6666
        %v6668 = vand.u32 %v6667, 4294901760
        %6669 = vmatmul.f32.gmra.mxu0 %v6668
        %v6670 = vpop.f32.mrf.mxu0
        %v6671 = vadd.f32 %v6410, %v6670
        %v6672 = vand.u32 %v957, 4294901760
        %v6673 = vsub.f32 %v957, %v6672
        %v6674 = vand.u32 %v6673, 4294901760
        %v6675 = vsub.f32 %v6673, %v6674
        %v6676 = vand.u32 %v6675, 4294901760
        %6677 = vmatmul.f32.gmra.mxu0 %v6676
        %v6678 = vpop.f32.mrf.mxu0
        %v6679 = vadd.f32 %v6414, %v6678
        %v6680 = vand.u32 %v961, 4294901760
        %v6681 = vsub.f32 %v961, %v6680
        %v6682 = vand.u32 %v6681, 4294901760
        %v6683 = vsub.f32 %v6681, %v6682
        %v6684 = vand.u32 %v6683, 4294901760
        %6685 = vmatmul.f32.gmra.mxu0 %v6684
        %v6686 = vpop.f32.mrf.mxu0
        %v6687 = vadd.f32 %v6418, %v6686
        %v6688 = vand.u32 %v965, 4294901760
        %v6689 = vsub.f32 %v965, %v6688
        %v6690 = vand.u32 %v6689, 4294901760
        %v6691 = vsub.f32 %v6689, %v6690
        %v6692 = vand.u32 %v6691, 4294901760
        %6693 = vmatmul.f32.gmra.mxu0 %v6692
        %v6694 = vpop.f32.mrf.mxu0
        %v6695 = vadd.f32 %v6422, %v6694
        %v6696 = vand.u32 %v969, 4294901760
        %v6697 = vsub.f32 %v969, %v6696
        %v6698 = vand.u32 %v6697, 4294901760
        %v6699 = vsub.f32 %v6697, %v6698
        %v6700 = vand.u32 %v6699, 4294901760
        %6701 = vmatmul.f32.gmra.mxu0 %v6700
        %v6702 = vpop.f32.mrf.mxu0
        %v6703 = vadd.f32 %v6426, %v6702
        %v6704 = vand.u32 %v973, 4294901760
        %v6705 = vsub.f32 %v973, %v6704
        %v6706 = vand.u32 %v6705, 4294901760
        %v6707 = vsub.f32 %v6705, %v6706
        %v6708 = vand.u32 %v6707, 4294901760
        %6709 = vmatmul.f32.gmra.mxu0 %v6708
        %v6710 = vpop.f32.mrf.mxu0
        %v6711 = vadd.f32 %v6430, %v6710
        %v6712 = vand.u32 %v977, 4294901760
        %v6713 = vsub.f32 %v977, %v6712
        %v6714 = vand.u32 %v6713, 4294901760
        %v6715 = vsub.f32 %v6713, %v6714
        %v6716 = vand.u32 %v6715, 4294901760
        %6717 = vmatmul.f32.gmra.mxu0 %v6716
        %v6718 = vpop.f32.mrf.mxu0
        %v6719 = vadd.f32 %v6434, %v6718
        %v6720 = vand.u32 %v981, 4294901760
        %v6721 = vsub.f32 %v981, %v6720
        %v6722 = vand.u32 %v6721, 4294901760
        %v6723 = vsub.f32 %v6721, %v6722
        %v6724 = vand.u32 %v6723, 4294901760
        %6725 = vmatmul.f32.gmra.mxu0 %v6724
        %v6726 = vpop.f32.mrf.mxu0
        %v6727 = vadd.f32 %v6438, %v6726
        %v6728 = vand.u32 %v985, 4294901760
        %v6729 = vsub.f32 %v985, %v6728
        %v6730 = vand.u32 %v6729, 4294901760
        %v6731 = vsub.f32 %v6729, %v6730
        %v6732 = vand.u32 %v6731, 4294901760
        %6733 = vmatmul.f32.gmra.mxu0 %v6732
        %v6734 = vpop.f32.mrf.mxu0
        %v6735 = vadd.f32 %v6442, %v6734
        %v6736 = vand.u32 %v989, 4294901760
        %v6737 = vsub.f32 %v989, %v6736
        %v6738 = vand.u32 %v6737, 4294901760
        %v6739 = vsub.f32 %v6737, %v6738
        %v6740 = vand.u32 %v6739, 4294901760
        %6741 = vmatmul.f32.gmra.mxu0 %v6740
        %v6742 = vpop.f32.mrf.mxu0
        %v6743 = vadd.f32 %v6446, %v6742
        %v6744 = vand.u32 %v993, 4294901760
        %v6745 = vsub.f32 %v993, %v6744
        %v6746 = vand.u32 %v6745, 4294901760
        %v6747 = vsub.f32 %v6745, %v6746
        %v6748 = vand.u32 %v6747, 4294901760
        %6749 = vmatmul.f32.gmra.mxu0 %v6748
        %v6750 = vpop.f32.mrf.mxu0
        %v6751 = vadd.f32 %v6450, %v6750
        %v6752 = vand.u32 %v997, 4294901760
        %v6753 = vsub.f32 %v997, %v6752
        %v6754 = vand.u32 %v6753, 4294901760
        %v6755 = vsub.f32 %v6753, %v6754
        %v6756 = vand.u32 %v6755, 4294901760
        %6757 = vmatmul.f32.gmra.mxu0 %v6756
        %v6758 = vpop.f32.mrf.mxu0
        %v6759 = vadd.f32 %v6454, %v6758
        %v6760 = vand.u32 %v1001, 4294901760
        %v6761 = vsub.f32 %v1001, %v6760
        %v6762 = vand.u32 %v6761, 4294901760
        %v6763 = vsub.f32 %v6761, %v6762
        %v6764 = vand.u32 %v6763, 4294901760
        %6765 = vmatmul.f32.gmra.mxu0 %v6764
        %v6766 = vpop.f32.mrf.mxu0
        %v6767 = vadd.f32 %v6458, %v6766
        %v6768 = vand.u32 %v1005, 4294901760
        %v6769 = vsub.f32 %v1005, %v6768
        %v6770 = vand.u32 %v6769, 4294901760
        %v6771 = vsub.f32 %v6769, %v6770
        %v6772 = vand.u32 %v6771, 4294901760
        %6773 = vmatmul.f32.gmra.mxu0 %v6772
        %v6774 = vpop.f32.mrf.mxu0
        %v6775 = vadd.f32 %v6462, %v6774
        %v6776 = vand.u32 %v1009, 4294901760
        %v6777 = vsub.f32 %v1009, %v6776
        %v6778 = vand.u32 %v6777, 4294901760
        %v6779 = vsub.f32 %v6777, %v6778
        %v6780 = vand.u32 %v6779, 4294901760
        %6781 = vmatmul.f32.gmra.mxu0 %v6780
        %v6782 = vpop.f32.mrf.mxu0
        %v6783 = vadd.f32 %v6466, %v6782
        %v6784 = vand.u32 %v1013, 4294901760
        %v6785 = vsub.f32 %v1013, %v6784
        %v6786 = vand.u32 %v6785, 4294901760
        %v6787 = vsub.f32 %v6785, %v6786
        %v6788 = vand.u32 %v6787, 4294901760
        %6789 = vmatmul.f32.gmra.mxu0 %v6788
        %v6790 = vpop.f32.mrf.mxu0
        %v6791 = vadd.f32 %v6470, %v6790
        %v6792 = vand.u32 %v1017, 4294901760
        %v6793 = vsub.f32 %v1017, %v6792
        %v6794 = vand.u32 %v6793, 4294901760
        %v6795 = vsub.f32 %v6793, %v6794
        %v6796 = vand.u32 %v6795, 4294901760
        %6797 = vmatmul.f32.gmra.mxu0 %v6796
        %v6798 = vpop.f32.mrf.mxu0
        %v6799 = vadd.f32 %v6474, %v6798
        %v6800 = vand.u32 %v1021, 4294901760
        %v6801 = vsub.f32 %v1021, %v6800
        %v6802 = vand.u32 %v6801, 4294901760
        %v6803 = vsub.f32 %v6801, %v6802
        %v6804 = vand.u32 %v6803, 4294901760
        %6805 = vmatmul.f32.gmra.mxu0 %v6804
        %v6806 = vpop.f32.mrf.mxu0
        %v6807 = vadd.f32 %v6478, %v6806
        %v6808 = vand.u32 %v1025, 4294901760
        %v6809 = vsub.f32 %v1025, %v6808
        %v6810 = vand.u32 %v6809, 4294901760
        %v6811 = vsub.f32 %v6809, %v6810
        %v6812 = vand.u32 %v6811, 4294901760
        %6813 = vmatmul.f32.gmra.mxu0 %v6812
        %v6814 = vpop.f32.mrf.mxu0
        %v6815 = vadd.f32 %v6482, %v6814
        %v6816 = vand.u32 %v1029, 4294901760
        %v6817 = vsub.f32 %v1029, %v6816
        %v6818 = vand.u32 %v6817, 4294901760
        %v6819 = vsub.f32 %v6817, %v6818
        %v6820 = vand.u32 %v6819, 4294901760
        %6821 = vmatmul.f32.gmra.mxu0 %v6820
        %v6822 = vpop.f32.mrf.mxu0
        %v6823 = vadd.f32 %v6486, %v6822
        %v6824 = vand.u32 %v1033, 4294901760
        %v6825 = vsub.f32 %v1033, %v6824
        %v6826 = vand.u32 %v6825, 4294901760
        %v6827 = vsub.f32 %v6825, %v6826
        %v6828 = vand.u32 %v6827, 4294901760
        %6829 = vmatmul.f32.gmra.mxu0 %v6828
        %v6830 = vpop.f32.mrf.mxu0
        %v6831 = vadd.f32 %v6490, %v6830
        %v6832 = vand.u32 %v1037, 4294901760
        %v6833 = vsub.f32 %v1037, %v6832
        %v6834 = vand.u32 %v6833, 4294901760
        %v6835 = vsub.f32 %v6833, %v6834
        %v6836 = vand.u32 %v6835, 4294901760
        %6837 = vmatmul.f32.gmra.mxu0 %v6836
        %v6838 = vpop.f32.mrf.mxu0
        %v6839 = vadd.f32 %v6494, %v6838
        %v6840 = vand.u32 %v1041, 4294901760
        %v6841 = vsub.f32 %v1041, %v6840
        %v6842 = vand.u32 %v6841, 4294901760
        %v6843 = vsub.f32 %v6841, %v6842
        %v6844 = vand.u32 %v6843, 4294901760
        %6845 = vmatmul.f32.gmra.mxu0 %v6844
        %v6846 = vpop.f32.mrf.mxu0
        %v6847 = vadd.f32 %v6498, %v6846
        %v6848 = vand.u32 %v1045, 4294901760
        %v6849 = vsub.f32 %v1045, %v6848
        %v6850 = vand.u32 %v6849, 4294901760
        %v6851 = vsub.f32 %v6849, %v6850
        %v6852 = vand.u32 %v6851, 4294901760
        %6853 = vmatmul.f32.gmra.mxu0 %v6852
        %v6854 = vpop.f32.mrf.mxu0
        %v6855 = vadd.f32 %v6502, %v6854
        %v6856 = vand.u32 %v1049, 4294901760
        %v6857 = vsub.f32 %v1049, %v6856
        %v6858 = vand.u32 %v6857, 4294901760
        %v6859 = vsub.f32 %v6857, %v6858
        %v6860 = vand.u32 %v6859, 4294901760
        %6861 = vmatmul.f32.gmra.mxu0 %v6860
        %v6862 = vpop.f32.mrf.mxu0
        %v6863 = vadd.f32 %v6506, %v6862
        %v6864 = vand.u32 %v1053, 4294901760
        %v6865 = vsub.f32 %v1053, %v6864
        %v6866 = vand.u32 %v6865, 4294901760
        %v6867 = vsub.f32 %v6865, %v6866
        %v6868 = vand.u32 %v6867, 4294901760
        %6869 = vmatmul.f32.gmra.mxu0 %v6868
        %v6870 = vpop.f32.mrf.mxu0
        %v6871 = vadd.f32 %v6510, %v6870
        %v6872 = vand.u32 %v1057, 4294901760
        %v6873 = vsub.f32 %v1057, %v6872
        %v6874 = vand.u32 %v6873, 4294901760
        %v6875 = vsub.f32 %v6873, %v6874
        %v6876 = vand.u32 %v6875, 4294901760
        %6877 = vmatmul.f32.gmra.mxu0 %v6876
        %v6878 = vpop.f32.mrf.mxu0
        %v6879 = vadd.f32 %v6514, %v6878
        %v6880 = vand.u32 %v1061, 4294901760
        %v6881 = vsub.f32 %v1061, %v6880
        %v6882 = vand.u32 %v6881, 4294901760
        %v6883 = vsub.f32 %v6881, %v6882
        %v6884 = vand.u32 %v6883, 4294901760
        %6885 = vmatmul.f32.gmra.mxu0 %v6884
        %v6886 = vpop.f32.mrf.mxu0
        %v6887 = vadd.f32 %v6518, %v6886
        %v6888 = vand.u32 %v1065, 4294901760
        %v6889 = vsub.f32 %v1065, %v6888
        %v6890 = vand.u32 %v6889, 4294901760
        %v6891 = vsub.f32 %v6889, %v6890
        %v6892 = vand.u32 %v6891, 4294901760
        %6893 = vmatmul.f32.gmra.mxu0 %v6892
        %v6894 = vpop.f32.mrf.mxu0
        %v6895 = vadd.f32 %v6522, %v6894
        %v6896 = vand.u32 %v1069, 4294901760
        %v6897 = vsub.f32 %v1069, %v6896
        %v6898 = vand.u32 %v6897, 4294901760
        %v6899 = vsub.f32 %v6897, %v6898
        %v6900 = vand.u32 %v6899, 4294901760
        %6901 = vmatmul.f32.gmra.mxu0 %v6900
        %v6902 = vpop.f32.mrf.mxu0
        %v6903 = vadd.f32 %v6526, %v6902
        %v6904 = vand.u32 %v1073, 4294901760
        %v6905 = vsub.f32 %v1073, %v6904
        %v6906 = vand.u32 %v6905, 4294901760
        %v6907 = vsub.f32 %v6905, %v6906
        %v6908 = vand.u32 %v6907, 4294901760
        %6909 = vmatmul.f32.gmra.mxu0 %v6908
        %v6910 = vpop.f32.mrf.mxu0
        %v6911 = vadd.f32 %v6530, %v6910
        %v6912 = vand.u32 %v1077, 4294901760
        %v6913 = vsub.f32 %v1077, %v6912
        %v6914 = vand.u32 %v6913, 4294901760
        %v6915 = vsub.f32 %v6913, %v6914
        %v6916 = vand.u32 %v6915, 4294901760
        %6917 = vmatmul.f32.gmra.mxu0 %v6916
        %v6918 = vpop.f32.mrf.mxu0
        %v6919 = vadd.f32 %v6534, %v6918
        %v6920 = vand.u32 %v1081, 4294901760
        %v6921 = vsub.f32 %v1081, %v6920
        %v6922 = vand.u32 %v6921, 4294901760
        %v6923 = vsub.f32 %v6921, %v6922
        %v6924 = vand.u32 %v6923, 4294901760
        %6925 = vmatmul.f32.gmra.mxu0 %v6924
        %v6926 = vpop.f32.mrf.mxu0
        %v6927 = vadd.f32 %v6538, %v6926
        %v6928 = vand.u32 %v1085, 4294901760
        %v6929 = vsub.f32 %v1085, %v6928
        %v6930 = vand.u32 %v6929, 4294901760
        %v6931 = vsub.f32 %v6929, %v6930
        %v6932 = vand.u32 %v6931, 4294901760
        %6933 = vmatmul.f32.gmra.mxu0 %v6932
        %v6934 = vpop.f32.mrf.mxu0
        %v6935 = vadd.f32 %v6542, %v6934
        %v6936 = vand.u32 %v1089, 4294901760
        %v6937 = vsub.f32 %v1089, %v6936
        %v6938 = vand.u32 %v6937, 4294901760
        %v6939 = vsub.f32 %v6937, %v6938
        %v6940 = vand.u32 %v6939, 4294901760
        %6941 = vmatmul.f32.gmra.mxu0 %v6940
        %v6942 = vpop.f32.mrf.mxu0
        %v6943 = vadd.f32 %v6546, %v6942
        %v6944 = vand.u32 %v1093, 4294901760
        %v6945 = vsub.f32 %v1093, %v6944
        %v6946 = vand.u32 %v6945, 4294901760
        %v6947 = vsub.f32 %v6945, %v6946
        %v6948 = vand.u32 %v6947, 4294901760
        %6949 = vmatmul.f32.gmra.mxu0 %v6948
        %v6950 = vpop.f32.mrf.mxu0
        %v6951 = vadd.f32 %v6550, %v6950
        %v6952 = vand.u32 %v1097, 4294901760
        %v6953 = vsub.f32 %v1097, %v6952
        %v6954 = vand.u32 %v6953, 4294901760
        %v6955 = vsub.f32 %v6953, %v6954
        %v6956 = vand.u32 %v6955, 4294901760
        %6957 = vmatmul.f32.gmra.mxu0 %v6956
        %v6958 = vpop.f32.mrf.mxu0
        %v6959 = vadd.f32 %v6554, %v6958
        %v6960 = vand.u32 %v1101, 4294901760
        %v6961 = vsub.f32 %v1101, %v6960
        %v6962 = vand.u32 %v6961, 4294901760
        %v6963 = vsub.f32 %v6961, %v6962
        %v6964 = vand.u32 %v6963, 4294901760
        %6965 = vmatmul.f32.gmra.mxu0 %v6964
        %v6966 = vpop.f32.mrf.mxu0
        %v6967 = vadd.f32 %v6558, %v6966
        %v6968 = vand.u32 %v1105, 4294901760
        %v6969 = vsub.f32 %v1105, %v6968
        %v6970 = vand.u32 %v6969, 4294901760
        %v6971 = vsub.f32 %v6969, %v6970
        %v6972 = vand.u32 %v6971, 4294901760
        %6973 = vmatmul.f32.gmra.mxu0 %v6972
        %v6974 = vpop.f32.mrf.mxu0
        %v6975 = vadd.f32 %v6562, %v6974
        %v6976 = vand.u32 %v1109, 4294901760
        %v6977 = vsub.f32 %v1109, %v6976
        %v6978 = vand.u32 %v6977, 4294901760
        %v6979 = vsub.f32 %v6977, %v6978
        %v6980 = vand.u32 %v6979, 4294901760
        %6981 = vmatmul.f32.gmra.mxu0 %v6980
        %v6982 = vpop.f32.mrf.mxu0
        %v6983 = vadd.f32 %v6566, %v6982
        %6984 = vdwg.mxu0
        %v6985 = vand.u32 %v1173, 4294901760
        %v6986 = vsub.f32 %v1173, %v6985
        %v6987 = vand.u32 %v6986, 4294901760
        %v6988 = vsub.f32 %v6986, %v6987
        %v6989 = vand.u32 %v6988, 4294901760
        %6990 = vmatpush.msra.mxu0 %v6989
        %v6991 = vand.u32 %v1172, 4294901760
        %v6992 = vsub.f32 %v1172, %v6991
        %v6993 = vand.u32 %v6992, 4294901760
        %v6994 = vsub.f32 %v6992, %v6993
        %v6995 = vand.u32 %v6994, 4294901760
        %6996 = vmatpush.msra.mxu0 %v6995
        %v6997 = vand.u32 %v1171, 4294901760
        %v6998 = vsub.f32 %v1171, %v6997
        %v6999 = vand.u32 %v6998, 4294901760
        %v7000 = vsub.f32 %v6998, %v6999
        %v7001 = vand.u32 %v7000, 4294901760
        %7002 = vmatpush.msra.mxu0 %v7001
        %v7003 = vand.u32 %v1170, 4294901760
        %v7004 = vsub.f32 %v1170, %v7003
        %v7005 = vand.u32 %v7004, 4294901760
        %v7006 = vsub.f32 %v7004, %v7005
        %v7007 = vand.u32 %v7006, 4294901760
        %7008 = vmatpush.msra.mxu0 %v7007
        %v7009 = vand.u32 %v1169, 4294901760
        %v7010 = vsub.f32 %v1169, %v7009
        %v7011 = vand.u32 %v7010, 4294901760
        %v7012 = vsub.f32 %v7010, %v7011
        %v7013 = vand.u32 %v7012, 4294901760
        %7014 = vmatpush.msra.mxu0 %v7013
        %v7015 = vand.u32 %v1168, 4294901760
        %v7016 = vsub.f32 %v1168, %v7015
        %v7017 = vand.u32 %v7016, 4294901760
        %v7018 = vsub.f32 %v7016, %v7017
        %v7019 = vand.u32 %v7018, 4294901760
        %7020 = vmatpush.msra.mxu0 %v7019
        %v7021 = vand.u32 %v1167, 4294901760
        %v7022 = vsub.f32 %v1167, %v7021
        %v7023 = vand.u32 %v7022, 4294901760
        %v7024 = vsub.f32 %v7022, %v7023
        %v7025 = vand.u32 %v7024, 4294901760
        %7026 = vmatpush.msra.mxu0 %v7025
        %v7027 = vand.u32 %v1166, 4294901760
        %v7028 = vsub.f32 %v1166, %v7027
        %v7029 = vand.u32 %v7028, 4294901760
        %v7030 = vsub.f32 %v7028, %v7029
        %v7031 = vand.u32 %v7030, 4294901760
        %7032 = vmatpush.msra.mxu0 %v7031
        %v7033 = vand.u32 %v1165, 4294901760
        %v7034 = vsub.f32 %v1165, %v7033
        %v7035 = vand.u32 %v7034, 4294901760
        %v7036 = vsub.f32 %v7034, %v7035
        %v7037 = vand.u32 %v7036, 4294901760
        %7038 = vmatpush.msra.mxu0 %v7037
        %v7039 = vand.u32 %v1164, 4294901760
        %v7040 = vsub.f32 %v1164, %v7039
        %v7041 = vand.u32 %v7040, 4294901760
        %v7042 = vsub.f32 %v7040, %v7041
        %v7043 = vand.u32 %v7042, 4294901760
        %7044 = vmatpush.msra.mxu0 %v7043
        %v7045 = vand.u32 %v1163, 4294901760
        %v7046 = vsub.f32 %v1163, %v7045
        %v7047 = vand.u32 %v7046, 4294901760
        %v7048 = vsub.f32 %v7046, %v7047
        %v7049 = vand.u32 %v7048, 4294901760
        %7050 = vmatpush.msra.mxu0 %v7049
        %v7051 = vand.u32 %v1162, 4294901760
        %v7052 = vsub.f32 %v1162, %v7051
        %v7053 = vand.u32 %v7052, 4294901760
        %v7054 = vsub.f32 %v7052, %v7053
        %v7055 = vand.u32 %v7054, 4294901760
        %7056 = vmatpush.msra.mxu0 %v7055
        %v7057 = vand.u32 %v1161, 4294901760
        %v7058 = vsub.f32 %v1161, %v7057
        %v7059 = vand.u32 %v7058, 4294901760
        %v7060 = vsub.f32 %v7058, %v7059
        %v7061 = vand.u32 %v7060, 4294901760
        %7062 = vmatpush.msra.mxu0 %v7061
        %v7063 = vand.u32 %v1160, 4294901760
        %v7064 = vsub.f32 %v1160, %v7063
        %v7065 = vand.u32 %v7064, 4294901760
        %v7066 = vsub.f32 %v7064, %v7065
        %v7067 = vand.u32 %v7066, 4294901760
        %7068 = vmatpush.msra.mxu0 %v7067
        %v7069 = vand.u32 %v1159, 4294901760
        %v7070 = vsub.f32 %v1159, %v7069
        %v7071 = vand.u32 %v7070, 4294901760
        %v7072 = vsub.f32 %v7070, %v7071
        %v7073 = vand.u32 %v7072, 4294901760
        %7074 = vmatpush.msra.mxu0 %v7073
        %v7075 = vand.u32 %v1158, 4294901760
        %v7076 = vsub.f32 %v1158, %v7075
        %v7077 = vand.u32 %v7076, 4294901760
        %v7078 = vsub.f32 %v7076, %v7077
        %v7079 = vand.u32 %v7078, 4294901760
        %7080 = vmatpush.msra.mxu0 %v7079
        %v7081 = vand.u32 %v921, 4294901760
        %7082 = vmatmul.f32.gmra.mxu0 %v7081
        %v7083 = vpop.f32.mrf.mxu0
        %v7084 = vadd.f32 %v6607, %v7083
        %v7085 = vand.u32 %v925, 4294901760
        %7086 = vmatmul.f32.gmra.mxu0 %v7085
        %v7087 = vpop.f32.mrf.mxu0
        %v7088 = vadd.f32 %v6615, %v7087
        %v7089 = vand.u32 %v929, 4294901760
        %7090 = vmatmul.f32.gmra.mxu0 %v7089
        %v7091 = vpop.f32.mrf.mxu0
        %v7092 = vadd.f32 %v6623, %v7091
        %v7093 = vand.u32 %v933, 4294901760
        %7094 = vmatmul.f32.gmra.mxu0 %v7093
        %v7095 = vpop.f32.mrf.mxu0
        %v7096 = vadd.f32 %v6631, %v7095
        %v7097 = vand.u32 %v937, 4294901760
        %7098 = vmatmul.f32.gmra.mxu0 %v7097
        %v7099 = vpop.f32.mrf.mxu0
        %v7100 = vadd.f32 %v6639, %v7099
        %v7101 = vand.u32 %v941, 4294901760
        %7102 = vmatmul.f32.gmra.mxu0 %v7101
        %v7103 = vpop.f32.mrf.mxu0
        %v7104 = vadd.f32 %v6647, %v7103
        %v7105 = vand.u32 %v945, 4294901760
        %7106 = vmatmul.f32.gmra.mxu0 %v7105
        %v7107 = vpop.f32.mrf.mxu0
        %v7108 = vadd.f32 %v6655, %v7107
        %v7109 = vand.u32 %v949, 4294901760
        %7110 = vmatmul.f32.gmra.mxu0 %v7109
        %v7111 = vpop.f32.mrf.mxu0
        %v7112 = vadd.f32 %v6663, %v7111
        %v7113 = vand.u32 %v953, 4294901760
        %7114 = vmatmul.f32.gmra.mxu0 %v7113
        %v7115 = vpop.f32.mrf.mxu0
        %v7116 = vadd.f32 %v6671, %v7115
        %v7117 = vand.u32 %v957, 4294901760
        %7118 = vmatmul.f32.gmra.mxu0 %v7117
        %v7119 = vpop.f32.mrf.mxu0
        %v7120 = vadd.f32 %v6679, %v7119
        %v7121 = vand.u32 %v961, 4294901760
        %7122 = vmatmul.f32.gmra.mxu0 %v7121
        %v7123 = vpop.f32.mrf.mxu0
        %v7124 = vadd.f32 %v6687, %v7123
        %v7125 = vand.u32 %v965, 4294901760
        %7126 = vmatmul.f32.gmra.mxu0 %v7125
        %v7127 = vpop.f32.mrf.mxu0
        %v7128 = vadd.f32 %v6695, %v7127
        %v7129 = vand.u32 %v969, 4294901760
        %7130 = vmatmul.f32.gmra.mxu0 %v7129
        %v7131 = vpop.f32.mrf.mxu0
        %v7132 = vadd.f32 %v6703, %v7131
        %v7133 = vand.u32 %v973, 4294901760
        %7134 = vmatmul.f32.gmra.mxu0 %v7133
        %v7135 = vpop.f32.mrf.mxu0
        %v7136 = vadd.f32 %v6711, %v7135
        %v7137 = vand.u32 %v977, 4294901760
        %7138 = vmatmul.f32.gmra.mxu0 %v7137
        %v7139 = vpop.f32.mrf.mxu0
        %v7140 = vadd.f32 %v6719, %v7139
        %v7141 = vand.u32 %v981, 4294901760
        %7142 = vmatmul.f32.gmra.mxu0 %v7141
        %v7143 = vpop.f32.mrf.mxu0
        %v7144 = vadd.f32 %v6727, %v7143
        %v7145 = vand.u32 %v985, 4294901760
        %7146 = vmatmul.f32.gmra.mxu0 %v7145
        %v7147 = vpop.f32.mrf.mxu0
        %v7148 = vadd.f32 %v6735, %v7147
        %v7149 = vand.u32 %v989, 4294901760
        %7150 = vmatmul.f32.gmra.mxu0 %v7149
        %v7151 = vpop.f32.mrf.mxu0
        %v7152 = vadd.f32 %v6743, %v7151
        %v7153 = vand.u32 %v993, 4294901760
        %7154 = vmatmul.f32.gmra.mxu0 %v7153
        %v7155 = vpop.f32.mrf.mxu0
        %v7156 = vadd.f32 %v6751, %v7155
        %v7157 = vand.u32 %v997, 4294901760
        %7158 = vmatmul.f32.gmra.mxu0 %v7157
        %v7159 = vpop.f32.mrf.mxu0
        %v7160 = vadd.f32 %v6759, %v7159
        %v7161 = vand.u32 %v1001, 4294901760
        %7162 = vmatmul.f32.gmra.mxu0 %v7161
        %v7163 = vpop.f32.mrf.mxu0
        %v7164 = vadd.f32 %v6767, %v7163
        %v7165 = vand.u32 %v1005, 4294901760
        %7166 = vmatmul.f32.gmra.mxu0 %v7165
        %v7167 = vpop.f32.mrf.mxu0
        %v7168 = vadd.f32 %v6775, %v7167
        %v7169 = vand.u32 %v1009, 4294901760
        %7170 = vmatmul.f32.gmra.mxu0 %v7169
        %v7171 = vpop.f32.mrf.mxu0
        %v7172 = vadd.f32 %v6783, %v7171
        %v7173 = vand.u32 %v1013, 4294901760
        %7174 = vmatmul.f32.gmra.mxu0 %v7173
        %v7175 = vpop.f32.mrf.mxu0
        %v7176 = vadd.f32 %v6791, %v7175
        %v7177 = vand.u32 %v1017, 4294901760
        %7178 = vmatmul.f32.gmra.mxu0 %v7177
        %v7179 = vpop.f32.mrf.mxu0
        %v7180 = vadd.f32 %v6799, %v7179
        %v7181 = vand.u32 %v1021, 4294901760
        %7182 = vmatmul.f32.gmra.mxu0 %v7181
        %v7183 = vpop.f32.mrf.mxu0
        %v7184 = vadd.f32 %v6807, %v7183
        %v7185 = vand.u32 %v1025, 4294901760
        %7186 = vmatmul.f32.gmra.mxu0 %v7185
        %v7187 = vpop.f32.mrf.mxu0
        %v7188 = vadd.f32 %v6815, %v7187
        %v7189 = vand.u32 %v1029, 4294901760
        %7190 = vmatmul.f32.gmra.mxu0 %v7189
        %v7191 = vpop.f32.mrf.mxu0
        %v7192 = vadd.f32 %v6823, %v7191
        %v7193 = vand.u32 %v1033, 4294901760
        %7194 = vmatmul.f32.gmra.mxu0 %v7193
        %v7195 = vpop.f32.mrf.mxu0
        %v7196 = vadd.f32 %v6831, %v7195
        %v7197 = vand.u32 %v1037, 4294901760
        %7198 = vmatmul.f32.gmra.mxu0 %v7197
        %v7199 = vpop.f32.mrf.mxu0
        %v7200 = vadd.f32 %v6839, %v7199
        %v7201 = vand.u32 %v1041, 4294901760
        %7202 = vmatmul.f32.gmra.mxu0 %v7201
        %v7203 = vpop.f32.mrf.mxu0
        %v7204 = vadd.f32 %v6847, %v7203
        %v7205 = vand.u32 %v1045, 4294901760
        %7206 = vmatmul.f32.gmra.mxu0 %v7205
        %v7207 = vpop.f32.mrf.mxu0
        %v7208 = vadd.f32 %v6855, %v7207
        %v7209 = vand.u32 %v1049, 4294901760
        %7210 = vmatmul.f32.gmra.mxu0 %v7209
        %v7211 = vpop.f32.mrf.mxu0
        %v7212 = vadd.f32 %v6863, %v7211
        %v7213 = vand.u32 %v1053, 4294901760
        %7214 = vmatmul.f32.gmra.mxu0 %v7213
        %v7215 = vpop.f32.mrf.mxu0
        %v7216 = vadd.f32 %v6871, %v7215
        %v7217 = vand.u32 %v1057, 4294901760
        %7218 = vmatmul.f32.gmra.mxu0 %v7217
        %v7219 = vpop.f32.mrf.mxu0
        %v7220 = vadd.f32 %v6879, %v7219
        %v7221 = vand.u32 %v1061, 4294901760
        %7222 = vmatmul.f32.gmra.mxu0 %v7221
        %v7223 = vpop.f32.mrf.mxu0
        %v7224 = vadd.f32 %v6887, %v7223
        %v7225 = vand.u32 %v1065, 4294901760
        %7226 = vmatmul.f32.gmra.mxu0 %v7225
        %v7227 = vpop.f32.mrf.mxu0
        %v7228 = vadd.f32 %v6895, %v7227
        %v7229 = vand.u32 %v1069, 4294901760
        %7230 = vmatmul.f32.gmra.mxu0 %v7229
        %v7231 = vpop.f32.mrf.mxu0
        %v7232 = vadd.f32 %v6903, %v7231
        %v7233 = vand.u32 %v1073, 4294901760
        %7234 = vmatmul.f32.gmra.mxu0 %v7233
        %v7235 = vpop.f32.mrf.mxu0
        %v7236 = vadd.f32 %v6911, %v7235
        %v7237 = vand.u32 %v1077, 4294901760
        %7238 = vmatmul.f32.gmra.mxu0 %v7237
        %v7239 = vpop.f32.mrf.mxu0
        %v7240 = vadd.f32 %v6919, %v7239
        %v7241 = vand.u32 %v1081, 4294901760
        %7242 = vmatmul.f32.gmra.mxu0 %v7241
        %v7243 = vpop.f32.mrf.mxu0
        %v7244 = vadd.f32 %v6927, %v7243
        %v7245 = vand.u32 %v1085, 4294901760
        %7246 = vmatmul.f32.gmra.mxu0 %v7245
        %v7247 = vpop.f32.mrf.mxu0
        %v7248 = vadd.f32 %v6935, %v7247
        %v7249 = vand.u32 %v1089, 4294901760
        %7250 = vmatmul.f32.gmra.mxu0 %v7249
        %v7251 = vpop.f32.mrf.mxu0
        %v7252 = vadd.f32 %v6943, %v7251
        %v7253 = vand.u32 %v1093, 4294901760
        %7254 = vmatmul.f32.gmra.mxu0 %v7253
        %v7255 = vpop.f32.mrf.mxu0
        %v7256 = vadd.f32 %v6951, %v7255
        %v7257 = vand.u32 %v1097, 4294901760
        %7258 = vmatmul.f32.gmra.mxu0 %v7257
        %v7259 = vpop.f32.mrf.mxu0
        %v7260 = vadd.f32 %v6959, %v7259
        %v7261 = vand.u32 %v1101, 4294901760
        %7262 = vmatmul.f32.gmra.mxu0 %v7261
        %v7263 = vpop.f32.mrf.mxu0
        %v7264 = vadd.f32 %v6967, %v7263
        %v7265 = vand.u32 %v1105, 4294901760
        %7266 = vmatmul.f32.gmra.mxu0 %v7265
        %v7267 = vpop.f32.mrf.mxu0
        %v7268 = vadd.f32 %v6975, %v7267
        %v7269 = vand.u32 %v1109, 4294901760
        %7270 = vmatmul.f32.gmra.mxu0 %v7269
        %v7271 = vpop.f32.mrf.mxu0
        %v7272 = vadd.f32 %v6983, %v7271
        %7273 = vdwg.mxu0
        %v7274 = vand.u32 %v1173, 4294901760
        %v7275 = vsub.f32 %v1173, %v7274
        %7276 = vmatpush.msra.mxu0 %v7275
        %v7277 = vand.u32 %v1172, 4294901760
        %v7278 = vsub.f32 %v1172, %v7277
        %7279 = vmatpush.msra.mxu0 %v7278
        %v7280 = vand.u32 %v1171, 4294901760
        %v7281 = vsub.f32 %v1171, %v7280
        %7282 = vmatpush.msra.mxu0 %v7281
        %v7283 = vand.u32 %v1170, 4294901760
        %v7284 = vsub.f32 %v1170, %v7283
        %7285 = vmatpush.msra.mxu0 %v7284
        %v7286 = vand.u32 %v1169, 4294901760
        %v7287 = vsub.f32 %v1169, %v7286
        %7288 = vmatpush.msra.mxu0 %v7287
        %v7289 = vand.u32 %v1168, 4294901760
        %v7290 = vsub.f32 %v1168, %v7289
        %7291 = vmatpush.msra.mxu0 %v7290
        %v7292 = vand.u32 %v1167, 4294901760
        %v7293 = vsub.f32 %v1167, %v7292
        %7294 = vmatpush.msra.mxu0 %v7293
        %v7295 = vand.u32 %v1166, 4294901760
        %v7296 = vsub.f32 %v1166, %v7295
        %7297 = vmatpush.msra.mxu0 %v7296
        %v7298 = vand.u32 %v1165, 4294901760
        %v7299 = vsub.f32 %v1165, %v7298
        %7300 = vmatpush.msra.mxu0 %v7299
        %v7301 = vand.u32 %v1164, 4294901760
        %v7302 = vsub.f32 %v1164, %v7301
        %7303 = vmatpush.msra.mxu0 %v7302
        %v7304 = vand.u32 %v1163, 4294901760
        %v7305 = vsub.f32 %v1163, %v7304
        %7306 = vmatpush.msra.mxu0 %v7305
        %v7307 = vand.u32 %v1162, 4294901760
        %v7308 = vsub.f32 %v1162, %v7307
        %7309 = vmatpush.msra.mxu0 %v7308
        %v7310 = vand.u32 %v1161, 4294901760
        %v7311 = vsub.f32 %v1161, %v7310
        %7312 = vmatpush.msra.mxu0 %v7311
        %v7313 = vand.u32 %v1160, 4294901760
        %v7314 = vsub.f32 %v1160, %v7313
        %7315 = vmatpush.msra.mxu0 %v7314
        %v7316 = vand.u32 %v1159, 4294901760
        %v7317 = vsub.f32 %v1159, %v7316
        %7318 = vmatpush.msra.mxu0 %v7317
        %v7319 = vand.u32 %v1158, 4294901760
        %v7320 = vsub.f32 %v1158, %v7319
        %7321 = vmatpush.msra.mxu0 %v7320
        %v7322 = vand.u32 %v921, 4294901760
        %v7323 = vsub.f32 %v921, %v7322
        %7324 = vmatmul.f32.gmra.mxu0 %v7323
        %v7325 = vpop.f32.mrf.mxu0
        %v7326 = vadd.f32 %v7084, %v7325
        %v7327 = vand.u32 %v925, 4294901760
        %v7328 = vsub.f32 %v925, %v7327
        %7329 = vmatmul.f32.gmra.mxu0 %v7328
        %v7330 = vpop.f32.mrf.mxu0
        %v7331 = vadd.f32 %v7088, %v7330
        %v7332 = vand.u32 %v929, 4294901760
        %v7333 = vsub.f32 %v929, %v7332
        %7334 = vmatmul.f32.gmra.mxu0 %v7333
        %v7335 = vpop.f32.mrf.mxu0
        %v7336 = vadd.f32 %v7092, %v7335
        %v7337 = vand.u32 %v933, 4294901760
        %v7338 = vsub.f32 %v933, %v7337
        %7339 = vmatmul.f32.gmra.mxu0 %v7338
        %v7340 = vpop.f32.mrf.mxu0
        %v7341 = vadd.f32 %v7096, %v7340
        %v7342 = vand.u32 %v937, 4294901760
        %v7343 = vsub.f32 %v937, %v7342
        %7344 = vmatmul.f32.gmra.mxu0 %v7343
        %v7345 = vpop.f32.mrf.mxu0
        %v7346 = vadd.f32 %v7100, %v7345
        %v7347 = vand.u32 %v941, 4294901760
        %v7348 = vsub.f32 %v941, %v7347
        %7349 = vmatmul.f32.gmra.mxu0 %v7348
        %v7350 = vpop.f32.mrf.mxu0
        %v7351 = vadd.f32 %v7104, %v7350
        %v7352 = vand.u32 %v945, 4294901760
        %v7353 = vsub.f32 %v945, %v7352
        %7354 = vmatmul.f32.gmra.mxu0 %v7353
        %v7355 = vpop.f32.mrf.mxu0
        %v7356 = vadd.f32 %v7108, %v7355
        %v7357 = vand.u32 %v949, 4294901760
        %v7358 = vsub.f32 %v949, %v7357
        %7359 = vmatmul.f32.gmra.mxu0 %v7358
        %v7360 = vpop.f32.mrf.mxu0
        %v7361 = vadd.f32 %v7112, %v7360
        %v7362 = vand.u32 %v953, 4294901760
        %v7363 = vsub.f32 %v953, %v7362
        %7364 = vmatmul.f32.gmra.mxu0 %v7363
        %v7365 = vpop.f32.mrf.mxu0
        %v7366 = vadd.f32 %v7116, %v7365
        %v7367 = vand.u32 %v957, 4294901760
        %v7368 = vsub.f32 %v957, %v7367
        %7369 = vmatmul.f32.gmra.mxu0 %v7368
        %v7370 = vpop.f32.mrf.mxu0
        %v7371 = vadd.f32 %v7120, %v7370
        %v7372 = vand.u32 %v961, 4294901760
        %v7373 = vsub.f32 %v961, %v7372
        %7374 = vmatmul.f32.gmra.mxu0 %v7373
        %v7375 = vpop.f32.mrf.mxu0
        %v7376 = vadd.f32 %v7124, %v7375
        %v7377 = vand.u32 %v965, 4294901760
        %v7378 = vsub.f32 %v965, %v7377
        %7379 = vmatmul.f32.gmra.mxu0 %v7378
        %v7380 = vpop.f32.mrf.mxu0
        %v7381 = vadd.f32 %v7128, %v7380
        %v7382 = vand.u32 %v969, 4294901760
        %v7383 = vsub.f32 %v969, %v7382
        %7384 = vmatmul.f32.gmra.mxu0 %v7383
        %v7385 = vpop.f32.mrf.mxu0
        %v7386 = vadd.f32 %v7132, %v7385
        %v7387 = vand.u32 %v973, 4294901760
        %v7388 = vsub.f32 %v973, %v7387
        %7389 = vmatmul.f32.gmra.mxu0 %v7388
        %v7390 = vpop.f32.mrf.mxu0
        %v7391 = vadd.f32 %v7136, %v7390
        %v7392 = vand.u32 %v977, 4294901760
        %v7393 = vsub.f32 %v977, %v7392
        %7394 = vmatmul.f32.gmra.mxu0 %v7393
        %v7395 = vpop.f32.mrf.mxu0
        %v7396 = vadd.f32 %v7140, %v7395
        %v7397 = vand.u32 %v981, 4294901760
        %v7398 = vsub.f32 %v981, %v7397
        %7399 = vmatmul.f32.gmra.mxu0 %v7398
        %v7400 = vpop.f32.mrf.mxu0
        %v7401 = vadd.f32 %v7144, %v7400
        %v7402 = vand.u32 %v985, 4294901760
        %v7403 = vsub.f32 %v985, %v7402
        %7404 = vmatmul.f32.gmra.mxu0 %v7403
        %v7405 = vpop.f32.mrf.mxu0
        %v7406 = vadd.f32 %v7148, %v7405
        %v7407 = vand.u32 %v989, 4294901760
        %v7408 = vsub.f32 %v989, %v7407
        %7409 = vmatmul.f32.gmra.mxu0 %v7408
        %v7410 = vpop.f32.mrf.mxu0
        %v7411 = vadd.f32 %v7152, %v7410
        %v7412 = vand.u32 %v993, 4294901760
        %v7413 = vsub.f32 %v993, %v7412
        %7414 = vmatmul.f32.gmra.mxu0 %v7413
        %v7415 = vpop.f32.mrf.mxu0
        %v7416 = vadd.f32 %v7156, %v7415
        %v7417 = vand.u32 %v997, 4294901760
        %v7418 = vsub.f32 %v997, %v7417
        %7419 = vmatmul.f32.gmra.mxu0 %v7418
        %v7420 = vpop.f32.mrf.mxu0
        %v7421 = vadd.f32 %v7160, %v7420
        %v7422 = vand.u32 %v1001, 4294901760
        %v7423 = vsub.f32 %v1001, %v7422
        %7424 = vmatmul.f32.gmra.mxu0 %v7423
        %v7425 = vpop.f32.mrf.mxu0
        %v7426 = vadd.f32 %v7164, %v7425
        %v7427 = vand.u32 %v1005, 4294901760
        %v7428 = vsub.f32 %v1005, %v7427
        %7429 = vmatmul.f32.gmra.mxu0 %v7428
        %v7430 = vpop.f32.mrf.mxu0
        %v7431 = vadd.f32 %v7168, %v7430
        %v7432 = vand.u32 %v1009, 4294901760
        %v7433 = vsub.f32 %v1009, %v7432
        %7434 = vmatmul.f32.gmra.mxu0 %v7433
        %v7435 = vpop.f32.mrf.mxu0
        %v7436 = vadd.f32 %v7172, %v7435
        %v7437 = vand.u32 %v1013, 4294901760
        %v7438 = vsub.f32 %v1013, %v7437
        %7439 = vmatmul.f32.gmra.mxu0 %v7438
        %v7440 = vpop.f32.mrf.mxu0
        %v7441 = vadd.f32 %v7176, %v7440
        %v7442 = vand.u32 %v1017, 4294901760
        %v7443 = vsub.f32 %v1017, %v7442
        %7444 = vmatmul.f32.gmra.mxu0 %v7443
        %v7445 = vpop.f32.mrf.mxu0
        %v7446 = vadd.f32 %v7180, %v7445
        %v7447 = vand.u32 %v1021, 4294901760
        %v7448 = vsub.f32 %v1021, %v7447
        %7449 = vmatmul.f32.gmra.mxu0 %v7448
        %v7450 = vpop.f32.mrf.mxu0
        %v7451 = vadd.f32 %v7184, %v7450
        %v7452 = vand.u32 %v1025, 4294901760
        %v7453 = vsub.f32 %v1025, %v7452
        %7454 = vmatmul.f32.gmra.mxu0 %v7453
        %v7455 = vpop.f32.mrf.mxu0
        %v7456 = vadd.f32 %v7188, %v7455
        %v7457 = vand.u32 %v1029, 4294901760
        %v7458 = vsub.f32 %v1029, %v7457
        %7459 = vmatmul.f32.gmra.mxu0 %v7458
        %v7460 = vpop.f32.mrf.mxu0
        %v7461 = vadd.f32 %v7192, %v7460
        %v7462 = vand.u32 %v1033, 4294901760
        %v7463 = vsub.f32 %v1033, %v7462
        %7464 = vmatmul.f32.gmra.mxu0 %v7463
        %v7465 = vpop.f32.mrf.mxu0
        %v7466 = vadd.f32 %v7196, %v7465
        %v7467 = vand.u32 %v1037, 4294901760
        %v7468 = vsub.f32 %v1037, %v7467
        %7469 = vmatmul.f32.gmra.mxu0 %v7468
        %v7470 = vpop.f32.mrf.mxu0
        %v7471 = vadd.f32 %v7200, %v7470
        %v7472 = vand.u32 %v1041, 4294901760
        %v7473 = vsub.f32 %v1041, %v7472
        %7474 = vmatmul.f32.gmra.mxu0 %v7473
        %v7475 = vpop.f32.mrf.mxu0
        %v7476 = vadd.f32 %v7204, %v7475
        %v7477 = vand.u32 %v1045, 4294901760
        %v7478 = vsub.f32 %v1045, %v7477
        %7479 = vmatmul.f32.gmra.mxu0 %v7478
        %v7480 = vpop.f32.mrf.mxu0
        %v7481 = vadd.f32 %v7208, %v7480
        %v7482 = vand.u32 %v1049, 4294901760
        %v7483 = vsub.f32 %v1049, %v7482
        %7484 = vmatmul.f32.gmra.mxu0 %v7483
        %v7485 = vpop.f32.mrf.mxu0
        %v7486 = vadd.f32 %v7212, %v7485
        %v7487 = vand.u32 %v1053, 4294901760
        %v7488 = vsub.f32 %v1053, %v7487
        %7489 = vmatmul.f32.gmra.mxu0 %v7488
        %v7490 = vpop.f32.mrf.mxu0
        %v7491 = vadd.f32 %v7216, %v7490
        %v7492 = vand.u32 %v1057, 4294901760
        %v7493 = vsub.f32 %v1057, %v7492
        %7494 = vmatmul.f32.gmra.mxu0 %v7493
        %v7495 = vpop.f32.mrf.mxu0
        %v7496 = vadd.f32 %v7220, %v7495
        %v7497 = vand.u32 %v1061, 4294901760
        %v7498 = vsub.f32 %v1061, %v7497
        %7499 = vmatmul.f32.gmra.mxu0 %v7498
        %v7500 = vpop.f32.mrf.mxu0
        %v7501 = vadd.f32 %v7224, %v7500
        %v7502 = vand.u32 %v1065, 4294901760
        %v7503 = vsub.f32 %v1065, %v7502
        %7504 = vmatmul.f32.gmra.mxu0 %v7503
        %v7505 = vpop.f32.mrf.mxu0
        %v7506 = vadd.f32 %v7228, %v7505
        %v7507 = vand.u32 %v1069, 4294901760
        %v7508 = vsub.f32 %v1069, %v7507
        %7509 = vmatmul.f32.gmra.mxu0 %v7508
        %v7510 = vpop.f32.mrf.mxu0
        %v7511 = vadd.f32 %v7232, %v7510
        %v7512 = vand.u32 %v1073, 4294901760
        %v7513 = vsub.f32 %v1073, %v7512
        %7514 = vmatmul.f32.gmra.mxu0 %v7513
        %v7515 = vpop.f32.mrf.mxu0
        %v7516 = vadd.f32 %v7236, %v7515
        %v7517 = vand.u32 %v1077, 4294901760
        %v7518 = vsub.f32 %v1077, %v7517
        %7519 = vmatmul.f32.gmra.mxu0 %v7518
        %v7520 = vpop.f32.mrf.mxu0
        %v7521 = vadd.f32 %v7240, %v7520
        %v7522 = vand.u32 %v1081, 4294901760
        %v7523 = vsub.f32 %v1081, %v7522
        %7524 = vmatmul.f32.gmra.mxu0 %v7523
        %v7525 = vpop.f32.mrf.mxu0
        %v7526 = vadd.f32 %v7244, %v7525
        %v7527 = vand.u32 %v1085, 4294901760
        %v7528 = vsub.f32 %v1085, %v7527
        %7529 = vmatmul.f32.gmra.mxu0 %v7528
        %v7530 = vpop.f32.mrf.mxu0
        %v7531 = vadd.f32 %v7248, %v7530
        %v7532 = vand.u32 %v1089, 4294901760
        %v7533 = vsub.f32 %v1089, %v7532
        %7534 = vmatmul.f32.gmra.mxu0 %v7533
        %v7535 = vpop.f32.mrf.mxu0
        %v7536 = vadd.f32 %v7252, %v7535
        %v7537 = vand.u32 %v1093, 4294901760
        %v7538 = vsub.f32 %v1093, %v7537
        %7539 = vmatmul.f32.gmra.mxu0 %v7538
        %v7540 = vpop.f32.mrf.mxu0
        %v7541 = vadd.f32 %v7256, %v7540
        %v7542 = vand.u32 %v1097, 4294901760
        %v7543 = vsub.f32 %v1097, %v7542
        %7544 = vmatmul.f32.gmra.mxu0 %v7543
        %v7545 = vpop.f32.mrf.mxu0
        %v7546 = vadd.f32 %v7260, %v7545
        %v7547 = vand.u32 %v1101, 4294901760
        %v7548 = vsub.f32 %v1101, %v7547
        %7549 = vmatmul.f32.gmra.mxu0 %v7548
        %v7550 = vpop.f32.mrf.mxu0
        %v7551 = vadd.f32 %v7264, %v7550
        %v7552 = vand.u32 %v1105, 4294901760
        %v7553 = vsub.f32 %v1105, %v7552
        %7554 = vmatmul.f32.gmra.mxu0 %v7553
        %v7555 = vpop.f32.mrf.mxu0
        %v7556 = vadd.f32 %v7268, %v7555
        %v7557 = vand.u32 %v1109, 4294901760
        %v7558 = vsub.f32 %v1109, %v7557
        %7559 = vmatmul.f32.gmra.mxu0 %v7558
        %v7560 = vpop.f32.mrf.mxu0
        %v7561 = vadd.f32 %v7272, %v7560
        %7562 = vdwg.mxu0
        %v7563 = vand.u32 %v1173, 4294901760
        %7564 = vmatpush.msra.mxu0 %v7563
        %v7565 = vand.u32 %v1172, 4294901760
        %7566 = vmatpush.msra.mxu0 %v7565
        %v7567 = vand.u32 %v1171, 4294901760
        %7568 = vmatpush.msra.mxu0 %v7567
        %v7569 = vand.u32 %v1170, 4294901760
        %7570 = vmatpush.msra.mxu0 %v7569
        %v7571 = vand.u32 %v1169, 4294901760
        %7572 = vmatpush.msra.mxu0 %v7571
        %v7573 = vand.u32 %v1168, 4294901760
        %7574 = vmatpush.msra.mxu0 %v7573
        %v7575 = vand.u32 %v1167, 4294901760
        %7576 = vmatpush.msra.mxu0 %v7575
        %v7577 = vand.u32 %v1166, 4294901760
        %7578 = vmatpush.msra.mxu0 %v7577
        %v7579 = vand.u32 %v1165, 4294901760
        %7580 = vmatpush.msra.mxu0 %v7579
        %v7581 = vand.u32 %v1164, 4294901760
        %7582 = vmatpush.msra.mxu0 %v7581
        %v7583 = vand.u32 %v1163, 4294901760
        %7584 = vmatpush.msra.mxu0 %v7583
        %v7585 = vand.u32 %v1162, 4294901760
        %7586 = vmatpush.msra.mxu0 %v7585
        %v7587 = vand.u32 %v1161, 4294901760
        %7588 = vmatpush.msra.mxu0 %v7587
        %v7589 = vand.u32 %v1160, 4294901760
        %7590 = vmatpush.msra.mxu0 %v7589
        %v7591 = vand.u32 %v1159, 4294901760
        %7592 = vmatpush.msra.mxu0 %v7591
        %v7593 = vand.u32 %v1158, 4294901760
        %7594 = vmatpush.msra.mxu0 %v7593
        %v7595 = vand.u32 %v921, 4294901760
        %v7596 = vsub.f32 %v921, %v7595
        %v7597 = vand.u32 %v7596, 4294901760
        %7598 = vmatmul.f32.gmra.mxu0 %v7597
        %v7599 = vpop.f32.mrf.mxu0
        %v7600 = vadd.f32 %v7326, %v7599
        %v7601 = vand.u32 %v925, 4294901760
        %v7602 = vsub.f32 %v925, %v7601
        %v7603 = vand.u32 %v7602, 4294901760
        %7604 = vmatmul.f32.gmra.mxu0 %v7603
        %v7605 = vpop.f32.mrf.mxu0
        %v7606 = vadd.f32 %v7331, %v7605
        %v7607 = vand.u32 %v929, 4294901760
        %v7608 = vsub.f32 %v929, %v7607
        %v7609 = vand.u32 %v7608, 4294901760
        %7610 = vmatmul.f32.gmra.mxu0 %v7609
        %v7611 = vpop.f32.mrf.mxu0
        %v7612 = vadd.f32 %v7336, %v7611
        %v7613 = vand.u32 %v933, 4294901760
        %v7614 = vsub.f32 %v933, %v7613
        %v7615 = vand.u32 %v7614, 4294901760
        %7616 = vmatmul.f32.gmra.mxu0 %v7615
        %v7617 = vpop.f32.mrf.mxu0
        %v7618 = vadd.f32 %v7341, %v7617
        %v7619 = vand.u32 %v937, 4294901760
        %v7620 = vsub.f32 %v937, %v7619
        %v7621 = vand.u32 %v7620, 4294901760
        %7622 = vmatmul.f32.gmra.mxu0 %v7621
        %v7623 = vpop.f32.mrf.mxu0
        %v7624 = vadd.f32 %v7346, %v7623
        %v7625 = vand.u32 %v941, 4294901760
        %v7626 = vsub.f32 %v941, %v7625
        %v7627 = vand.u32 %v7626, 4294901760
        %7628 = vmatmul.f32.gmra.mxu0 %v7627
        %v7629 = vpop.f32.mrf.mxu0
        %v7630 = vadd.f32 %v7351, %v7629
        %v7631 = vand.u32 %v945, 4294901760
        %v7632 = vsub.f32 %v945, %v7631
        %v7633 = vand.u32 %v7632, 4294901760
        %7634 = vmatmul.f32.gmra.mxu0 %v7633
        %v7635 = vpop.f32.mrf.mxu0
        %v7636 = vadd.f32 %v7356, %v7635
        %v7637 = vand.u32 %v949, 4294901760
        %v7638 = vsub.f32 %v949, %v7637
        %v7639 = vand.u32 %v7638, 4294901760
        %7640 = vmatmul.f32.gmra.mxu0 %v7639
        %v7641 = vpop.f32.mrf.mxu0
        %v7642 = vadd.f32 %v7361, %v7641
        %v7643 = vand.u32 %v953, 4294901760
        %v7644 = vsub.f32 %v953, %v7643
        %v7645 = vand.u32 %v7644, 4294901760
        %7646 = vmatmul.f32.gmra.mxu0 %v7645
        %v7647 = vpop.f32.mrf.mxu0
        %v7648 = vadd.f32 %v7366, %v7647
        %v7649 = vand.u32 %v957, 4294901760
        %v7650 = vsub.f32 %v957, %v7649
        %v7651 = vand.u32 %v7650, 4294901760
        %7652 = vmatmul.f32.gmra.mxu0 %v7651
        %v7653 = vpop.f32.mrf.mxu0
        %v7654 = vadd.f32 %v7371, %v7653
        %v7655 = vand.u32 %v961, 4294901760
        %v7656 = vsub.f32 %v961, %v7655
        %v7657 = vand.u32 %v7656, 4294901760
        %7658 = vmatmul.f32.gmra.mxu0 %v7657
        %v7659 = vpop.f32.mrf.mxu0
        %v7660 = vadd.f32 %v7376, %v7659
        %v7661 = vand.u32 %v965, 4294901760
        %v7662 = vsub.f32 %v965, %v7661
        %v7663 = vand.u32 %v7662, 4294901760
        %7664 = vmatmul.f32.gmra.mxu0 %v7663
        %v7665 = vpop.f32.mrf.mxu0
        %v7666 = vadd.f32 %v7381, %v7665
        %v7667 = vand.u32 %v969, 4294901760
        %v7668 = vsub.f32 %v969, %v7667
        %v7669 = vand.u32 %v7668, 4294901760
        %7670 = vmatmul.f32.gmra.mxu0 %v7669
        %v7671 = vpop.f32.mrf.mxu0
        %v7672 = vadd.f32 %v7386, %v7671
        %v7673 = vand.u32 %v973, 4294901760
        %v7674 = vsub.f32 %v973, %v7673
        %v7675 = vand.u32 %v7674, 4294901760
        %7676 = vmatmul.f32.gmra.mxu0 %v7675
        %v7677 = vpop.f32.mrf.mxu0
        %v7678 = vadd.f32 %v7391, %v7677
        %v7679 = vand.u32 %v977, 4294901760
        %v7680 = vsub.f32 %v977, %v7679
        %v7681 = vand.u32 %v7680, 4294901760
        %7682 = vmatmul.f32.gmra.mxu0 %v7681
        %v7683 = vpop.f32.mrf.mxu0
        %v7684 = vadd.f32 %v7396, %v7683
        %v7685 = vand.u32 %v981, 4294901760
        %v7686 = vsub.f32 %v981, %v7685
        %v7687 = vand.u32 %v7686, 4294901760
        %7688 = vmatmul.f32.gmra.mxu0 %v7687
        %v7689 = vpop.f32.mrf.mxu0
        %v7690 = vadd.f32 %v7401, %v7689
        %v7691 = vand.u32 %v985, 4294901760
        %v7692 = vsub.f32 %v985, %v7691
        %v7693 = vand.u32 %v7692, 4294901760
        %7694 = vmatmul.f32.gmra.mxu0 %v7693
        %v7695 = vpop.f32.mrf.mxu0
        %v7696 = vadd.f32 %v7406, %v7695
        %v7697 = vand.u32 %v989, 4294901760
        %v7698 = vsub.f32 %v989, %v7697
        %v7699 = vand.u32 %v7698, 4294901760
        %7700 = vmatmul.f32.gmra.mxu0 %v7699
        %v7701 = vpop.f32.mrf.mxu0
        %v7702 = vadd.f32 %v7411, %v7701
        %v7703 = vand.u32 %v993, 4294901760
        %v7704 = vsub.f32 %v993, %v7703
        %v7705 = vand.u32 %v7704, 4294901760
        %7706 = vmatmul.f32.gmra.mxu0 %v7705
        %v7707 = vpop.f32.mrf.mxu0
        %v7708 = vadd.f32 %v7416, %v7707
        %v7709 = vand.u32 %v997, 4294901760
        %v7710 = vsub.f32 %v997, %v7709
        %v7711 = vand.u32 %v7710, 4294901760
        %7712 = vmatmul.f32.gmra.mxu0 %v7711
        %v7713 = vpop.f32.mrf.mxu0
        %v7714 = vadd.f32 %v7421, %v7713
        %v7715 = vand.u32 %v1001, 4294901760
        %v7716 = vsub.f32 %v1001, %v7715
        %v7717 = vand.u32 %v7716, 4294901760
        %7718 = vmatmul.f32.gmra.mxu0 %v7717
        %v7719 = vpop.f32.mrf.mxu0
        %v7720 = vadd.f32 %v7426, %v7719
        %v7721 = vand.u32 %v1005, 4294901760
        %v7722 = vsub.f32 %v1005, %v7721
        %v7723 = vand.u32 %v7722, 4294901760
        %7724 = vmatmul.f32.gmra.mxu0 %v7723
        %v7725 = vpop.f32.mrf.mxu0
        %v7726 = vadd.f32 %v7431, %v7725
        %v7727 = vand.u32 %v1009, 4294901760
        %v7728 = vsub.f32 %v1009, %v7727
        %v7729 = vand.u32 %v7728, 4294901760
        %7730 = vmatmul.f32.gmra.mxu0 %v7729
        %v7731 = vpop.f32.mrf.mxu0
        %v7732 = vadd.f32 %v7436, %v7731
        %v7733 = vand.u32 %v1013, 4294901760
        %v7734 = vsub.f32 %v1013, %v7733
        %v7735 = vand.u32 %v7734, 4294901760
        %7736 = vmatmul.f32.gmra.mxu0 %v7735
        %v7737 = vpop.f32.mrf.mxu0
        %v7738 = vadd.f32 %v7441, %v7737
        %v7739 = vand.u32 %v1017, 4294901760
        %v7740 = vsub.f32 %v1017, %v7739
        %v7741 = vand.u32 %v7740, 4294901760
        %7742 = vmatmul.f32.gmra.mxu0 %v7741
        %v7743 = vpop.f32.mrf.mxu0
        %v7744 = vadd.f32 %v7446, %v7743
        %v7745 = vand.u32 %v1021, 4294901760
        %v7746 = vsub.f32 %v1021, %v7745
        %v7747 = vand.u32 %v7746, 4294901760
        %7748 = vmatmul.f32.gmra.mxu0 %v7747
        %v7749 = vpop.f32.mrf.mxu0
        %v7750 = vadd.f32 %v7451, %v7749
        %v7751 = vand.u32 %v1025, 4294901760
        %v7752 = vsub.f32 %v1025, %v7751
        %v7753 = vand.u32 %v7752, 4294901760
        %7754 = vmatmul.f32.gmra.mxu0 %v7753
        %v7755 = vpop.f32.mrf.mxu0
        %v7756 = vadd.f32 %v7456, %v7755
        %v7757 = vand.u32 %v1029, 4294901760
        %v7758 = vsub.f32 %v1029, %v7757
        %v7759 = vand.u32 %v7758, 4294901760
        %7760 = vmatmul.f32.gmra.mxu0 %v7759
        %v7761 = vpop.f32.mrf.mxu0
        %v7762 = vadd.f32 %v7461, %v7761
        %v7763 = vand.u32 %v1033, 4294901760
        %v7764 = vsub.f32 %v1033, %v7763
        %v7765 = vand.u32 %v7764, 4294901760
        %7766 = vmatmul.f32.gmra.mxu0 %v7765
        %v7767 = vpop.f32.mrf.mxu0
        %v7768 = vadd.f32 %v7466, %v7767
        %v7769 = vand.u32 %v1037, 4294901760
        %v7770 = vsub.f32 %v1037, %v7769
        %v7771 = vand.u32 %v7770, 4294901760
        %7772 = vmatmul.f32.gmra.mxu0 %v7771
        %v7773 = vpop.f32.mrf.mxu0
        %v7774 = vadd.f32 %v7471, %v7773
        %v7775 = vand.u32 %v1041, 4294901760
        %v7776 = vsub.f32 %v1041, %v7775
        %v7777 = vand.u32 %v7776, 4294901760
        %7778 = vmatmul.f32.gmra.mxu0 %v7777
        %v7779 = vpop.f32.mrf.mxu0
        %v7780 = vadd.f32 %v7476, %v7779
        %v7781 = vand.u32 %v1045, 4294901760
        %v7782 = vsub.f32 %v1045, %v7781
        %v7783 = vand.u32 %v7782, 4294901760
        %7784 = vmatmul.f32.gmra.mxu0 %v7783
        %v7785 = vpop.f32.mrf.mxu0
        %v7786 = vadd.f32 %v7481, %v7785
        %v7787 = vand.u32 %v1049, 4294901760
        %v7788 = vsub.f32 %v1049, %v7787
        %v7789 = vand.u32 %v7788, 4294901760
        %7790 = vmatmul.f32.gmra.mxu0 %v7789
        %v7791 = vpop.f32.mrf.mxu0
        %v7792 = vadd.f32 %v7486, %v7791
        %v7793 = vand.u32 %v1053, 4294901760
        %v7794 = vsub.f32 %v1053, %v7793
        %v7795 = vand.u32 %v7794, 4294901760
        %7796 = vmatmul.f32.gmra.mxu0 %v7795
        %v7797 = vpop.f32.mrf.mxu0
        %v7798 = vadd.f32 %v7491, %v7797
        %v7799 = vand.u32 %v1057, 4294901760
        %v7800 = vsub.f32 %v1057, %v7799
        %v7801 = vand.u32 %v7800, 4294901760
        %7802 = vmatmul.f32.gmra.mxu0 %v7801
        %v7803 = vpop.f32.mrf.mxu0
        %v7804 = vadd.f32 %v7496, %v7803
        %v7805 = vand.u32 %v1061, 4294901760
        %v7806 = vsub.f32 %v1061, %v7805
        %v7807 = vand.u32 %v7806, 4294901760
        %7808 = vmatmul.f32.gmra.mxu0 %v7807
        %v7809 = vpop.f32.mrf.mxu0
        %v7810 = vadd.f32 %v7501, %v7809
        %v7811 = vand.u32 %v1065, 4294901760
        %v7812 = vsub.f32 %v1065, %v7811
        %v7813 = vand.u32 %v7812, 4294901760
        %7814 = vmatmul.f32.gmra.mxu0 %v7813
        %v7815 = vpop.f32.mrf.mxu0
        %v7816 = vadd.f32 %v7506, %v7815
        %v7817 = vand.u32 %v1069, 4294901760
        %v7818 = vsub.f32 %v1069, %v7817
        %v7819 = vand.u32 %v7818, 4294901760
        %7820 = vmatmul.f32.gmra.mxu0 %v7819
        %v7821 = vpop.f32.mrf.mxu0
        %v7822 = vadd.f32 %v7511, %v7821
        %v7823 = vand.u32 %v1073, 4294901760
        %v7824 = vsub.f32 %v1073, %v7823
        %v7825 = vand.u32 %v7824, 4294901760
        %7826 = vmatmul.f32.gmra.mxu0 %v7825
        %v7827 = vpop.f32.mrf.mxu0
        %v7828 = vadd.f32 %v7516, %v7827
        %v7829 = vand.u32 %v1077, 4294901760
        %v7830 = vsub.f32 %v1077, %v7829
        %v7831 = vand.u32 %v7830, 4294901760
        %7832 = vmatmul.f32.gmra.mxu0 %v7831
        %v7833 = vpop.f32.mrf.mxu0
        %v7834 = vadd.f32 %v7521, %v7833
        %v7835 = vand.u32 %v1081, 4294901760
        %v7836 = vsub.f32 %v1081, %v7835
        %v7837 = vand.u32 %v7836, 4294901760
        %7838 = vmatmul.f32.gmra.mxu0 %v7837
        %v7839 = vpop.f32.mrf.mxu0
        %v7840 = vadd.f32 %v7526, %v7839
        %v7841 = vand.u32 %v1085, 4294901760
        %v7842 = vsub.f32 %v1085, %v7841
        %v7843 = vand.u32 %v7842, 4294901760
        %7844 = vmatmul.f32.gmra.mxu0 %v7843
        %v7845 = vpop.f32.mrf.mxu0
        %v7846 = vadd.f32 %v7531, %v7845
        %v7847 = vand.u32 %v1089, 4294901760
        %v7848 = vsub.f32 %v1089, %v7847
        %v7849 = vand.u32 %v7848, 4294901760
        %7850 = vmatmul.f32.gmra.mxu0 %v7849
        %v7851 = vpop.f32.mrf.mxu0
        %v7852 = vadd.f32 %v7536, %v7851
        %v7853 = vand.u32 %v1093, 4294901760
        %v7854 = vsub.f32 %v1093, %v7853
        %v7855 = vand.u32 %v7854, 4294901760
        %7856 = vmatmul.f32.gmra.mxu0 %v7855
        %v7857 = vpop.f32.mrf.mxu0
        %v7858 = vadd.f32 %v7541, %v7857
        %v7859 = vand.u32 %v1097, 4294901760
        %v7860 = vsub.f32 %v1097, %v7859
        %v7861 = vand.u32 %v7860, 4294901760
        %7862 = vmatmul.f32.gmra.mxu0 %v7861
        %v7863 = vpop.f32.mrf.mxu0
        %v7864 = vadd.f32 %v7546, %v7863
        %v7865 = vand.u32 %v1101, 4294901760
        %v7866 = vsub.f32 %v1101, %v7865
        %v7867 = vand.u32 %v7866, 4294901760
        %7868 = vmatmul.f32.gmra.mxu0 %v7867
        %v7869 = vpop.f32.mrf.mxu0
        %v7870 = vadd.f32 %v7551, %v7869
        %v7871 = vand.u32 %v1105, 4294901760
        %v7872 = vsub.f32 %v1105, %v7871
        %v7873 = vand.u32 %v7872, 4294901760
        %7874 = vmatmul.f32.gmra.mxu0 %v7873
        %v7875 = vpop.f32.mrf.mxu0
        %v7876 = vadd.f32 %v7556, %v7875
        %v7877 = vand.u32 %v1109, 4294901760
        %v7878 = vsub.f32 %v1109, %v7877
        %v7879 = vand.u32 %v7878, 4294901760
        %7880 = vmatmul.f32.gmra.mxu0 %v7879
        %v7881 = vpop.f32.mrf.mxu0
        %v7882 = vadd.f32 %v7561, %v7881
        %7883 = vdwg.mxu0
        %v7884 = vand.u32 %v1173, 4294901760
        %v7885 = vsub.f32 %v1173, %v7884
        %v7886 = vand.u32 %v7885, 4294901760
        %7887 = vmatpush.msra.mxu0 %v7886
        %v7888 = vand.u32 %v1172, 4294901760
        %v7889 = vsub.f32 %v1172, %v7888
        %v7890 = vand.u32 %v7889, 4294901760
        %7891 = vmatpush.msra.mxu0 %v7890
        %v7892 = vand.u32 %v1171, 4294901760
        %v7893 = vsub.f32 %v1171, %v7892
        %v7894 = vand.u32 %v7893, 4294901760
        %7895 = vmatpush.msra.mxu0 %v7894
        %v7896 = vand.u32 %v1170, 4294901760
        %v7897 = vsub.f32 %v1170, %v7896
        %v7898 = vand.u32 %v7897, 4294901760
        %7899 = vmatpush.msra.mxu0 %v7898
        %v7900 = vand.u32 %v1169, 4294901760
        %v7901 = vsub.f32 %v1169, %v7900
        %v7902 = vand.u32 %v7901, 4294901760
        %7903 = vmatpush.msra.mxu0 %v7902
        %v7904 = vand.u32 %v1168, 4294901760
        %v7905 = vsub.f32 %v1168, %v7904
        %v7906 = vand.u32 %v7905, 4294901760
        %7907 = vmatpush.msra.mxu0 %v7906
        %v7908 = vand.u32 %v1167, 4294901760
        %v7909 = vsub.f32 %v1167, %v7908
        %v7910 = vand.u32 %v7909, 4294901760
        %7911 = vmatpush.msra.mxu0 %v7910
        %v7912 = vand.u32 %v1166, 4294901760
        %v7913 = vsub.f32 %v1166, %v7912
        %v7914 = vand.u32 %v7913, 4294901760
        %7915 = vmatpush.msra.mxu0 %v7914
        %v7916 = vand.u32 %v1165, 4294901760
        %v7917 = vsub.f32 %v1165, %v7916
        %v7918 = vand.u32 %v7917, 4294901760
        %7919 = vmatpush.msra.mxu0 %v7918
        %v7920 = vand.u32 %v1164, 4294901760
        %v7921 = vsub.f32 %v1164, %v7920
        %v7922 = vand.u32 %v7921, 4294901760
        %7923 = vmatpush.msra.mxu0 %v7922
        %v7924 = vand.u32 %v1163, 4294901760
        %v7925 = vsub.f32 %v1163, %v7924
        %v7926 = vand.u32 %v7925, 4294901760
        %7927 = vmatpush.msra.mxu0 %v7926
        %v7928 = vand.u32 %v1162, 4294901760
        %v7929 = vsub.f32 %v1162, %v7928
        %v7930 = vand.u32 %v7929, 4294901760
        %7931 = vmatpush.msra.mxu0 %v7930
        %v7932 = vand.u32 %v1161, 4294901760
        %v7933 = vsub.f32 %v1161, %v7932
        %v7934 = vand.u32 %v7933, 4294901760
        %7935 = vmatpush.msra.mxu0 %v7934
        %v7936 = vand.u32 %v1160, 4294901760
        %v7937 = vsub.f32 %v1160, %v7936
        %v7938 = vand.u32 %v7937, 4294901760
        %7939 = vmatpush.msra.mxu0 %v7938
        %v7940 = vand.u32 %v1159, 4294901760
        %v7941 = vsub.f32 %v1159, %v7940
        %v7942 = vand.u32 %v7941, 4294901760
        %7943 = vmatpush.msra.mxu0 %v7942
        %v7944 = vand.u32 %v1158, 4294901760
        %v7945 = vsub.f32 %v1158, %v7944
        %v7946 = vand.u32 %v7945, 4294901760
        %7947 = vmatpush.msra.mxu0 %v7946
        %v7948 = vand.u32 %v921, 4294901760
        %7949 = vmatmul.f32.gmra.mxu0 %v7948
        %v7950 = vpop.f32.mrf.mxu0
        %v7951 = vadd.f32 %v7600, %v7950
        %v7952 = vand.u32 %v925, 4294901760
        %7953 = vmatmul.f32.gmra.mxu0 %v7952
        %v7954 = vpop.f32.mrf.mxu0
        %v7955 = vadd.f32 %v7606, %v7954
        %v7956 = vand.u32 %v929, 4294901760
        %7957 = vmatmul.f32.gmra.mxu0 %v7956
        %v7958 = vpop.f32.mrf.mxu0
        %v7959 = vadd.f32 %v7612, %v7958
        %v7960 = vand.u32 %v933, 4294901760
        %7961 = vmatmul.f32.gmra.mxu0 %v7960
        %v7962 = vpop.f32.mrf.mxu0
        %v7963 = vadd.f32 %v7618, %v7962
        %v7964 = vand.u32 %v937, 4294901760
        %7965 = vmatmul.f32.gmra.mxu0 %v7964
        %v7966 = vpop.f32.mrf.mxu0
        %v7967 = vadd.f32 %v7624, %v7966
        %v7968 = vand.u32 %v941, 4294901760
        %7969 = vmatmul.f32.gmra.mxu0 %v7968
        %v7970 = vpop.f32.mrf.mxu0
        %v7971 = vadd.f32 %v7630, %v7970
        %v7972 = vand.u32 %v945, 4294901760
        %7973 = vmatmul.f32.gmra.mxu0 %v7972
        %v7974 = vpop.f32.mrf.mxu0
        %v7975 = vadd.f32 %v7636, %v7974
        %v7976 = vand.u32 %v949, 4294901760
        %7977 = vmatmul.f32.gmra.mxu0 %v7976
        %v7978 = vpop.f32.mrf.mxu0
        %v7979 = vadd.f32 %v7642, %v7978
        %v7980 = vand.u32 %v953, 4294901760
        %7981 = vmatmul.f32.gmra.mxu0 %v7980
        %v7982 = vpop.f32.mrf.mxu0
        %v7983 = vadd.f32 %v7648, %v7982
        %v7984 = vand.u32 %v957, 4294901760
        %7985 = vmatmul.f32.gmra.mxu0 %v7984
        %v7986 = vpop.f32.mrf.mxu0
        %v7987 = vadd.f32 %v7654, %v7986
        %v7988 = vand.u32 %v961, 4294901760
        %7989 = vmatmul.f32.gmra.mxu0 %v7988
        %v7990 = vpop.f32.mrf.mxu0
        %v7991 = vadd.f32 %v7660, %v7990
        %v7992 = vand.u32 %v965, 4294901760
        %7993 = vmatmul.f32.gmra.mxu0 %v7992
        %v7994 = vpop.f32.mrf.mxu0
        %v7995 = vadd.f32 %v7666, %v7994
        %v7996 = vand.u32 %v969, 4294901760
        %7997 = vmatmul.f32.gmra.mxu0 %v7996
        %v7998 = vpop.f32.mrf.mxu0
        %v7999 = vadd.f32 %v7672, %v7998
        %v8000 = vand.u32 %v973, 4294901760
        %8001 = vmatmul.f32.gmra.mxu0 %v8000
        %v8002 = vpop.f32.mrf.mxu0
        %v8003 = vadd.f32 %v7678, %v8002
        %v8004 = vand.u32 %v977, 4294901760
        %8005 = vmatmul.f32.gmra.mxu0 %v8004
        %v8006 = vpop.f32.mrf.mxu0
        %v8007 = vadd.f32 %v7684, %v8006
        %v8008 = vand.u32 %v981, 4294901760
        %8009 = vmatmul.f32.gmra.mxu0 %v8008
        %v8010 = vpop.f32.mrf.mxu0
        %v8011 = vadd.f32 %v7690, %v8010
        %v8012 = vand.u32 %v985, 4294901760
        %8013 = vmatmul.f32.gmra.mxu0 %v8012
        %v8014 = vpop.f32.mrf.mxu0
        %v8015 = vadd.f32 %v7696, %v8014
        %v8016 = vand.u32 %v989, 4294901760
        %8017 = vmatmul.f32.gmra.mxu0 %v8016
        %v8018 = vpop.f32.mrf.mxu0
        %v8019 = vadd.f32 %v7702, %v8018
        %v8020 = vand.u32 %v993, 4294901760
        %8021 = vmatmul.f32.gmra.mxu0 %v8020
        %v8022 = vpop.f32.mrf.mxu0
        %v8023 = vadd.f32 %v7708, %v8022
        %v8024 = vand.u32 %v997, 4294901760
        %8025 = vmatmul.f32.gmra.mxu0 %v8024
        %v8026 = vpop.f32.mrf.mxu0
        %v8027 = vadd.f32 %v7714, %v8026
        %v8028 = vand.u32 %v1001, 4294901760
        %8029 = vmatmul.f32.gmra.mxu0 %v8028
        %v8030 = vpop.f32.mrf.mxu0
        %v8031 = vadd.f32 %v7720, %v8030
        %v8032 = vand.u32 %v1005, 4294901760
        %8033 = vmatmul.f32.gmra.mxu0 %v8032
        %v8034 = vpop.f32.mrf.mxu0
        %v8035 = vadd.f32 %v7726, %v8034
        %v8036 = vand.u32 %v1009, 4294901760
        %8037 = vmatmul.f32.gmra.mxu0 %v8036
        %v8038 = vpop.f32.mrf.mxu0
        %v8039 = vadd.f32 %v7732, %v8038
        %v8040 = vand.u32 %v1013, 4294901760
        %8041 = vmatmul.f32.gmra.mxu0 %v8040
        %v8042 = vpop.f32.mrf.mxu0
        %v8043 = vadd.f32 %v7738, %v8042
        %v8044 = vand.u32 %v1017, 4294901760
        %8045 = vmatmul.f32.gmra.mxu0 %v8044
        %v8046 = vpop.f32.mrf.mxu0
        %v8047 = vadd.f32 %v7744, %v8046
        %v8048 = vand.u32 %v1021, 4294901760
        %8049 = vmatmul.f32.gmra.mxu0 %v8048
        %v8050 = vpop.f32.mrf.mxu0
        %v8051 = vadd.f32 %v7750, %v8050
        %v8052 = vand.u32 %v1025, 4294901760
        %8053 = vmatmul.f32.gmra.mxu0 %v8052
        %v8054 = vpop.f32.mrf.mxu0
        %v8055 = vadd.f32 %v7756, %v8054
        %v8056 = vand.u32 %v1029, 4294901760
        %8057 = vmatmul.f32.gmra.mxu0 %v8056
        %v8058 = vpop.f32.mrf.mxu0
        %v8059 = vadd.f32 %v7762, %v8058
        %v8060 = vand.u32 %v1033, 4294901760
        %8061 = vmatmul.f32.gmra.mxu0 %v8060
        %v8062 = vpop.f32.mrf.mxu0
        %v8063 = vadd.f32 %v7768, %v8062
        %v8064 = vand.u32 %v1037, 4294901760
        %8065 = vmatmul.f32.gmra.mxu0 %v8064
        %v8066 = vpop.f32.mrf.mxu0
        %v8067 = vadd.f32 %v7774, %v8066
        %v8068 = vand.u32 %v1041, 4294901760
        %8069 = vmatmul.f32.gmra.mxu0 %v8068
        %v8070 = vpop.f32.mrf.mxu0
        %v8071 = vadd.f32 %v7780, %v8070
        %v8072 = vand.u32 %v1045, 4294901760
        %8073 = vmatmul.f32.gmra.mxu0 %v8072
        %v8074 = vpop.f32.mrf.mxu0
        %v8075 = vadd.f32 %v7786, %v8074
        %v8076 = vand.u32 %v1049, 4294901760
        %8077 = vmatmul.f32.gmra.mxu0 %v8076
        %v8078 = vpop.f32.mrf.mxu0
        %v8079 = vadd.f32 %v7792, %v8078
        %v8080 = vand.u32 %v1053, 4294901760
        %8081 = vmatmul.f32.gmra.mxu0 %v8080
        %v8082 = vpop.f32.mrf.mxu0
        %v8083 = vadd.f32 %v7798, %v8082
        %v8084 = vand.u32 %v1057, 4294901760
        %8085 = vmatmul.f32.gmra.mxu0 %v8084
        %v8086 = vpop.f32.mrf.mxu0
        %v8087 = vadd.f32 %v7804, %v8086
        %v8088 = vand.u32 %v1061, 4294901760
        %8089 = vmatmul.f32.gmra.mxu0 %v8088
        %v8090 = vpop.f32.mrf.mxu0
        %v8091 = vadd.f32 %v7810, %v8090
        %v8092 = vand.u32 %v1065, 4294901760
        %8093 = vmatmul.f32.gmra.mxu0 %v8092
        %v8094 = vpop.f32.mrf.mxu0
        %v8095 = vadd.f32 %v7816, %v8094
        %v8096 = vand.u32 %v1069, 4294901760
        %8097 = vmatmul.f32.gmra.mxu0 %v8096
        %v8098 = vpop.f32.mrf.mxu0
        %v8099 = vadd.f32 %v7822, %v8098
        %v8100 = vand.u32 %v1073, 4294901760
        %8101 = vmatmul.f32.gmra.mxu0 %v8100
        %v8102 = vpop.f32.mrf.mxu0
        %v8103 = vadd.f32 %v7828, %v8102
        %v8104 = vand.u32 %v1077, 4294901760
        %8105 = vmatmul.f32.gmra.mxu0 %v8104
        %v8106 = vpop.f32.mrf.mxu0
        %v8107 = vadd.f32 %v7834, %v8106
        %v8108 = vand.u32 %v1081, 4294901760
        %8109 = vmatmul.f32.gmra.mxu0 %v8108
        %v8110 = vpop.f32.mrf.mxu0
        %v8111 = vadd.f32 %v7840, %v8110
        %v8112 = vand.u32 %v1085, 4294901760
        %8113 = vmatmul.f32.gmra.mxu0 %v8112
        %v8114 = vpop.f32.mrf.mxu0
        %v8115 = vadd.f32 %v7846, %v8114
        %v8116 = vand.u32 %v1089, 4294901760
        %8117 = vmatmul.f32.gmra.mxu0 %v8116
        %v8118 = vpop.f32.mrf.mxu0
        %v8119 = vadd.f32 %v7852, %v8118
        %v8120 = vand.u32 %v1093, 4294901760
        %8121 = vmatmul.f32.gmra.mxu0 %v8120
        %v8122 = vpop.f32.mrf.mxu0
        %v8123 = vadd.f32 %v7858, %v8122
        %v8124 = vand.u32 %v1097, 4294901760
        %8125 = vmatmul.f32.gmra.mxu0 %v8124
        %v8126 = vpop.f32.mrf.mxu0
        %v8127 = vadd.f32 %v7864, %v8126
        %v8128 = vand.u32 %v1101, 4294901760
        %8129 = vmatmul.f32.gmra.mxu0 %v8128
        %v8130 = vpop.f32.mrf.mxu0
        %v8131 = vadd.f32 %v7870, %v8130
        %v8132 = vand.u32 %v1105, 4294901760
        %8133 = vmatmul.f32.gmra.mxu0 %v8132
        %v8134 = vpop.f32.mrf.mxu0
        %v8135 = vadd.f32 %v7876, %v8134
        %v8136 = vand.u32 %v1109, 4294901760
        %8137 = vmatmul.f32.gmra.mxu0 %v8136
        %v8138 = vpop.f32.mrf.mxu0
        %v8139 = vadd.f32 %v7882, %v8138
        %8140 = vdwg.mxu0
        %v8141 = vand.u32 %v1173, 4294901760
        %8142 = vmatpush.msra.mxu0 %v8141
        %v8143 = vand.u32 %v1172, 4294901760
        %8144 = vmatpush.msra.mxu0 %v8143
        %v8145 = vand.u32 %v1171, 4294901760
        %8146 = vmatpush.msra.mxu0 %v8145
        %v8147 = vand.u32 %v1170, 4294901760
        %8148 = vmatpush.msra.mxu0 %v8147
        %v8149 = vand.u32 %v1169, 4294901760
        %8150 = vmatpush.msra.mxu0 %v8149
        %v8151 = vand.u32 %v1168, 4294901760
        %8152 = vmatpush.msra.mxu0 %v8151
        %v8153 = vand.u32 %v1167, 4294901760
        %8154 = vmatpush.msra.mxu0 %v8153
        %v8155 = vand.u32 %v1166, 4294901760
        %8156 = vmatpush.msra.mxu0 %v8155
        %v8157 = vand.u32 %v1165, 4294901760
        %8158 = vmatpush.msra.mxu0 %v8157
        %v8159 = vand.u32 %v1164, 4294901760
        %8160 = vmatpush.msra.mxu0 %v8159
        %v8161 = vand.u32 %v1163, 4294901760
        %8162 = vmatpush.msra.mxu0 %v8161
        %v8163 = vand.u32 %v1162, 4294901760
        %8164 = vmatpush.msra.mxu0 %v8163
        %v8165 = vand.u32 %v1161, 4294901760
        %8166 = vmatpush.msra.mxu0 %v8165
        %v8167 = vand.u32 %v1160, 4294901760
        %8168 = vmatpush.msra.mxu0 %v8167
        %v8169 = vand.u32 %v1159, 4294901760
        %8170 = vmatpush.msra.mxu0 %v8169
        %v8171 = vand.u32 %v1158, 4294901760
        %8172 = vmatpush.msra.mxu0 %v8171
        %v8173 = vand.u32 %v921, 4294901760
        %8174 = vmatmul.f32.gmra.mxu0 %v8173
        %v8175 = vpop.f32.mrf.mxu0
        %v8176 = vadd.f32 %v7951, %v8175
        %v8177 = vand.u32 %v925, 4294901760
        %8178 = vmatmul.f32.gmra.mxu0 %v8177
        %v8179 = vpop.f32.mrf.mxu0
        %v8180 = vadd.f32 %v7955, %v8179
        %v8181 = vand.u32 %v929, 4294901760
        %8182 = vmatmul.f32.gmra.mxu0 %v8181
        %v8183 = vpop.f32.mrf.mxu0
        %v8184 = vadd.f32 %v7959, %v8183
        %v8185 = vand.u32 %v933, 4294901760
        %8186 = vmatmul.f32.gmra.mxu0 %v8185
        %v8187 = vpop.f32.mrf.mxu0
        %v8188 = vadd.f32 %v7963, %v8187
        %v8189 = vand.u32 %v937, 4294901760
        %8190 = vmatmul.f32.gmra.mxu0 %v8189
        %v8191 = vpop.f32.mrf.mxu0
        %v8192 = vadd.f32 %v7967, %v8191
        %v8193 = vand.u32 %v941, 4294901760
        %8194 = vmatmul.f32.gmra.mxu0 %v8193
        %v8195 = vpop.f32.mrf.mxu0
        %v8196 = vadd.f32 %v7971, %v8195
        %v8197 = vand.u32 %v945, 4294901760
        %8198 = vmatmul.f32.gmra.mxu0 %v8197
        %v8199 = vpop.f32.mrf.mxu0
        %v8200 = vadd.f32 %v7975, %v8199
        %v8201 = vand.u32 %v949, 4294901760
        %8202 = vmatmul.f32.gmra.mxu0 %v8201
        %v8203 = vpop.f32.mrf.mxu0
        %v8204 = vadd.f32 %v7979, %v8203
        %v8205 = vand.u32 %v953, 4294901760
        %8206 = vmatmul.f32.gmra.mxu0 %v8205
        %v8207 = vpop.f32.mrf.mxu0
        %v8208 = vadd.f32 %v7983, %v8207
        %v8209 = vand.u32 %v957, 4294901760
        %8210 = vmatmul.f32.gmra.mxu0 %v8209
        %v8211 = vpop.f32.mrf.mxu0
        %v8212 = vadd.f32 %v7987, %v8211
        %v8213 = vand.u32 %v961, 4294901760
        %8214 = vmatmul.f32.gmra.mxu0 %v8213
        %v8215 = vpop.f32.mrf.mxu0
        %v8216 = vadd.f32 %v7991, %v8215
        %v8217 = vand.u32 %v965, 4294901760
        %8218 = vmatmul.f32.gmra.mxu0 %v8217
        %v8219 = vpop.f32.mrf.mxu0
        %v8220 = vadd.f32 %v7995, %v8219
        %v8221 = vand.u32 %v969, 4294901760
        %8222 = vmatmul.f32.gmra.mxu0 %v8221
        %v8223 = vpop.f32.mrf.mxu0
        %v8224 = vadd.f32 %v7999, %v8223
        %v8225 = vand.u32 %v973, 4294901760
        %8226 = vmatmul.f32.gmra.mxu0 %v8225
        %v8227 = vpop.f32.mrf.mxu0
        %v8228 = vadd.f32 %v8003, %v8227
        %v8229 = vand.u32 %v977, 4294901760
        %8230 = vmatmul.f32.gmra.mxu0 %v8229
        %v8231 = vpop.f32.mrf.mxu0
        %v8232 = vadd.f32 %v8007, %v8231
        %v8233 = vand.u32 %v981, 4294901760
        %8234 = vmatmul.f32.gmra.mxu0 %v8233
        %v8235 = vpop.f32.mrf.mxu0
        %v8236 = vadd.f32 %v8011, %v8235
        %v8237 = vand.u32 %v985, 4294901760
        %8238 = vmatmul.f32.gmra.mxu0 %v8237
        %v8239 = vpop.f32.mrf.mxu0
        %v8240 = vadd.f32 %v8015, %v8239
        %v8241 = vand.u32 %v989, 4294901760
        %8242 = vmatmul.f32.gmra.mxu0 %v8241
        %v8243 = vpop.f32.mrf.mxu0
        %v8244 = vadd.f32 %v8019, %v8243
        %v8245 = vand.u32 %v993, 4294901760
        %8246 = vmatmul.f32.gmra.mxu0 %v8245
        %v8247 = vpop.f32.mrf.mxu0
        %v8248 = vadd.f32 %v8023, %v8247
        %v8249 = vand.u32 %v997, 4294901760
        %8250 = vmatmul.f32.gmra.mxu0 %v8249
        %v8251 = vpop.f32.mrf.mxu0
        %v8252 = vadd.f32 %v8027, %v8251
        %v8253 = vand.u32 %v1001, 4294901760
        %8254 = vmatmul.f32.gmra.mxu0 %v8253
        %v8255 = vpop.f32.mrf.mxu0
        %v8256 = vadd.f32 %v8031, %v8255
        %v8257 = vand.u32 %v1005, 4294901760
        %8258 = vmatmul.f32.gmra.mxu0 %v8257
        %v8259 = vpop.f32.mrf.mxu0
        %v8260 = vadd.f32 %v8035, %v8259
        %v8261 = vand.u32 %v1009, 4294901760
        %8262 = vmatmul.f32.gmra.mxu0 %v8261
        %v8263 = vpop.f32.mrf.mxu0
        %v8264 = vadd.f32 %v8039, %v8263
        %v8265 = vand.u32 %v1013, 4294901760
        %8266 = vmatmul.f32.gmra.mxu0 %v8265
        %v8267 = vpop.f32.mrf.mxu0
        %v8268 = vadd.f32 %v8043, %v8267
        %v8269 = vand.u32 %v1017, 4294901760
        %8270 = vmatmul.f32.gmra.mxu0 %v8269
        %v8271 = vpop.f32.mrf.mxu0
        %v8272 = vadd.f32 %v8047, %v8271
        %v8273 = vand.u32 %v1021, 4294901760
        %8274 = vmatmul.f32.gmra.mxu0 %v8273
        %v8275 = vpop.f32.mrf.mxu0
        %v8276 = vadd.f32 %v8051, %v8275
        %v8277 = vand.u32 %v1025, 4294901760
        %8278 = vmatmul.f32.gmra.mxu0 %v8277
        %v8279 = vpop.f32.mrf.mxu0
        %v8280 = vadd.f32 %v8055, %v8279
        %v8281 = vand.u32 %v1029, 4294901760
        %8282 = vmatmul.f32.gmra.mxu0 %v8281
        %v8283 = vpop.f32.mrf.mxu0
        %v8284 = vadd.f32 %v8059, %v8283
        %v8285 = vand.u32 %v1033, 4294901760
        %8286 = vmatmul.f32.gmra.mxu0 %v8285
        %v8287 = vpop.f32.mrf.mxu0
        %v8288 = vadd.f32 %v8063, %v8287
        %v8289 = vand.u32 %v1037, 4294901760
        %8290 = vmatmul.f32.gmra.mxu0 %v8289
        %v8291 = vpop.f32.mrf.mxu0
        %v8292 = vadd.f32 %v8067, %v8291
        %v8293 = vand.u32 %v1041, 4294901760
        %8294 = vmatmul.f32.gmra.mxu0 %v8293
        %v8295 = vpop.f32.mrf.mxu0
        %v8296 = vadd.f32 %v8071, %v8295
        %v8297 = vand.u32 %v1045, 4294901760
        %8298 = vmatmul.f32.gmra.mxu0 %v8297
        %v8299 = vpop.f32.mrf.mxu0
        %v8300 = vadd.f32 %v8075, %v8299
        %v8301 = vand.u32 %v1049, 4294901760
        %8302 = vmatmul.f32.gmra.mxu0 %v8301
        %v8303 = vpop.f32.mrf.mxu0
        %v8304 = vadd.f32 %v8079, %v8303
        %v8305 = vand.u32 %v1053, 4294901760
        %8306 = vmatmul.f32.gmra.mxu0 %v8305
        %v8307 = vpop.f32.mrf.mxu0
        %v8308 = vadd.f32 %v8083, %v8307
        %v8309 = vand.u32 %v1057, 4294901760
        %8310 = vmatmul.f32.gmra.mxu0 %v8309
        %v8311 = vpop.f32.mrf.mxu0
        %v8312 = vadd.f32 %v8087, %v8311
        %v8313 = vand.u32 %v1061, 4294901760
        %8314 = vmatmul.f32.gmra.mxu0 %v8313
        %v8315 = vpop.f32.mrf.mxu0
        %v8316 = vadd.f32 %v8091, %v8315
        %v8317 = vand.u32 %v1065, 4294901760
        %8318 = vmatmul.f32.gmra.mxu0 %v8317
        %v8319 = vpop.f32.mrf.mxu0
        %v8320 = vadd.f32 %v8095, %v8319
        %v8321 = vand.u32 %v1069, 4294901760
        %8322 = vmatmul.f32.gmra.mxu0 %v8321
        %v8323 = vpop.f32.mrf.mxu0
        %v8324 = vadd.f32 %v8099, %v8323
        %v8325 = vand.u32 %v1073, 4294901760
        %8326 = vmatmul.f32.gmra.mxu0 %v8325
        %v8327 = vpop.f32.mrf.mxu0
        %v8328 = vadd.f32 %v8103, %v8327
        %v8329 = vand.u32 %v1077, 4294901760
        %8330 = vmatmul.f32.gmra.mxu0 %v8329
        %v8331 = vpop.f32.mrf.mxu0
        %v8332 = vadd.f32 %v8107, %v8331
        %v8333 = vand.u32 %v1081, 4294901760
        %8334 = vmatmul.f32.gmra.mxu0 %v8333
        %v8335 = vpop.f32.mrf.mxu0
        %v8336 = vadd.f32 %v8111, %v8335
        %v8337 = vand.u32 %v1085, 4294901760
        %8338 = vmatmul.f32.gmra.mxu0 %v8337
        %v8339 = vpop.f32.mrf.mxu0
        %v8340 = vadd.f32 %v8115, %v8339
        %v8341 = vand.u32 %v1089, 4294901760
        %8342 = vmatmul.f32.gmra.mxu0 %v8341
        %v8343 = vpop.f32.mrf.mxu0
        %v8344 = vadd.f32 %v8119, %v8343
        %v8345 = vand.u32 %v1093, 4294901760
        %8346 = vmatmul.f32.gmra.mxu0 %v8345
        %v8347 = vpop.f32.mrf.mxu0
        %v8348 = vadd.f32 %v8123, %v8347
        %v8349 = vand.u32 %v1097, 4294901760
        %8350 = vmatmul.f32.gmra.mxu0 %v8349
        %v8351 = vpop.f32.mrf.mxu0
        %v8352 = vadd.f32 %v8127, %v8351
        %v8353 = vand.u32 %v1101, 4294901760
        %8354 = vmatmul.f32.gmra.mxu0 %v8353
        %v8355 = vpop.f32.mrf.mxu0
        %v8356 = vadd.f32 %v8131, %v8355
        %v8357 = vand.u32 %v1105, 4294901760
        %8358 = vmatmul.f32.gmra.mxu0 %v8357
        %v8359 = vpop.f32.mrf.mxu0
        %v8360 = vadd.f32 %v8135, %v8359
        %v8361 = vand.u32 %v1109, 4294901760
        %8362 = vmatmul.f32.gmra.mxu0 %v8361
        %v8363 = vpop.f32.mrf.mxu0
        %v8364 = vadd.f32 %v8139, %v8363
        %8365 = vdwg.mxu0
        %v8366 = vmul.f32 %v8176, 11.313708
        %v8367 = vmul.f32 %v8180, 11.313708
        %v8368 = vmul.f32 %v8184, 11.313708
        %v8369 = vmul.f32 %v8188, 11.313708
        %v8370 = vmul.f32 %v8192, 11.313708
        %v8371 = vmul.f32 %v8196, 11.313708
        %v8372 = vmul.f32 %v8200, 11.313708
        %v8373 = vmul.f32 %v8204, 11.313708
        %v8374 = vmul.f32 %v8208, 11.313708
        %v8375 = vmul.f32 %v8212, 11.313708
        %v8376 = vmul.f32 %v8216, 11.313708
        %v8377 = vmul.f32 %v8220, 11.313708
        %v8378 = vmul.f32 %v8224, 11.313708
        %v8379 = vmul.f32 %v8228, 11.313708
        %v8380 = vmul.f32 %v8232, 11.313708
        %v8381 = vmul.f32 %v8236, 11.313708
        %v8382 = vmul.f32 %v8240, 11.313708
        %v8383 = vmul.f32 %v8244, 11.313708
        %v8384 = vmul.f32 %v8248, 11.313708
        %v8385 = vmul.f32 %v8252, 11.313708
        %v8386 = vmul.f32 %v8256, 11.313708
        %v8387 = vmul.f32 %v8260, 11.313708
        %v8388 = vmul.f32 %v8264, 11.313708
        %v8389 = vmul.f32 %v8268, 11.313708
        %v8390 = vmul.f32 %v8272, 11.313708
        %v8391 = vmul.f32 %v8276, 11.313708
        %v8392 = vmul.f32 %v8280, 11.313708
        %v8393 = vmul.f32 %v8284, 11.313708
        %v8394 = vmul.f32 %v8288, 11.313708
        %v8395 = vmul.f32 %v8292, 11.313708
        %v8396 = vmul.f32 %v8296, 11.313708
        %v8397 = vmul.f32 %v8300, 11.313708
        %v8398 = vmul.f32 %v8304, 11.313708
        %v8399 = vmul.f32 %v8308, 11.313708
        %v8400 = vmul.f32 %v8312, 11.313708
        %v8401 = vmul.f32 %v8316, 11.313708
        %v8402 = vmul.f32 %v8320, 11.313708
        %v8403 = vmul.f32 %v8324, 11.313708
        %v8404 = vmul.f32 %v8328, 11.313708
        %v8405 = vmul.f32 %v8332, 11.313708
        %v8406 = vmul.f32 %v8336, 11.313708
        %v8407 = vmul.f32 %v8340, 11.313708
        %v8408 = vmul.f32 %v8344, 11.313708
        %v8409 = vmul.f32 %v8348, 11.313708
        %v8410 = vmul.f32 %v8352, 11.313708
        %v8411 = vmul.f32 %v8356, 11.313708
        %v8412 = vmul.f32 %v8360, 11.313708
        %v8413 = vmul.f32 %v8364, 11.313708
        %8414 = vst [vmem:[%s137] sm:$0xff] %v8366
        %8415 = vst [vmem:[%s137 + $0x8] sm:$0xff] %v8367
        %8416 = vst [vmem:[%s137 + $0x10] sm:$0xff] %v8368
        %8417 = vst [vmem:[%s137 + $0x18] sm:$0xff] %v8369
        %8418 = vst [vmem:[%s137 + $0x20] sm:$0xff] %v8370
        %8419 = vst [vmem:[%s137 + $0x28] sm:$0xff] %v8371
        %8420 = vst [vmem:[%s137 + $0x30] sm:$0xff] %v8372
        %8421 = vst [vmem:[%s137 + $0x38] sm:$0xff] %v8373
        %8422 = vst [vmem:[%s137 + $0x40] sm:$0xff] %v8374
        %8423 = vst [vmem:[%s137 + $0x48] sm:$0xff] %v8375
        %8424 = vst [vmem:[%s137 + $0x50] sm:$0xff] %v8376
        %8425 = vst [vmem:[%s137 + $0x58] sm:$0xff] %v8377
        %8426 = vst [vmem:[%s137 + $0x60] sm:$0xff] %v8378
        %8427 = vst [vmem:[%s137 + $0x68] sm:$0xff] %v8379
        %8428 = vst [vmem:[%s137 + $0x70] sm:$0xff] %v8380
        %8429 = vst [vmem:[%s137 + $0x78] sm:$0xff] %v8381
        %8430 = vst [vmem:[%s137 + $0x80] sm:$0xff] %v8382
        %8431 = vst [vmem:[%s137 + $0x88] sm:$0xff] %v8383
        %8432 = vst [vmem:[%s137 + $0x90] sm:$0xff] %v8384
        %8433 = vst [vmem:[%s137 + $0x98] sm:$0xff] %v8385
        %8434 = vst [vmem:[%s137 + $0xa0] sm:$0xff] %v8386
        %8435 = vst [vmem:[%s137 + $0xa8] sm:$0xff] %v8387
        %8436 = vst [vmem:[%s137 + $0xb0] sm:$0xff] %v8388
        %8437 = vst [vmem:[%s137 + $0xb8] sm:$0xff] %v8389
        %8438 = vst [vmem:[%s137 + $0xc0] sm:$0xff] %v8390
        %8439 = vst [vmem:[%s137 + $0xc8] sm:$0xff] %v8391
        %8440 = vst [vmem:[%s137 + $0xd0] sm:$0xff] %v8392
        %8441 = vst [vmem:[%s137 + $0xd8] sm:$0xff] %v8393
        %8442 = vst [vmem:[%s137 + $0xe0] sm:$0xff] %v8394
        %8443 = vst [vmem:[%s137 + $0xe8] sm:$0xff] %v8395
        %8444 = vst [vmem:[%s137 + $0xf0] sm:$0xff] %v8396
        %8445 = vst [vmem:[%s137 + $0xf8] sm:$0xff] %v8397
        %8446 = vst [vmem:[%s137 + $0x100] sm:$0xff] %v8398
        %8447 = vst [vmem:[%s137 + $0x108] sm:$0xff] %v8399
        %8448 = vst [vmem:[%s137 + $0x110] sm:$0xff] %v8400
        %8449 = vst [vmem:[%s137 + $0x118] sm:$0xff] %v8401
        %8450 = vst [vmem:[%s137 + $0x120] sm:$0xff] %v8402
        %8451 = vst [vmem:[%s137 + $0x128] sm:$0xff] %v8403
        %8452 = vst [vmem:[%s137 + $0x130] sm:$0xff] %v8404
        %8453 = vst [vmem:[%s137 + $0x138] sm:$0xff] %v8405
        %8454 = vst [vmem:[%s137 + $0x140] sm:$0xff] %v8406
        %8455 = vst [vmem:[%s137 + $0x148] sm:$0xff] %v8407
        %8456 = vst [vmem:[%s137 + $0x150] sm:$0xff] %v8408
        %8457 = vst [vmem:[%s137 + $0x158] sm:$0xff] %v8409
        %8458 = vst [vmem:[%s137 + $0x160] sm:$0xff] %v8410
        %8459 = vst [vmem:[%s137 + $0x168] sm:$0xff] %v8411
        %8460 = vst [vmem:[%s137 + $0x170] sm:$0xff] %v8412
        %8461 = vst [vmem:[%s137 + $0x178] sm:$0xff] %v8413
        %s8462 = sand.u32 %s71, 1
        %s8463 = scalar_lea.sflag [#allocation3], %s8462
        %s8464 = sand.u32 %s71, 1
        %s8465 = smul.addr %s8464, 384
        %s8466 = scalar_lea.vmem [#allocation2], %s8465
        // Predicated region
        $region29: #{tpu_custom_call.1} parent=27 // pred_check
          %p8467 = pneg %p81
        $region30: #{tpu_custom_call.1} parent=27 // pred_check_branch
          %8469 = sbr.rel (%p8467) target = $region32
        $region31: #{tpu_custom_call.1} parent=27 // pred_region
          %s8470 = smul.u32 48, %s16
          %8472 = vsyncadd %s8463, 0
          %s8473 = smul.addr %s8470, 8
          %s8474 = scalar_lea.hbm %s2, %s8473
          %s8475 = sshll.u32 %s8466, 4
          %s8476 = int_to_ptr.vmem [resolvable:$true] %s8475
          %s8477 = sshll.u32 %s8474, 4
          %s8478 = int_to_ptr.hbm [resolvable:$true] %s8477
          %8483 = dma.vmem_to_hbm [thread:$0]  %s8476, 6144, %s8478, %s8463, 128, 128, 8
        $region32: #{tpu_custom_call.1} parent=27 // pred_fallthru
          _
      $region28: #{tpu_custom_call.1} parent=5 // pred_fallthru
        _
      %p8484 = scmp.le.s32.totalorder 2, %s11
      // Predicated region
      $region33: #{tpu_custom_call.1} parent=5 // pred_check
        %p8485 = pneg %p8484
      $region34: #{tpu_custom_call.1} parent=5 // pred_check_branch
        %8487 = sbr.rel (%p8485) target = $region36
      $region35: #{tpu_custom_call.1} parent=5 // pred_region
        %s8488 = ssub.s32 %s11, 2
        // Predicated region
        $region37: #{tpu_custom_call.1} parent=35 // pred_check
          %p8489 = pneg %p87
        $region38: #{tpu_custom_call.1} parent=35 // pred_check_branch
          %8491 = sbr.rel (%p8489) target = $region40
        $region39: #{tpu_custom_call.1} parent=35 // pred_region
          %s8492 = sand.u32 %s72, 1
          %s8493 = scalar_lea.sflag [#allocation3], %s8492
          %s8494 = sand.u32 %s72, 1
          %s8495 = smul.addr %s8494, 384
          %s8496 = scalar_lea.vmem [#allocation2], %s8495
          %8498 = dma.done %s8493, 6144
        $region40: #{tpu_custom_call.1} parent=35 // pred_fallthru
          _
      $region36: #{tpu_custom_call.1} parent=5 // pred_fallthru
        _
    $region6: #{tpu_custom_call.1} parent=1 // loop_footer
      %s15 = sadd.s32 1, %s11
    $region7: #{tpu_custom_call.1} parent=1 // loop_footer_branch
      %10 = sbr.rel target = $region3
    $region8: #{tpu_custom_call.1} parent=1 // loop_exit
      _
    %8499 = vsyncpa [#allocation3], 1
    %s8500 = scalar_lea.sflag [#allocation3], 1
    %8501 = vsyncpa %s8500, 1

</llo_original>
